<compile_context>
chip_gen: v6e
topology: v6e:2x2x1
jax: 0.10.0
libtpu: 0.0.40
codegen_flags: <defaults>
</compile_context>

<pallas_src>
import functools

import jax
import jax.numpy as jnp
from jax import lax
from jax.experimental import pallas as pl
from jax.experimental.pallas import tpu as pltpu


# ---------------------------------------------------------------------------
# Tile selection: largest aligned divisor capped by `cap` (full extent if the
# dim already fits under the cap, which Mosaic always accepts).
# ---------------------------------------------------------------------------
def _pick_tile(dim, cap, align):
    if dim <= cap:
        return dim
    t = (cap // align) * align
    while t >= align:
        if dim % t == 0:
            return t
        t -= align
    return dim  # awkward size: fall back to full extent


# ---------------------------------------------------------------------------
# Tiled Linear: out[M, N] = x[M, K] @ w[N, K]^T (+ bias[N]).
# Weights stay in torch (out_features, in_features) layout; the contraction
# runs over the last dim of both operands, so no HBM weight-transpose copy.
# ---------------------------------------------------------------------------
def _linear_kernel(x_ref, w_ref, o_ref, acc_ref):
    @pl.when(pl.program_id(2) == 0)
    def _():
        acc_ref[...] = jnp.zeros(acc_ref.shape, acc_ref.dtype)

    acc_ref[...] += lax.dot_general(
        x_ref[...], w_ref[...], (((1,), (1,)), ((), ())),
        preferred_element_type=jnp.float32)

    @pl.when(pl.program_id(2) == pl.num_programs(2) - 1)
    def _():
        o_ref[...] = acc_ref[...].astype(o_ref.dtype)


def _linear_bias_kernel(x_ref, w_ref, b_ref, o_ref, acc_ref):
    @pl.when(pl.program_id(2) == 0)
    def _():
        acc_ref[...] = jnp.zeros(acc_ref.shape, acc_ref.dtype)

    acc_ref[...] += lax.dot_general(
        x_ref[...], w_ref[...], (((1,), (1,)), ((), ())),
        preferred_element_type=jnp.float32)

    @pl.when(pl.program_id(2) == pl.num_programs(2) - 1)
    def _():
        o_ref[...] = (acc_ref[...] + b_ref[...]).astype(o_ref.dtype)


def linear(x, w, bias=None, *, tm=512, tn=512, tk=512, out_dtype=None):
    M, K = x.shape
    N, K2 = w.shape
    assert K == K2
    out_dtype = out_dtype or x.dtype

    tm = _pick_tile(M, tm, 8)      # second-minor of x / out blocks
    tn = _pick_tile(N, tn, 128)    # minor of out block (lane-dense stores)
    tk = _pick_tile(K, tk, 128)    # minor of x / w blocks
    grid = (M // tm, N // tn, K // tk)

    in_specs = [
        pl.BlockSpec((tm, tk), lambda i, j, k: (i, k)),
        pl.BlockSpec((tn, tk), lambda i, j, k: (j, k)),   # torch-layout weight
    ]
    operands = (x, w)
    kernel = _linear_kernel
    if bias is not None:
        in_specs.append(pl.BlockSpec((1, tn), lambda i, j, k: (0, j)))
        operands = (x, w, bias.reshape(1, N).astype(jnp.float32))
        kernel = _linear_bias_kernel

    return pl.pallas_call(
        kernel,
        out_shape=jax.ShapeDtypeStruct((M, N), out_dtype),
        grid_spec=pltpu.PrefetchScalarGridSpec(
            num_scalar_prefetch=0,
            grid=grid,
            in_specs=in_specs,
            out_specs=pl.BlockSpec((tm, tn), lambda i, j, k: (i, j)),
            scratch_shapes=[pltpu.VMEM((tm, tn), jnp.float32)],
        ),
        compiler_params=pltpu.CompilerParams(
            dimension_semantics=("parallel", "parallel", "arbitrary")),
    )(*operands)


# ---------------------------------------------------------------------------
# Flash-attention core, all heads packed per grid step.
#   qkv : (B, N, 3*inner) laid out as [q | k | v], each chunk = (h d)
#   out : (B, N, inner)   == 'b n (h d)'  (lane-dense, no rearrange needed)
# ---------------------------------------------------------------------------
def _flash_kernel(scale, heads, dh, q_ref, k_ref, v_ref, o_ref,
                  m_sc, l_sc, acc_sc):
    kv = pl.program_id(2)

    @pl.when(kv == 0)
    def _():
        m_sc[...] = jnp.full(m_sc.shape, -jnp.inf, m_sc.dtype)
        l_sc[...] = jnp.zeros(l_sc.shape, l_sc.dtype)
        acc_sc[...] = jnp.zeros(acc_sc.shape, acc_sc.dtype)

    # Fold the softmax scale into q once per step over the (tq, heads*dh) tile
    # (heads*dh elements/row) instead of scaling every (tq, tk) score matrix.
    q = q_ref[...] * scale        # python-float scale keeps the input dtype
    k = k_ref[...]
    v = v_ref[...]

    # Static loop over heads (heads is a small compile-time constant); the
    # heavy score / p@v matmuls and the exp stay 128-lane dense.
    for h in range(heads):
        sl = slice(h * dh, (h + 1) * dh)
        s = lax.dot_general(q[:, sl], k[:, sl], (((1,), (1,)), ((), ())),
                            preferred_element_type=jnp.float32)      # (tq, tk)

        m_prev = m_sc[:, h:h + 1]                                     # (tq, 1)
        m_new = jnp.maximum(m_prev, s.max(axis=-1, keepdims=True))
        alpha = jnp.exp(m_prev - m_new)
        p = jnp.exp(s - m_new)

        l_sc[:, h:h + 1] = alpha * l_sc[:, h:h + 1] + p.sum(axis=-1,
                                                            keepdims=True)
        acc_sc[:, sl] = alpha * acc_sc[:, sl] + jnp.dot(
            p.astype(v.dtype), v[:, sl], preferred_element_type=jnp.float32)
        m_sc[:, h:h + 1] = m_new

    @pl.when(kv == pl.num_programs(2) - 1)
    def _():
        for h in range(heads):
            sl = slice(h * dh, (h + 1) * dh)
            inv_l = pl.reciprocal(l_sc[:, h:h + 1], approx=True)
            o_ref[:, sl] = (acc_sc[:, sl] * inv_l).astype(o_ref.dtype)


def flash_attention(qkv, heads, dh, scale, *, tq=256, tkv=512,
                    out_dtype=jnp.float32):
    B, N, three_inner = qkv.shape
    inner = heads * dh
    assert three_inner == 3 * inner
    assert inner % 128 == 0, "head-packed path needs heads*dim_head % 128 == 0"

    tq = _pick_tile(N, tq, 8)
    tkv = _pick_tile(N, tkv, 8)
    grid = (B, N // tq, N // tkv)

    kernel = functools.partial(_flash_kernel, scale, heads, dh)

    return pl.pallas_call(
        kernel,
        out_shape=jax.ShapeDtypeStruct((B, N, inner), out_dtype),
        grid_spec=pltpu.PrefetchScalarGridSpec(
            num_scalar_prefetch=0,
            grid=grid,
            in_specs=[
                # q rows follow the qi tile; k/v rows follow the ki tile; the
                # last-dim block index (0/1/2) selects the q/k/v chunk — the
                # head split is pure BlockSpec indexing, no XLA transposes.
                pl.BlockSpec((None, tq, inner), lambda b, qi, ki: (b, qi, 0)),
                pl.BlockSpec((None, tkv, inner), lambda b, qi, ki: (b, ki, 1)),
                pl.BlockSpec((None, tkv, inner), lambda b, qi, ki: (b, ki, 2)),
            ],
            out_specs=pl.BlockSpec((None, tq, inner),
                                   lambda b, qi, ki: (b, qi, 0)),
            scratch_shapes=[
                pltpu.VMEM((tq, heads), jnp.float32),   # running max (per head)
                pltpu.VMEM((tq, heads), jnp.float32),   # running denom
                pltpu.VMEM((tq, inner), jnp.float32),   # lane-dense accumulator
            ],
        ),
        compiler_params=pltpu.CompilerParams(
            dimension_semantics=("parallel", "parallel", "arbitrary")),
    )(qkv, qkv, qkv)


# ---------------------------------------------------------------------------
# Full module forward
# ---------------------------------------------------------------------------
def attention_forward(x, params, heads):
    B, N, dim = x.shape
    w_qkv = params['w_qkv']            # (3*inner, dim)   torch Linear layout
    inner = w_qkv.shape[0] // 3
    dh = inner // heads
    scale = float(dh) ** -0.5

    x2d = x.reshape(B * N, dim)

    # QKV projection (Linear, bias=False); bf16 intermediate halves the HBM
    # traffic feeding the attention kernel, accumulation stays f32 on the MXU.
    qkv = linear(x2d, w_qkv, out_dtype=jnp.bfloat16)          # (B*N, 3*inner)
    qkv = qkv.reshape(B, N, 3 * inner)                         # free reshape

    # Fused scaled-dot-product attention over all heads; output already in
    # 'b n (h d)' layout — no head merge / transpose round-trips through HBM.
    o = flash_attention(qkv, heads, dh, scale, out_dtype=x.dtype)  # (B, N, inner)

    if params.get('w_out') is not None:
        o2d = o.reshape(B * N, inner)                          # free reshape
        out2d = linear(o2d, params['w_out'], bias=params['b_out'],
                       out_dtype=x.dtype)                      # (B*N, dim)
        return out2d.reshape(B, N, -1)
    return o                                                   # Identity branch


# ---------------------------------------------------------------------------
# Pure-JAX reference matching the PyTorch forward
# ---------------------------------------------------------------------------
def reference_forward(x, params, heads):
    B, N, dim = x.shape
    w_qkv = params['w_qkv']
    inner = w_qkv.shape[0] // 3
    dh = inner // heads

    qkv = x @ w_qkv.T
    q, k, v = jnp.split(qkv, 3, axis=-1)

    def rearr(t):
        return t.reshape(B, N, heads, dh).transpose(0, 2, 1, 3)

    q, k, v = map(rearr, (q, k, v))
    dots = jnp.einsum('bhid,bhjd->bhij', q, k) * (dh ** -0.5)
    attn = jax.nn.softmax(dots, axis=-1)
    out = jnp.einsum('bhij,bhjd->bhid', attn, v)
    out = out.transpose(0, 2, 1, 3).reshape(B, N, inner)
    if params.get('w_out') is not None:
        out = out @ params['w_out'].T + params['b_out']
    return out


if __name__ == "__main__":
    key = jax.random.PRNGKey(0)
    B, N, dim = 2, 128, 64
    heads, dim_head = 4, 32
    inner = heads * dim_head                 # 128; project_out == True
    k0, k1, k2, k3 = jax.random.split(key, 4)

    x = jax.random.normal(k0, (B, N, dim), jnp.float32)
    params = dict(
        w_qkv=jax.random.normal(k1, (3 * inner, dim), jnp.float32) * dim ** -0.5,
        w_out=jax.random.normal(k2, (dim, inner), jnp.float32) * inner ** -0.5,
        b_out=0.1 * jax.random.normal(k3, (dim,), jnp.float32),
    )

    fwd = jax.jit(functools.partial(attention_forward, heads=heads))
    out = jax.block_until_ready(fwd(x, params))
    ref = jax.block_until_ready(reference_forward(x, params, heads))
    assert out.shape == ref.shape == (B, N, dim)
    err = float(jnp.max(jnp.abs(out - ref)))
    # bf16-stored qkv + default (bf16-pass) MXU precision in kernel & reference
    assert err < 5e-2, f"max abs err {err}"
    print("KERNEL_OK")
</pallas_src>

<mosaic_0001>
module attributes {stable_mosaic.version = 11 : i64} {
  func.func @_linear_kernel(%arg0: i32, %arg1: i32, %arg2: i32, %arg3: memref<256x64xf32, #tpu.memory_space<vmem>>, %arg4: memref<384x64xf32, #tpu.memory_space<vmem>>, %arg5: memref<256x384xbf16, #tpu.memory_space<vmem>>, %arg6: memref<256x384xf32, #tpu.memory_space<vmem>>) attributes {dimension_semantics = [#tpu.dimension_semantics<parallel>, #tpu.dimension_semantics<parallel>, #tpu.dimension_semantics<arbitrary>], iteration_bounds = array<i64: 1, 1, 1>, scalar_prefetch = 0 : i64, scratch_operands = 1 : i64, tpu.core_type = #tpu.core_type<tc>, window_params = [{transform_indices = @transform_0, window_bounds = array<i64: 256, 64>}, {transform_indices = @transform_1, window_bounds = array<i64: 384, 64>}, {transform_indices = @transform_2, window_bounds = array<i64: 256, 384>}]} {
    %c0_i32 = arith.constant 0 : i32
    %0 = arith.cmpi eq, %arg2, %c0_i32 : i32
    %1 = arith.extui %0 : i1 to i32
    %c0_i32_0 = arith.constant 0 : i32
    %2 = arith.cmpi ne, %1, %c0_i32_0 : i32
    scf.if %2 {
      %cst_10 = arith.constant 0.000000e+00 : f32
      %12 = vector.broadcast %cst_10 : f32 to vector<256x384xf32>
      %c0_11 = arith.constant 0 : index
      %c0_12 = arith.constant 0 : index
      %13 = vector.load %arg6[%c0_11, %c0_12] : memref<256x384xf32, #tpu.memory_space<vmem>>, vector<256x384xf32>
      tpu.vector_store %arg6[%c0_11, %c0_12], %12 {strides = array<i32>} : memref<256x384xf32, #tpu.memory_space<vmem>>, vector<256x384xf32>,
    } else {
    }
    %c0 = arith.constant 0 : index
    %c0_1 = arith.constant 0 : index
    %3 = vector.load %arg6[%c0, %c0_1] : memref<256x384xf32, #tpu.memory_space<vmem>>, vector<256x384xf32>
    %c0_2 = arith.constant 0 : index
    %c0_3 = arith.constant 0 : index
    %4 = vector.load %arg3[%c0_2, %c0_3] : memref<256x64xf32, #tpu.memory_space<vmem>>, vector<256x64xf32>
    %c0_4 = arith.constant 0 : index
    %c0_5 = arith.constant 0 : index
    %5 = vector.load %arg4[%c0_4, %c0_5] : memref<384x64xf32, #tpu.memory_space<vmem>>, vector<384x64xf32>
    %cst = arith.constant dense<0.000000e+00> : vector<256x384xf32>
    %6 = tpu.matmul %4, %5, %cst {dimension_numbers = #tpu.dot_dimension_numbers<[1], [1], [0], [0], [0, 0, 1, 0], [], []>} : vector<256x64xf32>, vector<384x64xf32>, vector<256x384xf32> -> vector<256x384xf32>
    %7 = arith.addf %3, %6 : vector<256x384xf32>
    %c0_6 = arith.constant 0 : index
    %c0_7 = arith.constant 0 : index
    %8 = vector.load %arg6[%c0_6, %c0_7] : memref<256x384xf32, #tpu.memory_space<vmem>>, vector<256x384xf32>
    tpu.vector_store %arg6[%c0_6, %c0_7], %7 {strides = array<i32>} : memref<256x384xf32, #tpu.memory_space<vmem>>, vector<256x384xf32>,
    %c0_i32_8 = arith.constant 0 : i32
    %9 = arith.cmpi eq, %arg2, %c0_i32_8 : i32
    %10 = arith.extui %9 : i1 to i32
    %c0_i32_9 = arith.constant 0 : i32
    %11 = arith.cmpi ne, %10, %c0_i32_9 : i32
    scf.if %11 {
      %c0_10 = arith.constant 0 : index
      %c0_11 = arith.constant 0 : index
      %12 = vector.load %arg6[%c0_10, %c0_11] : memref<256x384xf32, #tpu.memory_space<vmem>>, vector<256x384xf32>
      %13 = arith.truncf %12 : vector<256x384xf32> to vector<256x384xbf16>
      %c0_12 = arith.constant 0 : index
      %c0_13 = arith.constant 0 : index
      %14 = vector.load %arg5[%c0_12, %c0_13] : memref<256x384xbf16, #tpu.memory_space<vmem>>, vector<256x384xbf16>
      tpu.vector_store %arg5[%c0_12, %c0_13], %13 {strides = array<i32>} : memref<256x384xbf16, #tpu.memory_space<vmem>>, vector<256x384xbf16>,
    } else {
    }
    return
  }
  func.func @transform_0(%arg0: i32, %arg1: i32, %arg2: i32) -> (i32, i32) {
    %c0_i32 = arith.constant 0 : i32
    return %arg0, %arg2 : i32, i32
  }
  func.func @transform_1(%arg0: i32, %arg1: i32, %arg2: i32) -> (i32, i32) {
    %c0_i32 = arith.constant 0 : i32
    return %arg1, %arg2 : i32, i32
  }
  func.func @transform_2(%arg0: i32, %arg1: i32, %arg2: i32) -> (i32, i32) {
    %c0_i32 = arith.constant 0 : i32
    return %arg0, %arg1 : i32, i32
  }
}

module attributes {stable_mosaic.version = 11 : i64} {
  func.func @_flash_kernel(%arg0: i32, %arg1: i32, %arg2: i32, %arg3: memref<1x128x128xbf16, #tpu.memory_space<vmem>>, %arg4: memref<1x128x128xbf16, #tpu.memory_space<vmem>>, %arg5: memref<1x128x128xbf16, #tpu.memory_space<vmem>>, %arg6: memref<1x128x128xf32, #tpu.memory_space<vmem>>, %arg7: memref<128x4xf32, #tpu.memory_space<vmem>>, %arg8: memref<128x4xf32, #tpu.memory_space<vmem>>, %arg9: memref<128x128xf32, #tpu.memory_space<vmem>>) attributes {dimension_semantics = [#tpu.dimension_semantics<parallel>, #tpu.dimension_semantics<parallel>, #tpu.dimension_semantics<arbitrary>], iteration_bounds = array<i64: 2, 1, 1>, scalar_prefetch = 0 : i64, scratch_operands = 3 : i64, tpu.core_type = #tpu.core_type<tc>, window_params = [{transform_indices = @transform_0, window_bounds = array<i64: 1, 128, 128>}, {transform_indices = @transform_1, window_bounds = array<i64: 1, 128, 128>}, {transform_indices = @transform_2, window_bounds = array<i64: 1, 128, 128>}, {transform_indices = @transform_3, window_bounds = array<i64: 1, 128, 128>}]} {
    %c0_i32 = arith.constant 0 : i32
    %0 = arith.cmpi eq, %arg2, %c0_i32 : i32
    %1 = arith.extui %0 : i1 to i32
    %c0_i32_0 = arith.constant 0 : i32
    %2 = arith.cmpi ne, %1, %c0_i32_0 : i32
    scf.if %2 {
      %cst_69 = arith.constant 0xFF800000 : f32
      %122 = vector.broadcast %cst_69 : f32 to vector<128x4xf32>
      %c0_70 = arith.constant 0 : index
      %c0_71 = arith.constant 0 : index
      %123 = vector.load %arg7[%c0_70, %c0_71] : memref<128x4xf32, #tpu.memory_space<vmem>>, vector<128x4xf32>
      tpu.vector_store %arg7[%c0_70, %c0_71], %122 {strides = array<i32>} : memref<128x4xf32, #tpu.memory_space<vmem>>, vector<128x4xf32>,
      %cst_72 = arith.constant 0.000000e+00 : f32
      %124 = vector.broadcast %cst_72 : f32 to vector<128x4xf32>
      %c0_73 = arith.constant 0 : index
      %c0_74 = arith.constant 0 : index
      %125 = vector.load %arg8[%c0_73, %c0_74] : memref<128x4xf32, #tpu.memory_space<vmem>>, vector<128x4xf32>
      tpu.vector_store %arg8[%c0_73, %c0_74], %124 {strides = array<i32>} : memref<128x4xf32, #tpu.memory_space<vmem>>, vector<128x4xf32>,
      %cst_75 = arith.constant 0.000000e+00 : f32
      %126 = vector.broadcast %cst_75 : f32 to vector<128x128xf32>
      %c0_76 = arith.constant 0 : index
      %c0_77 = arith.constant 0 : index
      %127 = vector.load %arg9[%c0_76, %c0_77] : memref<128x128xf32, #tpu.memory_space<vmem>>, vector<128x128xf32>
      tpu.vector_store %arg9[%c0_76, %c0_77], %126 {strides = array<i32>} : memref<128x128xf32, #tpu.memory_space<vmem>>, vector<128x128xf32>,
    } else {
    }
    %c0 = arith.constant 0 : index
    %c0_1 = arith.constant 0 : index
    %c0_2 = arith.constant 0 : index
    %3 = vector.load %arg3[%c0, %c0_1, %c0_2] : memref<1x128x128xbf16, #tpu.memory_space<vmem>>, vector<1x128x128xbf16>
    %4 = vector.shape_cast %3 : vector<1x128x128xbf16> to vector<128x128xbf16>
    %cst = arith.constant 1.767580e-01 : bf16
    %5 = vector.broadcast %cst : bf16 to vector<128x128xbf16>
    %6 = arith.mulf %4, %5 : vector<128x128xbf16>
    %c0_3 = arith.constant 0 : index
    %c0_4 = arith.constant 0 : index
    %c0_5 = arith.constant 0 : index
    %7 = vector.load %arg4[%c0_3, %c0_4, %c0_5] : memref<1x128x128xbf16, #tpu.memory_space<vmem>>, vector<1x128x128xbf16>
    %8 = vector.shape_cast %7 : vector<1x128x128xbf16> to vector<128x128xbf16>
    %c0_6 = arith.constant 0 : index
    %c0_7 = arith.constant 0 : index
    %c0_8 = arith.constant 0 : index
    %9 = vector.load %arg5[%c0_6, %c0_7, %c0_8] : memref<1x128x128xbf16, #tpu.memory_space<vmem>>, vector<1x128x128xbf16>
    %10 = vector.shape_cast %9 : vector<1x128x128xbf16> to vector<128x128xbf16>
    %11 = vector.extract_strided_slice %6 {offsets = [0, 0], sizes = [128, 32], strides = [1, 1]} : vector<128x128xbf16> to vector<128x32xbf16>
    %12 = vector.extract_strided_slice %8 {offsets = [0, 0], sizes = [128, 32], strides = [1, 1]} : vector<128x128xbf16> to vector<128x32xbf16>
    %cst_9 = arith.constant dense<0.000000e+00> : vector<128x128xf32>
    %13 = tpu.matmul %11, %12, %cst_9 {dimension_numbers = #tpu.dot_dimension_numbers<[1], [1], [0], [0], [0, 0, 1, 0], [], []>} : vector<128x32xbf16>, vector<128x32xbf16>, vector<128x128xf32> -> vector<128x128xf32>
    %c0_10 = arith.constant 0 : index
    %c0_11 = arith.constant 0 : index
    %14 = vector.load %arg7[%c0_10, %c0_11] : memref<128x4xf32, #tpu.memory_space<vmem>>, vector<128x1xf32>
    %cst_12 = arith.constant dense<0xFF800000> : vector<128xf32>
    %15 = vector.multi_reduction <maximumf>, %13, %cst_12 [1] : vector<128x128xf32> to vector<128xf32>
    %16 = vector.shape_cast %15 : vector<128xf32> to vector<128x1xf32>
    %17 = arith.maximumf %14, %16 : vector<128x1xf32>
    %18 = arith.subf %14, %17 : vector<128x1xf32>
    %19 = math.exp %18 : vector<128x1xf32>
    %20 = vector.broadcast %17 : vector<128x1xf32> to vector<128x128xf32>
    %21 = arith.subf %13, %20 : vector<128x128xf32>
    %22 = math.exp %21 : vector<128x128xf32>
    %c0_13 = arith.constant 0 : index
    %c0_14 = arith.constant 0 : index
    %23 = vector.load %arg8[%c0_13, %c0_14] : memref<128x4xf32, #tpu.memory_space<vmem>>, vector<128x1xf32>
    %24 = arith.mulf %19, %23 : vector<128x1xf32>
    %cst_15 = arith.constant dense<0.000000e+00> : vector<128xf32>
    %25 = vector.multi_reduction <add>, %22, %cst_15 [1] : vector<128x128xf32> to vector<128xf32>
    %26 = vector.shape_cast %25 : vector<128xf32> to vector<128x1xf32>
    %27 = arith.addf %24, %26 : vector<128x1xf32>
    %c0_16 = arith.constant 0 : index
    %c0_17 = arith.constant 0 : index
    %28 = vector.load %arg8[%c0_16, %c0_17] : memref<128x4xf32, #tpu.memory_space<vmem>>, vector<128x1xf32>
    tpu.vector_store %arg8[%c0_16, %c0_17], %27 {strides = array<i32>} : memref<128x4xf32, #tpu.memory_space<vmem>>, vector<128x1xf32>,
    %c0_18 = arith.constant 0 : index
    %c0_19 = arith.constant 0 : index
    %29 = vector.load %arg9[%c0_18, %c0_19] : memref<128x128xf32, #tpu.memory_space<vmem>>, vector<128x32xf32>
    %30 = vector.broadcast %19 : vector<128x1xf32> to vector<128x32xf32>
    %31 = arith.mulf %30, %29 : vector<128x32xf32>
    %32 = arith.truncf %22 : vector<128x128xf32> to vector<128x128xbf16>
    %33 = vector.extract_strided_slice %10 {offsets = [0, 0], sizes = [128, 32], strides = [1, 1]} : vector<128x128xbf16> to vector<128x32xbf16>
    %cst_20 = arith.constant dense<0.000000e+00> : vector<128x32xf32>
    %34 = tpu.matmul %32, %33, %cst_20 {dimension_numbers = #tpu.dot_dimension_numbers<[1], [0], [0], [1], [0, 0, 1, 1], [], []>} : vector<128x128xbf16>, vector<128x32xbf16>, vector<128x32xf32> -> vector<128x32xf32>
    %35 = arith.addf %31, %34 : vector<128x32xf32>
    %c0_21 = arith.constant 0 : index
    %c0_22 = arith.constant 0 : index
    %36 = vector.load %arg9[%c0_21, %c0_22] : memref<128x128xf32, #tpu.memory_space<vmem>>, vector<128x32xf32>
    tpu.vector_store %arg9[%c0_21, %c0_22], %35 {strides = array<i32>} : memref<128x128xf32, #tpu.memory_space<vmem>>, vector<128x32xf32>,
    %c0_23 = arith.constant 0 : index
    %c0_24 = arith.constant 0 : index
    %37 = vector.load %arg7[%c0_23, %c0_24] : memref<128x4xf32, #tpu.memory_space<vmem>>, vector<128x1xf32>
    tpu.vector_store %arg7[%c0_23, %c0_24], %17 {strides = array<i32>} : memref<128x4xf32, #tpu.memory_space<vmem>>, vector<128x1xf32>,
    %38 = vector.extract_strided_slice %6 {offsets = [0, 32], sizes = [128, 32], strides = [1, 1]} : vector<128x128xbf16> to vector<128x32xbf16>
    %39 = vector.extract_strided_slice %8 {offsets = [0, 32], sizes = [128, 32], strides = [1, 1]} : vector<128x128xbf16> to vector<128x32xbf16>
    %cst_25 = arith.constant dense<0.000000e+00> : vector<128x128xf32>
    %40 = tpu.matmul %38, %39, %cst_25 {dimension_numbers = #tpu.dot_dimension_numbers<[1], [1], [0], [0], [0, 0, 1, 0], [], []>} : vector<128x32xbf16>, vector<128x32xbf16>, vector<128x128xf32> -> vector<128x128xf32>
    %c0_26 = arith.constant 0 : index
    %c1 = arith.constant 1 : index
    %41 = vector.load %arg7[%c0_26, %c1] : memref<128x4xf32, #tpu.memory_space<vmem>>, vector<128x1xf32>
    %cst_27 = arith.constant dense<0xFF800000> : vector<128xf32>
    %42 = vector.multi_reduction <maximumf>, %40, %cst_27 [1] : vector<128x128xf32> to vector<128xf32>
    %43 = vector.shape_cast %42 : vector<128xf32> to vector<128x1xf32>
    %44 = arith.maximumf %41, %43 : vector<128x1xf32>
    %45 = arith.subf %41, %44 : vector<128x1xf32>
    %46 = math.exp %45 : vector<128x1xf32>
    %47 = vector.broadcast %44 : vector<128x1xf32> to vector<128x128xf32>
    %48 = arith.subf %40, %47 : vector<128x128xf32>
    %49 = math.exp %48 : vector<128x128xf32>
    %c0_28 = arith.constant 0 : index
    %c1_29 = arith.constant 1 : index
    %50 = vector.load %arg8[%c0_28, %c1_29] : memref<128x4xf32, #tpu.memory_space<vmem>>, vector<128x1xf32>
    %51 = arith.mulf %46, %50 : vector<128x1xf32>
    %cst_30 = arith.constant dense<0.000000e+00> : vector<128xf32>
    %52 = vector.multi_reduction <add>, %49, %cst_30 [1] : vector<128x128xf32> to vector<128xf32>
    %53 = vector.shape_cast %52 : vector<128xf32> to vector<128x1xf32>
    %54 = arith.addf %51, %53 : vector<128x1xf32>
    %c0_31 = arith.constant 0 : index
    %c1_32 = arith.constant 1 : index
    %55 = vector.load %arg8[%c0_31, %c1_32] : memref<128x4xf32, #tpu.memory_space<vmem>>, vector<128x1xf32>
    tpu.vector_store %arg8[%c0_31, %c1_32], %54 {strides = array<i32>} : memref<128x4xf32, #tpu.memory_space<vmem>>, vector<128x1xf32>,
    %c0_33 = arith.constant 0 : index
    %c32 = arith.constant 32 : index
    %56 = vector.load %arg9[%c0_33, %c32] : memref<128x128xf32, #tpu.memory_space<vmem>>, vector<128x32xf32>
    %57 = vector.broadcast %46 : vector<128x1xf32> to vector<128x32xf32>
    %58 = arith.mulf %57, %56 : vector<128x32xf32>
    %59 = arith.truncf %49 : vector<128x128xf32> to vector<128x128xbf16>
    %60 = vector.extract_strided_slice %10 {offsets = [0, 32], sizes = [128, 32], strides = [1, 1]} : vector<128x128xbf16> to vector<128x32xbf16>
    %cst_34 = arith.constant dense<0.000000e+00> : vector<128x32xf32>
    %61 = tpu.matmul %59, %60, %cst_34 {dimension_numbers = #tpu.dot_dimension_numbers<[1], [0], [0], [1], [0, 0, 1, 1], [], []>} : vector<128x128xbf16>, vector<128x32xbf16>, vector<128x32xf32> -> vector<128x32xf32>
    %62 = arith.addf %58, %61 : vector<128x32xf32>
    %c0_35 = arith.constant 0 : index
    %c32_36 = arith.constant 32 : index
    %63 = vector.load %arg9[%c0_35, %c32_36] : memref<128x128xf32, #tpu.memory_space<vmem>>, vector<128x32xf32>
    tpu.vector_store %arg9[%c0_35, %c32_36], %62 {strides = array<i32>} : memref<128x128xf32, #tpu.memory_space<vmem>>, vector<128x32xf32>,
    %c0_37 = arith.constant 0 : index
    %c1_38 = arith.constant 1 : index
    %64 = vector.load %arg7[%c0_37, %c1_38] : memref<128x4xf32, #tpu.memory_space<vmem>>, vector<128x1xf32>
    tpu.vector_store %arg7[%c0_37, %c1_38], %44 {strides = array<i32>} : memref<128x4xf32, #tpu.memory_space<vmem>>, vector<128x1xf32>,
    %65 = vector.extract_strided_slice %6 {offsets = [0, 64], sizes = [128, 32], strides = [1, 1]} : vector<128x128xbf16> to vector<128x32xbf16>
    %66 = vector.extract_strided_slice %8 {offsets = [0, 64], sizes = [128, 32], strides = [1, 1]} : vector<128x128xbf16> to vector<128x32xbf16>
    %cst_39 = arith.constant dense<0.000000e+00> : vector<128x128xf32>
    %67 = tpu.matmul %65, %66, %cst_39 {dimension_numbers = #tpu.dot_dimension_numbers<[1], [1], [0], [0], [0, 0, 1, 0], [], []>} : vector<128x32xbf16>, vector<128x32xbf16>, vector<128x128xf32> -> vector<128x128xf32>
    %c0_40 = arith.constant 0 : index
    %c2 = arith.constant 2 : index
    %68 = vector.load %arg7[%c0_40, %c2] : memref<128x4xf32, #tpu.memory_space<vmem>>, vector<128x1xf32>
    %cst_41 = arith.constant dense<0xFF800000> : vector<128xf32>
    %69 = vector.multi_reduction <maximumf>, %67, %cst_41 [1] : vector<128x128xf32> to vector<128xf32>
    %70 = vector.shape_cast %69 : vector<128xf32> to vector<128x1xf32>
    %71 = arith.maximumf %68, %70 : vector<128x1xf32>
    %72 = arith.subf %68, %71 : vector<128x1xf32>
    %73 = math.exp %72 : vector<128x1xf32>
    %74 = vector.broadcast %71 : vector<128x1xf32> to vector<128x128xf32>
    %75 = arith.subf %67, %74 : vector<128x128xf32>
    %76 = math.exp %75 : vector<128x128xf32>
    %c0_42 = arith.constant 0 : index
    %c2_43 = arith.constant 2 : index
    %77 = vector.load %arg8[%c0_42, %c2_43] : memref<128x4xf32, #tpu.memory_space<vmem>>, vector<128x1xf32>
    %78 = arith.mulf %73, %77 : vector<128x1xf32>
    %cst_44 = arith.constant dense<0.000000e+00> : vector<128xf32>
    %79 = vector.multi_reduction <add>, %76, %cst_44 [1] : vector<128x128xf32> to vector<128xf32>
    %80 = vector.shape_cast %79 : vector<128xf32> to vector<128x1xf32>
    %81 = arith.addf %78, %80 : vector<128x1xf32>
    %c0_45 = arith.constant 0 : index
    %c2_46 = arith.constant 2 : index
    %82 = vector.load %arg8[%c0_45, %c2_46] : memref<128x4xf32, #tpu.memory_space<vmem>>, vector<128x1xf32>
    tpu.vector_store %arg8[%c0_45, %c2_46], %81 {strides = array<i32>} : memref<128x4xf32, #tpu.memory_space<vmem>>, vector<128x1xf32>,
    %c0_47 = arith.constant 0 : index
    %c64 = arith.constant 64 : index
    %83 = vector.load %arg9[%c0_47, %c64] : memref<128x128xf32, #tpu.memory_space<vmem>>, vector<128x32xf32>
    %84 = vector.broadcast %73 : vector<128x1xf32> to vector<128x32xf32>
    %85 = arith.mulf %84, %83 : vector<128x32xf32>
    %86 = arith.truncf %76 : vector<128x128xf32> to vector<128x128xbf16>
    %87 = vector.extract_strided_slice %10 {offsets = [0, 64], sizes = [128, 32], strides = [1, 1]} : vector<128x128xbf16> to vector<128x32xbf16>
    %cst_48 = arith.constant dense<0.000000e+00> : vector<128x32xf32>
    %88 = tpu.matmul %86, %87, %cst_48 {dimension_numbers = #tpu.dot_dimension_numbers<[1], [0], [0], [1], [0, 0, 1, 1], [], []>} : vector<128x128xbf16>, vector<128x32xbf16>, vector<128x32xf32> -> vector<128x32xf32>
    %89 = arith.addf %85, %88 : vector<128x32xf32>
    %c0_49 = arith.constant 0 : index
    %c64_50 = arith.constant 64 : index
    %90 = vector.load %arg9[%c0_49, %c64_50] : memref<128x128xf32, #tpu.memory_space<vmem>>, vector<128x32xf32>
    tpu.vector_store %arg9[%c0_49, %c64_50], %89 {strides = array<i32>} : memref<128x128xf32, #tpu.memory_space<vmem>>, vector<128x32xf32>,
    %c0_51 = arith.constant 0 : index
    %c2_52 = arith.constant 2 : index
    %91 = vector.load %arg7[%c0_51, %c2_52] : memref<128x4xf32, #tpu.memory_space<vmem>>, vector<128x1xf32>
    tpu.vector_store %arg7[%c0_51, %c2_52], %71 {strides = array<i32>} : memref<128x4xf32, #tpu.memory_space<vmem>>, vector<128x1xf32>,
    %92 = vector.extract_strided_slice %6 {offsets = [0, 96], sizes = [128, 32], strides = [1, 1]} : vector<128x128xbf16> to vector<128x32xbf16>
    %93 = vector.extract_strided_slice %8 {offsets = [0, 96], sizes = [128, 32], strides = [1, 1]} : vector<128x128xbf16> to vector<128x32xbf16>
    %cst_53 = arith.constant dense<0.000000e+00> : vector<128x128xf32>
    %94 = tpu.matmul %92, %93, %cst_53 {dimension_numbers = #tpu.dot_dimension_numbers<[1], [1], [0], [0], [0, 0, 1, 0], [], []>} : vector<128x32xbf16>, vector<128x32xbf16>, vector<128x128xf32> -> vector<128x128xf32>
    %c0_54 = arith.constant 0 : index
    %c3 = arith.constant 3 : index
    %95 = vector.load %arg7[%c0_54, %c3] : memref<128x4xf32, #tpu.memory_space<vmem>>, vector<128x1xf32>
    %cst_55 = arith.constant dense<0xFF800000> : vector<128xf32>
    %96 = vector.multi_reduction <maximumf>, %94, %cst_55 [1] : vector<128x128xf32> to vector<128xf32>
    %97 = vector.shape_cast %96 : vector<128xf32> to vector<128x1xf32>
    %98 = arith.maximumf %95, %97 : vector<128x1xf32>
    %99 = arith.subf %95, %98 : vector<128x1xf32>
    %100 = math.exp %99 : vector<128x1xf32>
    %101 = vector.broadcast %98 : vector<128x1xf32> to vector<128x128xf32>
    %102 = arith.subf %94, %101 : vector<128x128xf32>
    %103 = math.exp %102 : vector<128x128xf32>
    %c0_56 = arith.constant 0 : index
    %c3_57 = arith.constant 3 : index
    %104 = vector.load %arg8[%c0_56, %c3_57] : memref<128x4xf32, #tpu.memory_space<vmem>>, vector<128x1xf32>
    %105 = arith.mulf %100, %104 : vector<128x1xf32>
    %cst_58 = arith.constant dense<0.000000e+00> : vector<128xf32>
    %106 = vector.multi_reduction <add>, %103, %cst_58 [1] : vector<128x128xf32> to vector<128xf32>
    %107 = vector.shape_cast %106 : vector<128xf32> to vector<128x1xf32>
    %108 = arith.addf %105, %107 : vector<128x1xf32>
    %c0_59 = arith.constant 0 : index
    %c3_60 = arith.constant 3 : index
    %109 = vector.load %arg8[%c0_59, %c3_60] : memref<128x4xf32, #tpu.memory_space<vmem>>, vector<128x1xf32>
    tpu.vector_store %arg8[%c0_59, %c3_60], %108 {strides = array<i32>} : memref<128x4xf32, #tpu.memory_space<vmem>>, vector<128x1xf32>,
    %c0_61 = arith.constant 0 : index
    %c96 = arith.constant 96 : index
    %110 = vector.load %arg9[%c0_61, %c96] : memref<128x128xf32, #tpu.memory_space<vmem>>, vector<128x32xf32>
    %111 = vector.broadcast %100 : vector<128x1xf32> to vector<128x32xf32>
    %112 = arith.mulf %111, %110 : vector<128x32xf32>
    %113 = arith.truncf %103 : vector<128x128xf32> to vector<128x128xbf16>
    %114 = vector.extract_strided_slice %10 {offsets = [0, 96], sizes = [128, 32], strides = [1, 1]} : vector<128x128xbf16> to vector<128x32xbf16>
    %cst_62 = arith.constant dense<0.000000e+00> : vector<128x32xf32>
    %115 = tpu.matmul %113, %114, %cst_62 {dimension_numbers = #tpu.dot_dimension_numbers<[1], [0], [0], [1], [0, 0, 1, 1], [], []>} : vector<128x128xbf16>, vector<128x32xbf16>, vector<128x32xf32> -> vector<128x32xf32>
    %116 = arith.addf %112, %115 : vector<128x32xf32>
    %c0_63 = arith.constant 0 : index
    %c96_64 = arith.constant 96 : index
    %117 = vector.load %arg9[%c0_63, %c96_64] : memref<128x128xf32, #tpu.memory_space<vmem>>, vector<128x32xf32>
    tpu.vector_store %arg9[%c0_63, %c96_64], %116 {strides = array<i32>} : memref<128x128xf32, #tpu.memory_space<vmem>>, vector<128x32xf32>,
    %c0_65 = arith.constant 0 : index
    %c3_66 = arith.constant 3 : index
    %118 = vector.load %arg7[%c0_65, %c3_66] : memref<128x4xf32, #tpu.memory_space<vmem>>, vector<128x1xf32>
    tpu.vector_store %arg7[%c0_65, %c3_66], %98 {strides = array<i32>} : memref<128x4xf32, #tpu.memory_space<vmem>>, vector<128x1xf32>,
    %c0_i32_67 = arith.constant 0 : i32
    %119 = arith.cmpi eq, %arg2, %c0_i32_67 : i32
    %120 = arith.extui %119 : i1 to i32
    %c0_i32_68 = arith.constant 0 : i32
    %121 = arith.cmpi ne, %120, %c0_i32_68 : i32
    scf.if %121 {
      %c0_69 = arith.constant 0 : index
      %c0_70 = arith.constant 0 : index
      %122 = vector.load %arg8[%c0_69, %c0_70] : memref<128x4xf32, #tpu.memory_space<vmem>>, vector<128x1xf32>
      %123 = tpu.reciprocal %122 {approx = true} : vector<128x1xf32> -> vector<128x1xf32>
      %c0_71 = arith.constant 0 : index
      %c0_72 = arith.constant 0 : index
      %124 = vector.load %arg9[%c0_71, %c0_72] : memref<128x128xf32, #tpu.memory_space<vmem>>, vector<128x32xf32>
      %125 = vector.broadcast %123 : vector<128x1xf32> to vector<128x32xf32>
      %126 = arith.mulf %124, %125 : vector<128x32xf32>
      %c0_73 = arith.constant 0 : index
      %c0_74 = arith.constant 0 : index
      %c0_75 = arith.constant 0 : index
      %127 = vector.load %arg6[%c0_73, %c0_74, %c0_75] : memref<1x128x128xf32, #tpu.memory_space<vmem>>, vector<1x128x32xf32>
      %128 = vector.shape_cast %127 : vector<1x128x32xf32> to vector<128x32xf32>
      %129 = vector.shape_cast %126 : vector<128x32xf32> to vector<1x128x32xf32>
      tpu.vector_store %arg6[%c0_73, %c0_74, %c0_75], %129 {strides = array<i32>} : memref<1x128x128xf32, #tpu.memory_space<vmem>>, vector<1x128x32xf32>,
      %c0_76 = arith.constant 0 : index
      %c1_77 = arith.constant 1 : index
      %130 = vector.load %arg8[%c0_76, %c1_77] : memref<128x4xf32, #tpu.memory_space<vmem>>, vector<128x1xf32>
      %131 = tpu.reciprocal %130 {approx = true} : vector<128x1xf32> -> vector<128x1xf32>
      %c0_78 = arith.constant 0 : index
      %c32_79 = arith.constant 32 : index
      %132 = vector.load %arg9[%c0_78, %c32_79] : memref<128x128xf32, #tpu.memory_space<vmem>>, vector<128x32xf32>
      %133 = vector.broadcast %131 : vector<128x1xf32> to vector<128x32xf32>
      %134 = arith.mulf %132, %133 : vector<128x32xf32>
      %c0_80 = arith.constant 0 : index
      %c0_81 = arith.constant 0 : index
      %c32_82 = arith.constant 32 : index
      %135 = vector.load %arg6[%c0_80, %c0_81, %c32_82] : memref<1x128x128xf32, #tpu.memory_space<vmem>>, vector<1x128x32xf32>
      %136 = vector.shape_cast %135 : vector<1x128x32xf32> to vector<128x32xf32>
      %137 = vector.shape_cast %134 : vector<128x32xf32> to vector<1x128x32xf32>
      tpu.vector_store %arg6[%c0_80, %c0_81, %c32_82], %137 {strides = array<i32>} : memref<1x128x128xf32, #tpu.memory_space<vmem>>, vector<1x128x32xf32>,
      %c0_83 = arith.constant 0 : index
      %c2_84 = arith.constant 2 : index
      %138 = vector.load %arg8[%c0_83, %c2_84] : memref<128x4xf32, #tpu.memory_space<vmem>>, vector<128x1xf32>
      %139 = tpu.reciprocal %138 {approx = true} : vector<128x1xf32> -> vector<128x1xf32>
      %c0_85 = arith.constant 0 : index
      %c64_86 = arith.constant 64 : index
      %140 = vector.load %arg9[%c0_85, %c64_86] : memref<128x128xf32, #tpu.memory_space<vmem>>, vector<128x32xf32>
      %141 = vector.broadcast %139 : vector<128x1xf32> to vector<128x32xf32>
      %142 = arith.mulf %140, %141 : vector<128x32xf32>
      %c0_87 = arith.constant 0 : index
      %c0_88 = arith.constant 0 : index
      %c64_89 = arith.constant 64 : index
      %143 = vector.load %arg6[%c0_87, %c0_88, %c64_89] : memref<1x128x128xf32, #tpu.memory_space<vmem>>, vector<1x128x32xf32>
      %144 = vector.shape_cast %143 : vector<1x128x32xf32> to vector<128x32xf32>
      %145 = vector.shape_cast %142 : vector<128x32xf32> to vector<1x128x32xf32>
      tpu.vector_store %arg6[%c0_87, %c0_88, %c64_89], %145 {strides = array<i32>} : memref<1x128x128xf32, #tpu.memory_space<vmem>>, vector<1x128x32xf32>,
      %c0_90 = arith.constant 0 : index
      %c3_91 = arith.constant 3 : index
      %146 = vector.load %arg8[%c0_90, %c3_91] : memref<128x4xf32, #tpu.memory_space<vmem>>, vector<128x1xf32>
      %147 = tpu.reciprocal %146 {approx = true} : vector<128x1xf32> -> vector<128x1xf32>
      %c0_92 = arith.constant 0 : index
      %c96_93 = arith.constant 96 : index
      %148 = vector.load %arg9[%c0_92, %c96_93] : memref<128x128xf32, #tpu.memory_space<vmem>>, vector<128x32xf32>
      %149 = vector.broadcast %147 : vector<128x1xf32> to vector<128x32xf32>
      %150 = arith.mulf %148, %149 : vector<128x32xf32>
      %c0_94 = arith.constant 0 : index
      %c0_95 = arith.constant 0 : index
      %c96_96 = arith.constant 96 : index
      %151 = vector.load %arg6[%c0_94, %c0_95, %c96_96] : memref<1x128x128xf32, #tpu.memory_space<vmem>>, vector<1x128x32xf32>
      %152 = vector.shape_cast %151 : vector<1x128x32xf32> to vector<128x32xf32>
      %153 = vector.shape_cast %150 : vector<128x32xf32> to vector<1x128x32xf32>
      tpu.vector_store %arg6[%c0_94, %c0_95, %c96_96], %153 {strides = array<i32>} : memref<1x128x128xf32, #tpu.memory_space<vmem>>, vector<1x128x32xf32>,
    } else {
    }
    return
  }
  func.func @transform_0(%arg0: i32, %arg1: i32, %arg2: i32) -> (i32, i32, i32) {
    %c0_i32 = arith.constant 0 : i32
    %c0_i32_0 = arith.constant 0 : i32
    return %arg0, %arg1, %c0_i32 : i32, i32, i32
  }
  func.func @transform_1(%arg0: i32, %arg1: i32, %arg2: i32) -> (i32, i32, i32) {
    %c1_i32 = arith.constant 1 : i32
    %c0_i32 = arith.constant 0 : i32
    return %arg0, %arg2, %c1_i32 : i32, i32, i32
  }
  func.func @transform_2(%arg0: i32, %arg1: i32, %arg2: i32) -> (i32, i32, i32) {
    %c2_i32 = arith.constant 2 : i32
    %c0_i32 = arith.constant 0 : i32
    return %arg0, %arg2, %c2_i32 : i32, i32, i32
  }
  func.func @transform_3(%arg0: i32, %arg1: i32, %arg2: i32) -> (i32, i32, i32) {
    %c0_i32 = arith.constant 0 : i32
    %c0_i32_0 = arith.constant 0 : i32
    return %arg0, %arg1, %c0_i32 : i32, i32, i32
  }
}

module attributes {stable_mosaic.version = 11 : i64} {
  func.func @_linear_bias_kernel(%arg0: i32, %arg1: i32, %arg2: i32, %arg3: memref<256x128xf32, #tpu.memory_space<vmem>>, %arg4: memref<64x128xf32, #tpu.memory_space<vmem>>, %arg5: memref<1x64xf32, #tpu.memory_space<vmem>>, %arg6: memref<256x64xf32, #tpu.memory_space<vmem>>, %arg7: memref<256x64xf32, #tpu.memory_space<vmem>>) attributes {dimension_semantics = [#tpu.dimension_semantics<parallel>, #tpu.dimension_semantics<parallel>, #tpu.dimension_semantics<arbitrary>], iteration_bounds = array<i64: 1, 1, 1>, scalar_prefetch = 0 : i64, scratch_operands = 1 : i64, tpu.core_type = #tpu.core_type<tc>, window_params = [{transform_indices = @transform_0, window_bounds = array<i64: 256, 128>}, {transform_indices = @transform_1, window_bounds = array<i64: 64, 128>}, {transform_indices = @transform_2, window_bounds = array<i64: 1, 64>}, {transform_indices = @transform_3, window_bounds = array<i64: 256, 64>}]} {
    %c0_i32 = arith.constant 0 : i32
    %0 = arith.cmpi eq, %arg2, %c0_i32 : i32
    %1 = arith.extui %0 : i1 to i32
    %c0_i32_0 = arith.constant 0 : i32
    %2 = arith.cmpi ne, %1, %c0_i32_0 : i32
    scf.if %2 {
      %cst_10 = arith.constant 0.000000e+00 : f32
      %12 = vector.broadcast %cst_10 : f32 to vector<256x64xf32>
      %c0_11 = arith.constant 0 : index
      %c0_12 = arith.constant 0 : index
      %13 = vector.load %arg7[%c0_11, %c0_12] : memref<256x64xf32, #tpu.memory_space<vmem>>, vector<256x64xf32>
      tpu.vector_store %arg7[%c0_11, %c0_12], %12 {strides = array<i32>} : memref<256x64xf32, #tpu.memory_space<vmem>>, vector<256x64xf32>,
    } else {
    }
    %c0 = arith.constant 0 : index
    %c0_1 = arith.constant 0 : index
    %3 = vector.load %arg7[%c0, %c0_1] : memref<256x64xf32, #tpu.memory_space<vmem>>, vector<256x64xf32>
    %c0_2 = arith.constant 0 : index
    %c0_3 = arith.constant 0 : index
    %4 = vector.load %arg3[%c0_2, %c0_3] : memref<256x128xf32, #tpu.memory_space<vmem>>, vector<256x128xf32>
    %c0_4 = arith.constant 0 : index
    %c0_5 = arith.constant 0 : index
    %5 = vector.load %arg4[%c0_4, %c0_5] : memref<64x128xf32, #tpu.memory_space<vmem>>, vector<64x128xf32>
    %cst = arith.constant dense<0.000000e+00> : vector<256x64xf32>
    %6 = tpu.matmul %4, %5, %cst {dimension_numbers = #tpu.dot_dimension_numbers<[1], [1], [0], [0], [0, 0, 1, 0], [], []>} : vector<256x128xf32>, vector<64x128xf32>, vector<256x64xf32> -> vector<256x64xf32>
    %7 = arith.addf %3, %6 : vector<256x64xf32>
    %c0_6 = arith.constant 0 : index
    %c0_7 = arith.constant 0 : index
    %8 = vector.load %arg7[%c0_6, %c0_7] : memref<256x64xf32, #tpu.memory_space<vmem>>, vector<256x64xf32>
    tpu.vector_store %arg7[%c0_6, %c0_7], %7 {strides = array<i32>} : memref<256x64xf32, #tpu.memory_space<vmem>>, vector<256x64xf32>,
    %c0_i32_8 = arith.constant 0 : i32
    %9 = arith.cmpi eq, %arg2, %c0_i32_8 : i32
    %10 = arith.extui %9 : i1 to i32
    %c0_i32_9 = arith.constant 0 : i32
    %11 = arith.cmpi ne, %10, %c0_i32_9 : i32
    scf.if %11 {
      %c0_10 = arith.constant 0 : index
      %c0_11 = arith.constant 0 : index
      %12 = vector.load %arg7[%c0_10, %c0_11] : memref<256x64xf32, #tpu.memory_space<vmem>>, vector<256x64xf32>
      %c0_12 = arith.constant 0 : index
      %c0_13 = arith.constant 0 : index
      %13 = vector.load %arg5[%c0_12, %c0_13] : memref<1x64xf32, #tpu.memory_space<vmem>>, vector<1x64xf32>
      %14 = vector.broadcast %13 : vector<1x64xf32> to vector<256x64xf32>
      %15 = arith.addf %12, %14 : vector<256x64xf32>
      %c0_14 = arith.constant 0 : index
      %c0_15 = arith.constant 0 : index
      %16 = vector.load %arg6[%c0_14, %c0_15] : memref<256x64xf32, #tpu.memory_space<vmem>>, vector<256x64xf32>
      tpu.vector_store %arg6[%c0_14, %c0_15], %15 {strides = array<i32>} : memref<256x64xf32, #tpu.memory_space<vmem>>, vector<256x64xf32>,
    } else {
    }
    return
  }
  func.func @transform_0(%arg0: i32, %arg1: i32, %arg2: i32) -> (i32, i32) {
    %c0_i32 = arith.constant 0 : i32
    return %arg0, %arg2 : i32, i32
  }
  func.func @transform_1(%arg0: i32, %arg1: i32, %arg2: i32) -> (i32, i32) {
    %c0_i32 = arith.constant 0 : i32
    return %arg1, %arg2 : i32, i32
  }
  func.func @transform_2(%arg0: i32, %arg1: i32, %arg2: i32) -> (i32, i32) {
    %c0_i32 = arith.constant 0 : i32
    %c0_i32_0 = arith.constant 0 : i32
    return %c0_i32, %arg1 : i32, i32
  }
  func.func @transform_3(%arg0: i32, %arg1: i32, %arg2: i32) -> (i32, i32) {
    %c0_i32 = arith.constant 0 : i32
    return %arg0, %arg1 : i32, i32
  }
}

</mosaic_0001>

<llo_original>
// kernel: attention_forward.5
$region0: #{attention_forward.5}
  #allocation0 [shape = 'u32[]', space=smem, size = 0x4, offset = 0x4, fixed_abs, tag = 'smem constant byte address 0x4 - core index']
  #allocation1 [shape = 'u32[144,128]{1,0:T(1,128)}', space=vmem, size = 0x12000, scoped, tag = 'internal scratch']
  #allocation2 [shape = 'f32[256,64]{1,0:T(8,128)}', space=vmem, size = 0x20000, scoped, tag = 'scratch operand']
  %s0 = inlined_call_operand.vmem [shape: f32[256,128], index: 0, kind: input, shape index: {}]
  %s1 = inlined_call_operand.vmem [shape: f32[64,128], index: 1, kind: input, shape index: {}]
  %s2 = inlined_call_operand.vmem [shape: f32[1,64], index: 2, kind: input, shape index: {}]
  %s3 = inlined_call_operand.vmem [shape: f32[256,64], index: 3, kind: output, shape index: {}]
  %s4 = sld [smem:[#allocation0]]
  $region30: #{attention_forward.5} parent=0
    _
  %s6 = ssub.s32 1, %s4
  %s7 = scalar_select 0, %s6, %s4
  // Predicated region
  $region2: #{attention_forward.5} parent=0 // pred_check
    _
  $region3: #{attention_forward.5} parent=0 // pred_check_branch
    %9 = sbr.rel (0) target = $region5
  $region4: #{attention_forward.5} parent=0 // pred_region
    _
  $region5: #{attention_forward.5} parent=0 // pred_fallthru
    _
  // Predicated region
  $region6: #{attention_forward.5} parent=0 // pred_check
    _
  $region7: #{attention_forward.5} parent=0 // pred_check_branch
    %11 = sbr.rel (0) target = $region9
  $region8: #{attention_forward.5} parent=0 // pred_region
    _
  $region9: #{attention_forward.5} parent=0 // pred_fallthru
    _
  // Predicated region
  $region10: #{attention_forward.5} parent=0 // pred_check
    _
  $region11: #{attention_forward.5} parent=0 // pred_check_branch
    %13 = sbr.rel (0) target = $region13
  $region12: #{attention_forward.5} parent=0 // pred_region
    _
  $region13: #{attention_forward.5} parent=0 // pred_fallthru
    _
  %p14 = scmp.eq.s32.totalorder 0, 0
  // Predicated region
  $region14: #{attention_forward.5} parent=0 // pred_check
    %p15 = pneg %p14
  $region15: #{attention_forward.5} parent=0 // pred_check_branch
    %17 = sbr.rel (%p15) target = $region17
  $region16: #{attention_forward.5} parent=0 // pred_region
    %vm18 = vcmask 523264
    %19 = vst.msk [vmem:[#allocation2] sm:$0xff] %vm18, 0.0
    %20 = vst.msk [vmem:[#allocation2 + $0x8] sm:$0xff] %vm18, 0.0
    %21 = vst.msk [vmem:[#allocation2 + $0x10] sm:$0xff] %vm18, 0.0
    %22 = vst.msk [vmem:[#allocation2 + $0x18] sm:$0xff] %vm18, 0.0
    %23 = vst.msk [vmem:[#allocation2 + $0x20] sm:$0xff] %vm18, 0.0
    %24 = vst.msk [vmem:[#allocation2 + $0x28] sm:$0xff] %vm18, 0.0
    %25 = vst.msk [vmem:[#allocation2 + $0x30] sm:$0xff] %vm18, 0.0
    %26 = vst.msk [vmem:[#allocation2 + $0x38] sm:$0xff] %vm18, 0.0
    %27 = vst.msk [vmem:[#allocation2 + $0x40] sm:$0xff] %vm18, 0.0
    %28 = vst.msk [vmem:[#allocation2 + $0x48] sm:$0xff] %vm18, 0.0
    %29 = vst.msk [vmem:[#allocation2 + $0x50] sm:$0xff] %vm18, 0.0
    %30 = vst.msk [vmem:[#allocation2 + $0x58] sm:$0xff] %vm18, 0.0
    %31 = vst.msk [vmem:[#allocation2 + $0x60] sm:$0xff] %vm18, 0.0
    %32 = vst.msk [vmem:[#allocation2 + $0x68] sm:$0xff] %vm18, 0.0
    %33 = vst.msk [vmem:[#allocation2 + $0x70] sm:$0xff] %vm18, 0.0
    %34 = vst.msk [vmem:[#allocation2 + $0x78] sm:$0xff] %vm18, 0.0
    %35 = vst.msk [vmem:[#allocation2 + $0x80] sm:$0xff] %vm18, 0.0
    %36 = vst.msk [vmem:[#allocation2 + $0x88] sm:$0xff] %vm18, 0.0
    %37 = vst.msk [vmem:[#allocation2 + $0x90] sm:$0xff] %vm18, 0.0
    %38 = vst.msk [vmem:[#allocation2 + $0x98] sm:$0xff] %vm18, 0.0
    %39 = vst.msk [vmem:[#allocation2 + $0xa0] sm:$0xff] %vm18, 0.0
    %40 = vst.msk [vmem:[#allocation2 + $0xa8] sm:$0xff] %vm18, 0.0
    %41 = vst.msk [vmem:[#allocation2 + $0xb0] sm:$0xff] %vm18, 0.0
    %42 = vst.msk [vmem:[#allocation2 + $0xb8] sm:$0xff] %vm18, 0.0
    %43 = vst.msk [vmem:[#allocation2 + $0xc0] sm:$0xff] %vm18, 0.0
    %44 = vst.msk [vmem:[#allocation2 + $0xc8] sm:$0xff] %vm18, 0.0
    %45 = vst.msk [vmem:[#allocation2 + $0xd0] sm:$0xff] %vm18, 0.0
    %46 = vst.msk [vmem:[#allocation2 + $0xd8] sm:$0xff] %vm18, 0.0
    %47 = vst.msk [vmem:[#allocation2 + $0xe0] sm:$0xff] %vm18, 0.0
    %48 = vst.msk [vmem:[#allocation2 + $0xe8] sm:$0xff] %vm18, 0.0
    %49 = vst.msk [vmem:[#allocation2 + $0xf0] sm:$0xff] %vm18, 0.0
    %50 = vst.msk [vmem:[#allocation2 + $0xf8] sm:$0xff] %vm18, 0.0
  $region17: #{attention_forward.5} parent=0 // pred_fallthru
    _
  %v51 = vld [vmem:[#allocation2] sm:$0xff]
  %v52 = vld [vmem:[#allocation2 + $0x8] sm:$0xff]
  %v53 = vld [vmem:[#allocation2 + $0x10] sm:$0xff]
  %v54 = vld [vmem:[#allocation2 + $0x18] sm:$0xff]
  %v55 = vld [vmem:[#allocation2 + $0x20] sm:$0xff]
  %v56 = vld [vmem:[#allocation2 + $0x28] sm:$0xff]
  %v57 = vld [vmem:[#allocation2 + $0x30] sm:$0xff]
  %v58 = vld [vmem:[#allocation2 + $0x38] sm:$0xff]
  %v59 = vld [vmem:[#allocation2 + $0x40] sm:$0xff]
  %v60 = vld [vmem:[#allocation2 + $0x48] sm:$0xff]
  %v61 = vld [vmem:[#allocation2 + $0x50] sm:$0xff]
  %v62 = vld [vmem:[#allocation2 + $0x58] sm:$0xff]
  %v63 = vld [vmem:[#allocation2 + $0x60] sm:$0xff]
  %v64 = vld [vmem:[#allocation2 + $0x68] sm:$0xff]
  %v65 = vld [vmem:[#allocation2 + $0x70] sm:$0xff]
  %v66 = vld [vmem:[#allocation2 + $0x78] sm:$0xff]
  %v67 = vld [vmem:[#allocation2 + $0x80] sm:$0xff]
  %v68 = vld [vmem:[#allocation2 + $0x88] sm:$0xff]
  %v69 = vld [vmem:[#allocation2 + $0x90] sm:$0xff]
  %v70 = vld [vmem:[#allocation2 + $0x98] sm:$0xff]
  %v71 = vld [vmem:[#allocation2 + $0xa0] sm:$0xff]
  %v72 = vld [vmem:[#allocation2 + $0xa8] sm:$0xff]
  %v73 = vld [vmem:[#allocation2 + $0xb0] sm:$0xff]
  %v74 = vld [vmem:[#allocation2 + $0xb8] sm:$0xff]
  %v75 = vld [vmem:[#allocation2 + $0xc0] sm:$0xff]
  %v76 = vld [vmem:[#allocation2 + $0xc8] sm:$0xff]
  %v77 = vld [vmem:[#allocation2 + $0xd0] sm:$0xff]
  %v78 = vld [vmem:[#allocation2 + $0xd8] sm:$0xff]
  %v79 = vld [vmem:[#allocation2 + $0xe0] sm:$0xff]
  %v80 = vld [vmem:[#allocation2 + $0xe8] sm:$0xff]
  %v81 = vld [vmem:[#allocation2 + $0xf0] sm:$0xff]
  %v82 = vld [vmem:[#allocation2 + $0xf8] sm:$0xff]
  %v83 = vld [vmem:[%s0] sm:$0xff]
  %v84 = vld [vmem:[%s0 + $0x8] sm:$0xff]
  %v85 = vld [vmem:[%s0 + $0x10] sm:$0xff]
  %v86 = vld [vmem:[%s0 + $0x18] sm:$0xff]
  %v87 = vld [vmem:[%s0 + $0x20] sm:$0xff]
  %v88 = vld [vmem:[%s0 + $0x28] sm:$0xff]
  %v89 = vld [vmem:[%s0 + $0x30] sm:$0xff]
  %v90 = vld [vmem:[%s0 + $0x38] sm:$0xff]
  %v91 = vld [vmem:[%s0 + $0x40] sm:$0xff]
  %v92 = vld [vmem:[%s0 + $0x48] sm:$0xff]
  %v93 = vld [vmem:[%s0 + $0x50] sm:$0xff]
  %v94 = vld [vmem:[%s0 + $0x58] sm:$0xff]
  %v95 = vld [vmem:[%s0 + $0x60] sm:$0xff]
  %v96 = vld [vmem:[%s0 + $0x68] sm:$0xff]
  %v97 = vld [vmem:[%s0 + $0x70] sm:$0xff]
  %v98 = vld [vmem:[%s0 + $0x78] sm:$0xff]
  %v99 = vld [vmem:[%s0 + $0x80] sm:$0xff]
  %v100 = vld [vmem:[%s0 + $0x88] sm:$0xff]
  %v101 = vld [vmem:[%s0 + $0x90] sm:$0xff]
  %v102 = vld [vmem:[%s0 + $0x98] sm:$0xff]
  %v103 = vld [vmem:[%s0 + $0xa0] sm:$0xff]
  %v104 = vld [vmem:[%s0 + $0xa8] sm:$0xff]
  %v105 = vld [vmem:[%s0 + $0xb0] sm:$0xff]
  %v106 = vld [vmem:[%s0 + $0xb8] sm:$0xff]
  %v107 = vld [vmem:[%s0 + $0xc0] sm:$0xff]
  %v108 = vld [vmem:[%s0 + $0xc8] sm:$0xff]
  %v109 = vld [vmem:[%s0 + $0xd0] sm:$0xff]
  %v110 = vld [vmem:[%s0 + $0xd8] sm:$0xff]
  %v111 = vld [vmem:[%s0 + $0xe0] sm:$0xff]
  %v112 = vld [vmem:[%s0 + $0xe8] sm:$0xff]
  %v113 = vld [vmem:[%s0 + $0xf0] sm:$0xff]
  %v114 = vld [vmem:[%s0 + $0xf8] sm:$0xff]
  %v115 = vld [vmem:[%s1] sm:$0xff]
  %v116 = vld [vmem:[%s1 + $0x8] sm:$0xff]
  %v117 = vld [vmem:[%s1 + $0x10] sm:$0xff]
  %v118 = vld [vmem:[%s1 + $0x18] sm:$0xff]
  %v119 = vld [vmem:[%s1 + $0x20] sm:$0xff]
  %v120 = vld [vmem:[%s1 + $0x28] sm:$0xff]
  %v121 = vld [vmem:[%s1 + $0x30] sm:$0xff]
  %v122 = vld [vmem:[%s1 + $0x38] sm:$0xff]
  %123 = vmatprep.subr.mxu0 0.0
  %124 = vmatpush1.xpose.msra.mxu0 0.0
  %125 = vmatprep.subr.mxu0 0.0
  %126 = vmatpush1.xpose.msra.mxu0 0.0
  %127 = vmatprep.subr.mxu0 0.0
  %128 = vmatpush1.xpose.msra.mxu0 0.0
  %129 = vmatprep.subr.mxu0 0.0
  %130 = vmatpush1.xpose.msra.mxu0 0.0
  %131 = vmatprep.subr.mxu0 0.0
  %132 = vmatpush1.xpose.msra.mxu0 0.0
  %133 = vmatprep.subr.mxu0 0.0
  %134 = vmatpush1.xpose.msra.mxu0 0.0
  %135 = vmatprep.subr.mxu0 0.0
  %136 = vmatpush1.xpose.msra.mxu0 0.0
  %137 = vmatprep.subr.mxu0 0.0
  %138 = vmatpush1.xpose.msra.mxu0 0.0
  %139 = vmatprep.subr.mxu0 0.0
  %140 = vmatpush1.xpose.msra.mxu0 %v122
  %141 = vmatprep.subr.mxu0 0.0
  %142 = vmatpush1.xpose.msra.mxu0 %v121
  %143 = vmatprep.subr.mxu0 0.0
  %144 = vmatpush1.xpose.msra.mxu0 %v120
  %145 = vmatprep.subr.mxu0 0.0
  %146 = vmatpush1.xpose.msra.mxu0 %v119
  %147 = vmatprep.subr.mxu0 0.0
  %148 = vmatpush1.xpose.msra.mxu0 %v118
  %149 = vmatprep.subr.mxu0 0.0
  %150 = vmatpush1.xpose.msra.mxu0 %v117
  %151 = vmatprep.subr.mxu0 0.0
  %152 = vmatpush1.xpose.msra.mxu0 %v116
  %153 = vmatprep.subr.mxu0 0.0
  %154 = vmatpush1.xpose.msra.mxu0 %v115
  %155 = vmatprep.subr.mxu0 0.0
  %156 = vmatpush2.xpose.msra.mxu0 0.0
  %157 = vmatprep.subr.mxu0 0.0
  %158 = vmatpush2.xpose.msra.mxu0 0.0
  %159 = vmatprep.subr.mxu0 0.0
  %160 = vmatpush2.xpose.msra.mxu0 0.0
  %161 = vmatprep.subr.mxu0 0.0
  %162 = vmatpush2.xpose.msra.mxu0 0.0
  %163 = vmatprep.subr.mxu0 0.0
  %164 = vmatpush2.xpose.msra.mxu0 0.0
  %165 = vmatprep.subr.mxu0 0.0
  %166 = vmatpush2.xpose.msra.mxu0 0.0
  %167 = vmatprep.subr.mxu0 0.0
  %168 = vmatpush2.xpose.msra.mxu0 0.0
  %169 = vmatprep.subr.mxu0 0.0
  %170 = vmatpush2.xpose.msra.mxu0 0.0
  %171 = vmatprep.subr.mxu0 0.0
  %172 = vmatpush2.xpose.msra.mxu0 0.0
  %173 = vmatprep.subr.mxu0 0.0
  %174 = vmatpush2.xpose.msra.mxu0 0.0
  %175 = vmatprep.subr.mxu0 0.0
  %176 = vmatpush2.xpose.msra.mxu0 0.0
  %177 = vmatprep.subr.mxu0 0.0
  %178 = vmatpush2.xpose.msra.mxu0 0.0
  %179 = vmatprep.subr.mxu0 0.0
  %180 = vmatpush2.xpose.msra.mxu0 0.0
  %181 = vmatprep.subr.mxu0 0.0
  %182 = vmatpush2.xpose.msra.mxu0 0.0
  %183 = vmatprep.subr.mxu0 0.0
  %184 = vmatpush2.xpose.msra.mxu0 0.0
  %185 = vmatprep.subr.mxu0 0.0
  %186 = vmatpush2.xpose.msra.mxu0 0.0
  %187 = vmatprep.mubr.f32.mxu0 0.0
  %188 = vmatmul.mubr.f32.gmra.mxu0 %v83
  %v189 = vpop.f32.mrf.mxu0
  %v190 = vadd.f32 0.0, %v189
  %v191 = vpop.f32.mrf.mxu0
  %192 = vmatprep.mubr.f32.mxu0 0.0
  %193 = vmatmul.mubr.f32.gmra.mxu0 %v84
  %v194 = vpop.f32.mrf.mxu0
  %v195 = vadd.f32 0.0, %v194
  %v196 = vpop.f32.mrf.mxu0
  %197 = vmatprep.mubr.f32.mxu0 0.0
  %198 = vmatmul.mubr.f32.gmra.mxu0 %v85
  %v199 = vpop.f32.mrf.mxu0
  %v200 = vadd.f32 0.0, %v199
  %v201 = vpop.f32.mrf.mxu0
  %202 = vmatprep.mubr.f32.mxu0 0.0
  %203 = vmatmul.mubr.f32.gmra.mxu0 %v86
  %v204 = vpop.f32.mrf.mxu0
  %v205 = vadd.f32 0.0, %v204
  %v206 = vpop.f32.mrf.mxu0
  %207 = vmatprep.mubr.f32.mxu0 0.0
  %208 = vmatmul.mubr.f32.gmra.mxu0 %v87
  %v209 = vpop.f32.mrf.mxu0
  %v210 = vadd.f32 0.0, %v209
  %v211 = vpop.f32.mrf.mxu0
  %212 = vmatprep.mubr.f32.mxu0 0.0
  %213 = vmatmul.mubr.f32.gmra.mxu0 %v88
  %v214 = vpop.f32.mrf.mxu0
  %v215 = vadd.f32 0.0, %v214
  %v216 = vpop.f32.mrf.mxu0
  %217 = vmatprep.mubr.f32.mxu0 0.0
  %218 = vmatmul.mubr.f32.gmra.mxu0 %v89
  %v219 = vpop.f32.mrf.mxu0
  %v220 = vadd.f32 0.0, %v219
  %v221 = vpop.f32.mrf.mxu0
  %222 = vmatprep.mubr.f32.mxu0 0.0
  %223 = vmatmul.mubr.f32.gmra.mxu0 %v90
  %v224 = vpop.f32.mrf.mxu0
  %v225 = vadd.f32 0.0, %v224
  %v226 = vpop.f32.mrf.mxu0
  %227 = vmatprep.mubr.f32.mxu0 0.0
  %228 = vmatmul.mubr.f32.gmra.mxu0 %v91
  %v229 = vpop.f32.mrf.mxu0
  %v230 = vadd.f32 0.0, %v229
  %v231 = vpop.f32.mrf.mxu0
  %232 = vmatprep.mubr.f32.mxu0 0.0
  %233 = vmatmul.mubr.f32.gmra.mxu0 %v92
  %v234 = vpop.f32.mrf.mxu0
  %v235 = vadd.f32 0.0, %v234
  %v236 = vpop.f32.mrf.mxu0
  %237 = vmatprep.mubr.f32.mxu0 0.0
  %238 = vmatmul.mubr.f32.gmra.mxu0 %v93
  %v239 = vpop.f32.mrf.mxu0
  %v240 = vadd.f32 0.0, %v239
  %v241 = vpop.f32.mrf.mxu0
  %242 = vmatprep.mubr.f32.mxu0 0.0
  %243 = vmatmul.mubr.f32.gmra.mxu0 %v94
  %v244 = vpop.f32.mrf.mxu0
  %v245 = vadd.f32 0.0, %v244
  %v246 = vpop.f32.mrf.mxu0
  %247 = vmatprep.mubr.f32.mxu0 0.0
  %248 = vmatmul.mubr.f32.gmra.mxu0 %v95
  %v249 = vpop.f32.mrf.mxu0
  %v250 = vadd.f32 0.0, %v249
  %v251 = vpop.f32.mrf.mxu0
  %252 = vmatprep.mubr.f32.mxu0 0.0
  %253 = vmatmul.mubr.f32.gmra.mxu0 %v96
  %v254 = vpop.f32.mrf.mxu0
  %v255 = vadd.f32 0.0, %v254
  %v256 = vpop.f32.mrf.mxu0
  %257 = vmatprep.mubr.f32.mxu0 0.0
  %258 = vmatmul.mubr.f32.gmra.mxu0 %v97
  %v259 = vpop.f32.mrf.mxu0
  %v260 = vadd.f32 0.0, %v259
  %v261 = vpop.f32.mrf.mxu0
  %262 = vmatprep.mubr.f32.mxu0 0.0
  %263 = vmatmul.mubr.f32.gmra.mxu0 %v98
  %v264 = vpop.f32.mrf.mxu0
  %v265 = vadd.f32 0.0, %v264
  %v266 = vpop.f32.mrf.mxu0
  %267 = vmatprep.mubr.f32.mxu0 0.0
  %268 = vmatmul.mubr.f32.gmra.mxu0 %v99
  %v269 = vpop.f32.mrf.mxu0
  %v270 = vadd.f32 0.0, %v269
  %v271 = vpop.f32.mrf.mxu0
  %272 = vmatprep.mubr.f32.mxu0 0.0
  %273 = vmatmul.mubr.f32.gmra.mxu0 %v100
  %v274 = vpop.f32.mrf.mxu0
  %v275 = vadd.f32 0.0, %v274
  %v276 = vpop.f32.mrf.mxu0
  %277 = vmatprep.mubr.f32.mxu0 0.0
  %278 = vmatmul.mubr.f32.gmra.mxu0 %v101
  %v279 = vpop.f32.mrf.mxu0
  %v280 = vadd.f32 0.0, %v279
  %v281 = vpop.f32.mrf.mxu0
  %282 = vmatprep.mubr.f32.mxu0 0.0
  %283 = vmatmul.mubr.f32.gmra.mxu0 %v102
  %v284 = vpop.f32.mrf.mxu0
  %v285 = vadd.f32 0.0, %v284
  %v286 = vpop.f32.mrf.mxu0
  %287 = vmatprep.mubr.f32.mxu0 0.0
  %288 = vmatmul.mubr.f32.gmra.mxu0 %v103
  %v289 = vpop.f32.mrf.mxu0
  %v290 = vadd.f32 0.0, %v289
  %v291 = vpop.f32.mrf.mxu0
  %292 = vmatprep.mubr.f32.mxu0 0.0
  %293 = vmatmul.mubr.f32.gmra.mxu0 %v104
  %v294 = vpop.f32.mrf.mxu0
  %v295 = vadd.f32 0.0, %v294
  %v296 = vpop.f32.mrf.mxu0
  %297 = vmatprep.mubr.f32.mxu0 0.0
  %298 = vmatmul.mubr.f32.gmra.mxu0 %v105
  %v299 = vpop.f32.mrf.mxu0
  %v300 = vadd.f32 0.0, %v299
  %v301 = vpop.f32.mrf.mxu0
  %302 = vmatprep.mubr.f32.mxu0 0.0
  %303 = vmatmul.mubr.f32.gmra.mxu0 %v106
  %v304 = vpop.f32.mrf.mxu0
  %v305 = vadd.f32 0.0, %v304
  %v306 = vpop.f32.mrf.mxu0
  %307 = vmatprep.mubr.f32.mxu0 0.0
  %308 = vmatmul.mubr.f32.gmra.mxu0 %v107
  %v309 = vpop.f32.mrf.mxu0
  %v310 = vadd.f32 0.0, %v309
  %v311 = vpop.f32.mrf.mxu0
  %312 = vmatprep.mubr.f32.mxu0 0.0
  %313 = vmatmul.mubr.f32.gmra.mxu0 %v108
  %v314 = vpop.f32.mrf.mxu0
  %v315 = vadd.f32 0.0, %v314
  %v316 = vpop.f32.mrf.mxu0
  %317 = vmatprep.mubr.f32.mxu0 0.0
  %318 = vmatmul.mubr.f32.gmra.mxu0 %v109
  %v319 = vpop.f32.mrf.mxu0
  %v320 = vadd.f32 0.0, %v319
  %v321 = vpop.f32.mrf.mxu0
  %322 = vmatprep.mubr.f32.mxu0 0.0
  %323 = vmatmul.mubr.f32.gmra.mxu0 %v110
  %v324 = vpop.f32.mrf.mxu0
  %v325 = vadd.f32 0.0, %v324
  %v326 = vpop.f32.mrf.mxu0
  %327 = vmatprep.mubr.f32.mxu0 0.0
  %328 = vmatmul.mubr.f32.gmra.mxu0 %v111
  %v329 = vpop.f32.mrf.mxu0
  %v330 = vadd.f32 0.0, %v329
  %v331 = vpop.f32.mrf.mxu0
  %332 = vmatprep.mubr.f32.mxu0 0.0
  %333 = vmatmul.mubr.f32.gmra.mxu0 %v112
  %v334 = vpop.f32.mrf.mxu0
  %v335 = vadd.f32 0.0, %v334
  %v336 = vpop.f32.mrf.mxu0
  %337 = vmatprep.mubr.f32.mxu0 0.0
  %338 = vmatmul.mubr.f32.gmra.mxu0 %v113
  %v339 = vpop.f32.mrf.mxu0
  %v340 = vadd.f32 0.0, %v339
  %v341 = vpop.f32.mrf.mxu0
  %342 = vmatprep.mubr.f32.mxu0 0.0
  %343 = vmatmul.mubr.f32.gmra.mxu0 %v114
  %v344 = vpop.f32.mrf.mxu0
  %v345 = vadd.f32 0.0, %v344
  %v346 = vpop.f32.mrf.mxu0
  %347 = vdwg.mxu0
  %v348 = vadd.f32 %v51, %v190
  %v349 = vadd.f32 %v52, %v195
  %v350 = vadd.f32 %v53, %v200
  %v351 = vadd.f32 %v54, %v205
  %v352 = vadd.f32 %v55, %v210
  %v353 = vadd.f32 %v56, %v215
  %v354 = vadd.f32 %v57, %v220
  %v355 = vadd.f32 %v58, %v225
  %v356 = vadd.f32 %v59, %v230
  %v357 = vadd.f32 %v60, %v235
  %v358 = vadd.f32 %v61, %v240
  %v359 = vadd.f32 %v62, %v245
  %v360 = vadd.f32 %v63, %v250
  %v361 = vadd.f32 %v64, %v255
  %v362 = vadd.f32 %v65, %v260
  %v363 = vadd.f32 %v66, %v265
  %v364 = vadd.f32 %v67, %v270
  %v365 = vadd.f32 %v68, %v275
  %v366 = vadd.f32 %v69, %v280
  %v367 = vadd.f32 %v70, %v285
  %v368 = vadd.f32 %v71, %v290
  %v369 = vadd.f32 %v72, %v295
  %v370 = vadd.f32 %v73, %v300
  %v371 = vadd.f32 %v74, %v305
  %v372 = vadd.f32 %v75, %v310
  %v373 = vadd.f32 %v76, %v315
  %v374 = vadd.f32 %v77, %v320
  %v375 = vadd.f32 %v78, %v325
  %v376 = vadd.f32 %v79, %v330
  %v377 = vadd.f32 %v80, %v335
  %v378 = vadd.f32 %v81, %v340
  %v379 = vadd.f32 %v82, %v345
  %vm380 = vcmask 523264
  %381 = vst.msk [vmem:[#allocation2] sm:$0xff] %vm380, %v348
  %382 = vst.msk [vmem:[#allocation2 + $0x8] sm:$0xff] %vm380, %v349
  %383 = vst.msk [vmem:[#allocation2 + $0x10] sm:$0xff] %vm380, %v350
  %384 = vst.msk [vmem:[#allocation2 + $0x18] sm:$0xff] %vm380, %v351
  %385 = vst.msk [vmem:[#allocation2 + $0x20] sm:$0xff] %vm380, %v352
  %386 = vst.msk [vmem:[#allocation2 + $0x28] sm:$0xff] %vm380, %v353
  %387 = vst.msk [vmem:[#allocation2 + $0x30] sm:$0xff] %vm380, %v354
  %388 = vst.msk [vmem:[#allocation2 + $0x38] sm:$0xff] %vm380, %v355
  %389 = vst.msk [vmem:[#allocation2 + $0x40] sm:$0xff] %vm380, %v356
  %390 = vst.msk [vmem:[#allocation2 + $0x48] sm:$0xff] %vm380, %v357
  %391 = vst.msk [vmem:[#allocation2 + $0x50] sm:$0xff] %vm380, %v358
  %392 = vst.msk [vmem:[#allocation2 + $0x58] sm:$0xff] %vm380, %v359
  %393 = vst.msk [vmem:[#allocation2 + $0x60] sm:$0xff] %vm380, %v360
  %394 = vst.msk [vmem:[#allocation2 + $0x68] sm:$0xff] %vm380, %v361
  %395 = vst.msk [vmem:[#allocation2 + $0x70] sm:$0xff] %vm380, %v362
  %396 = vst.msk [vmem:[#allocation2 + $0x78] sm:$0xff] %vm380, %v363
  %397 = vst.msk [vmem:[#allocation2 + $0x80] sm:$0xff] %vm380, %v364
  %398 = vst.msk [vmem:[#allocation2 + $0x88] sm:$0xff] %vm380, %v365
  %399 = vst.msk [vmem:[#allocation2 + $0x90] sm:$0xff] %vm380, %v366
  %400 = vst.msk [vmem:[#allocation2 + $0x98] sm:$0xff] %vm380, %v367
  %401 = vst.msk [vmem:[#allocation2 + $0xa0] sm:$0xff] %vm380, %v368
  %402 = vst.msk [vmem:[#allocation2 + $0xa8] sm:$0xff] %vm380, %v369
  %403 = vst.msk [vmem:[#allocation2 + $0xb0] sm:$0xff] %vm380, %v370
  %404 = vst.msk [vmem:[#allocation2 + $0xb8] sm:$0xff] %vm380, %v371
  %405 = vst.msk [vmem:[#allocation2 + $0xc0] sm:$0xff] %vm380, %v372
  %406 = vst.msk [vmem:[#allocation2 + $0xc8] sm:$0xff] %vm380, %v373
  %407 = vst.msk [vmem:[#allocation2 + $0xd0] sm:$0xff] %vm380, %v374
  %408 = vst.msk [vmem:[#allocation2 + $0xd8] sm:$0xff] %vm380, %v375
  %409 = vst.msk [vmem:[#allocation2 + $0xe0] sm:$0xff] %vm380, %v376
  %410 = vst.msk [vmem:[#allocation2 + $0xe8] sm:$0xff] %vm380, %v377
  %411 = vst.msk [vmem:[#allocation2 + $0xf0] sm:$0xff] %vm380, %v378
  %412 = vst.msk [vmem:[#allocation2 + $0xf8] sm:$0xff] %vm380, %v379
  // Predicated region
  $region18: #{attention_forward.5} parent=0 // pred_check
    %p413 = pneg %p14
  $region19: #{attention_forward.5} parent=0 // pred_check_branch
    %415 = sbr.rel (%p413) target = $region21
  $region20: #{attention_forward.5} parent=0 // pred_region
    %v416 = vld [vmem:[#allocation2] sm:$0xff]
    %v417 = vld [vmem:[#allocation2 + $0x8] sm:$0xff]
    %v418 = vld [vmem:[#allocation2 + $0x10] sm:$0xff]
    %v419 = vld [vmem:[#allocation2 + $0x18] sm:$0xff]
    %v420 = vld [vmem:[#allocation2 + $0x20] sm:$0xff]
    %v421 = vld [vmem:[#allocation2 + $0x28] sm:$0xff]
    %v422 = vld [vmem:[#allocation2 + $0x30] sm:$0xff]
    %v423 = vld [vmem:[#allocation2 + $0x38] sm:$0xff]
    %v424 = vld [vmem:[#allocation2 + $0x40] sm:$0xff]
    %v425 = vld [vmem:[#allocation2 + $0x48] sm:$0xff]
    %v426 = vld [vmem:[#allocation2 + $0x50] sm:$0xff]
    %v427 = vld [vmem:[#allocation2 + $0x58] sm:$0xff]
    %v428 = vld [vmem:[#allocation2 + $0x60] sm:$0xff]
    %v429 = vld [vmem:[#allocation2 + $0x68] sm:$0xff]
    %v430 = vld [vmem:[#allocation2 + $0x70] sm:$0xff]
    %v431 = vld [vmem:[#allocation2 + $0x78] sm:$0xff]
    %v432 = vld [vmem:[#allocation2 + $0x80] sm:$0xff]
    %v433 = vld [vmem:[#allocation2 + $0x88] sm:$0xff]
    %v434 = vld [vmem:[#allocation2 + $0x90] sm:$0xff]
    %v435 = vld [vmem:[#allocation2 + $0x98] sm:$0xff]
    %v436 = vld [vmem:[#allocation2 + $0xa0] sm:$0xff]
    %v437 = vld [vmem:[#allocation2 + $0xa8] sm:$0xff]
    %v438 = vld [vmem:[#allocation2 + $0xb0] sm:$0xff]
    %v439 = vld [vmem:[#allocation2 + $0xb8] sm:$0xff]
    %v440 = vld [vmem:[#allocation2 + $0xc0] sm:$0xff]
    %v441 = vld [vmem:[#allocation2 + $0xc8] sm:$0xff]
    %v442 = vld [vmem:[#allocation2 + $0xd0] sm:$0xff]
    %v443 = vld [vmem:[#allocation2 + $0xd8] sm:$0xff]
    %v444 = vld [vmem:[#allocation2 + $0xe0] sm:$0xff]
    %v445 = vld [vmem:[#allocation2 + $0xe8] sm:$0xff]
    %v446 = vld [vmem:[#allocation2 + $0xf0] sm:$0xff]
    %v447 = vld [vmem:[#allocation2 + $0xf8] sm:$0xff]
    %v448 = vld [vmem:[%s2] sm:$0x1]
    %v450 = vlaneseq
    %v451 = vshrl.u32 %v450, 7
    %v452 = vsub.s32 0, %v451
    %v453 = vrot.slane %v448, %v452
    %v455 = vadd.f32 %v416, %v453
    %v456 = vadd.f32 %v417, %v453
    %v457 = vadd.f32 %v418, %v453
    %v458 = vadd.f32 %v419, %v453
    %v459 = vadd.f32 %v420, %v453
    %v460 = vadd.f32 %v421, %v453
    %v461 = vadd.f32 %v422, %v453
    %v462 = vadd.f32 %v423, %v453
    %v463 = vadd.f32 %v424, %v453
    %v464 = vadd.f32 %v425, %v453
    %v465 = vadd.f32 %v426, %v453
    %v466 = vadd.f32 %v427, %v453
    %v467 = vadd.f32 %v428, %v453
    %v468 = vadd.f32 %v429, %v453
    %v469 = vadd.f32 %v430, %v453
    %v470 = vadd.f32 %v431, %v453
    %v471 = vadd.f32 %v432, %v453
    %v472 = vadd.f32 %v433, %v453
    %v473 = vadd.f32 %v434, %v453
    %v474 = vadd.f32 %v435, %v453
    %v475 = vadd.f32 %v436, %v453
    %v476 = vadd.f32 %v437, %v453
    %v477 = vadd.f32 %v438, %v453
    %v478 = vadd.f32 %v439, %v453
    %v479 = vadd.f32 %v440, %v453
    %v480 = vadd.f32 %v441, %v453
    %v481 = vadd.f32 %v442, %v453
    %v482 = vadd.f32 %v443, %v453
    %v483 = vadd.f32 %v444, %v453
    %v484 = vadd.f32 %v445, %v453
    %v485 = vadd.f32 %v446, %v453
    %v486 = vadd.f32 %v447, %v453
    %487 = vst.msk [vmem:[%s3] sm:$0xff] %vm380, %v455
    %488 = vst.msk [vmem:[%s3 + $0x8] sm:$0xff] %vm380, %v456
    %489 = vst.msk [vmem:[%s3 + $0x10] sm:$0xff] %vm380, %v457
    %490 = vst.msk [vmem:[%s3 + $0x18] sm:$0xff] %vm380, %v458
    %491 = vst.msk [vmem:[%s3 + $0x20] sm:$0xff] %vm380, %v459
    %492 = vst.msk [vmem:[%s3 + $0x28] sm:$0xff] %vm380, %v460
    %493 = vst.msk [vmem:[%s3 + $0x30] sm:$0xff] %vm380, %v461
    %494 = vst.msk [vmem:[%s3 + $0x38] sm:$0xff] %vm380, %v462
    %495 = vst.msk [vmem:[%s3 + $0x40] sm:$0xff] %vm380, %v463
    %496 = vst.msk [vmem:[%s3 + $0x48] sm:$0xff] %vm380, %v464
    %497 = vst.msk [vmem:[%s3 + $0x50] sm:$0xff] %vm380, %v465
    %498 = vst.msk [vmem:[%s3 + $0x58] sm:$0xff] %vm380, %v466
    %499 = vst.msk [vmem:[%s3 + $0x60] sm:$0xff] %vm380, %v467
    %500 = vst.msk [vmem:[%s3 + $0x68] sm:$0xff] %vm380, %v468
    %501 = vst.msk [vmem:[%s3 + $0x70] sm:$0xff] %vm380, %v469
    %502 = vst.msk [vmem:[%s3 + $0x78] sm:$0xff] %vm380, %v470
    %503 = vst.msk [vmem:[%s3 + $0x80] sm:$0xff] %vm380, %v471
    %504 = vst.msk [vmem:[%s3 + $0x88] sm:$0xff] %vm380, %v472
    %505 = vst.msk [vmem:[%s3 + $0x90] sm:$0xff] %vm380, %v473
    %506 = vst.msk [vmem:[%s3 + $0x98] sm:$0xff] %vm380, %v474
    %507 = vst.msk [vmem:[%s3 + $0xa0] sm:$0xff] %vm380, %v475
    %508 = vst.msk [vmem:[%s3 + $0xa8] sm:$0xff] %vm380, %v476
    %509 = vst.msk [vmem:[%s3 + $0xb0] sm:$0xff] %vm380, %v477
    %510 = vst.msk [vmem:[%s3 + $0xb8] sm:$0xff] %vm380, %v478
    %511 = vst.msk [vmem:[%s3 + $0xc0] sm:$0xff] %vm380, %v479
    %512 = vst.msk [vmem:[%s3 + $0xc8] sm:$0xff] %vm380, %v480
    %513 = vst.msk [vmem:[%s3 + $0xd0] sm:$0xff] %vm380, %v481
    %514 = vst.msk [vmem:[%s3 + $0xd8] sm:$0xff] %vm380, %v482
    %515 = vst.msk [vmem:[%s3 + $0xe0] sm:$0xff] %vm380, %v483
    %516 = vst.msk [vmem:[%s3 + $0xe8] sm:$0xff] %vm380, %v484
    %517 = vst.msk [vmem:[%s3 + $0xf0] sm:$0xff] %vm380, %v485
    %518 = vst.msk [vmem:[%s3 + $0xf8] sm:$0xff] %vm380, %v486
  $region21: #{attention_forward.5} parent=0 // pred_fallthru
    _
  // Predicated region
  $region22: #{attention_forward.5} parent=0 // pred_check
    _
  $region23: #{attention_forward.5} parent=0 // pred_check_branch
    %520 = sbr.rel (0) target = $region25
  $region24: #{attention_forward.5} parent=0 // pred_region
    _
  $region25: #{attention_forward.5} parent=0 // pred_fallthru
    _
  // Predicated region
  $region26: #{attention_forward.5} parent=0 // pred_check
    _
  $region27: #{attention_forward.5} parent=0 // pred_check_branch
    %522 = sbr.rel (0) target = $region29
  $region28: #{attention_forward.5} parent=0 // pred_region
    _
  $region29: #{attention_forward.5} parent=0 // pred_fallthru
    _

// kernel: attention_forward.3
$region0: #{attention_forward.3}
  #allocation0 [shape = 'u32[]', space=smem, size = 0x4, offset = 0x4, fixed_abs, tag = 'smem constant byte address 0x4 - core index']
  #allocation1 [shape = 'u32[144,128]{1,0:T(1,128)}', space=vmem, size = 0x12000, scoped, tag = 'internal scratch']
  #allocation2 [shape = 'f32[256,384]{1,0:T(8,128)}', space=vmem, size = 0x60000, scoped, tag = 'scratch operand']
  %s0 = inlined_call_operand.vmem [shape: f32[256,64], index: 0, kind: input, shape index: {}]
  %s1 = inlined_call_operand.vmem [shape: f32[384,64], index: 1, kind: input, shape index: {}]
  %s2 = inlined_call_operand.vmem [shape: bf16[256,384], index: 2, kind: output, shape index: {}]
  %s3 = sld [smem:[#allocation0]]
  $region26: #{attention_forward.3} parent=0
    _
  %s5 = ssub.s32 1, %s3
  %s6 = scalar_select 0, %s5, %s3
  // Predicated region
  $region2: #{attention_forward.3} parent=0 // pred_check
    _
  $region3: #{attention_forward.3} parent=0 // pred_check_branch
    %8 = sbr.rel (0) target = $region5
  $region4: #{attention_forward.3} parent=0 // pred_region
    _
  $region5: #{attention_forward.3} parent=0 // pred_fallthru
    _
  // Predicated region
  $region6: #{attention_forward.3} parent=0 // pred_check
    _
  $region7: #{attention_forward.3} parent=0 // pred_check_branch
    %10 = sbr.rel (0) target = $region9
  $region8: #{attention_forward.3} parent=0 // pred_region
    _
  $region9: #{attention_forward.3} parent=0 // pred_fallthru
    _
  %p11 = scmp.eq.s32.totalorder 0, 0
  // Predicated region
  $region10: #{attention_forward.3} parent=0 // pred_check
    %p12 = pneg %p11
  $region11: #{attention_forward.3} parent=0 // pred_check_branch
    %14 = sbr.rel (%p12) target = $region13
  $region12: #{attention_forward.3} parent=0 // pred_region
    %15 = vst [vmem:[#allocation2] sm:$0xff] 0.0
    %16 = vst [vmem:[#allocation2 + $0x8] sm:$0xff] 0.0
    %17 = vst [vmem:[#allocation2 + $0x10] sm:$0xff] 0.0
    %18 = vst [vmem:[#allocation2 + $0x18] sm:$0xff] 0.0
    %19 = vst [vmem:[#allocation2 + $0x20] sm:$0xff] 0.0
    %20 = vst [vmem:[#allocation2 + $0x28] sm:$0xff] 0.0
    %21 = vst [vmem:[#allocation2 + $0x30] sm:$0xff] 0.0
    %22 = vst [vmem:[#allocation2 + $0x38] sm:$0xff] 0.0
    %23 = vst [vmem:[#allocation2 + $0x40] sm:$0xff] 0.0
    %24 = vst [vmem:[#allocation2 + $0x48] sm:$0xff] 0.0
    %25 = vst [vmem:[#allocation2 + $0x50] sm:$0xff] 0.0
    %26 = vst [vmem:[#allocation2 + $0x58] sm:$0xff] 0.0
    %27 = vst [vmem:[#allocation2 + $0x60] sm:$0xff] 0.0
    %28 = vst [vmem:[#allocation2 + $0x68] sm:$0xff] 0.0
    %29 = vst [vmem:[#allocation2 + $0x70] sm:$0xff] 0.0
    %30 = vst [vmem:[#allocation2 + $0x78] sm:$0xff] 0.0
    %31 = vst [vmem:[#allocation2 + $0x80] sm:$0xff] 0.0
    %32 = vst [vmem:[#allocation2 + $0x88] sm:$0xff] 0.0
    %33 = vst [vmem:[#allocation2 + $0x90] sm:$0xff] 0.0
    %34 = vst [vmem:[#allocation2 + $0x98] sm:$0xff] 0.0
    %35 = vst [vmem:[#allocation2 + $0xa0] sm:$0xff] 0.0
    %36 = vst [vmem:[#allocation2 + $0xa8] sm:$0xff] 0.0
    %37 = vst [vmem:[#allocation2 + $0xb0] sm:$0xff] 0.0
    %38 = vst [vmem:[#allocation2 + $0xb8] sm:$0xff] 0.0
    %39 = vst [vmem:[#allocation2 + $0xc0] sm:$0xff] 0.0
    %40 = vst [vmem:[#allocation2 + $0xc8] sm:$0xff] 0.0
    %41 = vst [vmem:[#allocation2 + $0xd0] sm:$0xff] 0.0
    %42 = vst [vmem:[#allocation2 + $0xd8] sm:$0xff] 0.0
    %43 = vst [vmem:[#allocation2 + $0xe0] sm:$0xff] 0.0
    %44 = vst [vmem:[#allocation2 + $0xe8] sm:$0xff] 0.0
    %45 = vst [vmem:[#allocation2 + $0xf0] sm:$0xff] 0.0
    %46 = vst [vmem:[#allocation2 + $0xf8] sm:$0xff] 0.0
    %47 = vst [vmem:[#allocation2 + $0x100] sm:$0xff] 0.0
    %48 = vst [vmem:[#allocation2 + $0x108] sm:$0xff] 0.0
    %49 = vst [vmem:[#allocation2 + $0x110] sm:$0xff] 0.0
    %50 = vst [vmem:[#allocation2 + $0x118] sm:$0xff] 0.0
    %51 = vst [vmem:[#allocation2 + $0x120] sm:$0xff] 0.0
    %52 = vst [vmem:[#allocation2 + $0x128] sm:$0xff] 0.0
    %53 = vst [vmem:[#allocation2 + $0x130] sm:$0xff] 0.0
    %54 = vst [vmem:[#allocation2 + $0x138] sm:$0xff] 0.0
    %55 = vst [vmem:[#allocation2 + $0x140] sm:$0xff] 0.0
    %56 = vst [vmem:[#allocation2 + $0x148] sm:$0xff] 0.0
    %57 = vst [vmem:[#allocation2 + $0x150] sm:$0xff] 0.0
    %58 = vst [vmem:[#allocation2 + $0x158] sm:$0xff] 0.0
    %59 = vst [vmem:[#allocation2 + $0x160] sm:$0xff] 0.0
    %60 = vst [vmem:[#allocation2 + $0x168] sm:$0xff] 0.0
    %61 = vst [vmem:[#allocation2 + $0x170] sm:$0xff] 0.0
    %62 = vst [vmem:[#allocation2 + $0x178] sm:$0xff] 0.0
    %63 = vst [vmem:[#allocation2 + $0x180] sm:$0xff] 0.0
    %64 = vst [vmem:[#allocation2 + $0x188] sm:$0xff] 0.0
    %65 = vst [vmem:[#allocation2 + $0x190] sm:$0xff] 0.0
    %66 = vst [vmem:[#allocation2 + $0x198] sm:$0xff] 0.0
    %67 = vst [vmem:[#allocation2 + $0x1a0] sm:$0xff] 0.0
    %68 = vst [vmem:[#allocation2 + $0x1a8] sm:$0xff] 0.0
    %69 = vst [vmem:[#allocation2 + $0x1b0] sm:$0xff] 0.0
    %70 = vst [vmem:[#allocation2 + $0x1b8] sm:$0xff] 0.0
    %71 = vst [vmem:[#allocation2 + $0x1c0] sm:$0xff] 0.0
    %72 = vst [vmem:[#allocation2 + $0x1c8] sm:$0xff] 0.0
    %73 = vst [vmem:[#allocation2 + $0x1d0] sm:$0xff] 0.0
    %74 = vst [vmem:[#allocation2 + $0x1d8] sm:$0xff] 0.0
    %75 = vst [vmem:[#allocation2 + $0x1e0] sm:$0xff] 0.0
    %76 = vst [vmem:[#allocation2 + $0x1e8] sm:$0xff] 0.0
    %77 = vst [vmem:[#allocation2 + $0x1f0] sm:$0xff] 0.0
    %78 = vst [vmem:[#allocation2 + $0x1f8] sm:$0xff] 0.0
    %79 = vst [vmem:[#allocation2 + $0x200] sm:$0xff] 0.0
    %80 = vst [vmem:[#allocation2 + $0x208] sm:$0xff] 0.0
    %81 = vst [vmem:[#allocation2 + $0x210] sm:$0xff] 0.0
    %82 = vst [vmem:[#allocation2 + $0x218] sm:$0xff] 0.0
    %83 = vst [vmem:[#allocation2 + $0x220] sm:$0xff] 0.0
    %84 = vst [vmem:[#allocation2 + $0x228] sm:$0xff] 0.0
    %85 = vst [vmem:[#allocation2 + $0x230] sm:$0xff] 0.0
    %86 = vst [vmem:[#allocation2 + $0x238] sm:$0xff] 0.0
    %87 = vst [vmem:[#allocation2 + $0x240] sm:$0xff] 0.0
    %88 = vst [vmem:[#allocation2 + $0x248] sm:$0xff] 0.0
    %89 = vst [vmem:[#allocation2 + $0x250] sm:$0xff] 0.0
    %90 = vst [vmem:[#allocation2 + $0x258] sm:$0xff] 0.0
    %91 = vst [vmem:[#allocation2 + $0x260] sm:$0xff] 0.0
    %92 = vst [vmem:[#allocation2 + $0x268] sm:$0xff] 0.0
    %93 = vst [vmem:[#allocation2 + $0x270] sm:$0xff] 0.0
    %94 = vst [vmem:[#allocation2 + $0x278] sm:$0xff] 0.0
    %95 = vst [vmem:[#allocation2 + $0x280] sm:$0xff] 0.0
    %96 = vst [vmem:[#allocation2 + $0x288] sm:$0xff] 0.0
    %97 = vst [vmem:[#allocation2 + $0x290] sm:$0xff] 0.0
    %98 = vst [vmem:[#allocation2 + $0x298] sm:$0xff] 0.0
    %99 = vst [vmem:[#allocation2 + $0x2a0] sm:$0xff] 0.0
    %100 = vst [vmem:[#allocation2 + $0x2a8] sm:$0xff] 0.0
    %101 = vst [vmem:[#allocation2 + $0x2b0] sm:$0xff] 0.0
    %102 = vst [vmem:[#allocation2 + $0x2b8] sm:$0xff] 0.0
    %103 = vst [vmem:[#allocation2 + $0x2c0] sm:$0xff] 0.0
    %104 = vst [vmem:[#allocation2 + $0x2c8] sm:$0xff] 0.0
    %105 = vst [vmem:[#allocation2 + $0x2d0] sm:$0xff] 0.0
    %106 = vst [vmem:[#allocation2 + $0x2d8] sm:$0xff] 0.0
    %107 = vst [vmem:[#allocation2 + $0x2e0] sm:$0xff] 0.0
    %108 = vst [vmem:[#allocation2 + $0x2e8] sm:$0xff] 0.0
    %109 = vst [vmem:[#allocation2 + $0x2f0] sm:$0xff] 0.0
    %110 = vst [vmem:[#allocation2 + $0x2f8] sm:$0xff] 0.0
  $region13: #{attention_forward.3} parent=0 // pred_fallthru
    _
  %v111 = vld [vmem:[#allocation2] sm:$0xff]
  %v112 = vld [vmem:[#allocation2 + $0x8] sm:$0xff]
  %v113 = vld [vmem:[#allocation2 + $0x10] sm:$0xff]
  %v114 = vld [vmem:[#allocation2 + $0x18] sm:$0xff]
  %v115 = vld [vmem:[#allocation2 + $0x20] sm:$0xff]
  %v116 = vld [vmem:[#allocation2 + $0x28] sm:$0xff]
  %v117 = vld [vmem:[#allocation2 + $0x30] sm:$0xff]
  %v118 = vld [vmem:[#allocation2 + $0x38] sm:$0xff]
  %v119 = vld [vmem:[#allocation2 + $0x40] sm:$0xff]
  %v120 = vld [vmem:[#allocation2 + $0x48] sm:$0xff]
  %v121 = vld [vmem:[#allocation2 + $0x50] sm:$0xff]
  %v122 = vld [vmem:[#allocation2 + $0x58] sm:$0xff]
  %v123 = vld [vmem:[#allocation2 + $0x60] sm:$0xff]
  %v124 = vld [vmem:[#allocation2 + $0x68] sm:$0xff]
  %v125 = vld [vmem:[#allocation2 + $0x70] sm:$0xff]
  %v126 = vld [vmem:[#allocation2 + $0x78] sm:$0xff]
  %v127 = vld [vmem:[#allocation2 + $0x80] sm:$0xff]
  %v128 = vld [vmem:[#allocation2 + $0x88] sm:$0xff]
  %v129 = vld [vmem:[#allocation2 + $0x90] sm:$0xff]
  %v130 = vld [vmem:[#allocation2 + $0x98] sm:$0xff]
  %v131 = vld [vmem:[#allocation2 + $0xa0] sm:$0xff]
  %v132 = vld [vmem:[#allocation2 + $0xa8] sm:$0xff]
  %v133 = vld [vmem:[#allocation2 + $0xb0] sm:$0xff]
  %v134 = vld [vmem:[#allocation2 + $0xb8] sm:$0xff]
  %v135 = vld [vmem:[#allocation2 + $0xc0] sm:$0xff]
  %v136 = vld [vmem:[#allocation2 + $0xc8] sm:$0xff]
  %v137 = vld [vmem:[#allocation2 + $0xd0] sm:$0xff]
  %v138 = vld [vmem:[#allocation2 + $0xd8] sm:$0xff]
  %v139 = vld [vmem:[#allocation2 + $0xe0] sm:$0xff]
  %v140 = vld [vmem:[#allocation2 + $0xe8] sm:$0xff]
  %v141 = vld [vmem:[#allocation2 + $0xf0] sm:$0xff]
  %v142 = vld [vmem:[#allocation2 + $0xf8] sm:$0xff]
  %v143 = vld [vmem:[#allocation2 + $0x100] sm:$0xff]
  %v144 = vld [vmem:[#allocation2 + $0x108] sm:$0xff]
  %v145 = vld [vmem:[#allocation2 + $0x110] sm:$0xff]
  %v146 = vld [vmem:[#allocation2 + $0x118] sm:$0xff]
  %v147 = vld [vmem:[#allocation2 + $0x120] sm:$0xff]
  %v148 = vld [vmem:[#allocation2 + $0x128] sm:$0xff]
  %v149 = vld [vmem:[#allocation2 + $0x130] sm:$0xff]
  %v150 = vld [vmem:[#allocation2 + $0x138] sm:$0xff]
  %v151 = vld [vmem:[#allocation2 + $0x140] sm:$0xff]
  %v152 = vld [vmem:[#allocation2 + $0x148] sm:$0xff]
  %v153 = vld [vmem:[#allocation2 + $0x150] sm:$0xff]
  %v154 = vld [vmem:[#allocation2 + $0x158] sm:$0xff]
  %v155 = vld [vmem:[#allocation2 + $0x160] sm:$0xff]
  %v156 = vld [vmem:[#allocation2 + $0x168] sm:$0xff]
  %v157 = vld [vmem:[#allocation2 + $0x170] sm:$0xff]
  %v158 = vld [vmem:[#allocation2 + $0x178] sm:$0xff]
  %v159 = vld [vmem:[#allocation2 + $0x180] sm:$0xff]
  %v160 = vld [vmem:[#allocation2 + $0x188] sm:$0xff]
  %v161 = vld [vmem:[#allocation2 + $0x190] sm:$0xff]
  %v162 = vld [vmem:[#allocation2 + $0x198] sm:$0xff]
  %v163 = vld [vmem:[#allocation2 + $0x1a0] sm:$0xff]
  %v164 = vld [vmem:[#allocation2 + $0x1a8] sm:$0xff]
  %v165 = vld [vmem:[#allocation2 + $0x1b0] sm:$0xff]
  %v166 = vld [vmem:[#allocation2 + $0x1b8] sm:$0xff]
  %v167 = vld [vmem:[#allocation2 + $0x1c0] sm:$0xff]
  %v168 = vld [vmem:[#allocation2 + $0x1c8] sm:$0xff]
  %v169 = vld [vmem:[#allocation2 + $0x1d0] sm:$0xff]
  %v170 = vld [vmem:[#allocation2 + $0x1d8] sm:$0xff]
  %v171 = vld [vmem:[#allocation2 + $0x1e0] sm:$0xff]
  %v172 = vld [vmem:[#allocation2 + $0x1e8] sm:$0xff]
  %v173 = vld [vmem:[#allocation2 + $0x1f0] sm:$0xff]
  %v174 = vld [vmem:[#allocation2 + $0x1f8] sm:$0xff]
  %v175 = vld [vmem:[#allocation2 + $0x200] sm:$0xff]
  %v176 = vld [vmem:[#allocation2 + $0x208] sm:$0xff]
  %v177 = vld [vmem:[#allocation2 + $0x210] sm:$0xff]
  %v178 = vld [vmem:[#allocation2 + $0x218] sm:$0xff]
  %v179 = vld [vmem:[#allocation2 + $0x220] sm:$0xff]
  %v180 = vld [vmem:[#allocation2 + $0x228] sm:$0xff]
  %v181 = vld [vmem:[#allocation2 + $0x230] sm:$0xff]
  %v182 = vld [vmem:[#allocation2 + $0x238] sm:$0xff]
  %v183 = vld [vmem:[#allocation2 + $0x240] sm:$0xff]
  %v184 = vld [vmem:[#allocation2 + $0x248] sm:$0xff]
  %v185 = vld [vmem:[#allocation2 + $0x250] sm:$0xff]
  %v186 = vld [vmem:[#allocation2 + $0x258] sm:$0xff]
  %v187 = vld [vmem:[#allocation2 + $0x260] sm:$0xff]
  %v188 = vld [vmem:[#allocation2 + $0x268] sm:$0xff]
  %v189 = vld [vmem:[#allocation2 + $0x270] sm:$0xff]
  %v190 = vld [vmem:[#allocation2 + $0x278] sm:$0xff]
  %v191 = vld [vmem:[#allocation2 + $0x280] sm:$0xff]
  %v192 = vld [vmem:[#allocation2 + $0x288] sm:$0xff]
  %v193 = vld [vmem:[#allocation2 + $0x290] sm:$0xff]
  %v194 = vld [vmem:[#allocation2 + $0x298] sm:$0xff]
  %v195 = vld [vmem:[#allocation2 + $0x2a0] sm:$0xff]
  %v196 = vld [vmem:[#allocation2 + $0x2a8] sm:$0xff]
  %v197 = vld [vmem:[#allocation2 + $0x2b0] sm:$0xff]
  %v198 = vld [vmem:[#allocation2 + $0x2b8] sm:$0xff]
  %v199 = vld [vmem:[#allocation2 + $0x2c0] sm:$0xff]
  %v200 = vld [vmem:[#allocation2 + $0x2c8] sm:$0xff]
  %v201 = vld [vmem:[#allocation2 + $0x2d0] sm:$0xff]
  %v202 = vld [vmem:[#allocation2 + $0x2d8] sm:$0xff]
  %v203 = vld [vmem:[#allocation2 + $0x2e0] sm:$0xff]
  %v204 = vld [vmem:[#allocation2 + $0x2e8] sm:$0xff]
  %v205 = vld [vmem:[#allocation2 + $0x2f0] sm:$0xff]
  %v206 = vld [vmem:[#allocation2 + $0x2f8] sm:$0xff]
  %v207 = vld [vmem:[%s0] sm:$0xff]
  %v208 = vld [vmem:[%s0 + $0x8] sm:$0xff]
  %v209 = vld [vmem:[%s0 + $0x10] sm:$0xff]
  %v210 = vld [vmem:[%s0 + $0x18] sm:$0xff]
  %v211 = vld [vmem:[%s0 + $0x20] sm:$0xff]
  %v212 = vld [vmem:[%s0 + $0x28] sm:$0xff]
  %v213 = vld [vmem:[%s0 + $0x30] sm:$0xff]
  %v214 = vld [vmem:[%s0 + $0x38] sm:$0xff]
  %v215 = vld [vmem:[%s0 + $0x40] sm:$0xff]
  %v216 = vld [vmem:[%s0 + $0x48] sm:$0xff]
  %v217 = vld [vmem:[%s0 + $0x50] sm:$0xff]
  %v218 = vld [vmem:[%s0 + $0x58] sm:$0xff]
  %v219 = vld [vmem:[%s0 + $0x60] sm:$0xff]
  %v220 = vld [vmem:[%s0 + $0x68] sm:$0xff]
  %v221 = vld [vmem:[%s0 + $0x70] sm:$0xff]
  %v222 = vld [vmem:[%s0 + $0x78] sm:$0xff]
  %v223 = vld [vmem:[%s0 + $0x80] sm:$0xff]
  %v224 = vld [vmem:[%s0 + $0x88] sm:$0xff]
  %v225 = vld [vmem:[%s0 + $0x90] sm:$0xff]
  %v226 = vld [vmem:[%s0 + $0x98] sm:$0xff]
  %v227 = vld [vmem:[%s0 + $0xa0] sm:$0xff]
  %v228 = vld [vmem:[%s0 + $0xa8] sm:$0xff]
  %v229 = vld [vmem:[%s0 + $0xb0] sm:$0xff]
  %v230 = vld [vmem:[%s0 + $0xb8] sm:$0xff]
  %v231 = vld [vmem:[%s0 + $0xc0] sm:$0xff]
  %v232 = vld [vmem:[%s0 + $0xc8] sm:$0xff]
  %v233 = vld [vmem:[%s0 + $0xd0] sm:$0xff]
  %v234 = vld [vmem:[%s0 + $0xd8] sm:$0xff]
  %v235 = vld [vmem:[%s0 + $0xe0] sm:$0xff]
  %v236 = vld [vmem:[%s0 + $0xe8] sm:$0xff]
  %v237 = vld [vmem:[%s0 + $0xf0] sm:$0xff]
  %v238 = vld [vmem:[%s0 + $0xf8] sm:$0xff]
  %v239 = vld [vmem:[%s1] sm:$0xff]
  %v240 = vld [vmem:[%s1 + $0x8] sm:$0xff]
  %v241 = vld [vmem:[%s1 + $0x10] sm:$0xff]
  %v242 = vld [vmem:[%s1 + $0x18] sm:$0xff]
  %v243 = vld [vmem:[%s1 + $0x20] sm:$0xff]
  %v244 = vld [vmem:[%s1 + $0x28] sm:$0xff]
  %v245 = vld [vmem:[%s1 + $0x30] sm:$0xff]
  %v246 = vld [vmem:[%s1 + $0x38] sm:$0xff]
  %v247 = vld [vmem:[%s1 + $0x40] sm:$0xff]
  %v248 = vld [vmem:[%s1 + $0x48] sm:$0xff]
  %v249 = vld [vmem:[%s1 + $0x50] sm:$0xff]
  %v250 = vld [vmem:[%s1 + $0x58] sm:$0xff]
  %v251 = vld [vmem:[%s1 + $0x60] sm:$0xff]
  %v252 = vld [vmem:[%s1 + $0x68] sm:$0xff]
  %v253 = vld [vmem:[%s1 + $0x70] sm:$0xff]
  %v254 = vld [vmem:[%s1 + $0x78] sm:$0xff]
  %v255 = vld [vmem:[%s1 + $0x80] sm:$0xff]
  %v256 = vld [vmem:[%s1 + $0x88] sm:$0xff]
  %v257 = vld [vmem:[%s1 + $0x90] sm:$0xff]
  %v258 = vld [vmem:[%s1 + $0x98] sm:$0xff]
  %v259 = vld [vmem:[%s1 + $0xa0] sm:$0xff]
  %v260 = vld [vmem:[%s1 + $0xa8] sm:$0xff]
  %v261 = vld [vmem:[%s1 + $0xb0] sm:$0xff]
  %v262 = vld [vmem:[%s1 + $0xb8] sm:$0xff]
  %v263 = vld [vmem:[%s1 + $0xc0] sm:$0xff]
  %v264 = vld [vmem:[%s1 + $0xc8] sm:$0xff]
  %v265 = vld [vmem:[%s1 + $0xd0] sm:$0xff]
  %v266 = vld [vmem:[%s1 + $0xd8] sm:$0xff]
  %v267 = vld [vmem:[%s1 + $0xe0] sm:$0xff]
  %v268 = vld [vmem:[%s1 + $0xe8] sm:$0xff]
  %v269 = vld [vmem:[%s1 + $0xf0] sm:$0xff]
  %v270 = vld [vmem:[%s1 + $0xf8] sm:$0xff]
  %v271 = vld [vmem:[%s1 + $0x100] sm:$0xff]
  %v272 = vld [vmem:[%s1 + $0x108] sm:$0xff]
  %v273 = vld [vmem:[%s1 + $0x110] sm:$0xff]
  %v274 = vld [vmem:[%s1 + $0x118] sm:$0xff]
  %v275 = vld [vmem:[%s1 + $0x120] sm:$0xff]
  %v276 = vld [vmem:[%s1 + $0x128] sm:$0xff]
  %v277 = vld [vmem:[%s1 + $0x130] sm:$0xff]
  %v278 = vld [vmem:[%s1 + $0x138] sm:$0xff]
  %v279 = vld [vmem:[%s1 + $0x140] sm:$0xff]
  %v280 = vld [vmem:[%s1 + $0x148] sm:$0xff]
  %v281 = vld [vmem:[%s1 + $0x150] sm:$0xff]
  %v282 = vld [vmem:[%s1 + $0x158] sm:$0xff]
  %v283 = vld [vmem:[%s1 + $0x160] sm:$0xff]
  %v284 = vld [vmem:[%s1 + $0x168] sm:$0xff]
  %v285 = vld [vmem:[%s1 + $0x170] sm:$0xff]
  %v286 = vld [vmem:[%s1 + $0x178] sm:$0xff]
  %vm287 = vcmask 523264
  %v289 = vsel %vm287, %v207, 0
  %v292 = vsel %vm287, %v208, 0
  %v295 = vsel %vm287, %v209, 0
  %v298 = vsel %vm287, %v210, 0
  %v301 = vsel %vm287, %v211, 0
  %v304 = vsel %vm287, %v212, 0
  %v307 = vsel %vm287, %v213, 0
  %v310 = vsel %vm287, %v214, 0
  %v313 = vsel %vm287, %v215, 0
  %v316 = vsel %vm287, %v216, 0
  %v319 = vsel %vm287, %v217, 0
  %v322 = vsel %vm287, %v218, 0
  %v325 = vsel %vm287, %v219, 0
  %v328 = vsel %vm287, %v220, 0
  %v331 = vsel %vm287, %v221, 0
  %v334 = vsel %vm287, %v222, 0
  %v337 = vsel %vm287, %v223, 0
  %v340 = vsel %vm287, %v224, 0
  %v343 = vsel %vm287, %v225, 0
  %v346 = vsel %vm287, %v226, 0
  %v349 = vsel %vm287, %v227, 0
  %v352 = vsel %vm287, %v228, 0
  %v355 = vsel %vm287, %v229, 0
  %v358 = vsel %vm287, %v230, 0
  %v361 = vsel %vm287, %v231, 0
  %v364 = vsel %vm287, %v232, 0
  %v367 = vsel %vm287, %v233, 0
  %v370 = vsel %vm287, %v234, 0
  %v373 = vsel %vm287, %v235, 0
  %v376 = vsel %vm287, %v236, 0
  %v379 = vsel %vm287, %v237, 0
  %v382 = vsel %vm287, %v238, 0
  %v385 = vsel %vm287, %v239, 0
  %v388 = vsel %vm287, %v240, 0
  %v391 = vsel %vm287, %v241, 0
  %v394 = vsel %vm287, %v242, 0
  %v397 = vsel %vm287, %v243, 0
  %v400 = vsel %vm287, %v244, 0
  %v403 = vsel %vm287, %v245, 0
  %v406 = vsel %vm287, %v246, 0
  %v409 = vsel %vm287, %v247, 0
  %v412 = vsel %vm287, %v248, 0
  %v415 = vsel %vm287, %v249, 0
  %v418 = vsel %vm287, %v250, 0
  %v421 = vsel %vm287, %v251, 0
  %v424 = vsel %vm287, %v252, 0
  %v427 = vsel %vm287, %v253, 0
  %v430 = vsel %vm287, %v254, 0
  %v433 = vsel %vm287, %v255, 0
  %v436 = vsel %vm287, %v256, 0
  %v439 = vsel %vm287, %v257, 0
  %v442 = vsel %vm287, %v258, 0
  %v445 = vsel %vm287, %v259, 0
  %v448 = vsel %vm287, %v260, 0
  %v451 = vsel %vm287, %v261, 0
  %v454 = vsel %vm287, %v262, 0
  %v457 = vsel %vm287, %v263, 0
  %v460 = vsel %vm287, %v264, 0
  %v463 = vsel %vm287, %v265, 0
  %v466 = vsel %vm287, %v266, 0
  %v469 = vsel %vm287, %v267, 0
  %v472 = vsel %vm287, %v268, 0
  %v475 = vsel %vm287, %v269, 0
  %v478 = vsel %vm287, %v270, 0
  %v481 = vsel %vm287, %v271, 0
  %v484 = vsel %vm287, %v272, 0
  %v487 = vsel %vm287, %v273, 0
  %v490 = vsel %vm287, %v274, 0
  %v493 = vsel %vm287, %v275, 0
  %v496 = vsel %vm287, %v276, 0
  %v499 = vsel %vm287, %v277, 0
  %v502 = vsel %vm287, %v278, 0
  %v505 = vsel %vm287, %v279, 0
  %v508 = vsel %vm287, %v280, 0
  %v511 = vsel %vm287, %v281, 0
  %v514 = vsel %vm287, %v282, 0
  %v517 = vsel %vm287, %v283, 0
  %v520 = vsel %vm287, %v284, 0
  %v523 = vsel %vm287, %v285, 0
  %v526 = vsel %vm287, %v286, 0
  %528 = vmatprep.subr.mxu0 0.0
  %529 = vmatpush1.xpose.msra.mxu0 %v430
  %530 = vmatprep.subr.mxu0 0.0
  %531 = vmatpush1.xpose.msra.mxu0 %v427
  %532 = vmatprep.subr.mxu0 0.0
  %533 = vmatpush1.xpose.msra.mxu0 %v424
  %534 = vmatprep.subr.mxu0 0.0
  %535 = vmatpush1.xpose.msra.mxu0 %v421
  %536 = vmatprep.subr.mxu0 0.0
  %537 = vmatpush1.xpose.msra.mxu0 %v418
  %538 = vmatprep.subr.mxu0 0.0
  %539 = vmatpush1.xpose.msra.mxu0 %v415
  %540 = vmatprep.subr.mxu0 0.0
  %541 = vmatpush1.xpose.msra.mxu0 %v412
  %542 = vmatprep.subr.mxu0 0.0
  %543 = vmatpush1.xpose.msra.mxu0 %v409
  %544 = vmatprep.subr.mxu0 0.0
  %545 = vmatpush1.xpose.msra.mxu0 %v406
  %546 = vmatprep.subr.mxu0 0.0
  %547 = vmatpush1.xpose.msra.mxu0 %v403
  %548 = vmatprep.subr.mxu0 0.0
  %549 = vmatpush1.xpose.msra.mxu0 %v400
  %550 = vmatprep.subr.mxu0 0.0
  %551 = vmatpush1.xpose.msra.mxu0 %v397
  %552 = vmatprep.subr.mxu0 0.0
  %553 = vmatpush1.xpose.msra.mxu0 %v394
  %554 = vmatprep.subr.mxu0 0.0
  %555 = vmatpush1.xpose.msra.mxu0 %v391
  %556 = vmatprep.subr.mxu0 0.0
  %557 = vmatpush1.xpose.msra.mxu0 %v388
  %558 = vmatprep.subr.mxu0 0.0
  %559 = vmatpush1.xpose.msra.mxu0 %v385
  %560 = vmatprep.subr.mxu0 0.0
  %561 = vmatpush2.xpose.msra.mxu0 %v478
  %562 = vmatprep.subr.mxu0 0.0
  %563 = vmatpush2.xpose.msra.mxu0 %v475
  %564 = vmatprep.subr.mxu0 0.0
  %565 = vmatpush2.xpose.msra.mxu0 %v472
  %566 = vmatprep.subr.mxu0 0.0
  %567 = vmatpush2.xpose.msra.mxu0 %v469
  %568 = vmatprep.subr.mxu0 0.0
  %569 = vmatpush2.xpose.msra.mxu0 %v466
  %570 = vmatprep.subr.mxu0 0.0
  %571 = vmatpush2.xpose.msra.mxu0 %v463
  %572 = vmatprep.subr.mxu0 0.0
  %573 = vmatpush2.xpose.msra.mxu0 %v460
  %574 = vmatprep.subr.mxu0 0.0
  %575 = vmatpush2.xpose.msra.mxu0 %v457
  %576 = vmatprep.subr.mxu0 0.0
  %577 = vmatpush2.xpose.msra.mxu0 %v454
  %578 = vmatprep.subr.mxu0 0.0
  %579 = vmatpush2.xpose.msra.mxu0 %v451
  %580 = vmatprep.subr.mxu0 0.0
  %581 = vmatpush2.xpose.msra.mxu0 %v448
  %582 = vmatprep.subr.mxu0 0.0
  %583 = vmatpush2.xpose.msra.mxu0 %v445
  %584 = vmatprep.subr.mxu0 0.0
  %585 = vmatpush2.xpose.msra.mxu0 %v442
  %586 = vmatprep.subr.mxu0 0.0
  %587 = vmatpush2.xpose.msra.mxu0 %v439
  %588 = vmatprep.subr.mxu0 0.0
  %589 = vmatpush2.xpose.msra.mxu0 %v436
  %590 = vmatprep.subr.mxu0 0.0
  %591 = vmatpush2.xpose.msra.mxu0 %v433
  %592 = vmatprep.mubr.f32.mxu0 0.0
  %593 = vmatmul.mubr.f32.gmra.mxu0 %v289
  %v594 = vpop.f32.mrf.mxu0
  %v595 = vadd.f32 0.0, %v594
  %v596 = vpop.f32.mrf.mxu0
  %v597 = vadd.f32 0.0, %v596
  %598 = vmatprep.mubr.f32.mxu0 0.0
  %599 = vmatmul.mubr.f32.gmra.mxu0 %v292
  %v600 = vpop.f32.mrf.mxu0
  %v601 = vadd.f32 0.0, %v600
  %v602 = vpop.f32.mrf.mxu0
  %v603 = vadd.f32 0.0, %v602
  %604 = vmatprep.mubr.f32.mxu0 0.0
  %605 = vmatmul.mubr.f32.gmra.mxu0 %v295
  %v606 = vpop.f32.mrf.mxu0
  %v607 = vadd.f32 0.0, %v606
  %v608 = vpop.f32.mrf.mxu0
  %v609 = vadd.f32 0.0, %v608
  %610 = vmatprep.mubr.f32.mxu0 0.0
  %611 = vmatmul.mubr.f32.gmra.mxu0 %v298
  %v612 = vpop.f32.mrf.mxu0
  %v613 = vadd.f32 0.0, %v612
  %v614 = vpop.f32.mrf.mxu0
  %v615 = vadd.f32 0.0, %v614
  %616 = vmatprep.mubr.f32.mxu0 0.0
  %617 = vmatmul.mubr.f32.gmra.mxu0 %v301
  %v618 = vpop.f32.mrf.mxu0
  %v619 = vadd.f32 0.0, %v618
  %v620 = vpop.f32.mrf.mxu0
  %v621 = vadd.f32 0.0, %v620
  %622 = vmatprep.mubr.f32.mxu0 0.0
  %623 = vmatmul.mubr.f32.gmra.mxu0 %v304
  %v624 = vpop.f32.mrf.mxu0
  %v625 = vadd.f32 0.0, %v624
  %v626 = vpop.f32.mrf.mxu0
  %v627 = vadd.f32 0.0, %v626
  %628 = vmatprep.mubr.f32.mxu0 0.0
  %629 = vmatmul.mubr.f32.gmra.mxu0 %v307
  %v630 = vpop.f32.mrf.mxu0
  %v631 = vadd.f32 0.0, %v630
  %v632 = vpop.f32.mrf.mxu0
  %v633 = vadd.f32 0.0, %v632
  %634 = vmatprep.mubr.f32.mxu0 0.0
  %635 = vmatmul.mubr.f32.gmra.mxu0 %v310
  %v636 = vpop.f32.mrf.mxu0
  %v637 = vadd.f32 0.0, %v636
  %v638 = vpop.f32.mrf.mxu0
  %v639 = vadd.f32 0.0, %v638
  %640 = vmatprep.mubr.f32.mxu0 0.0
  %641 = vmatmul.mubr.f32.gmra.mxu0 %v313
  %v642 = vpop.f32.mrf.mxu0
  %v643 = vadd.f32 0.0, %v642
  %v644 = vpop.f32.mrf.mxu0
  %v645 = vadd.f32 0.0, %v644
  %646 = vmatprep.mubr.f32.mxu0 0.0
  %647 = vmatmul.mubr.f32.gmra.mxu0 %v316
  %v648 = vpop.f32.mrf.mxu0
  %v649 = vadd.f32 0.0, %v648
  %v650 = vpop.f32.mrf.mxu0
  %v651 = vadd.f32 0.0, %v650
  %652 = vmatprep.mubr.f32.mxu0 0.0
  %653 = vmatmul.mubr.f32.gmra.mxu0 %v319
  %v654 = vpop.f32.mrf.mxu0
  %v655 = vadd.f32 0.0, %v654
  %v656 = vpop.f32.mrf.mxu0
  %v657 = vadd.f32 0.0, %v656
  %658 = vmatprep.mubr.f32.mxu0 0.0
  %659 = vmatmul.mubr.f32.gmra.mxu0 %v322
  %v660 = vpop.f32.mrf.mxu0
  %v661 = vadd.f32 0.0, %v660
  %v662 = vpop.f32.mrf.mxu0
  %v663 = vadd.f32 0.0, %v662
  %664 = vmatprep.mubr.f32.mxu0 0.0
  %665 = vmatmul.mubr.f32.gmra.mxu0 %v325
  %v666 = vpop.f32.mrf.mxu0
  %v667 = vadd.f32 0.0, %v666
  %v668 = vpop.f32.mrf.mxu0
  %v669 = vadd.f32 0.0, %v668
  %670 = vmatprep.mubr.f32.mxu0 0.0
  %671 = vmatmul.mubr.f32.gmra.mxu0 %v328
  %v672 = vpop.f32.mrf.mxu0
  %v673 = vadd.f32 0.0, %v672
  %v674 = vpop.f32.mrf.mxu0
  %v675 = vadd.f32 0.0, %v674
  %676 = vmatprep.mubr.f32.mxu0 0.0
  %677 = vmatmul.mubr.f32.gmra.mxu0 %v331
  %v678 = vpop.f32.mrf.mxu0
  %v679 = vadd.f32 0.0, %v678
  %v680 = vpop.f32.mrf.mxu0
  %v681 = vadd.f32 0.0, %v680
  %682 = vmatprep.mubr.f32.mxu0 0.0
  %683 = vmatmul.mubr.f32.gmra.mxu0 %v334
  %v684 = vpop.f32.mrf.mxu0
  %v685 = vadd.f32 0.0, %v684
  %v686 = vpop.f32.mrf.mxu0
  %v687 = vadd.f32 0.0, %v686
  %688 = vmatprep.mubr.f32.mxu0 0.0
  %689 = vmatmul.mubr.f32.gmra.mxu0 %v337
  %v690 = vpop.f32.mrf.mxu0
  %v691 = vadd.f32 0.0, %v690
  %v692 = vpop.f32.mrf.mxu0
  %v693 = vadd.f32 0.0, %v692
  %694 = vmatprep.mubr.f32.mxu0 0.0
  %695 = vmatmul.mubr.f32.gmra.mxu0 %v340
  %v696 = vpop.f32.mrf.mxu0
  %v697 = vadd.f32 0.0, %v696
  %v698 = vpop.f32.mrf.mxu0
  %v699 = vadd.f32 0.0, %v698
  %700 = vmatprep.mubr.f32.mxu0 0.0
  %701 = vmatmul.mubr.f32.gmra.mxu0 %v343
  %v702 = vpop.f32.mrf.mxu0
  %v703 = vadd.f32 0.0, %v702
  %v704 = vpop.f32.mrf.mxu0
  %v705 = vadd.f32 0.0, %v704
  %706 = vmatprep.mubr.f32.mxu0 0.0
  %707 = vmatmul.mubr.f32.gmra.mxu0 %v346
  %v708 = vpop.f32.mrf.mxu0
  %v709 = vadd.f32 0.0, %v708
  %v710 = vpop.f32.mrf.mxu0
  %v711 = vadd.f32 0.0, %v710
  %712 = vmatprep.mubr.f32.mxu0 0.0
  %713 = vmatmul.mubr.f32.gmra.mxu0 %v349
  %v714 = vpop.f32.mrf.mxu0
  %v715 = vadd.f32 0.0, %v714
  %v716 = vpop.f32.mrf.mxu0
  %v717 = vadd.f32 0.0, %v716
  %718 = vmatprep.mubr.f32.mxu0 0.0
  %719 = vmatmul.mubr.f32.gmra.mxu0 %v352
  %v720 = vpop.f32.mrf.mxu0
  %v721 = vadd.f32 0.0, %v720
  %v722 = vpop.f32.mrf.mxu0
  %v723 = vadd.f32 0.0, %v722
  %724 = vmatprep.mubr.f32.mxu0 0.0
  %725 = vmatmul.mubr.f32.gmra.mxu0 %v355
  %v726 = vpop.f32.mrf.mxu0
  %v727 = vadd.f32 0.0, %v726
  %v728 = vpop.f32.mrf.mxu0
  %v729 = vadd.f32 0.0, %v728
  %730 = vmatprep.mubr.f32.mxu0 0.0
  %731 = vmatmul.mubr.f32.gmra.mxu0 %v358
  %v732 = vpop.f32.mrf.mxu0
  %v733 = vadd.f32 0.0, %v732
  %v734 = vpop.f32.mrf.mxu0
  %v735 = vadd.f32 0.0, %v734
  %736 = vmatprep.mubr.f32.mxu0 0.0
  %737 = vmatmul.mubr.f32.gmra.mxu0 %v361
  %v738 = vpop.f32.mrf.mxu0
  %v739 = vadd.f32 0.0, %v738
  %v740 = vpop.f32.mrf.mxu0
  %v741 = vadd.f32 0.0, %v740
  %742 = vmatprep.mubr.f32.mxu0 0.0
  %743 = vmatmul.mubr.f32.gmra.mxu0 %v364
  %v744 = vpop.f32.mrf.mxu0
  %v745 = vadd.f32 0.0, %v744
  %v746 = vpop.f32.mrf.mxu0
  %v747 = vadd.f32 0.0, %v746
  %748 = vmatprep.mubr.f32.mxu0 0.0
  %749 = vmatmul.mubr.f32.gmra.mxu0 %v367
  %v750 = vpop.f32.mrf.mxu0
  %v751 = vadd.f32 0.0, %v750
  %v752 = vpop.f32.mrf.mxu0
  %v753 = vadd.f32 0.0, %v752
  %754 = vmatprep.mubr.f32.mxu0 0.0
  %755 = vmatmul.mubr.f32.gmra.mxu0 %v370
  %v756 = vpop.f32.mrf.mxu0
  %v757 = vadd.f32 0.0, %v756
  %v758 = vpop.f32.mrf.mxu0
  %v759 = vadd.f32 0.0, %v758
  %760 = vmatprep.mubr.f32.mxu0 0.0
  %761 = vmatmul.mubr.f32.gmra.mxu0 %v373
  %v762 = vpop.f32.mrf.mxu0
  %v763 = vadd.f32 0.0, %v762
  %v764 = vpop.f32.mrf.mxu0
  %v765 = vadd.f32 0.0, %v764
  %766 = vmatprep.mubr.f32.mxu0 0.0
  %767 = vmatmul.mubr.f32.gmra.mxu0 %v376
  %v768 = vpop.f32.mrf.mxu0
  %v769 = vadd.f32 0.0, %v768
  %v770 = vpop.f32.mrf.mxu0
  %v771 = vadd.f32 0.0, %v770
  %772 = vmatprep.mubr.f32.mxu0 0.0
  %773 = vmatmul.mubr.f32.gmra.mxu0 %v379
  %v774 = vpop.f32.mrf.mxu0
  %v775 = vadd.f32 0.0, %v774
  %v776 = vpop.f32.mrf.mxu0
  %v777 = vadd.f32 0.0, %v776
  %778 = vmatprep.mubr.f32.mxu0 0.0
  %779 = vmatmul.mubr.f32.gmra.mxu0 %v382
  %v780 = vpop.f32.mrf.mxu0
  %v781 = vadd.f32 0.0, %v780
  %v782 = vpop.f32.mrf.mxu0
  %v783 = vadd.f32 0.0, %v782
  %784 = vdwg.mxu0
  %785 = vmatprep.subr.mxu0 0.0
  %786 = vmatpush1.xpose.msra.mxu0 %v526
  %787 = vmatprep.subr.mxu0 0.0
  %788 = vmatpush1.xpose.msra.mxu0 %v523
  %789 = vmatprep.subr.mxu0 0.0
  %790 = vmatpush1.xpose.msra.mxu0 %v520
  %791 = vmatprep.subr.mxu0 0.0
  %792 = vmatpush1.xpose.msra.mxu0 %v517
  %793 = vmatprep.subr.mxu0 0.0
  %794 = vmatpush1.xpose.msra.mxu0 %v514
  %795 = vmatprep.subr.mxu0 0.0
  %796 = vmatpush1.xpose.msra.mxu0 %v511
  %797 = vmatprep.subr.mxu0 0.0
  %798 = vmatpush1.xpose.msra.mxu0 %v508
  %799 = vmatprep.subr.mxu0 0.0
  %800 = vmatpush1.xpose.msra.mxu0 %v505
  %801 = vmatprep.subr.mxu0 0.0
  %802 = vmatpush1.xpose.msra.mxu0 %v502
  %803 = vmatprep.subr.mxu0 0.0
  %804 = vmatpush1.xpose.msra.mxu0 %v499
  %805 = vmatprep.subr.mxu0 0.0
  %806 = vmatpush1.xpose.msra.mxu0 %v496
  %807 = vmatprep.subr.mxu0 0.0
  %808 = vmatpush1.xpose.msra.mxu0 %v493
  %809 = vmatprep.subr.mxu0 0.0
  %810 = vmatpush1.xpose.msra.mxu0 %v490
  %811 = vmatprep.subr.mxu0 0.0
  %812 = vmatpush1.xpose.msra.mxu0 %v487
  %813 = vmatprep.subr.mxu0 0.0
  %814 = vmatpush1.xpose.msra.mxu0 %v484
  %815 = vmatprep.subr.mxu0 0.0
  %816 = vmatpush1.xpose.msra.mxu0 %v481
  %817 = vmatprep.subr.mxu0 0.0
  %818 = vmatpush2.xpose.msra.mxu0 0.0
  %819 = vmatprep.subr.mxu0 0.0
  %820 = vmatpush2.xpose.msra.mxu0 0.0
  %821 = vmatprep.subr.mxu0 0.0
  %822 = vmatpush2.xpose.msra.mxu0 0.0
  %823 = vmatprep.subr.mxu0 0.0
  %824 = vmatpush2.xpose.msra.mxu0 0.0
  %825 = vmatprep.subr.mxu0 0.0
  %826 = vmatpush2.xpose.msra.mxu0 0.0
  %827 = vmatprep.subr.mxu0 0.0
  %828 = vmatpush2.xpose.msra.mxu0 0.0
  %829 = vmatprep.subr.mxu0 0.0
  %830 = vmatpush2.xpose.msra.mxu0 0.0
  %831 = vmatprep.subr.mxu0 0.0
  %832 = vmatpush2.xpose.msra.mxu0 0.0
  %833 = vmatprep.subr.mxu0 0.0
  %834 = vmatpush2.xpose.msra.mxu0 0.0
  %835 = vmatprep.subr.mxu0 0.0
  %836 = vmatpush2.xpose.msra.mxu0 0.0
  %837 = vmatprep.subr.mxu0 0.0
  %838 = vmatpush2.xpose.msra.mxu0 0.0
  %839 = vmatprep.subr.mxu0 0.0
  %840 = vmatpush2.xpose.msra.mxu0 0.0
  %841 = vmatprep.subr.mxu0 0.0
  %842 = vmatpush2.xpose.msra.mxu0 0.0
  %843 = vmatprep.subr.mxu0 0.0
  %844 = vmatpush2.xpose.msra.mxu0 0.0
  %845 = vmatprep.subr.mxu0 0.0
  %846 = vmatpush2.xpose.msra.mxu0 0.0
  %847 = vmatprep.subr.mxu0 0.0
  %848 = vmatpush2.xpose.msra.mxu0 0.0
  %849 = vmatprep.mubr.f32.mxu0 0.0
  %850 = vmatmul.mubr.f32.gmra.mxu0 %v289
  %v851 = vpop.f32.mrf.mxu0
  %v852 = vadd.f32 0.0, %v851
  %v853 = vpop.f32.mrf.mxu0
  %854 = vmatprep.mubr.f32.mxu0 0.0
  %855 = vmatmul.mubr.f32.gmra.mxu0 %v292
  %v856 = vpop.f32.mrf.mxu0
  %v857 = vadd.f32 0.0, %v856
  %v858 = vpop.f32.mrf.mxu0
  %859 = vmatprep.mubr.f32.mxu0 0.0
  %860 = vmatmul.mubr.f32.gmra.mxu0 %v295
  %v861 = vpop.f32.mrf.mxu0
  %v862 = vadd.f32 0.0, %v861
  %v863 = vpop.f32.mrf.mxu0
  %864 = vmatprep.mubr.f32.mxu0 0.0
  %865 = vmatmul.mubr.f32.gmra.mxu0 %v298
  %v866 = vpop.f32.mrf.mxu0
  %v867 = vadd.f32 0.0, %v866
  %v868 = vpop.f32.mrf.mxu0
  %869 = vmatprep.mubr.f32.mxu0 0.0
  %870 = vmatmul.mubr.f32.gmra.mxu0 %v301
  %v871 = vpop.f32.mrf.mxu0
  %v872 = vadd.f32 0.0, %v871
  %v873 = vpop.f32.mrf.mxu0
  %874 = vmatprep.mubr.f32.mxu0 0.0
  %875 = vmatmul.mubr.f32.gmra.mxu0 %v304
  %v876 = vpop.f32.mrf.mxu0
  %v877 = vadd.f32 0.0, %v876
  %v878 = vpop.f32.mrf.mxu0
  %879 = vmatprep.mubr.f32.mxu0 0.0
  %880 = vmatmul.mubr.f32.gmra.mxu0 %v307
  %v881 = vpop.f32.mrf.mxu0
  %v882 = vadd.f32 0.0, %v881
  %v883 = vpop.f32.mrf.mxu0
  %884 = vmatprep.mubr.f32.mxu0 0.0
  %885 = vmatmul.mubr.f32.gmra.mxu0 %v310
  %v886 = vpop.f32.mrf.mxu0
  %v887 = vadd.f32 0.0, %v886
  %v888 = vpop.f32.mrf.mxu0
  %889 = vmatprep.mubr.f32.mxu0 0.0
  %890 = vmatmul.mubr.f32.gmra.mxu0 %v313
  %v891 = vpop.f32.mrf.mxu0
  %v892 = vadd.f32 0.0, %v891
  %v893 = vpop.f32.mrf.mxu0
  %894 = vmatprep.mubr.f32.mxu0 0.0
  %895 = vmatmul.mubr.f32.gmra.mxu0 %v316
  %v896 = vpop.f32.mrf.mxu0
  %v897 = vadd.f32 0.0, %v896
  %v898 = vpop.f32.mrf.mxu0
  %899 = vmatprep.mubr.f32.mxu0 0.0
  %900 = vmatmul.mubr.f32.gmra.mxu0 %v319
  %v901 = vpop.f32.mrf.mxu0
  %v902 = vadd.f32 0.0, %v901
  %v903 = vpop.f32.mrf.mxu0
  %904 = vmatprep.mubr.f32.mxu0 0.0
  %905 = vmatmul.mubr.f32.gmra.mxu0 %v322
  %v906 = vpop.f32.mrf.mxu0
  %v907 = vadd.f32 0.0, %v906
  %v908 = vpop.f32.mrf.mxu0
  %909 = vmatprep.mubr.f32.mxu0 0.0
  %910 = vmatmul.mubr.f32.gmra.mxu0 %v325
  %v911 = vpop.f32.mrf.mxu0
  %v912 = vadd.f32 0.0, %v911
  %v913 = vpop.f32.mrf.mxu0
  %914 = vmatprep.mubr.f32.mxu0 0.0
  %915 = vmatmul.mubr.f32.gmra.mxu0 %v328
  %v916 = vpop.f32.mrf.mxu0
  %v917 = vadd.f32 0.0, %v916
  %v918 = vpop.f32.mrf.mxu0
  %919 = vmatprep.mubr.f32.mxu0 0.0
  %920 = vmatmul.mubr.f32.gmra.mxu0 %v331
  %v921 = vpop.f32.mrf.mxu0
  %v922 = vadd.f32 0.0, %v921
  %v923 = vpop.f32.mrf.mxu0
  %924 = vmatprep.mubr.f32.mxu0 0.0
  %925 = vmatmul.mubr.f32.gmra.mxu0 %v334
  %v926 = vpop.f32.mrf.mxu0
  %v927 = vadd.f32 0.0, %v926
  %v928 = vpop.f32.mrf.mxu0
  %929 = vmatprep.mubr.f32.mxu0 0.0
  %930 = vmatmul.mubr.f32.gmra.mxu0 %v337
  %v931 = vpop.f32.mrf.mxu0
  %v932 = vadd.f32 0.0, %v931
  %v933 = vpop.f32.mrf.mxu0
  %934 = vmatprep.mubr.f32.mxu0 0.0
  %935 = vmatmul.mubr.f32.gmra.mxu0 %v340
  %v936 = vpop.f32.mrf.mxu0
  %v937 = vadd.f32 0.0, %v936
  %v938 = vpop.f32.mrf.mxu0
  %939 = vmatprep.mubr.f32.mxu0 0.0
  %940 = vmatmul.mubr.f32.gmra.mxu0 %v343
  %v941 = vpop.f32.mrf.mxu0
  %v942 = vadd.f32 0.0, %v941
  %v943 = vpop.f32.mrf.mxu0
  %944 = vmatprep.mubr.f32.mxu0 0.0
  %945 = vmatmul.mubr.f32.gmra.mxu0 %v346
  %v946 = vpop.f32.mrf.mxu0
  %v947 = vadd.f32 0.0, %v946
  %v948 = vpop.f32.mrf.mxu0
  %949 = vmatprep.mubr.f32.mxu0 0.0
  %950 = vmatmul.mubr.f32.gmra.mxu0 %v349
  %v951 = vpop.f32.mrf.mxu0
  %v952 = vadd.f32 0.0, %v951
  %v953 = vpop.f32.mrf.mxu0
  %954 = vmatprep.mubr.f32.mxu0 0.0
  %955 = vmatmul.mubr.f32.gmra.mxu0 %v352
  %v956 = vpop.f32.mrf.mxu0
  %v957 = vadd.f32 0.0, %v956
  %v958 = vpop.f32.mrf.mxu0
  %959 = vmatprep.mubr.f32.mxu0 0.0
  %960 = vmatmul.mubr.f32.gmra.mxu0 %v355
  %v961 = vpop.f32.mrf.mxu0
  %v962 = vadd.f32 0.0, %v961
  %v963 = vpop.f32.mrf.mxu0
  %964 = vmatprep.mubr.f32.mxu0 0.0
  %965 = vmatmul.mubr.f32.gmra.mxu0 %v358
  %v966 = vpop.f32.mrf.mxu0
  %v967 = vadd.f32 0.0, %v966
  %v968 = vpop.f32.mrf.mxu0
  %969 = vmatprep.mubr.f32.mxu0 0.0
  %970 = vmatmul.mubr.f32.gmra.mxu0 %v361
  %v971 = vpop.f32.mrf.mxu0
  %v972 = vadd.f32 0.0, %v971
  %v973 = vpop.f32.mrf.mxu0
  %974 = vmatprep.mubr.f32.mxu0 0.0
  %975 = vmatmul.mubr.f32.gmra.mxu0 %v364
  %v976 = vpop.f32.mrf.mxu0
  %v977 = vadd.f32 0.0, %v976
  %v978 = vpop.f32.mrf.mxu0
  %979 = vmatprep.mubr.f32.mxu0 0.0
  %980 = vmatmul.mubr.f32.gmra.mxu0 %v367
  %v981 = vpop.f32.mrf.mxu0
  %v982 = vadd.f32 0.0, %v981
  %v983 = vpop.f32.mrf.mxu0
  %984 = vmatprep.mubr.f32.mxu0 0.0
  %985 = vmatmul.mubr.f32.gmra.mxu0 %v370
  %v986 = vpop.f32.mrf.mxu0
  %v987 = vadd.f32 0.0, %v986
  %v988 = vpop.f32.mrf.mxu0
  %989 = vmatprep.mubr.f32.mxu0 0.0
  %990 = vmatmul.mubr.f32.gmra.mxu0 %v373
  %v991 = vpop.f32.mrf.mxu0
  %v992 = vadd.f32 0.0, %v991
  %v993 = vpop.f32.mrf.mxu0
  %994 = vmatprep.mubr.f32.mxu0 0.0
  %995 = vmatmul.mubr.f32.gmra.mxu0 %v376
  %v996 = vpop.f32.mrf.mxu0
  %v997 = vadd.f32 0.0, %v996
  %v998 = vpop.f32.mrf.mxu0
  %999 = vmatprep.mubr.f32.mxu0 0.0
  %1000 = vmatmul.mubr.f32.gmra.mxu0 %v379
  %v1001 = vpop.f32.mrf.mxu0
  %v1002 = vadd.f32 0.0, %v1001
  %v1003 = vpop.f32.mrf.mxu0
  %1004 = vmatprep.mubr.f32.mxu0 0.0
  %1005 = vmatmul.mubr.f32.gmra.mxu0 %v382
  %v1006 = vpop.f32.mrf.mxu0
  %v1007 = vadd.f32 0.0, %v1006
  %v1008 = vpop.f32.mrf.mxu0
  %1009 = vdwg.mxu0
  %v1010 = vadd.f32 %v111, %v595
  %v1011 = vadd.f32 %v112, %v597
  %v1012 = vadd.f32 %v113, %v852
  %v1013 = vadd.f32 %v114, %v601
  %v1014 = vadd.f32 %v115, %v603
  %v1015 = vadd.f32 %v116, %v857
  %v1016 = vadd.f32 %v117, %v607
  %v1017 = vadd.f32 %v118, %v609
  %v1018 = vadd.f32 %v119, %v862
  %v1019 = vadd.f32 %v120, %v613
  %v1020 = vadd.f32 %v121, %v615
  %v1021 = vadd.f32 %v122, %v867
  %v1022 = vadd.f32 %v123, %v619
  %v1023 = vadd.f32 %v124, %v621
  %v1024 = vadd.f32 %v125, %v872
  %v1025 = vadd.f32 %v126, %v625
  %v1026 = vadd.f32 %v127, %v627
  %v1027 = vadd.f32 %v128, %v877
  %v1028 = vadd.f32 %v129, %v631
  %v1029 = vadd.f32 %v130, %v633
  %v1030 = vadd.f32 %v131, %v882
  %v1031 = vadd.f32 %v132, %v637
  %v1032 = vadd.f32 %v133, %v639
  %v1033 = vadd.f32 %v134, %v887
  %v1034 = vadd.f32 %v135, %v643
  %v1035 = vadd.f32 %v136, %v645
  %v1036 = vadd.f32 %v137, %v892
  %v1037 = vadd.f32 %v138, %v649
  %v1038 = vadd.f32 %v139, %v651
  %v1039 = vadd.f32 %v140, %v897
  %v1040 = vadd.f32 %v141, %v655
  %v1041 = vadd.f32 %v142, %v657
  %v1042 = vadd.f32 %v143, %v902
  %v1043 = vadd.f32 %v144, %v661
  %v1044 = vadd.f32 %v145, %v663
  %v1045 = vadd.f32 %v146, %v907
  %v1046 = vadd.f32 %v147, %v667
  %v1047 = vadd.f32 %v148, %v669
  %v1048 = vadd.f32 %v149, %v912
  %v1049 = vadd.f32 %v150, %v673
  %v1050 = vadd.f32 %v151, %v675
  %v1051 = vadd.f32 %v152, %v917
  %v1052 = vadd.f32 %v153, %v679
  %v1053 = vadd.f32 %v154, %v681
  %v1054 = vadd.f32 %v155, %v922
  %v1055 = vadd.f32 %v156, %v685
  %v1056 = vadd.f32 %v157, %v687
  %v1057 = vadd.f32 %v158, %v927
  %v1058 = vadd.f32 %v159, %v691
  %v1059 = vadd.f32 %v160, %v693
  %v1060 = vadd.f32 %v161, %v932
  %v1061 = vadd.f32 %v162, %v697
  %v1062 = vadd.f32 %v163, %v699
  %v1063 = vadd.f32 %v164, %v937
  %v1064 = vadd.f32 %v165, %v703
  %v1065 = vadd.f32 %v166, %v705
  %v1066 = vadd.f32 %v167, %v942
  %v1067 = vadd.f32 %v168, %v709
  %v1068 = vadd.f32 %v169, %v711
  %v1069 = vadd.f32 %v170, %v947
  %v1070 = vadd.f32 %v171, %v715
  %v1071 = vadd.f32 %v172, %v717
  %v1072 = vadd.f32 %v173, %v952
  %v1073 = vadd.f32 %v174, %v721
  %v1074 = vadd.f32 %v175, %v723
  %v1075 = vadd.f32 %v176, %v957
  %v1076 = vadd.f32 %v177, %v727
  %v1077 = vadd.f32 %v178, %v729
  %v1078 = vadd.f32 %v179, %v962
  %v1079 = vadd.f32 %v180, %v733
  %v1080 = vadd.f32 %v181, %v735
  %v1081 = vadd.f32 %v182, %v967
  %v1082 = vadd.f32 %v183, %v739
  %v1083 = vadd.f32 %v184, %v741
  %v1084 = vadd.f32 %v185, %v972
  %v1085 = vadd.f32 %v186, %v745
  %v1086 = vadd.f32 %v187, %v747
  %v1087 = vadd.f32 %v188, %v977
  %v1088 = vadd.f32 %v189, %v751
  %v1089 = vadd.f32 %v190, %v753
  %v1090 = vadd.f32 %v191, %v982
  %v1091 = vadd.f32 %v192, %v757
  %v1092 = vadd.f32 %v193, %v759
  %v1093 = vadd.f32 %v194, %v987
  %v1094 = vadd.f32 %v195, %v763
  %v1095 = vadd.f32 %v196, %v765
  %v1096 = vadd.f32 %v197, %v992
  %v1097 = vadd.f32 %v198, %v769
  %v1098 = vadd.f32 %v199, %v771
  %v1099 = vadd.f32 %v200, %v997
  %v1100 = vadd.f32 %v201, %v775
  %v1101 = vadd.f32 %v202, %v777
  %v1102 = vadd.f32 %v203, %v1002
  %v1103 = vadd.f32 %v204, %v781
  %v1104 = vadd.f32 %v205, %v783
  %v1105 = vadd.f32 %v206, %v1007
  %1106 = vst [vmem:[#allocation2] sm:$0xff] %v1010
  %1107 = vst [vmem:[#allocation2 + $0x8] sm:$0xff] %v1011
  %1108 = vst [vmem:[#allocation2 + $0x10] sm:$0xff] %v1012
  %1109 = vst [vmem:[#allocation2 + $0x18] sm:$0xff] %v1013
  %1110 = vst [vmem:[#allocation2 + $0x20] sm:$0xff] %v1014
  %1111 = vst [vmem:[#allocation2 + $0x28] sm:$0xff] %v1015
  %1112 = vst [vmem:[#allocation2 + $0x30] sm:$0xff] %v1016
  %1113 = vst [vmem:[#allocation2 + $0x38] sm:$0xff] %v1017
  %1114 = vst [vmem:[#allocation2 + $0x40] sm:$0xff] %v1018
  %1115 = vst [vmem:[#allocation2 + $0x48] sm:$0xff] %v1019
  %1116 = vst [vmem:[#allocation2 + $0x50] sm:$0xff] %v1020
  %1117 = vst [vmem:[#allocation2 + $0x58] sm:$0xff] %v1021
  %1118 = vst [vmem:[#allocation2 + $0x60] sm:$0xff] %v1022
  %1119 = vst [vmem:[#allocation2 + $0x68] sm:$0xff] %v1023
  %1120 = vst [vmem:[#allocation2 + $0x70] sm:$0xff] %v1024
  %1121 = vst [vmem:[#allocation2 + $0x78] sm:$0xff] %v1025
  %1122 = vst [vmem:[#allocation2 + $0x80] sm:$0xff] %v1026
  %1123 = vst [vmem:[#allocation2 + $0x88] sm:$0xff] %v1027
  %1124 = vst [vmem:[#allocation2 + $0x90] sm:$0xff] %v1028
  %1125 = vst [vmem:[#allocation2 + $0x98] sm:$0xff] %v1029
  %1126 = vst [vmem:[#allocation2 + $0xa0] sm:$0xff] %v1030
  %1127 = vst [vmem:[#allocation2 + $0xa8] sm:$0xff] %v1031
  %1128 = vst [vmem:[#allocation2 + $0xb0] sm:$0xff] %v1032
  %1129 = vst [vmem:[#allocation2 + $0xb8] sm:$0xff] %v1033
  %1130 = vst [vmem:[#allocation2 + $0xc0] sm:$0xff] %v1034
  %1131 = vst [vmem:[#allocation2 + $0xc8] sm:$0xff] %v1035
  %1132 = vst [vmem:[#allocation2 + $0xd0] sm:$0xff] %v1036
  %1133 = vst [vmem:[#allocation2 + $0xd8] sm:$0xff] %v1037
  %1134 = vst [vmem:[#allocation2 + $0xe0] sm:$0xff] %v1038
  %1135 = vst [vmem:[#allocation2 + $0xe8] sm:$0xff] %v1039
  %1136 = vst [vmem:[#allocation2 + $0xf0] sm:$0xff] %v1040
  %1137 = vst [vmem:[#allocation2 + $0xf8] sm:$0xff] %v1041
  %1138 = vst [vmem:[#allocation2 + $0x100] sm:$0xff] %v1042
  %1139 = vst [vmem:[#allocation2 + $0x108] sm:$0xff] %v1043
  %1140 = vst [vmem:[#allocation2 + $0x110] sm:$0xff] %v1044
  %1141 = vst [vmem:[#allocation2 + $0x118] sm:$0xff] %v1045
  %1142 = vst [vmem:[#allocation2 + $0x120] sm:$0xff] %v1046
  %1143 = vst [vmem:[#allocation2 + $0x128] sm:$0xff] %v1047
  %1144 = vst [vmem:[#allocation2 + $0x130] sm:$0xff] %v1048
  %1145 = vst [vmem:[#allocation2 + $0x138] sm:$0xff] %v1049
  %1146 = vst [vmem:[#allocation2 + $0x140] sm:$0xff] %v1050
  %1147 = vst [vmem:[#allocation2 + $0x148] sm:$0xff] %v1051
  %1148 = vst [vmem:[#allocation2 + $0x150] sm:$0xff] %v1052
  %1149 = vst [vmem:[#allocation2 + $0x158] sm:$0xff] %v1053
  %1150 = vst [vmem:[#allocation2 + $0x160] sm:$0xff] %v1054
  %1151 = vst [vmem:[#allocation2 + $0x168] sm:$0xff] %v1055
  %1152 = vst [vmem:[#allocation2 + $0x170] sm:$0xff] %v1056
  %1153 = vst [vmem:[#allocation2 + $0x178] sm:$0xff] %v1057
  %1154 = vst [vmem:[#allocation2 + $0x180] sm:$0xff] %v1058
  %1155 = vst [vmem:[#allocation2 + $0x188] sm:$0xff] %v1059
  %1156 = vst [vmem:[#allocation2 + $0x190] sm:$0xff] %v1060
  %1157 = vst [vmem:[#allocation2 + $0x198] sm:$0xff] %v1061
  %1158 = vst [vmem:[#allocation2 + $0x1a0] sm:$0xff] %v1062
  %1159 = vst [vmem:[#allocation2 + $0x1a8] sm:$0xff] %v1063
  %1160 = vst [vmem:[#allocation2 + $0x1b0] sm:$0xff] %v1064
  %1161 = vst [vmem:[#allocation2 + $0x1b8] sm:$0xff] %v1065
  %1162 = vst [vmem:[#allocation2 + $0x1c0] sm:$0xff] %v1066
  %1163 = vst [vmem:[#allocation2 + $0x1c8] sm:$0xff] %v1067
  %1164 = vst [vmem:[#allocation2 + $0x1d0] sm:$0xff] %v1068
  %1165 = vst [vmem:[#allocation2 + $0x1d8] sm:$0xff] %v1069
  %1166 = vst [vmem:[#allocation2 + $0x1e0] sm:$0xff] %v1070
  %1167 = vst [vmem:[#allocation2 + $0x1e8] sm:$0xff] %v1071
  %1168 = vst [vmem:[#allocation2 + $0x1f0] sm:$0xff] %v1072
  %1169 = vst [vmem:[#allocation2 + $0x1f8] sm:$0xff] %v1073
  %1170 = vst [vmem:[#allocation2 + $0x200] sm:$0xff] %v1074
  %1171 = vst [vmem:[#allocation2 + $0x208] sm:$0xff] %v1075
  %1172 = vst [vmem:[#allocation2 + $0x210] sm:$0xff] %v1076
  %1173 = vst [vmem:[#allocation2 + $0x218] sm:$0xff] %v1077
  %1174 = vst [vmem:[#allocation2 + $0x220] sm:$0xff] %v1078
  %1175 = vst [vmem:[#allocation2 + $0x228] sm:$0xff] %v1079
  %1176 = vst [vmem:[#allocation2 + $0x230] sm:$0xff] %v1080
  %1177 = vst [vmem:[#allocation2 + $0x238] sm:$0xff] %v1081
  %1178 = vst [vmem:[#allocation2 + $0x240] sm:$0xff] %v1082
  %1179 = vst [vmem:[#allocation2 + $0x248] sm:$0xff] %v1083
  %1180 = vst [vmem:[#allocation2 + $0x250] sm:$0xff] %v1084
  %1181 = vst [vmem:[#allocation2 + $0x258] sm:$0xff] %v1085
  %1182 = vst [vmem:[#allocation2 + $0x260] sm:$0xff] %v1086
  %1183 = vst [vmem:[#allocation2 + $0x268] sm:$0xff] %v1087
  %1184 = vst [vmem:[#allocation2 + $0x270] sm:$0xff] %v1088
  %1185 = vst [vmem:[#allocation2 + $0x278] sm:$0xff] %v1089
  %1186 = vst [vmem:[#allocation2 + $0x280] sm:$0xff] %v1090
  %1187 = vst [vmem:[#allocation2 + $0x288] sm:$0xff] %v1091
  %1188 = vst [vmem:[#allocation2 + $0x290] sm:$0xff] %v1092
  %1189 = vst [vmem:[#allocation2 + $0x298] sm:$0xff] %v1093
  %1190 = vst [vmem:[#allocation2 + $0x2a0] sm:$0xff] %v1094
  %1191 = vst [vmem:[#allocation2 + $0x2a8] sm:$0xff] %v1095
  %1192 = vst [vmem:[#allocation2 + $0x2b0] sm:$0xff] %v1096
  %1193 = vst [vmem:[#allocation2 + $0x2b8] sm:$0xff] %v1097
  %1194 = vst [vmem:[#allocation2 + $0x2c0] sm:$0xff] %v1098
  %1195 = vst [vmem:[#allocation2 + $0x2c8] sm:$0xff] %v1099
  %1196 = vst [vmem:[#allocation2 + $0x2d0] sm:$0xff] %v1100
  %1197 = vst [vmem:[#allocation2 + $0x2d8] sm:$0xff] %v1101
  %1198 = vst [vmem:[#allocation2 + $0x2e0] sm:$0xff] %v1102
  %1199 = vst [vmem:[#allocation2 + $0x2e8] sm:$0xff] %v1103
  %1200 = vst [vmem:[#allocation2 + $0x2f0] sm:$0xff] %v1104
  %1201 = vst [vmem:[#allocation2 + $0x2f8] sm:$0xff] %v1105
  // Predicated region
  $region14: #{attention_forward.3} parent=0 // pred_check
    %p1202 = pneg %p11
  $region15: #{attention_forward.3} parent=0 // pred_check_branch
    %1204 = sbr.rel (%p1202) target = $region17
  $region16: #{attention_forward.3} parent=0 // pred_region
    %v1205 = vld [vmem:[#allocation2] sm:$0xff]
    %v1206 = vld [vmem:[#allocation2 + $0x8] sm:$0xff]
    %v1207 = vld [vmem:[#allocation2 + $0x10] sm:$0xff]
    %v1208 = vld [vmem:[#allocation2 + $0x18] sm:$0xff]
    %v1209 = vld [vmem:[#allocation2 + $0x20] sm:$0xff]
    %v1210 = vld [vmem:[#allocation2 + $0x28] sm:$0xff]
    %v1211 = vld [vmem:[#allocation2 + $0x30] sm:$0xff]
    %v1212 = vld [vmem:[#allocation2 + $0x38] sm:$0xff]
    %v1213 = vld [vmem:[#allocation2 + $0x40] sm:$0xff]
    %v1214 = vld [vmem:[#allocation2 + $0x48] sm:$0xff]
    %v1215 = vld [vmem:[#allocation2 + $0x50] sm:$0xff]
    %v1216 = vld [vmem:[#allocation2 + $0x58] sm:$0xff]
    %v1217 = vld [vmem:[#allocation2 + $0x60] sm:$0xff]
    %v1218 = vld [vmem:[#allocation2 + $0x68] sm:$0xff]
    %v1219 = vld [vmem:[#allocation2 + $0x70] sm:$0xff]
    %v1220 = vld [vmem:[#allocation2 + $0x78] sm:$0xff]
    %v1221 = vld [vmem:[#allocation2 + $0x80] sm:$0xff]
    %v1222 = vld [vmem:[#allocation2 + $0x88] sm:$0xff]
    %v1223 = vld [vmem:[#allocation2 + $0x90] sm:$0xff]
    %v1224 = vld [vmem:[#allocation2 + $0x98] sm:$0xff]
    %v1225 = vld [vmem:[#allocation2 + $0xa0] sm:$0xff]
    %v1226 = vld [vmem:[#allocation2 + $0xa8] sm:$0xff]
    %v1227 = vld [vmem:[#allocation2 + $0xb0] sm:$0xff]
    %v1228 = vld [vmem:[#allocation2 + $0xb8] sm:$0xff]
    %v1229 = vld [vmem:[#allocation2 + $0xc0] sm:$0xff]
    %v1230 = vld [vmem:[#allocation2 + $0xc8] sm:$0xff]
    %v1231 = vld [vmem:[#allocation2 + $0xd0] sm:$0xff]
    %v1232 = vld [vmem:[#allocation2 + $0xd8] sm:$0xff]
    %v1233 = vld [vmem:[#allocation2 + $0xe0] sm:$0xff]
    %v1234 = vld [vmem:[#allocation2 + $0xe8] sm:$0xff]
    %v1235 = vld [vmem:[#allocation2 + $0xf0] sm:$0xff]
    %v1236 = vld [vmem:[#allocation2 + $0xf8] sm:$0xff]
    %v1237 = vld [vmem:[#allocation2 + $0x100] sm:$0xff]
    %v1238 = vld [vmem:[#allocation2 + $0x108] sm:$0xff]
    %v1239 = vld [vmem:[#allocation2 + $0x110] sm:$0xff]
    %v1240 = vld [vmem:[#allocation2 + $0x118] sm:$0xff]
    %v1241 = vld [vmem:[#allocation2 + $0x120] sm:$0xff]
    %v1242 = vld [vmem:[#allocation2 + $0x128] sm:$0xff]
    %v1243 = vld [vmem:[#allocation2 + $0x130] sm:$0xff]
    %v1244 = vld [vmem:[#allocation2 + $0x138] sm:$0xff]
    %v1245 = vld [vmem:[#allocation2 + $0x140] sm:$0xff]
    %v1246 = vld [vmem:[#allocation2 + $0x148] sm:$0xff]
    %v1247 = vld [vmem:[#allocation2 + $0x150] sm:$0xff]
    %v1248 = vld [vmem:[#allocation2 + $0x158] sm:$0xff]
    %v1249 = vld [vmem:[#allocation2 + $0x160] sm:$0xff]
    %v1250 = vld [vmem:[#allocation2 + $0x168] sm:$0xff]
    %v1251 = vld [vmem:[#allocation2 + $0x170] sm:$0xff]
    %v1252 = vld [vmem:[#allocation2 + $0x178] sm:$0xff]
    %v1253 = vld [vmem:[#allocation2 + $0x180] sm:$0xff]
    %v1254 = vld [vmem:[#allocation2 + $0x188] sm:$0xff]
    %v1255 = vld [vmem:[#allocation2 + $0x190] sm:$0xff]
    %v1256 = vld [vmem:[#allocation2 + $0x198] sm:$0xff]
    %v1257 = vld [vmem:[#allocation2 + $0x1a0] sm:$0xff]
    %v1258 = vld [vmem:[#allocation2 + $0x1a8] sm:$0xff]
    %v1259 = vld [vmem:[#allocation2 + $0x1b0] sm:$0xff]
    %v1260 = vld [vmem:[#allocation2 + $0x1b8] sm:$0xff]
    %v1261 = vld [vmem:[#allocation2 + $0x1c0] sm:$0xff]
    %v1262 = vld [vmem:[#allocation2 + $0x1c8] sm:$0xff]
    %v1263 = vld [vmem:[#allocation2 + $0x1d0] sm:$0xff]
    %v1264 = vld [vmem:[#allocation2 + $0x1d8] sm:$0xff]
    %v1265 = vld [vmem:[#allocation2 + $0x1e0] sm:$0xff]
    %v1266 = vld [vmem:[#allocation2 + $0x1e8] sm:$0xff]
    %v1267 = vld [vmem:[#allocation2 + $0x1f0] sm:$0xff]
    %v1268 = vld [vmem:[#allocation2 + $0x1f8] sm:$0xff]
    %v1269 = vld [vmem:[#allocation2 + $0x200] sm:$0xff]
    %v1270 = vld [vmem:[#allocation2 + $0x208] sm:$0xff]
    %v1271 = vld [vmem:[#allocation2 + $0x210] sm:$0xff]
    %v1272 = vld [vmem:[#allocation2 + $0x218] sm:$0xff]
    %v1273 = vld [vmem:[#allocation2 + $0x220] sm:$0xff]
    %v1274 = vld [vmem:[#allocation2 + $0x228] sm:$0xff]
    %v1275 = vld [vmem:[#allocation2 + $0x230] sm:$0xff]
    %v1276 = vld [vmem:[#allocation2 + $0x238] sm:$0xff]
    %v1277 = vld [vmem:[#allocation2 + $0x240] sm:$0xff]
    %v1278 = vld [vmem:[#allocation2 + $0x248] sm:$0xff]
    %v1279 = vld [vmem:[#allocation2 + $0x250] sm:$0xff]
    %v1280 = vld [vmem:[#allocation2 + $0x258] sm:$0xff]
    %v1281 = vld [vmem:[#allocation2 + $0x260] sm:$0xff]
    %v1282 = vld [vmem:[#allocation2 + $0x268] sm:$0xff]
    %v1283 = vld [vmem:[#allocation2 + $0x270] sm:$0xff]
    %v1284 = vld [vmem:[#allocation2 + $0x278] sm:$0xff]
    %v1285 = vld [vmem:[#allocation2 + $0x280] sm:$0xff]
    %v1286 = vld [vmem:[#allocation2 + $0x288] sm:$0xff]
    %v1287 = vld [vmem:[#allocation2 + $0x290] sm:$0xff]
    %v1288 = vld [vmem:[#allocation2 + $0x298] sm:$0xff]
    %v1289 = vld [vmem:[#allocation2 + $0x2a0] sm:$0xff]
    %v1290 = vld [vmem:[#allocation2 + $0x2a8] sm:$0xff]
    %v1291 = vld [vmem:[#allocation2 + $0x2b0] sm:$0xff]
    %v1292 = vld [vmem:[#allocation2 + $0x2b8] sm:$0xff]
    %v1293 = vld [vmem:[#allocation2 + $0x2c0] sm:$0xff]
    %v1294 = vld [vmem:[#allocation2 + $0x2c8] sm:$0xff]
    %v1295 = vld [vmem:[#allocation2 + $0x2d0] sm:$0xff]
    %v1296 = vld [vmem:[#allocation2 + $0x2d8] sm:$0xff]
    %v1297 = vld [vmem:[#allocation2 + $0x2e0] sm:$0xff]
    %v1298 = vld [vmem:[#allocation2 + $0x2e8] sm:$0xff]
    %v1299 = vld [vmem:[#allocation2 + $0x2f0] sm:$0xff]
    %v1300 = vld [vmem:[#allocation2 + $0x2f8] sm:$0xff]
    %v1301 = vpack.c.bf16 %v1208, %v1205
    %v1302 = vpack.c.bf16 %v1209, %v1206
    %v1303 = vpack.c.bf16 %v1210, %v1207
    %v1304 = vpack.c.bf16 %v1214, %v1211
    %v1305 = vpack.c.bf16 %v1215, %v1212
    %v1306 = vpack.c.bf16 %v1216, %v1213
    %v1307 = vpack.c.bf16 %v1220, %v1217
    %v1308 = vpack.c.bf16 %v1221, %v1218
    %v1309 = vpack.c.bf16 %v1222, %v1219
    %v1310 = vpack.c.bf16 %v1226, %v1223
    %v1311 = vpack.c.bf16 %v1227, %v1224
    %v1312 = vpack.c.bf16 %v1228, %v1225
    %v1313 = vpack.c.bf16 %v1232, %v1229
    %v1314 = vpack.c.bf16 %v1233, %v1230
    %v1315 = vpack.c.bf16 %v1234, %v1231
    %v1316 = vpack.c.bf16 %v1238, %v1235
    %v1317 = vpack.c.bf16 %v1239, %v1236
    %v1318 = vpack.c.bf16 %v1240, %v1237
    %v1319 = vpack.c.bf16 %v1244, %v1241
    %v1320 = vpack.c.bf16 %v1245, %v1242
    %v1321 = vpack.c.bf16 %v1246, %v1243
    %v1322 = vpack.c.bf16 %v1250, %v1247
    %v1323 = vpack.c.bf16 %v1251, %v1248
    %v1324 = vpack.c.bf16 %v1252, %v1249
    %v1325 = vpack.c.bf16 %v1256, %v1253
    %v1326 = vpack.c.bf16 %v1257, %v1254
    %v1327 = vpack.c.bf16 %v1258, %v1255
    %v1328 = vpack.c.bf16 %v1262, %v1259
    %v1329 = vpack.c.bf16 %v1263, %v1260
    %v1330 = vpack.c.bf16 %v1264, %v1261
    %v1331 = vpack.c.bf16 %v1268, %v1265
    %v1332 = vpack.c.bf16 %v1269, %v1266
    %v1333 = vpack.c.bf16 %v1270, %v1267
    %v1334 = vpack.c.bf16 %v1274, %v1271
    %v1335 = vpack.c.bf16 %v1275, %v1272
    %v1336 = vpack.c.bf16 %v1276, %v1273
    %v1337 = vpack.c.bf16 %v1280, %v1277
    %v1338 = vpack.c.bf16 %v1281, %v1278
    %v1339 = vpack.c.bf16 %v1282, %v1279
    %v1340 = vpack.c.bf16 %v1286, %v1283
    %v1341 = vpack.c.bf16 %v1287, %v1284
    %v1342 = vpack.c.bf16 %v1288, %v1285
    %v1343 = vpack.c.bf16 %v1292, %v1289
    %v1344 = vpack.c.bf16 %v1293, %v1290
    %v1345 = vpack.c.bf16 %v1294, %v1291
    %v1346 = vpack.c.bf16 %v1298, %v1295
    %v1347 = vpack.c.bf16 %v1299, %v1296
    %v1348 = vpack.c.bf16 %v1300, %v1297
    %v1397 = vunpack.c.l.b16 %v1301
    %v1398 = vunpack.c.l.b16 %v1302
    %v1399 = vunpack.c.l.b16 %v1303
    %v1400 = vunpack.c.h.b16 %v1301
    %v1401 = vunpack.c.h.b16 %v1302
    %v1402 = vunpack.c.h.b16 %v1303
    %v1403 = vunpack.c.l.b16 %v1304
    %v1404 = vunpack.c.l.b16 %v1305
    %v1405 = vunpack.c.l.b16 %v1306
    %v1406 = vunpack.c.h.b16 %v1304
    %v1407 = vunpack.c.h.b16 %v1305
    %v1408 = vunpack.c.h.b16 %v1306
    %v1409 = vunpack.c.l.b16 %v1307
    %v1410 = vunpack.c.l.b16 %v1308
    %v1411 = vunpack.c.l.b16 %v1309
    %v1412 = vunpack.c.h.b16 %v1307
    %v1413 = vunpack.c.h.b16 %v1308
    %v1414 = vunpack.c.h.b16 %v1309
    %v1415 = vunpack.c.l.b16 %v1310
    %v1416 = vunpack.c.l.b16 %v1311
    %v1417 = vunpack.c.l.b16 %v1312
    %v1418 = vunpack.c.h.b16 %v1310
    %v1419 = vunpack.c.h.b16 %v1311
    %v1420 = vunpack.c.h.b16 %v1312
    %v1421 = vunpack.c.l.b16 %v1313
    %v1422 = vunpack.c.l.b16 %v1314
    %v1423 = vunpack.c.l.b16 %v1315
    %v1424 = vunpack.c.h.b16 %v1313
    %v1425 = vunpack.c.h.b16 %v1314
    %v1426 = vunpack.c.h.b16 %v1315
    %v1427 = vunpack.c.l.b16 %v1316
    %v1428 = vunpack.c.l.b16 %v1317
    %v1429 = vunpack.c.l.b16 %v1318
    %v1430 = vunpack.c.h.b16 %v1316
    %v1431 = vunpack.c.h.b16 %v1317
    %v1432 = vunpack.c.h.b16 %v1318
    %v1433 = vunpack.c.l.b16 %v1319
    %v1434 = vunpack.c.l.b16 %v1320
    %v1435 = vunpack.c.l.b16 %v1321
    %v1436 = vunpack.c.h.b16 %v1319
    %v1437 = vunpack.c.h.b16 %v1320
    %v1438 = vunpack.c.h.b16 %v1321
    %v1439 = vunpack.c.l.b16 %v1322
    %v1440 = vunpack.c.l.b16 %v1323
    %v1441 = vunpack.c.l.b16 %v1324
    %v1442 = vunpack.c.h.b16 %v1322
    %v1443 = vunpack.c.h.b16 %v1323
    %v1444 = vunpack.c.h.b16 %v1324
    %v1445 = vunpack.c.l.b16 %v1325
    %v1446 = vunpack.c.l.b16 %v1326
    %v1447 = vunpack.c.l.b16 %v1327
    %v1448 = vunpack.c.h.b16 %v1325
    %v1449 = vunpack.c.h.b16 %v1326
    %v1450 = vunpack.c.h.b16 %v1327
    %v1451 = vunpack.c.l.b16 %v1328
    %v1452 = vunpack.c.l.b16 %v1329
    %v1453 = vunpack.c.l.b16 %v1330
    %v1454 = vunpack.c.h.b16 %v1328
    %v1455 = vunpack.c.h.b16 %v1329
    %v1456 = vunpack.c.h.b16 %v1330
    %v1457 = vunpack.c.l.b16 %v1331
    %v1458 = vunpack.c.l.b16 %v1332
    %v1459 = vunpack.c.l.b16 %v1333
    %v1460 = vunpack.c.h.b16 %v1331
    %v1461 = vunpack.c.h.b16 %v1332
    %v1462 = vunpack.c.h.b16 %v1333
    %v1463 = vunpack.c.l.b16 %v1334
    %v1464 = vunpack.c.l.b16 %v1335
    %v1465 = vunpack.c.l.b16 %v1336
    %v1466 = vunpack.c.h.b16 %v1334
    %v1467 = vunpack.c.h.b16 %v1335
    %v1468 = vunpack.c.h.b16 %v1336
    %v1469 = vunpack.c.l.b16 %v1337
    %v1470 = vunpack.c.l.b16 %v1338
    %v1471 = vunpack.c.l.b16 %v1339
    %v1472 = vunpack.c.h.b16 %v1337
    %v1473 = vunpack.c.h.b16 %v1338
    %v1474 = vunpack.c.h.b16 %v1339
    %v1475 = vunpack.c.l.b16 %v1340
    %v1476 = vunpack.c.l.b16 %v1341
    %v1477 = vunpack.c.l.b16 %v1342
    %v1478 = vunpack.c.h.b16 %v1340
    %v1479 = vunpack.c.h.b16 %v1341
    %v1480 = vunpack.c.h.b16 %v1342
    %v1481 = vunpack.c.l.b16 %v1343
    %v1482 = vunpack.c.l.b16 %v1344
    %v1483 = vunpack.c.l.b16 %v1345
    %v1484 = vunpack.c.h.b16 %v1343
    %v1485 = vunpack.c.h.b16 %v1344
    %v1486 = vunpack.c.h.b16 %v1345
    %v1487 = vunpack.c.l.b16 %v1346
    %v1488 = vunpack.c.l.b16 %v1347
    %v1489 = vunpack.c.l.b16 %v1348
    %v1490 = vunpack.c.h.b16 %v1346
    %v1491 = vunpack.c.h.b16 %v1347
    %v1492 = vunpack.c.h.b16 %v1348
    %v1493 = vpack.c.b16 %v1398, %v1397
    %v1494 = vpack.c.b16 %v1399, %v1399
    %v1495 = vpack.c.b16 %v1401, %v1400
    %v1496 = vpack.c.b16 %v1402, %v1402
    %v1497 = vpack.c.b16 %v1404, %v1403
    %v1498 = vpack.c.b16 %v1405, %v1405
    %v1499 = vpack.c.b16 %v1407, %v1406
    %v1500 = vpack.c.b16 %v1408, %v1408
    %v1501 = vpack.c.b16 %v1410, %v1409
    %v1502 = vpack.c.b16 %v1411, %v1411
    %v1503 = vpack.c.b16 %v1413, %v1412
    %v1504 = vpack.c.b16 %v1414, %v1414
    %v1505 = vpack.c.b16 %v1416, %v1415
    %v1506 = vpack.c.b16 %v1417, %v1417
    %v1507 = vpack.c.b16 %v1419, %v1418
    %v1508 = vpack.c.b16 %v1420, %v1420
    %v1509 = vpack.c.b16 %v1422, %v1421
    %v1510 = vpack.c.b16 %v1423, %v1423
    %v1511 = vpack.c.b16 %v1425, %v1424
    %v1512 = vpack.c.b16 %v1426, %v1426
    %v1513 = vpack.c.b16 %v1428, %v1427
    %v1514 = vpack.c.b16 %v1429, %v1429
    %v1515 = vpack.c.b16 %v1431, %v1430
    %v1516 = vpack.c.b16 %v1432, %v1432
    %v1517 = vpack.c.b16 %v1434, %v1433
    %v1518 = vpack.c.b16 %v1435, %v1435
    %v1519 = vpack.c.b16 %v1437, %v1436
    %v1520 = vpack.c.b16 %v1438, %v1438
    %v1521 = vpack.c.b16 %v1440, %v1439
    %v1522 = vpack.c.b16 %v1441, %v1441
    %v1523 = vpack.c.b16 %v1443, %v1442
    %v1524 = vpack.c.b16 %v1444, %v1444
    %v1525 = vpack.c.b16 %v1446, %v1445
    %v1526 = vpack.c.b16 %v1447, %v1447
    %v1527 = vpack.c.b16 %v1449, %v1448
    %v1528 = vpack.c.b16 %v1450, %v1450
    %v1529 = vpack.c.b16 %v1452, %v1451
    %v1530 = vpack.c.b16 %v1453, %v1453
    %v1531 = vpack.c.b16 %v1455, %v1454
    %v1532 = vpack.c.b16 %v1456, %v1456
    %v1533 = vpack.c.b16 %v1458, %v1457
    %v1534 = vpack.c.b16 %v1459, %v1459
    %v1535 = vpack.c.b16 %v1461, %v1460
    %v1536 = vpack.c.b16 %v1462, %v1462
    %v1537 = vpack.c.b16 %v1464, %v1463
    %v1538 = vpack.c.b16 %v1465, %v1465
    %v1539 = vpack.c.b16 %v1467, %v1466
    %v1540 = vpack.c.b16 %v1468, %v1468
    %v1541 = vpack.c.b16 %v1470, %v1469
    %v1542 = vpack.c.b16 %v1471, %v1471
    %v1543 = vpack.c.b16 %v1473, %v1472
    %v1544 = vpack.c.b16 %v1474, %v1474
    %v1545 = vpack.c.b16 %v1476, %v1475
    %v1546 = vpack.c.b16 %v1477, %v1477
    %v1547 = vpack.c.b16 %v1479, %v1478
    %v1548 = vpack.c.b16 %v1480, %v1480
    %v1549 = vpack.c.b16 %v1482, %v1481
    %v1550 = vpack.c.b16 %v1483, %v1483
    %v1551 = vpack.c.b16 %v1485, %v1484
    %v1552 = vpack.c.b16 %v1486, %v1486
    %v1553 = vpack.c.b16 %v1488, %v1487
    %v1554 = vpack.c.b16 %v1489, %v1489
    %v1555 = vpack.c.b16 %v1491, %v1490
    %v1556 = vpack.c.b16 %v1492, %v1492
    %1621 = vst [vmem:[%s2] sm:$0xff] %v1493
    %1622 = vst [vmem:[%s2 + $0x8] sm:$0xf] %v1494
    %1623 = vst [vmem:[%s2 + $0xc] sm:$0xff] %v1495
    %1624 = vst [vmem:[%s2 + $0x14] sm:$0xf] %v1496
    %1625 = vst [vmem:[%s2 + $0x18] sm:$0xff] %v1497
    %1626 = vst [vmem:[%s2 + $0x20] sm:$0xf] %v1498
    %1627 = vst [vmem:[%s2 + $0x24] sm:$0xff] %v1499
    %1628 = vst [vmem:[%s2 + $0x2c] sm:$0xf] %v1500
    %1629 = vst [vmem:[%s2 + $0x30] sm:$0xff] %v1501
    %1630 = vst [vmem:[%s2 + $0x38] sm:$0xf] %v1502
    %1631 = vst [vmem:[%s2 + $0x3c] sm:$0xff] %v1503
    %1632 = vst [vmem:[%s2 + $0x44] sm:$0xf] %v1504
    %1633 = vst [vmem:[%s2 + $0x48] sm:$0xff] %v1505
    %1634 = vst [vmem:[%s2 + $0x50] sm:$0xf] %v1506
    %1635 = vst [vmem:[%s2 + $0x54] sm:$0xff] %v1507
    %1636 = vst [vmem:[%s2 + $0x5c] sm:$0xf] %v1508
    %1637 = vst [vmem:[%s2 + $0x60] sm:$0xff] %v1509
    %1638 = vst [vmem:[%s2 + $0x68] sm:$0xf] %v1510
    %1639 = vst [vmem:[%s2 + $0x6c] sm:$0xff] %v1511
    %1640 = vst [vmem:[%s2 + $0x74] sm:$0xf] %v1512
    %1641 = vst [vmem:[%s2 + $0x78] sm:$0xff] %v1513
    %1642 = vst [vmem:[%s2 + $0x80] sm:$0xf] %v1514
    %1643 = vst [vmem:[%s2 + $0x84] sm:$0xff] %v1515
    %1644 = vst [vmem:[%s2 + $0x8c] sm:$0xf] %v1516
    %1645 = vst [vmem:[%s2 + $0x90] sm:$0xff] %v1517
    %1646 = vst [vmem:[%s2 + $0x98] sm:$0xf] %v1518
    %1647 = vst [vmem:[%s2 + $0x9c] sm:$0xff] %v1519
    %1648 = vst [vmem:[%s2 + $0xa4] sm:$0xf] %v1520
    %1649 = vst [vmem:[%s2 + $0xa8] sm:$0xff] %v1521
    %1650 = vst [vmem:[%s2 + $0xb0] sm:$0xf] %v1522
    %1651 = vst [vmem:[%s2 + $0xb4] sm:$0xff] %v1523
    %1652 = vst [vmem:[%s2 + $0xbc] sm:$0xf] %v1524
    %1653 = vst [vmem:[%s2 + $0xc0] sm:$0xff] %v1525
    %1654 = vst [vmem:[%s2 + $0xc8] sm:$0xf] %v1526
    %1655 = vst [vmem:[%s2 + $0xcc] sm:$0xff] %v1527
    %1656 = vst [vmem:[%s2 + $0xd4] sm:$0xf] %v1528
    %1657 = vst [vmem:[%s2 + $0xd8] sm:$0xff] %v1529
    %1658 = vst [vmem:[%s2 + $0xe0] sm:$0xf] %v1530
    %1659 = vst [vmem:[%s2 + $0xe4] sm:$0xff] %v1531
    %1660 = vst [vmem:[%s2 + $0xec] sm:$0xf] %v1532
    %1661 = vst [vmem:[%s2 + $0xf0] sm:$0xff] %v1533
    %1662 = vst [vmem:[%s2 + $0xf8] sm:$0xf] %v1534
    %1663 = vst [vmem:[%s2 + $0xfc] sm:$0xff] %v1535
    %1664 = vst [vmem:[%s2 + $0x104] sm:$0xf] %v1536
    %1665 = vst [vmem:[%s2 + $0x108] sm:$0xff] %v1537
    %1666 = vst [vmem:[%s2 + $0x110] sm:$0xf] %v1538
    %1667 = vst [vmem:[%s2 + $0x114] sm:$0xff] %v1539
    %1668 = vst [vmem:[%s2 + $0x11c] sm:$0xf] %v1540
    %1669 = vst [vmem:[%s2 + $0x120] sm:$0xff] %v1541
    %1670 = vst [vmem:[%s2 + $0x128] sm:$0xf] %v1542
    %1671 = vst [vmem:[%s2 + $0x12c] sm:$0xff] %v1543
    %1672 = vst [vmem:[%s2 + $0x134] sm:$0xf] %v1544
    %1673 = vst [vmem:[%s2 + $0x138] sm:$0xff] %v1545
    %1674 = vst [vmem:[%s2 + $0x140] sm:$0xf] %v1546
    %1675 = vst [vmem:[%s2 + $0x144] sm:$0xff] %v1547
    %1676 = vst [vmem:[%s2 + $0x14c] sm:$0xf] %v1548
    %1677 = vst [vmem:[%s2 + $0x150] sm:$0xff] %v1549
    %1678 = vst [vmem:[%s2 + $0x158] sm:$0xf] %v1550
    %1679 = vst [vmem:[%s2 + $0x15c] sm:$0xff] %v1551
    %1680 = vst [vmem:[%s2 + $0x164] sm:$0xf] %v1552
    %1681 = vst [vmem:[%s2 + $0x168] sm:$0xff] %v1553
    %1682 = vst [vmem:[%s2 + $0x170] sm:$0xf] %v1554
    %1683 = vst [vmem:[%s2 + $0x174] sm:$0xff] %v1555
    %1684 = vst [vmem:[%s2 + $0x17c] sm:$0xf] %v1556
  $region17: #{attention_forward.3} parent=0 // pred_fallthru
    _
  // Predicated region
  $region18: #{attention_forward.3} parent=0 // pred_check
    _
  $region19: #{attention_forward.3} parent=0 // pred_check_branch
    %1686 = sbr.rel (0) target = $region21
  $region20: #{attention_forward.3} parent=0 // pred_region
    _
  $region21: #{attention_forward.3} parent=0 // pred_fallthru
    _
  // Predicated region
  $region22: #{attention_forward.3} parent=0 // pred_check
    _
  $region23: #{attention_forward.3} parent=0 // pred_check_branch
    %1688 = sbr.rel (0) target = $region25
  $region24: #{attention_forward.3} parent=0 // pred_region
    _
  $region25: #{attention_forward.3} parent=0 // pred_fallthru
    _

// kernel: attention_forward.4
$region0: #{attention_forward.4}
  #allocation0 [shape = 'u32[]', space=smem, size = 0x4, offset = 0x4, fixed_abs, tag = 'smem constant byte address 0x4 - core index']
  #allocation1 [shape = 'u32[144,128]{1,0:T(1,128)}', space=vmem, size = 0x12000, scoped, tag = 'internal scratch']
  #allocation2 [shape = 'f32[128,4]{1,0:T(8,128)}', space=vmem, size = 0x10000, scoped, tag = 'scratch operand']
  #allocation3 [shape = 'f32[128,4]{1,0:T(8,128)}', space=vmem, size = 0x10000, scoped, tag = 'scratch operand']
  #allocation4 [shape = 'f32[128,128]{1,0:T(8,128)}', space=vmem, size = 0x10000, scoped, tag = 'scratch operand']
  %s0 = inlined_call_operand.vmem [shape: bf16[2,128,384], index: 0, kind: input, shape index: {}, may-alias: {0,1,2}]
  %s1 = inlined_call_operand.vmem [shape: bf16[2,128,384], index: 1, kind: input, shape index: {}, may-alias: {0,1,2}]
  %s2 = inlined_call_operand.vmem [shape: bf16[2,128,384], index: 2, kind: input, shape index: {}, may-alias: {0,1,2}]
  %s3 = inlined_call_operand.vmem [shape: f32[2,128,128], index: 3, kind: output, shape index: {}]
  %s4 = sld [smem:[#allocation0]]
  $region176: #{attention_forward.4} parent=0
    _
  %s6 = ssub.s32 1, %s4
  %s7 = scalar_select 0, %s6, %s4
  $region1: #{attention_forward.4} parent=0
    #allocation5 [shape = 'u8[65536]{0}', space=vmem, size = 0x10000, scoped, tag = 'input window, operand 0']
    #allocation6 [shape = 'u8[65536]{0}', space=vmem, size = 0x10000, scoped, tag = 'input window, operand 1']
    #allocation7 [shape = 'u8[65536]{0}', space=vmem, size = 0x10000, scoped, tag = 'input window, operand 2']
    loop: start=0, step=1, limit=4
    $region2: #{attention_forward.4} parent=1 // loop_pre_header
      _
    $region3: #{attention_forward.4} parent=1 // loop_header
      %s9 = sphi 0, %s13
      %p10 = scmp.ge.s32.totalorder %s9, 4
      %s16 = sphi 0, %s35
      %s17 = sphi 0, %s31
      %s18 = sphi 0, %s27
      %s19 = sphi 0, %s16
      %s20 = sphi 0, %s17
      %s21 = sphi 0, %s18
      %s22 = sphi 0, %s19
      %s23 = sphi 0, %s20
      %s24 = sphi 0, %s21
      %s40 = sphi 0, %s42
      %s43 = sphi 0, %s40
      %s44 = sphi 0, %s43
      %s60 = sphi 0, %s44
      %s68 = sphi 0, %s70
      %s71 = sphi 0, %s68
      %s72 = sphi 0, %s71
      %s88 = sphi 0, %s72
      %s96 = sphi 0, %s98
      %s99 = sphi 0, %s96
      %s100 = sphi 0, %s99
      %s116 = sphi 0, %s100
      %s124 = sphi 0, %s126
      %s127 = sphi 0, %s124
      %s128 = sphi 0, %s127
      %s144 = sphi 0, %s128
    $region4: #{attention_forward.4} parent=1 // loop_header_branch
      %12 = sbr.rel (%p10) target = $region8
    $region5: #{attention_forward.4} parent=1 // loop_body
      %s14 = ssub.s32 %s9, 1
      %s15 = ssub.s32 %s9, 2
      %s25 = sadd.s32 1, %s18
      %p26 = scmp.ge.s32.totalorder %s25, 1
      %s27 = scalar_select %p26, 0, %s25
      %s28 = sadd.s32 1, %s17
      %s29 = scalar_select %p26, %s28, %s17
      %p30 = scmp.ge.s32.totalorder %s29, 1
      %s31 = scalar_select %p30, 0, %s29
      %s32 = sadd.s32 1, %s16
      %s33 = scalar_select %p30, %s32, %s16
      %p34 = scmp.ge.s32.totalorder %s33, 2
      %s35 = scalar_select %p34, 0, %s33
      %s36 = ssub.s32 %s16, %s35
      %s37 = ssub.s32 %s17, %s31
      %s38 = sor.u32 %s36, %s37
      %p39 = scmp.eq.s32.totalorder %s38, 0
      %s41 = sadd.s32 %s40, 1
      %s42 = scalar_select %p39, %s40, %s41
      %p45 = pneg %p39
      %p46 = scmp.eq.s32.totalorder %s9, 1
      %p47 = por %p45, %p46
      %p48 = scmp.ne.s32.totalorder %s40, %s43
      %p49 = scmp.eq.s32.totalorder %s9, 0
      %p50 = por %p48, %p49
      %p51 = scmp.ne.s32.totalorder %s40, %s43
      %p52 = scmp.eq.s32.totalorder %s14, 1
      %p53 = por %p51, %p52
      %p54 = scmp.ne.s32.totalorder %s43, %s44
      %p55 = scmp.eq.s32.totalorder %s14, 0
      %p56 = por %p54, %p55
      %p57 = scmp.ne.s32.totalorder %s43, %s44
      %p58 = scmp.eq.s32.totalorder %s15, 1
      %p59 = por %p57, %p58
      %p61 = scmp.ne.s32.totalorder %s44, %s60
      %p62 = scmp.eq.s32.totalorder %s15, 0
      %p63 = por %p61, %p62
      %s64 = ssub.s32 %s16, %s35
      %s65 = ssub.s32 %s18, %s27
      %s66 = sor.u32 %s64, %s65
      %p67 = scmp.eq.s32.totalorder %s66, 0
      %s69 = sadd.s32 %s68, 1
      %s70 = scalar_select %p67, %s68, %s69
      %p73 = pneg %p67
      %p74 = scmp.eq.s32.totalorder %s9, 1
      %p75 = por %p73, %p74
      %p76 = scmp.ne.s32.totalorder %s68, %s71
      %p77 = scmp.eq.s32.totalorder %s9, 0
      %p78 = por %p76, %p77
      %p79 = scmp.ne.s32.totalorder %s68, %s71
      %p80 = scmp.eq.s32.totalorder %s14, 1
      %p81 = por %p79, %p80
      %p82 = scmp.ne.s32.totalorder %s71, %s72
      %p83 = scmp.eq.s32.totalorder %s14, 0
      %p84 = por %p82, %p83
      %p85 = scmp.ne.s32.totalorder %s71, %s72
      %p86 = scmp.eq.s32.totalorder %s15, 1
      %p87 = por %p85, %p86
      %p89 = scmp.ne.s32.totalorder %s72, %s88
      %p90 = scmp.eq.s32.totalorder %s15, 0
      %p91 = por %p89, %p90
      %s92 = ssub.s32 %s16, %s35
      %s93 = ssub.s32 %s18, %s27
      %s94 = sor.u32 %s92, %s93
      %p95 = scmp.eq.s32.totalorder %s94, 0
      %s97 = sadd.s32 %s96, 1
      %s98 = scalar_select %p95, %s96, %s97
      %p101 = pneg %p95
      %p102 = scmp.eq.s32.totalorder %s9, 1
      %p103 = por %p101, %p102
      %p104 = scmp.ne.s32.totalorder %s96, %s99
      %p105 = scmp.eq.s32.totalorder %s9, 0
      %p106 = por %p104, %p105
      %p107 = scmp.ne.s32.totalorder %s96, %s99
      %p108 = scmp.eq.s32.totalorder %s14, 1
      %p109 = por %p107, %p108
      %p110 = scmp.ne.s32.totalorder %s99, %s100
      %p111 = scmp.eq.s32.totalorder %s14, 0
      %p112 = por %p110, %p111
      %p113 = scmp.ne.s32.totalorder %s99, %s100
      %p114 = scmp.eq.s32.totalorder %s15, 1
      %p115 = por %p113, %p114
      %p117 = scmp.ne.s32.totalorder %s100, %s116
      %p118 = scmp.eq.s32.totalorder %s15, 0
      %p119 = por %p117, %p118
      %s120 = ssub.s32 %s16, %s35
      %s121 = ssub.s32 %s17, %s31
      %s122 = sor.u32 %s120, %s121
      %p123 = scmp.eq.s32.totalorder %s122, 0
      %s125 = sadd.s32 %s124, 1
      %s126 = scalar_select %p123, %s124, %s125
      %p129 = pneg %p123
      %p130 = scmp.eq.s32.totalorder %s9, 1
      %p131 = por %p129, %p130
      %p132 = scmp.ne.s32.totalorder %s124, %s127
      %p133 = scmp.eq.s32.totalorder %s9, 0
      %p134 = por %p132, %p133
      %p135 = scmp.ne.s32.totalorder %s124, %s127
      %p136 = scmp.eq.s32.totalorder %s14, 1
      %p137 = por %p135, %p136
      %p138 = scmp.ne.s32.totalorder %s127, %s128
      %p139 = scmp.eq.s32.totalorder %s14, 0
      %p140 = por %p138, %p139
      %p141 = scmp.ne.s32.totalorder %s127, %s128
      %p142 = scmp.eq.s32.totalorder %s15, 1
      %p143 = por %p141, %p142
      %p145 = scmp.ne.s32.totalorder %s128, %s144
      %p146 = scmp.eq.s32.totalorder %s15, 0
      %p147 = por %p145, %p146
      %p148 = scmp.le.s32.totalorder 1, %s9
      %p149 = scmp.lt.s32.totalorder %s9, 3
      %p150 = pnand %p148, %p149
      %p151 = pneg %p150
      // Predicated region
      $region9: #{attention_forward.4} parent=5 // pred_check
        _
      $region10: #{attention_forward.4} parent=5 // pred_check_branch
        %153 = sbr.rel (%p150) target = $region12
      $region11: #{attention_forward.4} parent=5 // pred_region
        %s154 = ssub.s32 %s9, 1
      $region12: #{attention_forward.4} parent=5 // pred_fallthru
        _
      %p155 = scmp.lt.s32.totalorder %s9, 2
      // Predicated region
      $region13: #{attention_forward.4} parent=5 // pred_check
        %p156 = pneg %p155
      $region14: #{attention_forward.4} parent=5 // pred_check_branch
        %158 = sbr.rel (%p156) target = $region16
      $region15: #{attention_forward.4} parent=5 // pred_region
        // Predicated region
        $region17: #{attention_forward.4} parent=15 // pred_check
          %p159 = pneg %p50
        $region18: #{attention_forward.4} parent=15 // pred_check_branch
          %161 = sbr.rel (%p159) target = $region20
        $region19: #{attention_forward.4} parent=15 // pred_region
          %s162 = sand.u32 %s40, 1
          %s163 = sand.u32 %s40, 1
          %s164 = smul.addr %s163, 64
          %s165 = scalar_lea.vmem [#allocation5], %s164
          %s166 = smul.u32 16, %s17
          %s167 = smul.addr %s166, 3
          %s168 = smul.addr %s16, 48
          %s169 = sadd.s32 %s167, %s168
          %s170 = smul.addr %s169, 4
          %s171 = scalar_lea.vmem %s0, %s170
          // Predicated region
          $region21: #{attention_forward.4} parent=19 // pred_check
            _
          $region22: #{attention_forward.4} parent=19 // pred_check_branch
            %173 = sbr.rel (0) target = $region24
          $region23: #{attention_forward.4} parent=19 // pred_region
            // Predicated region
            $region25: #{attention_forward.4} parent=23 // pred_check
              _
            $region26: #{attention_forward.4} parent=23 // pred_check_branch
              %175 = sbr.rel target = $region28
            $region27: #{attention_forward.4} parent=23 // pred_region
              // Predicated region
              $region40: #{attention_forward.4} parent=27 // pred_check
                _
              $region41: #{attention_forward.4} parent=27 // pred_check_branch
                %221 = sbr.rel (0) target = $region43
              $region42: #{attention_forward.4} parent=27 // pred_region
                loop: start=0, step=1, limit=1
                $region44: #{attention_forward.4} parent=42 // loop_pre_header
                  _
                $region45: #{attention_forward.4} parent=42 // loop_header
                  %s223 = sphi 0, %s227
                  %p224 = scmp.ge.s32.totalorder %s223, 1
                  %s228 = sphi %s171, %s171
                  %s229 = sphi %s165, %s165
                $region46: #{attention_forward.4} parent=42 // loop_header_branch
                  %226 = sbr.rel (%p224) target = $region50
                $region47: #{attention_forward.4} parent=42 // loop_body
                  _
                $region48: #{attention_forward.4} parent=42 // loop_footer
                  %s227 = sadd.s32 1, %s223
                $region49: #{attention_forward.4} parent=42 // loop_footer_branch
                  %222 = sbr.rel target = $region45
                $region50: #{attention_forward.4} parent=42 // loop_exit
                  _
                %s231 = ssub.s32 16, 1
                loop: start=0, step=1, limit=1
                $region51: #{attention_forward.4} parent=42 // loop_pre_header
                  _
                $region52: #{attention_forward.4} parent=42 // loop_header
                  %s233 = sphi 0, %s237
                  %p234 = scmp.ge.s32.totalorder %s233, 1
                  %s238 = sphi %s171, %s171
                  %s239 = sphi %s165, %s165
                $region53: #{attention_forward.4} parent=42 // loop_header_branch
                  %236 = sbr.rel (%p234) target = $region57
                $region54: #{attention_forward.4} parent=42 // loop_body
                  %v240 = vld [vmem:[%s238] sm:%s231]
                  %241 = vst [vmem:[%s239] sm:%s231] %v240
                  %v242 = vld [vmem:[%s238 + $0xc] sm:%s231]
                  %243 = vst [vmem:[%s239 + $0x4] sm:%s231] %v242
                  %v244 = vld [vmem:[%s238 + $0x18] sm:%s231]
                  %245 = vst [vmem:[%s239 + $0x8] sm:%s231] %v244
                  %v246 = vld [vmem:[%s238 + $0x24] sm:%s231]
                  %247 = vst [vmem:[%s239 + $0xc] sm:%s231] %v246
                  %v248 = vld [vmem:[%s238 + $0x30] sm:%s231]
                  %249 = vst [vmem:[%s239 + $0x10] sm:%s231] %v248
                  %v250 = vld [vmem:[%s238 + $0x3c] sm:%s231]
                  %251 = vst [vmem:[%s239 + $0x14] sm:%s231] %v250
                  %v252 = vld [vmem:[%s238 + $0x48] sm:%s231]
                  %253 = vst [vmem:[%s239 + $0x18] sm:%s231] %v252
                  %v254 = vld [vmem:[%s238 + $0x54] sm:%s231]
                  %255 = vst [vmem:[%s239 + $0x1c] sm:%s231] %v254
                  %v256 = vld [vmem:[%s238 + $0x60] sm:%s231]
                  %257 = vst [vmem:[%s239 + $0x20] sm:%s231] %v256
                  %v258 = vld [vmem:[%s238 + $0x6c] sm:%s231]
                  %259 = vst [vmem:[%s239 + $0x24] sm:%s231] %v258
                  %v260 = vld [vmem:[%s238 + $0x78] sm:%s231]
                  %261 = vst [vmem:[%s239 + $0x28] sm:%s231] %v260
                  %v262 = vld [vmem:[%s238 + $0x84] sm:%s231]
                  %263 = vst [vmem:[%s239 + $0x2c] sm:%s231] %v262
                  %v264 = vld [vmem:[%s238 + $0x90] sm:%s231]
                  %265 = vst [vmem:[%s239 + $0x30] sm:%s231] %v264
                  %v266 = vld [vmem:[%s238 + $0x9c] sm:%s231]
                  %267 = vst [vmem:[%s239 + $0x34] sm:%s231] %v266
                  %v268 = vld [vmem:[%s238 + $0xa8] sm:%s231]
                  %269 = vst [vmem:[%s239 + $0x38] sm:%s231] %v268
                  %v270 = vld [vmem:[%s238 + $0xb4] sm:%s231]
                  %271 = vst [vmem:[%s239 + $0x3c] sm:%s231] %v270
                $region55: #{attention_forward.4} parent=42 // loop_footer
                  %s237 = sadd.s32 1, %s233
                $region56: #{attention_forward.4} parent=42 // loop_footer_branch
                  %232 = sbr.rel target = $region52
                $region57: #{attention_forward.4} parent=42 // loop_exit
                  _
              $region43: #{attention_forward.4} parent=27 // pred_fallthru
                _
            $region28: #{attention_forward.4} parent=23 // pred_fallthru
              _
            // Predicated region
            $region29: #{attention_forward.4} parent=23 // pred_check
              _
            $region30: #{attention_forward.4} parent=23 // pred_check_branch
              %177 = sbr.rel (0) target = $region32
            $region31: #{attention_forward.4} parent=23 // pred_region
              %s179 = ssub.s32 16, 1
              loop: start=0, step=1, limit=1
              $region33: #{attention_forward.4} parent=31 // loop_pre_header
                _
              $region34: #{attention_forward.4} parent=31 // loop_header
                %s181 = sphi 0, %s185
                %p182 = scmp.ge.s32.totalorder %s181, 1
                %s186 = sphi %s171, %s171
                %s187 = sphi %s165, %s165
              $region35: #{attention_forward.4} parent=31 // loop_header_branch
                %184 = sbr.rel (%p182) target = $region39
              $region36: #{attention_forward.4} parent=31 // loop_body
                %v188 = vld [vmem:[%s186] sm:%s179]
                %189 = vst [vmem:[%s187] sm:%s179] %v188
                %v190 = vld [vmem:[%s186 + $0xc] sm:%s179]
                %191 = vst [vmem:[%s187 + $0x4] sm:%s179] %v190
                %v192 = vld [vmem:[%s186 + $0x18] sm:%s179]
                %193 = vst [vmem:[%s187 + $0x8] sm:%s179] %v192
                %v194 = vld [vmem:[%s186 + $0x24] sm:%s179]
                %195 = vst [vmem:[%s187 + $0xc] sm:%s179] %v194
                %v196 = vld [vmem:[%s186 + $0x30] sm:%s179]
                %197 = vst [vmem:[%s187 + $0x10] sm:%s179] %v196
                %v198 = vld [vmem:[%s186 + $0x3c] sm:%s179]
                %199 = vst [vmem:[%s187 + $0x14] sm:%s179] %v198
                %v200 = vld [vmem:[%s186 + $0x48] sm:%s179]
                %201 = vst [vmem:[%s187 + $0x18] sm:%s179] %v200
                %v202 = vld [vmem:[%s186 + $0x54] sm:%s179]
                %203 = vst [vmem:[%s187 + $0x1c] sm:%s179] %v202
                %v204 = vld [vmem:[%s186 + $0x60] sm:%s179]
                %205 = vst [vmem:[%s187 + $0x20] sm:%s179] %v204
                %v206 = vld [vmem:[%s186 + $0x6c] sm:%s179]
                %207 = vst [vmem:[%s187 + $0x24] sm:%s179] %v206
                %v208 = vld [vmem:[%s186 + $0x78] sm:%s179]
                %209 = vst [vmem:[%s187 + $0x28] sm:%s179] %v208
                %v210 = vld [vmem:[%s186 + $0x84] sm:%s179]
                %211 = vst [vmem:[%s187 + $0x2c] sm:%s179] %v210
                %v212 = vld [vmem:[%s186 + $0x90] sm:%s179]
                %213 = vst [vmem:[%s187 + $0x30] sm:%s179] %v212
                %v214 = vld [vmem:[%s186 + $0x9c] sm:%s179]
                %215 = vst [vmem:[%s187 + $0x34] sm:%s179] %v214
                %v216 = vld [vmem:[%s186 + $0xa8] sm:%s179]
                %217 = vst [vmem:[%s187 + $0x38] sm:%s179] %v216
                %v218 = vld [vmem:[%s186 + $0xb4] sm:%s179]
                %219 = vst [vmem:[%s187 + $0x3c] sm:%s179] %v218
              $region37: #{attention_forward.4} parent=31 // loop_footer
                %s185 = sadd.s32 1, %s181
              $region38: #{attention_forward.4} parent=31 // loop_footer_branch
                %180 = sbr.rel target = $region34
              $region39: #{attention_forward.4} parent=31 // loop_exit
                _
            $region32: #{attention_forward.4} parent=23 // pred_fallthru
              _
          $region24: #{attention_forward.4} parent=19 // pred_fallthru
            _
          %272 = vnop
        $region20: #{attention_forward.4} parent=15 // pred_fallthru
          _
        // Predicated region
        $region58: #{attention_forward.4} parent=15 // pred_check
          %p273 = pneg %p78
        $region59: #{attention_forward.4} parent=15 // pred_check_branch
          %275 = sbr.rel (%p273) target = $region61
        $region60: #{attention_forward.4} parent=15 // pred_region
          %s276 = sand.u32 %s68, 1
          %s277 = sand.u32 %s68, 1
          %s278 = smul.addr %s277, 64
          %s279 = scalar_lea.vmem [#allocation6], %s278
          %s280 = smul.u32 16, %s18
          %s281 = smul.addr %s280, 3
          %s282 = sadd.s32 1, %s281
          %s283 = smul.addr %s16, 48
          %s284 = sadd.s32 %s282, %s283
          %s285 = smul.addr %s284, 4
          %s286 = scalar_lea.vmem %s1, %s285
          // Predicated region
          $region62: #{attention_forward.4} parent=60 // pred_check
            _
          $region63: #{attention_forward.4} parent=60 // pred_check_branch
            %288 = sbr.rel (0) target = $region65
          $region64: #{attention_forward.4} parent=60 // pred_region
            // Predicated region
            $region66: #{attention_forward.4} parent=64 // pred_check
              _
            $region67: #{attention_forward.4} parent=64 // pred_check_branch
              %290 = sbr.rel target = $region69
            $region68: #{attention_forward.4} parent=64 // pred_region
              // Predicated region
              $region81: #{attention_forward.4} parent=68 // pred_check
                _
              $region82: #{attention_forward.4} parent=68 // pred_check_branch
                %336 = sbr.rel (0) target = $region84
              $region83: #{attention_forward.4} parent=68 // pred_region
                loop: start=0, step=1, limit=1
                $region85: #{attention_forward.4} parent=83 // loop_pre_header
                  _
                $region86: #{attention_forward.4} parent=83 // loop_header
                  %s338 = sphi 0, %s342
                  %p339 = scmp.ge.s32.totalorder %s338, 1
                  %s343 = sphi %s286, %s286
                  %s344 = sphi %s279, %s279
                $region87: #{attention_forward.4} parent=83 // loop_header_branch
                  %341 = sbr.rel (%p339) target = $region91
                $region88: #{attention_forward.4} parent=83 // loop_body
                  _
                $region89: #{attention_forward.4} parent=83 // loop_footer
                  %s342 = sadd.s32 1, %s338
                $region90: #{attention_forward.4} parent=83 // loop_footer_branch
                  %337 = sbr.rel target = $region86
                $region91: #{attention_forward.4} parent=83 // loop_exit
                  _
                %s346 = ssub.s32 16, 1
                loop: start=0, step=1, limit=1
                $region92: #{attention_forward.4} parent=83 // loop_pre_header
                  _
                $region93: #{attention_forward.4} parent=83 // loop_header
                  %s348 = sphi 0, %s352
                  %p349 = scmp.ge.s32.totalorder %s348, 1
                  %s353 = sphi %s286, %s286
                  %s354 = sphi %s279, %s279
                $region94: #{attention_forward.4} parent=83 // loop_header_branch
                  %351 = sbr.rel (%p349) target = $region98
                $region95: #{attention_forward.4} parent=83 // loop_body
                  %v355 = vld [vmem:[%s353] sm:%s346]
                  %356 = vst [vmem:[%s354] sm:%s346] %v355
                  %v357 = vld [vmem:[%s353 + $0xc] sm:%s346]
                  %358 = vst [vmem:[%s354 + $0x4] sm:%s346] %v357
                  %v359 = vld [vmem:[%s353 + $0x18] sm:%s346]
                  %360 = vst [vmem:[%s354 + $0x8] sm:%s346] %v359
                  %v361 = vld [vmem:[%s353 + $0x24] sm:%s346]
                  %362 = vst [vmem:[%s354 + $0xc] sm:%s346] %v361
                  %v363 = vld [vmem:[%s353 + $0x30] sm:%s346]
                  %364 = vst [vmem:[%s354 + $0x10] sm:%s346] %v363
                  %v365 = vld [vmem:[%s353 + $0x3c] sm:%s346]
                  %366 = vst [vmem:[%s354 + $0x14] sm:%s346] %v365
                  %v367 = vld [vmem:[%s353 + $0x48] sm:%s346]
                  %368 = vst [vmem:[%s354 + $0x18] sm:%s346] %v367
                  %v369 = vld [vmem:[%s353 + $0x54] sm:%s346]
                  %370 = vst [vmem:[%s354 + $0x1c] sm:%s346] %v369
                  %v371 = vld [vmem:[%s353 + $0x60] sm:%s346]
                  %372 = vst [vmem:[%s354 + $0x20] sm:%s346] %v371
                  %v373 = vld [vmem:[%s353 + $0x6c] sm:%s346]
                  %374 = vst [vmem:[%s354 + $0x24] sm:%s346] %v373
                  %v375 = vld [vmem:[%s353 + $0x78] sm:%s346]
                  %376 = vst [vmem:[%s354 + $0x28] sm:%s346] %v375
                  %v377 = vld [vmem:[%s353 + $0x84] sm:%s346]
                  %378 = vst [vmem:[%s354 + $0x2c] sm:%s346] %v377
                  %v379 = vld [vmem:[%s353 + $0x90] sm:%s346]
                  %380 = vst [vmem:[%s354 + $0x30] sm:%s346] %v379
                  %v381 = vld [vmem:[%s353 + $0x9c] sm:%s346]
                  %382 = vst [vmem:[%s354 + $0x34] sm:%s346] %v381
                  %v383 = vld [vmem:[%s353 + $0xa8] sm:%s346]
                  %384 = vst [vmem:[%s354 + $0x38] sm:%s346] %v383
                  %v385 = vld [vmem:[%s353 + $0xb4] sm:%s346]
                  %386 = vst [vmem:[%s354 + $0x3c] sm:%s346] %v385
                $region96: #{attention_forward.4} parent=83 // loop_footer
                  %s352 = sadd.s32 1, %s348
                $region97: #{attention_forward.4} parent=83 // loop_footer_branch
                  %347 = sbr.rel target = $region93
                $region98: #{attention_forward.4} parent=83 // loop_exit
                  _
              $region84: #{attention_forward.4} parent=68 // pred_fallthru
                _
            $region69: #{attention_forward.4} parent=64 // pred_fallthru
              _
            // Predicated region
            $region70: #{attention_forward.4} parent=64 // pred_check
              _
            $region71: #{attention_forward.4} parent=64 // pred_check_branch
              %292 = sbr.rel (0) target = $region73
            $region72: #{attention_forward.4} parent=64 // pred_region
              %s294 = ssub.s32 16, 1
              loop: start=0, step=1, limit=1
              $region74: #{attention_forward.4} parent=72 // loop_pre_header
                _
              $region75: #{attention_forward.4} parent=72 // loop_header
                %s296 = sphi 0, %s300
                %p297 = scmp.ge.s32.totalorder %s296, 1
                %s301 = sphi %s286, %s286
                %s302 = sphi %s279, %s279
              $region76: #{attention_forward.4} parent=72 // loop_header_branch
                %299 = sbr.rel (%p297) target = $region80
              $region77: #{attention_forward.4} parent=72 // loop_body
                %v303 = vld [vmem:[%s301] sm:%s294]
                %304 = vst [vmem:[%s302] sm:%s294] %v303
                %v305 = vld [vmem:[%s301 + $0xc] sm:%s294]
                %306 = vst [vmem:[%s302 + $0x4] sm:%s294] %v305
                %v307 = vld [vmem:[%s301 + $0x18] sm:%s294]
                %308 = vst [vmem:[%s302 + $0x8] sm:%s294] %v307
                %v309 = vld [vmem:[%s301 + $0x24] sm:%s294]
                %310 = vst [vmem:[%s302 + $0xc] sm:%s294] %v309
                %v311 = vld [vmem:[%s301 + $0x30] sm:%s294]
                %312 = vst [vmem:[%s302 + $0x10] sm:%s294] %v311
                %v313 = vld [vmem:[%s301 + $0x3c] sm:%s294]
                %314 = vst [vmem:[%s302 + $0x14] sm:%s294] %v313
                %v315 = vld [vmem:[%s301 + $0x48] sm:%s294]
                %316 = vst [vmem:[%s302 + $0x18] sm:%s294] %v315
                %v317 = vld [vmem:[%s301 + $0x54] sm:%s294]
                %318 = vst [vmem:[%s302 + $0x1c] sm:%s294] %v317
                %v319 = vld [vmem:[%s301 + $0x60] sm:%s294]
                %320 = vst [vmem:[%s302 + $0x20] sm:%s294] %v319
                %v321 = vld [vmem:[%s301 + $0x6c] sm:%s294]
                %322 = vst [vmem:[%s302 + $0x24] sm:%s294] %v321
                %v323 = vld [vmem:[%s301 + $0x78] sm:%s294]
                %324 = vst [vmem:[%s302 + $0x28] sm:%s294] %v323
                %v325 = vld [vmem:[%s301 + $0x84] sm:%s294]
                %326 = vst [vmem:[%s302 + $0x2c] sm:%s294] %v325
                %v327 = vld [vmem:[%s301 + $0x90] sm:%s294]
                %328 = vst [vmem:[%s302 + $0x30] sm:%s294] %v327
                %v329 = vld [vmem:[%s301 + $0x9c] sm:%s294]
                %330 = vst [vmem:[%s302 + $0x34] sm:%s294] %v329
                %v331 = vld [vmem:[%s301 + $0xa8] sm:%s294]
                %332 = vst [vmem:[%s302 + $0x38] sm:%s294] %v331
                %v333 = vld [vmem:[%s301 + $0xb4] sm:%s294]
                %334 = vst [vmem:[%s302 + $0x3c] sm:%s294] %v333
              $region78: #{attention_forward.4} parent=72 // loop_footer
                %s300 = sadd.s32 1, %s296
              $region79: #{attention_forward.4} parent=72 // loop_footer_branch
                %295 = sbr.rel target = $region75
              $region80: #{attention_forward.4} parent=72 // loop_exit
                _
            $region73: #{attention_forward.4} parent=64 // pred_fallthru
              _
          $region65: #{attention_forward.4} parent=60 // pred_fallthru
            _
          %387 = vnop
        $region61: #{attention_forward.4} parent=15 // pred_fallthru
          _
        // Predicated region
        $region99: #{attention_forward.4} parent=15 // pred_check
          %p388 = pneg %p106
        $region100: #{attention_forward.4} parent=15 // pred_check_branch
          %390 = sbr.rel (%p388) target = $region102
        $region101: #{attention_forward.4} parent=15 // pred_region
          %s391 = sand.u32 %s96, 1
          %s392 = sand.u32 %s96, 1
          %s393 = smul.addr %s392, 64
          %s394 = scalar_lea.vmem [#allocation7], %s393
          %s395 = smul.u32 16, %s18
          %s396 = smul.addr %s395, 3
          %s397 = sadd.s32 2, %s396
          %s398 = smul.addr %s16, 48
          %s399 = sadd.s32 %s397, %s398
          %s400 = smul.addr %s399, 4
          %s401 = scalar_lea.vmem %s2, %s400
          // Predicated region
          $region103: #{attention_forward.4} parent=101 // pred_check
            _
          $region104: #{attention_forward.4} parent=101 // pred_check_branch
            %403 = sbr.rel (0) target = $region106
          $region105: #{attention_forward.4} parent=101 // pred_region
            // Predicated region
            $region107: #{attention_forward.4} parent=105 // pred_check
              _
            $region108: #{attention_forward.4} parent=105 // pred_check_branch
              %405 = sbr.rel target = $region110
            $region109: #{attention_forward.4} parent=105 // pred_region
              // Predicated region
              $region122: #{attention_forward.4} parent=109 // pred_check
                _
              $region123: #{attention_forward.4} parent=109 // pred_check_branch
                %451 = sbr.rel (0) target = $region125
              $region124: #{attention_forward.4} parent=109 // pred_region
                loop: start=0, step=1, limit=1
                $region126: #{attention_forward.4} parent=124 // loop_pre_header
                  _
                $region127: #{attention_forward.4} parent=124 // loop_header
                  %s453 = sphi 0, %s457
                  %p454 = scmp.ge.s32.totalorder %s453, 1
                  %s458 = sphi %s401, %s401
                  %s459 = sphi %s394, %s394
                $region128: #{attention_forward.4} parent=124 // loop_header_branch
                  %456 = sbr.rel (%p454) target = $region132
                $region129: #{attention_forward.4} parent=124 // loop_body
                  _
                $region130: #{attention_forward.4} parent=124 // loop_footer
                  %s457 = sadd.s32 1, %s453
                $region131: #{attention_forward.4} parent=124 // loop_footer_branch
                  %452 = sbr.rel target = $region127
                $region132: #{attention_forward.4} parent=124 // loop_exit
                  _
                %s461 = ssub.s32 16, 1
                loop: start=0, step=1, limit=1
                $region133: #{attention_forward.4} parent=124 // loop_pre_header
                  _
                $region134: #{attention_forward.4} parent=124 // loop_header
                  %s463 = sphi 0, %s467
                  %p464 = scmp.ge.s32.totalorder %s463, 1
                  %s468 = sphi %s401, %s401
                  %s469 = sphi %s394, %s394
                $region135: #{attention_forward.4} parent=124 // loop_header_branch
                  %466 = sbr.rel (%p464) target = $region139
                $region136: #{attention_forward.4} parent=124 // loop_body
                  %v470 = vld [vmem:[%s468] sm:%s461]
                  %471 = vst [vmem:[%s469] sm:%s461] %v470
                  %v472 = vld [vmem:[%s468 + $0xc] sm:%s461]
                  %473 = vst [vmem:[%s469 + $0x4] sm:%s461] %v472
                  %v474 = vld [vmem:[%s468 + $0x18] sm:%s461]
                  %475 = vst [vmem:[%s469 + $0x8] sm:%s461] %v474
                  %v476 = vld [vmem:[%s468 + $0x24] sm:%s461]
                  %477 = vst [vmem:[%s469 + $0xc] sm:%s461] %v476
                  %v478 = vld [vmem:[%s468 + $0x30] sm:%s461]
                  %479 = vst [vmem:[%s469 + $0x10] sm:%s461] %v478
                  %v480 = vld [vmem:[%s468 + $0x3c] sm:%s461]
                  %481 = vst [vmem:[%s469 + $0x14] sm:%s461] %v480
                  %v482 = vld [vmem:[%s468 + $0x48] sm:%s461]
                  %483 = vst [vmem:[%s469 + $0x18] sm:%s461] %v482
                  %v484 = vld [vmem:[%s468 + $0x54] sm:%s461]
                  %485 = vst [vmem:[%s469 + $0x1c] sm:%s461] %v484
                  %v486 = vld [vmem:[%s468 + $0x60] sm:%s461]
                  %487 = vst [vmem:[%s469 + $0x20] sm:%s461] %v486
                  %v488 = vld [vmem:[%s468 + $0x6c] sm:%s461]
                  %489 = vst [vmem:[%s469 + $0x24] sm:%s461] %v488
                  %v490 = vld [vmem:[%s468 + $0x78] sm:%s461]
                  %491 = vst [vmem:[%s469 + $0x28] sm:%s461] %v490
                  %v492 = vld [vmem:[%s468 + $0x84] sm:%s461]
                  %493 = vst [vmem:[%s469 + $0x2c] sm:%s461] %v492
                  %v494 = vld [vmem:[%s468 + $0x90] sm:%s461]
                  %495 = vst [vmem:[%s469 + $0x30] sm:%s461] %v494
                  %v496 = vld [vmem:[%s468 + $0x9c] sm:%s461]
                  %497 = vst [vmem:[%s469 + $0x34] sm:%s461] %v496
                  %v498 = vld [vmem:[%s468 + $0xa8] sm:%s461]
                  %499 = vst [vmem:[%s469 + $0x38] sm:%s461] %v498
                  %v500 = vld [vmem:[%s468 + $0xb4] sm:%s461]
                  %501 = vst [vmem:[%s469 + $0x3c] sm:%s461] %v500
                $region137: #{attention_forward.4} parent=124 // loop_footer
                  %s467 = sadd.s32 1, %s463
                $region138: #{attention_forward.4} parent=124 // loop_footer_branch
                  %462 = sbr.rel target = $region134
                $region139: #{attention_forward.4} parent=124 // loop_exit
                  _
              $region125: #{attention_forward.4} parent=109 // pred_fallthru
                _
            $region110: #{attention_forward.4} parent=105 // pred_fallthru
              _
            // Predicated region
            $region111: #{attention_forward.4} parent=105 // pred_check
              _
            $region112: #{attention_forward.4} parent=105 // pred_check_branch
              %407 = sbr.rel (0) target = $region114
            $region113: #{attention_forward.4} parent=105 // pred_region
              %s409 = ssub.s32 16, 1
              loop: start=0, step=1, limit=1
              $region115: #{attention_forward.4} parent=113 // loop_pre_header
                _
              $region116: #{attention_forward.4} parent=113 // loop_header
                %s411 = sphi 0, %s415
                %p412 = scmp.ge.s32.totalorder %s411, 1
                %s416 = sphi %s401, %s401
                %s417 = sphi %s394, %s394
              $region117: #{attention_forward.4} parent=113 // loop_header_branch
                %414 = sbr.rel (%p412) target = $region121
              $region118: #{attention_forward.4} parent=113 // loop_body
                %v418 = vld [vmem:[%s416] sm:%s409]
                %419 = vst [vmem:[%s417] sm:%s409] %v418
                %v420 = vld [vmem:[%s416 + $0xc] sm:%s409]
                %421 = vst [vmem:[%s417 + $0x4] sm:%s409] %v420
                %v422 = vld [vmem:[%s416 + $0x18] sm:%s409]
                %423 = vst [vmem:[%s417 + $0x8] sm:%s409] %v422
                %v424 = vld [vmem:[%s416 + $0x24] sm:%s409]
                %425 = vst [vmem:[%s417 + $0xc] sm:%s409] %v424
                %v426 = vld [vmem:[%s416 + $0x30] sm:%s409]
                %427 = vst [vmem:[%s417 + $0x10] sm:%s409] %v426
                %v428 = vld [vmem:[%s416 + $0x3c] sm:%s409]
                %429 = vst [vmem:[%s417 + $0x14] sm:%s409] %v428
                %v430 = vld [vmem:[%s416 + $0x48] sm:%s409]
                %431 = vst [vmem:[%s417 + $0x18] sm:%s409] %v430
                %v432 = vld [vmem:[%s416 + $0x54] sm:%s409]
                %433 = vst [vmem:[%s417 + $0x1c] sm:%s409] %v432
                %v434 = vld [vmem:[%s416 + $0x60] sm:%s409]
                %435 = vst [vmem:[%s417 + $0x20] sm:%s409] %v434
                %v436 = vld [vmem:[%s416 + $0x6c] sm:%s409]
                %437 = vst [vmem:[%s417 + $0x24] sm:%s409] %v436
                %v438 = vld [vmem:[%s416 + $0x78] sm:%s409]
                %439 = vst [vmem:[%s417 + $0x28] sm:%s409] %v438
                %v440 = vld [vmem:[%s416 + $0x84] sm:%s409]
                %441 = vst [vmem:[%s417 + $0x2c] sm:%s409] %v440
                %v442 = vld [vmem:[%s416 + $0x90] sm:%s409]
                %443 = vst [vmem:[%s417 + $0x30] sm:%s409] %v442
                %v444 = vld [vmem:[%s416 + $0x9c] sm:%s409]
                %445 = vst [vmem:[%s417 + $0x34] sm:%s409] %v444
                %v446 = vld [vmem:[%s416 + $0xa8] sm:%s409]
                %447 = vst [vmem:[%s417 + $0x38] sm:%s409] %v446
                %v448 = vld [vmem:[%s416 + $0xb4] sm:%s409]
                %449 = vst [vmem:[%s417 + $0x3c] sm:%s409] %v448
              $region119: #{attention_forward.4} parent=113 // loop_footer
                %s415 = sadd.s32 1, %s411
              $region120: #{attention_forward.4} parent=113 // loop_footer_branch
                %410 = sbr.rel target = $region116
              $region121: #{attention_forward.4} parent=113 // loop_exit
                _
            $region114: #{attention_forward.4} parent=105 // pred_fallthru
              _
          $region106: #{attention_forward.4} parent=101 // pred_fallthru
            _
          %502 = vnop
        $region102: #{attention_forward.4} parent=15 // pred_fallthru
          _
      $region16: #{attention_forward.4} parent=5 // pred_fallthru
        _
      %p503 = scmp.le.s32.totalorder 1, %s9
      %p504 = scmp.lt.s32.totalorder %s9, 3
      %p505 = pnand %p503, %p504
      %p506 = pneg %p505
      // Predicated region
      $region140: #{attention_forward.4} parent=5 // pred_check
        _
      $region141: #{attention_forward.4} parent=5 // pred_check_branch
        %508 = sbr.rel (%p505) target = $region143
      $region142: #{attention_forward.4} parent=5 // pred_region
        %s509 = ssub.s32 %s9, 1
        %s510 = sand.u32 %s43, 1
        %s511 = sand.u32 %s43, 1
        %s512 = smul.addr %s511, 64
        %s513 = scalar_lea.vmem [#allocation5], %s512
        // Predicated region
        $region144: #{attention_forward.4} parent=142 // pred_check
          %p514 = pneg %p56
        $region145: #{attention_forward.4} parent=142 // pred_check_branch
          %516 = sbr.rel (%p514) target = $region147
        $region146: #{attention_forward.4} parent=142 // pred_region
          _
        $region147: #{attention_forward.4} parent=142 // pred_fallthru
          _
        %s517 = sand.u32 %s71, 1
        %s518 = sand.u32 %s71, 1
        %s519 = smul.addr %s518, 64
        %s520 = scalar_lea.vmem [#allocation6], %s519
        // Predicated region
        $region148: #{attention_forward.4} parent=142 // pred_check
          %p521 = pneg %p84
        $region149: #{attention_forward.4} parent=142 // pred_check_branch
          %523 = sbr.rel (%p521) target = $region151
        $region150: #{attention_forward.4} parent=142 // pred_region
          _
        $region151: #{attention_forward.4} parent=142 // pred_fallthru
          _
        %s524 = sand.u32 %s99, 1
        %s525 = sand.u32 %s99, 1
        %s526 = smul.addr %s525, 64
        %s527 = scalar_lea.vmem [#allocation7], %s526
        // Predicated region
        $region152: #{attention_forward.4} parent=142 // pred_check
          %p528 = pneg %p112
        $region153: #{attention_forward.4} parent=142 // pred_check_branch
          %530 = sbr.rel (%p528) target = $region155
        $region154: #{attention_forward.4} parent=142 // pred_region
          _
        $region155: #{attention_forward.4} parent=142 // pred_fallthru
          _
        %s531 = sand.u32 %s43, 1
        %s532 = sand.u32 %s43, 1
        %s533 = smul.addr %s532, 64
        %s534 = scalar_lea.vmem [#allocation5], %s533
        %p535 = pneg %p56
        %p536 = pneg %p53
        %s537 = sand.u32 %s71, 1
        %s538 = sand.u32 %s71, 1
        %s539 = smul.addr %s538, 64
        %s540 = scalar_lea.vmem [#allocation6], %s539
        %p541 = pneg %p84
        %p542 = pneg %p81
        %s543 = sand.u32 %s99, 1
        %s544 = sand.u32 %s99, 1
        %s545 = smul.addr %s544, 64
        %s546 = scalar_lea.vmem [#allocation7], %s545
        %p547 = pneg %p112
        %p548 = pneg %p109
        %p549 = pneg %p140
        %p550 = pneg %p137
        %s551 = smul.u32 16, %s20
        %p552 = scmp.lt.s32.totalorder %s19, 1
        %s553 = scalar_select %p552, %s19, 1
        %p554 = scmp.lt.s32.totalorder %s551, 15
        %s555 = scalar_select %p554, %s551, 15
        %s556 = smul.addr %s553, 16
        %s557 = sadd.s32 %s555, %s556
        %s558 = smul.addr %s557, 8
        %s559 = scalar_lea.vmem %s3, %s558
        %s560 = smul.u32 16, %s20
        %s561 = smul.u32 16, %s21
        %s562 = smul.u32 16, %s21
        %s563 = smul.u32 16, %s20
        %p564 = scmp.lt.s32.totalorder %s19, 1
        %s565 = scalar_select %p564, %s19, 1
        %p566 = scmp.lt.s32.totalorder %s563, 15
        %s567 = scalar_select %p566, %s563, 15
        %s568 = smul.addr %s565, 16
        %s569 = sadd.s32 %s567, %s568
        %s570 = smul.addr %s569, 8
        %s571 = scalar_lea.vmem %s3, %s570
        %s572 = smul.u32 16, %s20
        %p575 = scmp.eq.s32.totalorder %s21, 0
        // Predicated region
        $region156: #{attention_forward.4} parent=142 // pred_check
          %p576 = pneg %p575
        $region157: #{attention_forward.4} parent=142 // pred_check_branch
          %578 = sbr.rel (%p576) target = $region159
        $region158: #{attention_forward.4} parent=142 // pred_region
          %vm579 = vcmask 31744
          %580 = vst.msk [vmem:[#allocation2] sm:$0xff] %vm579, -inf
          %581 = vst.msk [vmem:[#allocation2 + $0x8] sm:$0xff] %vm579, -inf
          %582 = vst.msk [vmem:[#allocation2 + $0x10] sm:$0xff] %vm579, -inf
          %583 = vst.msk [vmem:[#allocation2 + $0x18] sm:$0xff] %vm579, -inf
          %584 = vst.msk [vmem:[#allocation2 + $0x20] sm:$0xff] %vm579, -inf
          %585 = vst.msk [vmem:[#allocation2 + $0x28] sm:$0xff] %vm579, -inf
          %586 = vst.msk [vmem:[#allocation2 + $0x30] sm:$0xff] %vm579, -inf
          %587 = vst.msk [vmem:[#allocation2 + $0x38] sm:$0xff] %vm579, -inf
          %588 = vst.msk [vmem:[#allocation2 + $0x40] sm:$0xff] %vm579, -inf
          %589 = vst.msk [vmem:[#allocation2 + $0x48] sm:$0xff] %vm579, -inf
          %590 = vst.msk [vmem:[#allocation2 + $0x50] sm:$0xff] %vm579, -inf
          %591 = vst.msk [vmem:[#allocation2 + $0x58] sm:$0xff] %vm579, -inf
          %592 = vst.msk [vmem:[#allocation2 + $0x60] sm:$0xff] %vm579, -inf
          %593 = vst.msk [vmem:[#allocation2 + $0x68] sm:$0xff] %vm579, -inf
          %594 = vst.msk [vmem:[#allocation2 + $0x70] sm:$0xff] %vm579, -inf
          %595 = vst.msk [vmem:[#allocation2 + $0x78] sm:$0xff] %vm579, -inf
          %596 = vst.msk [vmem:[#allocation3] sm:$0xff] %vm579, 0.0
          %597 = vst.msk [vmem:[#allocation3 + $0x8] sm:$0xff] %vm579, 0.0
          %598 = vst.msk [vmem:[#allocation3 + $0x10] sm:$0xff] %vm579, 0.0
          %599 = vst.msk [vmem:[#allocation3 + $0x18] sm:$0xff] %vm579, 0.0
          %600 = vst.msk [vmem:[#allocation3 + $0x20] sm:$0xff] %vm579, 0.0
          %601 = vst.msk [vmem:[#allocation3 + $0x28] sm:$0xff] %vm579, 0.0
          %602 = vst.msk [vmem:[#allocation3 + $0x30] sm:$0xff] %vm579, 0.0
          %603 = vst.msk [vmem:[#allocation3 + $0x38] sm:$0xff] %vm579, 0.0
          %604 = vst.msk [vmem:[#allocation3 + $0x40] sm:$0xff] %vm579, 0.0
          %605 = vst.msk [vmem:[#allocation3 + $0x48] sm:$0xff] %vm579, 0.0
          %606 = vst.msk [vmem:[#allocation3 + $0x50] sm:$0xff] %vm579, 0.0
          %607 = vst.msk [vmem:[#allocation3 + $0x58] sm:$0xff] %vm579, 0.0
          %608 = vst.msk [vmem:[#allocation3 + $0x60] sm:$0xff] %vm579, 0.0
          %609 = vst.msk [vmem:[#allocation3 + $0x68] sm:$0xff] %vm579, 0.0
          %610 = vst.msk [vmem:[#allocation3 + $0x70] sm:$0xff] %vm579, 0.0
          %611 = vst.msk [vmem:[#allocation3 + $0x78] sm:$0xff] %vm579, 0.0
          %612 = vst [vmem:[#allocation4] sm:$0xff] 0.0
          %613 = vst [vmem:[#allocation4 + $0x8] sm:$0xff] 0.0
          %614 = vst [vmem:[#allocation4 + $0x10] sm:$0xff] 0.0
          %615 = vst [vmem:[#allocation4 + $0x18] sm:$0xff] 0.0
          %616 = vst [vmem:[#allocation4 + $0x20] sm:$0xff] 0.0
          %617 = vst [vmem:[#allocation4 + $0x28] sm:$0xff] 0.0
          %618 = vst [vmem:[#allocation4 + $0x30] sm:$0xff] 0.0
          %619 = vst [vmem:[#allocation4 + $0x38] sm:$0xff] 0.0
          %620 = vst [vmem:[#allocation4 + $0x40] sm:$0xff] 0.0
          %621 = vst [vmem:[#allocation4 + $0x48] sm:$0xff] 0.0
          %622 = vst [vmem:[#allocation4 + $0x50] sm:$0xff] 0.0
          %623 = vst [vmem:[#allocation4 + $0x58] sm:$0xff] 0.0
          %624 = vst [vmem:[#allocation4 + $0x60] sm:$0xff] 0.0
          %625 = vst [vmem:[#allocation4 + $0x68] sm:$0xff] 0.0
          %626 = vst [vmem:[#allocation4 + $0x70] sm:$0xff] 0.0
          %627 = vst [vmem:[#allocation4 + $0x78] sm:$0xff] 0.0
        $region159: #{attention_forward.4} parent=142 // pred_fallthru
          _
        %v628 = vld [vmem:[%s513] sm:$0xf]
        %v629 = vld [vmem:[%s513 + $0x4] sm:$0xf]
        %v630 = vld [vmem:[%s513 + $0x8] sm:$0xf]
        %v631 = vld [vmem:[%s513 + $0xc] sm:$0xf]
        %v632 = vld [vmem:[%s513 + $0x10] sm:$0xf]
        %v633 = vld [vmem:[%s513 + $0x14] sm:$0xf]
        %v634 = vld [vmem:[%s513 + $0x18] sm:$0xf]
        %v635 = vld [vmem:[%s513 + $0x1c] sm:$0xf]
        %v636 = vld [vmem:[%s513 + $0x20] sm:$0xf]
        %v637 = vld [vmem:[%s513 + $0x24] sm:$0xf]
        %v638 = vld [vmem:[%s513 + $0x28] sm:$0xf]
        %v639 = vld [vmem:[%s513 + $0x2c] sm:$0xf]
        %v640 = vld [vmem:[%s513 + $0x30] sm:$0xf]
        %v641 = vld [vmem:[%s513 + $0x34] sm:$0xf]
        %v642 = vld [vmem:[%s513 + $0x38] sm:$0xf]
        %v643 = vld [vmem:[%s513 + $0x3c] sm:$0xf]
        %v644 = vmul.bf16 %v628, 1043676725
        %v645 = vmul.bf16 %v629, 1043676725
        %v646 = vmul.bf16 %v630, 1043676725
        %v647 = vmul.bf16 %v631, 1043676725
        %v648 = vmul.bf16 %v632, 1043676725
        %v649 = vmul.bf16 %v633, 1043676725
        %v650 = vmul.bf16 %v634, 1043676725
        %v651 = vmul.bf16 %v635, 1043676725
        %v652 = vmul.bf16 %v636, 1043676725
        %v653 = vmul.bf16 %v637, 1043676725
        %v654 = vmul.bf16 %v638, 1043676725
        %v655 = vmul.bf16 %v639, 1043676725
        %v656 = vmul.bf16 %v640, 1043676725
        %v657 = vmul.bf16 %v641, 1043676725
        %v658 = vmul.bf16 %v642, 1043676725
        %v659 = vmul.bf16 %v643, 1043676725
        %v660 = vld [vmem:[%s520] sm:$0xf]
        %v661 = vld [vmem:[%s520 + $0x4] sm:$0xf]
        %v662 = vld [vmem:[%s520 + $0x8] sm:$0xf]
        %v663 = vld [vmem:[%s520 + $0xc] sm:$0xf]
        %v664 = vld [vmem:[%s520 + $0x10] sm:$0xf]
        %v665 = vld [vmem:[%s520 + $0x14] sm:$0xf]
        %v666 = vld [vmem:[%s520 + $0x18] sm:$0xf]
        %v667 = vld [vmem:[%s520 + $0x1c] sm:$0xf]
        %v668 = vld [vmem:[%s520 + $0x20] sm:$0xf]
        %v669 = vld [vmem:[%s520 + $0x24] sm:$0xf]
        %v670 = vld [vmem:[%s520 + $0x28] sm:$0xf]
        %v671 = vld [vmem:[%s520 + $0x2c] sm:$0xf]
        %v672 = vld [vmem:[%s520 + $0x30] sm:$0xf]
        %v673 = vld [vmem:[%s520 + $0x34] sm:$0xf]
        %v674 = vld [vmem:[%s520 + $0x38] sm:$0xf]
        %v675 = vld [vmem:[%s520 + $0x3c] sm:$0xf]
        %v676 = vld [vmem:[%s527] sm:$0xf]
        %v677 = vld [vmem:[%s527 + $0x4] sm:$0xf]
        %v678 = vld [vmem:[%s527 + $0x8] sm:$0xf]
        %v679 = vld [vmem:[%s527 + $0xc] sm:$0xf]
        %v680 = vld [vmem:[%s527 + $0x10] sm:$0xf]
        %v681 = vld [vmem:[%s527 + $0x14] sm:$0xf]
        %v682 = vld [vmem:[%s527 + $0x18] sm:$0xf]
        %v683 = vld [vmem:[%s527 + $0x1c] sm:$0xf]
        %v684 = vld [vmem:[%s527 + $0x20] sm:$0xf]
        %v685 = vld [vmem:[%s527 + $0x24] sm:$0xf]
        %v686 = vld [vmem:[%s527 + $0x28] sm:$0xf]
        %v687 = vld [vmem:[%s527 + $0x2c] sm:$0xf]
        %v688 = vld [vmem:[%s527 + $0x30] sm:$0xf]
        %v689 = vld [vmem:[%s527 + $0x34] sm:$0xf]
        %v690 = vld [vmem:[%s527 + $0x38] sm:$0xf]
        %v691 = vld [vmem:[%s527 + $0x3c] sm:$0xf]
        %v708 = vunpack.c.l.b16 %v644
        %v709 = vunpack.c.l.b16 %v645
        %v710 = vunpack.c.l.b16 %v646
        %v711 = vunpack.c.l.b16 %v647
        %v712 = vunpack.c.l.b16 %v648
        %v713 = vunpack.c.l.b16 %v649
        %v714 = vunpack.c.l.b16 %v650
        %v715 = vunpack.c.l.b16 %v651
        %v716 = vunpack.c.l.b16 %v652
        %v717 = vunpack.c.l.b16 %v653
        %v718 = vunpack.c.l.b16 %v654
        %v719 = vunpack.c.l.b16 %v655
        %v720 = vunpack.c.l.b16 %v656
        %v721 = vunpack.c.l.b16 %v657
        %v722 = vunpack.c.l.b16 %v658
        %v723 = vunpack.c.l.b16 %v659
        %v724 = vpack.c.b16 %v709, %v708
        %v725 = vpack.c.b16 %v711, %v710
        %v726 = vpack.c.b16 %v713, %v712
        %v727 = vpack.c.b16 %v715, %v714
        %v728 = vpack.c.b16 %v717, %v716
        %v729 = vpack.c.b16 %v719, %v718
        %v730 = vpack.c.b16 %v721, %v720
        %v731 = vpack.c.b16 %v723, %v722
        %v748 = vunpack.c.l.b16 %v660
        %v749 = vunpack.c.l.b16 %v661
        %v750 = vunpack.c.l.b16 %v662
        %v751 = vunpack.c.l.b16 %v663
        %v752 = vunpack.c.l.b16 %v664
        %v753 = vunpack.c.l.b16 %v665
        %v754 = vunpack.c.l.b16 %v666
        %v755 = vunpack.c.l.b16 %v667
        %v756 = vunpack.c.l.b16 %v668
        %v757 = vunpack.c.l.b16 %v669
        %v758 = vunpack.c.l.b16 %v670
        %v759 = vunpack.c.l.b16 %v671
        %v760 = vunpack.c.l.b16 %v672
        %v761 = vunpack.c.l.b16 %v673
        %v762 = vunpack.c.l.b16 %v674
        %v763 = vunpack.c.l.b16 %v675
        %v764 = vpack.c.b16 %v749, %v748
        %v765 = vpack.c.b16 %v751, %v750
        %v766 = vpack.c.b16 %v753, %v752
        %v767 = vpack.c.b16 %v755, %v754
        %v768 = vpack.c.b16 %v757, %v756
        %v769 = vpack.c.b16 %v759, %v758
        %v770 = vpack.c.b16 %v761, %v760
        %v771 = vpack.c.b16 %v763, %v762
        %vm772 = vcmask 261120
        %v774 = vsel %vm772, %v724, 0
        %v777 = vsel %vm772, %v725, 0
        %v780 = vsel %vm772, %v726, 0
        %v783 = vsel %vm772, %v727, 0
        %v786 = vsel %vm772, %v728, 0
        %v789 = vsel %vm772, %v729, 0
        %v792 = vsel %vm772, %v730, 0
        %v795 = vsel %vm772, %v731, 0
        %v798 = vsel %vm772, %v764, 0
        %v801 = vsel %vm772, %v765, 0
        %v804 = vsel %vm772, %v766, 0
        %v807 = vsel %vm772, %v767, 0
        %v810 = vsel %vm772, %v768, 0
        %v813 = vsel %vm772, %v769, 0
        %v816 = vsel %vm772, %v770, 0
        %v819 = vsel %vm772, %v771, 0
        %821 = vmatprep.subr.bf16.mxu0 0
        %822 = vmatpush1.bf16.xpose.msra.mxu0 %v819
        %823 = vmatprep.subr.bf16.mxu0 0
        %824 = vmatpush1.bf16.xpose.msra.mxu0 %v816
        %825 = vmatprep.subr.bf16.mxu0 0
        %826 = vmatpush1.bf16.xpose.msra.mxu0 %v813
        %827 = vmatprep.subr.bf16.mxu0 0
        %828 = vmatpush1.bf16.xpose.msra.mxu0 %v810
        %829 = vmatprep.subr.bf16.mxu0 0
        %830 = vmatpush1.bf16.xpose.msra.mxu0 %v807
        %831 = vmatprep.subr.bf16.mxu0 0
        %832 = vmatpush1.bf16.xpose.msra.mxu0 %v804
        %833 = vmatprep.subr.bf16.mxu0 0
        %834 = vmatpush1.bf16.xpose.msra.mxu0 %v801
        %835 = vmatprep.subr.bf16.mxu0 0
        %836 = vmatpush1.bf16.xpose.msra.mxu0 %v798
        %837 = vmatprep.subr.bf16.mxu0 0
        %838 = vmatpush2.bf16.xpose.msra.mxu0 0
        %839 = vmatprep.subr.bf16.mxu0 0
        %840 = vmatpush2.bf16.xpose.msra.mxu0 0
        %841 = vmatprep.subr.bf16.mxu0 0
        %842 = vmatpush2.bf16.xpose.msra.mxu0 0
        %843 = vmatprep.subr.bf16.mxu0 0
        %844 = vmatpush2.bf16.xpose.msra.mxu0 0
        %845 = vmatprep.subr.bf16.mxu0 0
        %846 = vmatpush2.bf16.xpose.msra.mxu0 0
        %847 = vmatprep.subr.bf16.mxu0 0
        %848 = vmatpush2.bf16.xpose.msra.mxu0 0
        %849 = vmatprep.subr.bf16.mxu0 0
        %850 = vmatpush2.bf16.xpose.msra.mxu0 0
        %851 = vmatprep.subr.bf16.mxu0 0
        %852 = vmatpush2.bf16.xpose.msra.mxu0 0
        %853 = vmatprep.mubr.bf16.mxu0 0
        %854 = vmatmul.mubr.bf16.gmra.mxu0 %v774
        %v855 = vpop.f32.mrf.mxu0
        %v856 = vadd.f32 0.0, %v855
        %v857 = vpop.f32.mrf.mxu0
        %v858 = vpop.f32.mrf.mxu0
        %v859 = vadd.f32 0.0, %v858
        %v860 = vpop.f32.mrf.mxu0
        %861 = vmatprep.mubr.bf16.mxu0 0
        %862 = vmatmul.mubr.bf16.gmra.mxu0 %v777
        %v863 = vpop.f32.mrf.mxu0
        %v864 = vadd.f32 0.0, %v863
        %v865 = vpop.f32.mrf.mxu0
        %v866 = vpop.f32.mrf.mxu0
        %v867 = vadd.f32 0.0, %v866
        %v868 = vpop.f32.mrf.mxu0
        %869 = vmatprep.mubr.bf16.mxu0 0
        %870 = vmatmul.mubr.bf16.gmra.mxu0 %v780
        %v871 = vpop.f32.mrf.mxu0
        %v872 = vadd.f32 0.0, %v871
        %v873 = vpop.f32.mrf.mxu0
        %v874 = vpop.f32.mrf.mxu0
        %v875 = vadd.f32 0.0, %v874
        %v876 = vpop.f32.mrf.mxu0
        %877 = vmatprep.mubr.bf16.mxu0 0
        %878 = vmatmul.mubr.bf16.gmra.mxu0 %v783
        %v879 = vpop.f32.mrf.mxu0
        %v880 = vadd.f32 0.0, %v879
        %v881 = vpop.f32.mrf.mxu0
        %v882 = vpop.f32.mrf.mxu0
        %v883 = vadd.f32 0.0, %v882
        %v884 = vpop.f32.mrf.mxu0
        %885 = vmatprep.mubr.bf16.mxu0 0
        %886 = vmatmul.mubr.bf16.gmra.mxu0 %v786
        %v887 = vpop.f32.mrf.mxu0
        %v888 = vadd.f32 0.0, %v887
        %v889 = vpop.f32.mrf.mxu0
        %v890 = vpop.f32.mrf.mxu0
        %v891 = vadd.f32 0.0, %v890
        %v892 = vpop.f32.mrf.mxu0
        %893 = vmatprep.mubr.bf16.mxu0 0
        %894 = vmatmul.mubr.bf16.gmra.mxu0 %v789
        %v895 = vpop.f32.mrf.mxu0
        %v896 = vadd.f32 0.0, %v895
        %v897 = vpop.f32.mrf.mxu0
        %v898 = vpop.f32.mrf.mxu0
        %v899 = vadd.f32 0.0, %v898
        %v900 = vpop.f32.mrf.mxu0
        %901 = vmatprep.mubr.bf16.mxu0 0
        %902 = vmatmul.mubr.bf16.gmra.mxu0 %v792
        %v903 = vpop.f32.mrf.mxu0
        %v904 = vadd.f32 0.0, %v903
        %v905 = vpop.f32.mrf.mxu0
        %v906 = vpop.f32.mrf.mxu0
        %v907 = vadd.f32 0.0, %v906
        %v908 = vpop.f32.mrf.mxu0
        %909 = vmatprep.mubr.bf16.mxu0 0
        %910 = vmatmul.mubr.bf16.gmra.mxu0 %v795
        %v911 = vpop.f32.mrf.mxu0
        %v912 = vadd.f32 0.0, %v911
        %v913 = vpop.f32.mrf.mxu0
        %v914 = vpop.f32.mrf.mxu0
        %v915 = vadd.f32 0.0, %v914
        %v916 = vpop.f32.mrf.mxu0
        %917 = vdwg.mxu0
        %v918 = vld [vmem:[#allocation2] sm:$0xff]
        %v919 = vld [vmem:[#allocation2 + $0x8] sm:$0xff]
        %v920 = vld [vmem:[#allocation2 + $0x10] sm:$0xff]
        %v921 = vld [vmem:[#allocation2 + $0x18] sm:$0xff]
        %v922 = vld [vmem:[#allocation2 + $0x20] sm:$0xff]
        %v923 = vld [vmem:[#allocation2 + $0x28] sm:$0xff]
        %v924 = vld [vmem:[#allocation2 + $0x30] sm:$0xff]
        %v925 = vld [vmem:[#allocation2 + $0x38] sm:$0xff]
        %v926 = vld [vmem:[#allocation2 + $0x40] sm:$0xff]
        %v927 = vld [vmem:[#allocation2 + $0x48] sm:$0xff]
        %v928 = vld [vmem:[#allocation2 + $0x50] sm:$0xff]
        %v929 = vld [vmem:[#allocation2 + $0x58] sm:$0xff]
        %v930 = vld [vmem:[#allocation2 + $0x60] sm:$0xff]
        %v931 = vld [vmem:[#allocation2 + $0x68] sm:$0xff]
        %v932 = vld [vmem:[#allocation2 + $0x70] sm:$0xff]
        %v933 = vld [vmem:[#allocation2 + $0x78] sm:$0xff]
        %934 = vmax.xlane.f32.xlu0 %v856
        %v935 = vpop.xlane.xlu0 %934
        %936 = vmax.xlane.f32.xlu0 %v859
        %v937 = vpop.xlane.xlu0 %936
        %938 = vmax.xlane.f32.xlu0 %v864
        %v939 = vpop.xlane.xlu0 %938
        %940 = vmax.xlane.f32.xlu0 %v867
        %v941 = vpop.xlane.xlu0 %940
        %942 = vmax.xlane.f32.xlu0 %v872
        %v943 = vpop.xlane.xlu0 %942
        %944 = vmax.xlane.f32.xlu0 %v875
        %v945 = vpop.xlane.xlu0 %944
        %946 = vmax.xlane.f32.xlu0 %v880
        %v947 = vpop.xlane.xlu0 %946
        %948 = vmax.xlane.f32.xlu0 %v883
        %v949 = vpop.xlane.xlu0 %948
        %950 = vmax.xlane.f32.xlu0 %v888
        %v951 = vpop.xlane.xlu0 %950
        %952 = vmax.xlane.f32.xlu0 %v891
        %v953 = vpop.xlane.xlu0 %952
        %954 = vmax.xlane.f32.xlu0 %v896
        %v955 = vpop.xlane.xlu0 %954
        %956 = vmax.xlane.f32.xlu0 %v899
        %v957 = vpop.xlane.xlu0 %956
        %958 = vmax.xlane.f32.xlu0 %v904
        %v959 = vpop.xlane.xlu0 %958
        %960 = vmax.xlane.f32.xlu0 %v907
        %v961 = vpop.xlane.xlu0 %960
        %962 = vmax.xlane.f32.xlu0 %v912
        %v963 = vpop.xlane.xlu0 %962
        %964 = vmax.xlane.f32.xlu0 %v915
        %v965 = vpop.xlane.xlu0 %964
        %v966 = vmax.f32 %v918, %v935
        %v967 = vmax.f32 %v919, %v937
        %v968 = vmax.f32 %v920, %v939
        %v969 = vmax.f32 %v921, %v941
        %v970 = vmax.f32 %v922, %v943
        %v971 = vmax.f32 %v923, %v945
        %v972 = vmax.f32 %v924, %v947
        %v973 = vmax.f32 %v925, %v949
        %v974 = vmax.f32 %v926, %v951
        %v975 = vmax.f32 %v927, %v953
        %v976 = vmax.f32 %v928, %v955
        %v977 = vmax.f32 %v929, %v957
        %v978 = vmax.f32 %v930, %v959
        %v979 = vmax.f32 %v931, %v961
        %v980 = vmax.f32 %v932, %v963
        %v981 = vmax.f32 %v933, %v965
        %v982 = vsub.f32 %v918, %v966
        %v983 = vsub.f32 %v919, %v967
        %v984 = vsub.f32 %v920, %v968
        %v985 = vsub.f32 %v921, %v969
        %v986 = vsub.f32 %v922, %v970
        %v987 = vsub.f32 %v923, %v971
        %v988 = vsub.f32 %v924, %v972
        %v989 = vsub.f32 %v925, %v973
        %v990 = vsub.f32 %v926, %v974
        %v991 = vsub.f32 %v927, %v975
        %v992 = vsub.f32 %v928, %v976
        %v993 = vsub.f32 %v929, %v977
        %v994 = vsub.f32 %v930, %v978
        %v995 = vsub.f32 %v931, %v979
        %v996 = vsub.f32 %v932, %v980
        %v997 = vsub.f32 %v933, %v981
        %v998 = vmul.f32 %v982, 1.442695
        %v999 = vpow.pop %v998
        %v1000 = vmul.f32 %v983, 1.442695
        %v1001 = vpow.pop %v1000
        %v1002 = vmul.f32 %v984, 1.442695
        %v1003 = vpow.pop %v1002
        %v1004 = vmul.f32 %v985, 1.442695
        %v1005 = vpow.pop %v1004
        %v1006 = vmul.f32 %v986, 1.442695
        %v1007 = vpow.pop %v1006
        %v1008 = vmul.f32 %v987, 1.442695
        %v1009 = vpow.pop %v1008
        %v1010 = vmul.f32 %v988, 1.442695
        %v1011 = vpow.pop %v1010
        %v1012 = vmul.f32 %v989, 1.442695
        %v1013 = vpow.pop %v1012
        %v1014 = vmul.f32 %v990, 1.442695
        %v1015 = vpow.pop %v1014
        %v1016 = vmul.f32 %v991, 1.442695
        %v1017 = vpow.pop %v1016
        %v1018 = vmul.f32 %v992, 1.442695
        %v1019 = vpow.pop %v1018
        %v1020 = vmul.f32 %v993, 1.442695
        %v1021 = vpow.pop %v1020
        %v1022 = vmul.f32 %v994, 1.442695
        %v1023 = vpow.pop %v1022
        %v1024 = vmul.f32 %v995, 1.442695
        %v1025 = vpow.pop %v1024
        %v1026 = vmul.f32 %v996, 1.442695
        %v1027 = vpow.pop %v1026
        %v1028 = vmul.f32 %v997, 1.442695
        %v1029 = vpow.pop %v1028
        %1031 = vset.pattern.permute.xlu0 0
        %1032 = vperm.xlu0 %1031, %v966
        %v1033 = vpop.permute.xlu0 %1032
        %1036 = vset.pattern.permute.xlu0 0
        %1037 = vperm.xlu0 %1036, %v967
        %v1038 = vpop.permute.xlu0 %1037
        %1041 = vset.pattern.permute.xlu0 0
        %1042 = vperm.xlu0 %1041, %v968
        %v1043 = vpop.permute.xlu0 %1042
        %1046 = vset.pattern.permute.xlu0 0
        %1047 = vperm.xlu0 %1046, %v969
        %v1048 = vpop.permute.xlu0 %1047
        %1051 = vset.pattern.permute.xlu0 0
        %1052 = vperm.xlu0 %1051, %v970
        %v1053 = vpop.permute.xlu0 %1052
        %1056 = vset.pattern.permute.xlu0 0
        %1057 = vperm.xlu0 %1056, %v971
        %v1058 = vpop.permute.xlu0 %1057
        %1061 = vset.pattern.permute.xlu0 0
        %1062 = vperm.xlu0 %1061, %v972
        %v1063 = vpop.permute.xlu0 %1062
        %1066 = vset.pattern.permute.xlu0 0
        %1067 = vperm.xlu0 %1066, %v973
        %v1068 = vpop.permute.xlu0 %1067
        %1071 = vset.pattern.permute.xlu0 0
        %1072 = vperm.xlu0 %1071, %v974
        %v1073 = vpop.permute.xlu0 %1072
        %1076 = vset.pattern.permute.xlu0 0
        %1077 = vperm.xlu0 %1076, %v975
        %v1078 = vpop.permute.xlu0 %1077
        %1081 = vset.pattern.permute.xlu0 0
        %1082 = vperm.xlu0 %1081, %v976
        %v1083 = vpop.permute.xlu0 %1082
        %1086 = vset.pattern.permute.xlu0 0
        %1087 = vperm.xlu0 %1086, %v977
        %v1088 = vpop.permute.xlu0 %1087
        %1091 = vset.pattern.permute.xlu0 0
        %1092 = vperm.xlu0 %1091, %v978
        %v1093 = vpop.permute.xlu0 %1092
        %1096 = vset.pattern.permute.xlu0 0
        %1097 = vperm.xlu0 %1096, %v979
        %v1098 = vpop.permute.xlu0 %1097
        %1101 = vset.pattern.permute.xlu0 0
        %1102 = vperm.xlu0 %1101, %v980
        %v1103 = vpop.permute.xlu0 %1102
        %1106 = vset.pattern.permute.xlu0 0
        %1107 = vperm.xlu0 %1106, %v981
        %v1108 = vpop.permute.xlu0 %1107
        %v1110 = vsub.f32 %v856, %v1033
        %v1111 = vsub.f32 %v859, %v1038
        %v1112 = vsub.f32 %v864, %v1043
        %v1113 = vsub.f32 %v867, %v1048
        %v1114 = vsub.f32 %v872, %v1053
        %v1115 = vsub.f32 %v875, %v1058
        %v1116 = vsub.f32 %v880, %v1063
        %v1117 = vsub.f32 %v883, %v1068
        %v1118 = vsub.f32 %v888, %v1073
        %v1119 = vsub.f32 %v891, %v1078
        %v1120 = vsub.f32 %v896, %v1083
        %v1121 = vsub.f32 %v899, %v1088
        %v1122 = vsub.f32 %v904, %v1093
        %v1123 = vsub.f32 %v907, %v1098
        %v1124 = vsub.f32 %v912, %v1103
        %v1125 = vsub.f32 %v915, %v1108
        %v1126 = vmul.f32 %v1110, 1.442695
        %v1127 = vpow.pop %v1126
        %v1128 = vmul.f32 %v1111, 1.442695
        %v1129 = vpow.pop %v1128
        %v1130 = vmul.f32 %v1112, 1.442695
        %v1131 = vpow.pop %v1130
        %v1132 = vmul.f32 %v1113, 1.442695
        %v1133 = vpow.pop %v1132
        %v1134 = vmul.f32 %v1114, 1.442695
        %v1135 = vpow.pop %v1134
        %v1136 = vmul.f32 %v1115, 1.442695
        %v1137 = vpow.pop %v1136
        %v1138 = vmul.f32 %v1116, 1.442695
        %v1139 = vpow.pop %v1138
        %v1140 = vmul.f32 %v1117, 1.442695
        %v1141 = vpow.pop %v1140
        %v1142 = vmul.f32 %v1118, 1.442695
        %v1143 = vpow.pop %v1142
        %v1144 = vmul.f32 %v1119, 1.442695
        %v1145 = vpow.pop %v1144
        %v1146 = vmul.f32 %v1120, 1.442695
        %v1147 = vpow.pop %v1146
        %v1148 = vmul.f32 %v1121, 1.442695
        %v1149 = vpow.pop %v1148
        %v1150 = vmul.f32 %v1122, 1.442695
        %v1151 = vpow.pop %v1150
        %v1152 = vmul.f32 %v1123, 1.442695
        %v1153 = vpow.pop %v1152
        %v1154 = vmul.f32 %v1124, 1.442695
        %v1155 = vpow.pop %v1154
        %v1156 = vmul.f32 %v1125, 1.442695
        %v1157 = vpow.pop %v1156
        %v1158 = vld [vmem:[#allocation3] sm:$0xff]
        %v1159 = vld [vmem:[#allocation3 + $0x8] sm:$0xff]
        %v1160 = vld [vmem:[#allocation3 + $0x10] sm:$0xff]
        %v1161 = vld [vmem:[#allocation3 + $0x18] sm:$0xff]
        %v1162 = vld [vmem:[#allocation3 + $0x20] sm:$0xff]
        %v1163 = vld [vmem:[#allocation3 + $0x28] sm:$0xff]
        %v1164 = vld [vmem:[#allocation3 + $0x30] sm:$0xff]
        %v1165 = vld [vmem:[#allocation3 + $0x38] sm:$0xff]
        %v1166 = vld [vmem:[#allocation3 + $0x40] sm:$0xff]
        %v1167 = vld [vmem:[#allocation3 + $0x48] sm:$0xff]
        %v1168 = vld [vmem:[#allocation3 + $0x50] sm:$0xff]
        %v1169 = vld [vmem:[#allocation3 + $0x58] sm:$0xff]
        %v1170 = vld [vmem:[#allocation3 + $0x60] sm:$0xff]
        %v1171 = vld [vmem:[#allocation3 + $0x68] sm:$0xff]
        %v1172 = vld [vmem:[#allocation3 + $0x70] sm:$0xff]
        %v1173 = vld [vmem:[#allocation3 + $0x78] sm:$0xff]
        %v1174 = vmul.f32 %v999, %v1158
        %v1175 = vmul.f32 %v1001, %v1159
        %v1176 = vmul.f32 %v1003, %v1160
        %v1177 = vmul.f32 %v1005, %v1161
        %v1178 = vmul.f32 %v1007, %v1162
        %v1179 = vmul.f32 %v1009, %v1163
        %v1180 = vmul.f32 %v1011, %v1164
        %v1181 = vmul.f32 %v1013, %v1165
        %v1182 = vmul.f32 %v1015, %v1166
        %v1183 = vmul.f32 %v1017, %v1167
        %v1184 = vmul.f32 %v1019, %v1168
        %v1185 = vmul.f32 %v1021, %v1169
        %v1186 = vmul.f32 %v1023, %v1170
        %v1187 = vmul.f32 %v1025, %v1171
        %v1188 = vmul.f32 %v1027, %v1172
        %v1189 = vmul.f32 %v1029, %v1173
        %1190 = vadd.xlane.f32.xlu0 %v1127
        %v1191 = vpop.xlane.xlu0 %1190
        %1192 = vadd.xlane.f32.xlu0 %v1129
        %v1193 = vpop.xlane.xlu0 %1192
        %1194 = vadd.xlane.f32.xlu0 %v1131
        %v1195 = vpop.xlane.xlu0 %1194
        %1196 = vadd.xlane.f32.xlu0 %v1133
        %v1197 = vpop.xlane.xlu0 %1196
        %1198 = vadd.xlane.f32.xlu0 %v1135
        %v1199 = vpop.xlane.xlu0 %1198
        %1200 = vadd.xlane.f32.xlu0 %v1137
        %v1201 = vpop.xlane.xlu0 %1200
        %1202 = vadd.xlane.f32.xlu0 %v1139
        %v1203 = vpop.xlane.xlu0 %1202
        %1204 = vadd.xlane.f32.xlu0 %v1141
        %v1205 = vpop.xlane.xlu0 %1204
        %1206 = vadd.xlane.f32.xlu0 %v1143
        %v1207 = vpop.xlane.xlu0 %1206
        %1208 = vadd.xlane.f32.xlu0 %v1145
        %v1209 = vpop.xlane.xlu0 %1208
        %1210 = vadd.xlane.f32.xlu0 %v1147
        %v1211 = vpop.xlane.xlu0 %1210
        %1212 = vadd.xlane.f32.xlu0 %v1149
        %v1213 = vpop.xlane.xlu0 %1212
        %1214 = vadd.xlane.f32.xlu0 %v1151
        %v1215 = vpop.xlane.xlu0 %1214
        %1216 = vadd.xlane.f32.xlu0 %v1153
        %v1217 = vpop.xlane.xlu0 %1216
        %1218 = vadd.xlane.f32.xlu0 %v1155
        %v1219 = vpop.xlane.xlu0 %1218
        %1220 = vadd.xlane.f32.xlu0 %v1157
        %v1221 = vpop.xlane.xlu0 %1220
        %v1222 = vadd.f32 %v1174, %v1191
        %v1223 = vadd.f32 %v1175, %v1193
        %v1224 = vadd.f32 %v1176, %v1195
        %v1225 = vadd.f32 %v1177, %v1197
        %v1226 = vadd.f32 %v1178, %v1199
        %v1227 = vadd.f32 %v1179, %v1201
        %v1228 = vadd.f32 %v1180, %v1203
        %v1229 = vadd.f32 %v1181, %v1205
        %v1230 = vadd.f32 %v1182, %v1207
        %v1231 = vadd.f32 %v1183, %v1209
        %v1232 = vadd.f32 %v1184, %v1211
        %v1233 = vadd.f32 %v1185, %v1213
        %v1234 = vadd.f32 %v1186, %v1215
        %v1235 = vadd.f32 %v1187, %v1217
        %v1236 = vadd.f32 %v1188, %v1219
        %v1237 = vadd.f32 %v1189, %v1221
        %vm1238 = vcmask 7168
        %1239 = vst.msk [vmem:[#allocation3] sm:$0xff] %vm1238, %v1222
        %1240 = vst.msk [vmem:[#allocation3 + $0x8] sm:$0xff] %vm1238, %v1223
        %1241 = vst.msk [vmem:[#allocation3 + $0x10] sm:$0xff] %vm1238, %v1224
        %1242 = vst.msk [vmem:[#allocation3 + $0x18] sm:$0xff] %vm1238, %v1225
        %1243 = vst.msk [vmem:[#allocation3 + $0x20] sm:$0xff] %vm1238, %v1226
        %1244 = vst.msk [vmem:[#allocation3 + $0x28] sm:$0xff] %vm1238, %v1227
        %1245 = vst.msk [vmem:[#allocation3 + $0x30] sm:$0xff] %vm1238, %v1228
        %1246 = vst.msk [vmem:[#allocation3 + $0x38] sm:$0xff] %vm1238, %v1229
        %1247 = vst.msk [vmem:[#allocation3 + $0x40] sm:$0xff] %vm1238, %v1230
        %1248 = vst.msk [vmem:[#allocation3 + $0x48] sm:$0xff] %vm1238, %v1231
        %1249 = vst.msk [vmem:[#allocation3 + $0x50] sm:$0xff] %vm1238, %v1232
        %1250 = vst.msk [vmem:[#allocation3 + $0x58] sm:$0xff] %vm1238, %v1233
        %1251 = vst.msk [vmem:[#allocation3 + $0x60] sm:$0xff] %vm1238, %v1234
        %1252 = vst.msk [vmem:[#allocation3 + $0x68] sm:$0xff] %vm1238, %v1235
        %1253 = vst.msk [vmem:[#allocation3 + $0x70] sm:$0xff] %vm1238, %v1236
        %1254 = vst.msk [vmem:[#allocation3 + $0x78] sm:$0xff] %vm1238, %v1237
        %v1255 = vld [vmem:[#allocation4] sm:$0xff]
        %v1256 = vld [vmem:[#allocation4 + $0x8] sm:$0xff]
        %v1257 = vld [vmem:[#allocation4 + $0x10] sm:$0xff]
        %v1258 = vld [vmem:[#allocation4 + $0x18] sm:$0xff]
        %v1259 = vld [vmem:[#allocation4 + $0x20] sm:$0xff]
        %v1260 = vld [vmem:[#allocation4 + $0x28] sm:$0xff]
        %v1261 = vld [vmem:[#allocation4 + $0x30] sm:$0xff]
        %v1262 = vld [vmem:[#allocation4 + $0x38] sm:$0xff]
        %v1263 = vld [vmem:[#allocation4 + $0x40] sm:$0xff]
        %v1264 = vld [vmem:[#allocation4 + $0x48] sm:$0xff]
        %v1265 = vld [vmem:[#allocation4 + $0x50] sm:$0xff]
        %v1266 = vld [vmem:[#allocation4 + $0x58] sm:$0xff]
        %v1267 = vld [vmem:[#allocation4 + $0x60] sm:$0xff]
        %v1268 = vld [vmem:[#allocation4 + $0x68] sm:$0xff]
        %v1269 = vld [vmem:[#allocation4 + $0x70] sm:$0xff]
        %v1270 = vld [vmem:[#allocation4 + $0x78] sm:$0xff]
        %1272 = vset.pattern.permute.xlu0 0
        %1273 = vperm.xlu0 %1272, %v999
        %v1274 = vpop.permute.xlu0 %1273
        %1277 = vset.pattern.permute.xlu0 0
        %1278 = vperm.xlu0 %1277, %v1001
        %v1279 = vpop.permute.xlu0 %1278
        %1282 = vset.pattern.permute.xlu0 0
        %1283 = vperm.xlu0 %1282, %v1003
        %v1284 = vpop.permute.xlu0 %1283
        %1287 = vset.pattern.permute.xlu0 0
        %1288 = vperm.xlu0 %1287, %v1005
        %v1289 = vpop.permute.xlu0 %1288
        %1292 = vset.pattern.permute.xlu0 0
        %1293 = vperm.xlu0 %1292, %v1007
        %v1294 = vpop.permute.xlu0 %1293
        %1297 = vset.pattern.permute.xlu0 0
        %1298 = vperm.xlu0 %1297, %v1009
        %v1299 = vpop.permute.xlu0 %1298
        %1302 = vset.pattern.permute.xlu0 0
        %1303 = vperm.xlu0 %1302, %v1011
        %v1304 = vpop.permute.xlu0 %1303
        %1307 = vset.pattern.permute.xlu0 0
        %1308 = vperm.xlu0 %1307, %v1013
        %v1309 = vpop.permute.xlu0 %1308
        %1312 = vset.pattern.permute.xlu0 0
        %1313 = vperm.xlu0 %1312, %v1015
        %v1314 = vpop.permute.xlu0 %1313
        %1317 = vset.pattern.permute.xlu0 0
        %1318 = vperm.xlu0 %1317, %v1017
        %v1319 = vpop.permute.xlu0 %1318
        %1322 = vset.pattern.permute.xlu0 0
        %1323 = vperm.xlu0 %1322, %v1019
        %v1324 = vpop.permute.xlu0 %1323
        %1327 = vset.pattern.permute.xlu0 0
        %1328 = vperm.xlu0 %1327, %v1021
        %v1329 = vpop.permute.xlu0 %1328
        %1332 = vset.pattern.permute.xlu0 0
        %1333 = vperm.xlu0 %1332, %v1023
        %v1334 = vpop.permute.xlu0 %1333
        %1337 = vset.pattern.permute.xlu0 0
        %1338 = vperm.xlu0 %1337, %v1025
        %v1339 = vpop.permute.xlu0 %1338
        %1342 = vset.pattern.permute.xlu0 0
        %1343 = vperm.xlu0 %1342, %v1027
        %v1344 = vpop.permute.xlu0 %1343
        %1347 = vset.pattern.permute.xlu0 0
        %1348 = vperm.xlu0 %1347, %v1029
        %v1349 = vpop.permute.xlu0 %1348
        %v1351 = vmul.f32 %v1274, %v1255
        %v1352 = vmul.f32 %v1279, %v1256
        %v1353 = vmul.f32 %v1284, %v1257
        %v1354 = vmul.f32 %v1289, %v1258
        %v1355 = vmul.f32 %v1294, %v1259
        %v1356 = vmul.f32 %v1299, %v1260
        %v1357 = vmul.f32 %v1304, %v1261
        %v1358 = vmul.f32 %v1309, %v1262
        %v1359 = vmul.f32 %v1314, %v1263
        %v1360 = vmul.f32 %v1319, %v1264
        %v1361 = vmul.f32 %v1324, %v1265
        %v1362 = vmul.f32 %v1329, %v1266
        %v1363 = vmul.f32 %v1334, %v1267
        %v1364 = vmul.f32 %v1339, %v1268
        %v1365 = vmul.f32 %v1344, %v1269
        %v1366 = vmul.f32 %v1349, %v1270
        %v1367 = vpack.c.bf16 %v1129, %v1127
        %v1368 = vpack.c.bf16 %v1133, %v1131
        %v1369 = vpack.c.bf16 %v1137, %v1135
        %v1370 = vpack.c.bf16 %v1141, %v1139
        %v1371 = vpack.c.bf16 %v1145, %v1143
        %v1372 = vpack.c.bf16 %v1149, %v1147
        %v1373 = vpack.c.bf16 %v1153, %v1151
        %v1374 = vpack.c.bf16 %v1157, %v1155
        %v1391 = vunpack.c.l.b16 %v676
        %v1392 = vunpack.c.l.b16 %v677
        %v1393 = vunpack.c.l.b16 %v678
        %v1394 = vunpack.c.l.b16 %v679
        %v1395 = vunpack.c.l.b16 %v680
        %v1396 = vunpack.c.l.b16 %v681
        %v1397 = vunpack.c.l.b16 %v682
        %v1398 = vunpack.c.l.b16 %v683
        %v1399 = vunpack.c.l.b16 %v684
        %v1400 = vunpack.c.l.b16 %v685
        %v1401 = vunpack.c.l.b16 %v686
        %v1402 = vunpack.c.l.b16 %v687
        %v1403 = vunpack.c.l.b16 %v688
        %v1404 = vunpack.c.l.b16 %v689
        %v1405 = vunpack.c.l.b16 %v690
        %v1406 = vunpack.c.l.b16 %v691
        %v1407 = vpack.c.b16 %v1392, %v1391
        %v1408 = vpack.c.b16 %v1394, %v1393
        %v1409 = vpack.c.b16 %v1396, %v1395
        %v1410 = vpack.c.b16 %v1398, %v1397
        %v1411 = vpack.c.b16 %v1400, %v1399
        %v1412 = vpack.c.b16 %v1402, %v1401
        %v1413 = vpack.c.b16 %v1404, %v1403
        %v1414 = vpack.c.b16 %v1406, %v1405
        %1423 = vmatprep.subr.bf16.mxu0 0
        %1424 = vmatpush1.bf16.msra.mxu0 %v1414
        %1425 = vmatprep.subr.bf16.mxu0 0
        %1426 = vmatpush1.bf16.msra.mxu0 %v1413
        %1427 = vmatprep.subr.bf16.mxu0 0
        %1428 = vmatpush1.bf16.msra.mxu0 %v1412
        %1429 = vmatprep.subr.bf16.mxu0 0
        %1430 = vmatpush1.bf16.msra.mxu0 %v1411
        %1431 = vmatprep.subr.bf16.mxu0 0
        %1432 = vmatpush1.bf16.msra.mxu0 %v1410
        %1433 = vmatprep.subr.bf16.mxu0 0
        %1434 = vmatpush1.bf16.msra.mxu0 %v1409
        %1435 = vmatprep.subr.bf16.mxu0 0
        %1436 = vmatpush1.bf16.msra.mxu0 %v1408
        %1437 = vmatprep.subr.bf16.mxu0 0
        %1438 = vmatpush1.bf16.msra.mxu0 %v1407
        %1439 = vmatprep.subr.bf16.mxu0 0
        %1440 = vmatpush2.bf16.msra.mxu0 0
        %1441 = vmatprep.subr.bf16.mxu0 0
        %1442 = vmatpush2.bf16.msra.mxu0 0
        %1443 = vmatprep.subr.bf16.mxu0 0
        %1444 = vmatpush2.bf16.msra.mxu0 0
        %1445 = vmatprep.subr.bf16.mxu0 0
        %1446 = vmatpush2.bf16.msra.mxu0 0
        %1447 = vmatprep.subr.bf16.mxu0 0
        %1448 = vmatpush2.bf16.msra.mxu0 0
        %1449 = vmatprep.subr.bf16.mxu0 0
        %1450 = vmatpush2.bf16.msra.mxu0 0
        %1451 = vmatprep.subr.bf16.mxu0 0
        %1452 = vmatpush2.bf16.msra.mxu0 0
        %1453 = vmatprep.subr.bf16.mxu0 0
        %1454 = vmatpush2.bf16.msra.mxu0 0
        %1455 = vmatprep.mubr.bf16.mxu0 0
        %1456 = vmatmul.mubr.bf16.gmra.mxu0 %v1367
        %v1457 = vpop.f32.mrf.mxu0
        %v1458 = vadd.f32 0.0, %v1457
        %v1459 = vpop.f32.mrf.mxu0
        %v1460 = vpop.f32.mrf.mxu0
        %v1461 = vadd.f32 0.0, %v1460
        %v1462 = vpop.f32.mrf.mxu0
        %1463 = vmatprep.mubr.bf16.mxu0 0
        %1464 = vmatmul.mubr.bf16.gmra.mxu0 %v1368
        %v1465 = vpop.f32.mrf.mxu0
        %v1466 = vadd.f32 0.0, %v1465
        %v1467 = vpop.f32.mrf.mxu0
        %v1468 = vpop.f32.mrf.mxu0
        %v1469 = vadd.f32 0.0, %v1468
        %v1470 = vpop.f32.mrf.mxu0
        %1471 = vmatprep.mubr.bf16.mxu0 0
        %1472 = vmatmul.mubr.bf16.gmra.mxu0 %v1369
        %v1473 = vpop.f32.mrf.mxu0
        %v1474 = vadd.f32 0.0, %v1473
        %v1475 = vpop.f32.mrf.mxu0
        %v1476 = vpop.f32.mrf.mxu0
        %v1477 = vadd.f32 0.0, %v1476
        %v1478 = vpop.f32.mrf.mxu0
        %1479 = vmatprep.mubr.bf16.mxu0 0
        %1480 = vmatmul.mubr.bf16.gmra.mxu0 %v1370
        %v1481 = vpop.f32.mrf.mxu0
        %v1482 = vadd.f32 0.0, %v1481
        %v1483 = vpop.f32.mrf.mxu0
        %v1484 = vpop.f32.mrf.mxu0
        %v1485 = vadd.f32 0.0, %v1484
        %v1486 = vpop.f32.mrf.mxu0
        %1487 = vmatprep.mubr.bf16.mxu0 0
        %1488 = vmatmul.mubr.bf16.gmra.mxu0 %v1371
        %v1489 = vpop.f32.mrf.mxu0
        %v1490 = vadd.f32 0.0, %v1489
        %v1491 = vpop.f32.mrf.mxu0
        %v1492 = vpop.f32.mrf.mxu0
        %v1493 = vadd.f32 0.0, %v1492
        %v1494 = vpop.f32.mrf.mxu0
        %1495 = vmatprep.mubr.bf16.mxu0 0
        %1496 = vmatmul.mubr.bf16.gmra.mxu0 %v1372
        %v1497 = vpop.f32.mrf.mxu0
        %v1498 = vadd.f32 0.0, %v1497
        %v1499 = vpop.f32.mrf.mxu0
        %v1500 = vpop.f32.mrf.mxu0
        %v1501 = vadd.f32 0.0, %v1500
        %v1502 = vpop.f32.mrf.mxu0
        %1503 = vmatprep.mubr.bf16.mxu0 0
        %1504 = vmatmul.mubr.bf16.gmra.mxu0 %v1373
        %v1505 = vpop.f32.mrf.mxu0
        %v1506 = vadd.f32 0.0, %v1505
        %v1507 = vpop.f32.mrf.mxu0
        %v1508 = vpop.f32.mrf.mxu0
        %v1509 = vadd.f32 0.0, %v1508
        %v1510 = vpop.f32.mrf.mxu0
        %1511 = vmatprep.mubr.bf16.mxu0 0
        %1512 = vmatmul.mubr.bf16.gmra.mxu0 %v1374
        %v1513 = vpop.f32.mrf.mxu0
        %v1514 = vadd.f32 0.0, %v1513
        %v1515 = vpop.f32.mrf.mxu0
        %v1516 = vpop.f32.mrf.mxu0
        %v1517 = vadd.f32 0.0, %v1516
        %v1518 = vpop.f32.mrf.mxu0
        %1519 = vdwg.mxu0
        %v1520 = vadd.f32 %v1351, %v1458
        %v1521 = vadd.f32 %v1352, %v1461
        %v1522 = vadd.f32 %v1353, %v1466
        %v1523 = vadd.f32 %v1354, %v1469
        %v1524 = vadd.f32 %v1355, %v1474
        %v1525 = vadd.f32 %v1356, %v1477
        %v1526 = vadd.f32 %v1357, %v1482
        %v1527 = vadd.f32 %v1358, %v1485
        %v1528 = vadd.f32 %v1359, %v1490
        %v1529 = vadd.f32 %v1360, %v1493
        %v1530 = vadd.f32 %v1361, %v1498
        %v1531 = vadd.f32 %v1362, %v1501
        %v1532 = vadd.f32 %v1363, %v1506
        %v1533 = vadd.f32 %v1364, %v1509
        %v1534 = vadd.f32 %v1365, %v1514
        %v1535 = vadd.f32 %v1366, %v1517
        %1536 = vst.msk [vmem:[#allocation4] sm:$0xff] %vm772, %v1520
        %1537 = vst.msk [vmem:[#allocation4 + $0x8] sm:$0xff] %vm772, %v1521
        %1538 = vst.msk [vmem:[#allocation4 + $0x10] sm:$0xff] %vm772, %v1522
        %1539 = vst.msk [vmem:[#allocation4 + $0x18] sm:$0xff] %vm772, %v1523
        %1540 = vst.msk [vmem:[#allocation4 + $0x20] sm:$0xff] %vm772, %v1524
        %1541 = vst.msk [vmem:[#allocation4 + $0x28] sm:$0xff] %vm772, %v1525
        %1542 = vst.msk [vmem:[#allocation4 + $0x30] sm:$0xff] %vm772, %v1526
        %1543 = vst.msk [vmem:[#allocation4 + $0x38] sm:$0xff] %vm772, %v1527
        %1544 = vst.msk [vmem:[#allocation4 + $0x40] sm:$0xff] %vm772, %v1528
        %1545 = vst.msk [vmem:[#allocation4 + $0x48] sm:$0xff] %vm772, %v1529
        %1546 = vst.msk [vmem:[#allocation4 + $0x50] sm:$0xff] %vm772, %v1530
        %1547 = vst.msk [vmem:[#allocation4 + $0x58] sm:$0xff] %vm772, %v1531
        %1548 = vst.msk [vmem:[#allocation4 + $0x60] sm:$0xff] %vm772, %v1532
        %1549 = vst.msk [vmem:[#allocation4 + $0x68] sm:$0xff] %vm772, %v1533
        %1550 = vst.msk [vmem:[#allocation4 + $0x70] sm:$0xff] %vm772, %v1534
        %1551 = vst.msk [vmem:[#allocation4 + $0x78] sm:$0xff] %vm772, %v1535
        %1552 = vst.msk [vmem:[#allocation2] sm:$0xff] %vm1238, %v966
        %1553 = vst.msk [vmem:[#allocation2 + $0x8] sm:$0xff] %vm1238, %v967
        %1554 = vst.msk [vmem:[#allocation2 + $0x10] sm:$0xff] %vm1238, %v968
        %1555 = vst.msk [vmem:[#allocation2 + $0x18] sm:$0xff] %vm1238, %v969
        %1556 = vst.msk [vmem:[#allocation2 + $0x20] sm:$0xff] %vm1238, %v970
        %1557 = vst.msk [vmem:[#allocation2 + $0x28] sm:$0xff] %vm1238, %v971
        %1558 = vst.msk [vmem:[#allocation2 + $0x30] sm:$0xff] %vm1238, %v972
        %1559 = vst.msk [vmem:[#allocation2 + $0x38] sm:$0xff] %vm1238, %v973
        %1560 = vst.msk [vmem:[#allocation2 + $0x40] sm:$0xff] %vm1238, %v974
        %1561 = vst.msk [vmem:[#allocation2 + $0x48] sm:$0xff] %vm1238, %v975
        %1562 = vst.msk [vmem:[#allocation2 + $0x50] sm:$0xff] %vm1238, %v976
        %1563 = vst.msk [vmem:[#allocation2 + $0x58] sm:$0xff] %vm1238, %v977
        %1564 = vst.msk [vmem:[#allocation2 + $0x60] sm:$0xff] %vm1238, %v978
        %1565 = vst.msk [vmem:[#allocation2 + $0x68] sm:$0xff] %vm1238, %v979
        %1566 = vst.msk [vmem:[#allocation2 + $0x70] sm:$0xff] %vm1238, %v980
        %1567 = vst.msk [vmem:[#allocation2 + $0x78] sm:$0xff] %vm1238, %v981
        %1568 = vrot.lane.b32.xlu0 %v724, 96
        %v1569 = vpop.permute.xlu0 %1568
        %1570 = vrot.lane.b32.xlu0 %v725, 96
        %v1571 = vpop.permute.xlu0 %1570
        %1572 = vrot.lane.b32.xlu0 %v726, 96
        %v1573 = vpop.permute.xlu0 %1572
        %1574 = vrot.lane.b32.xlu0 %v727, 96
        %v1575 = vpop.permute.xlu0 %1574
        %1576 = vrot.lane.b32.xlu0 %v728, 96
        %v1577 = vpop.permute.xlu0 %1576
        %1578 = vrot.lane.b32.xlu0 %v729, 96
        %v1579 = vpop.permute.xlu0 %1578
        %1580 = vrot.lane.b32.xlu0 %v730, 96
        %v1581 = vpop.permute.xlu0 %1580
        %1582 = vrot.lane.b32.xlu0 %v731, 96
        %v1583 = vpop.permute.xlu0 %1582
        %1584 = vrot.lane.b32.xlu0 %v764, 96
        %v1585 = vpop.permute.xlu0 %1584
        %1586 = vrot.lane.b32.xlu0 %v765, 96
        %v1587 = vpop.permute.xlu0 %1586
        %1588 = vrot.lane.b32.xlu0 %v766, 96
        %v1589 = vpop.permute.xlu0 %1588
        %1590 = vrot.lane.b32.xlu0 %v767, 96
        %v1591 = vpop.permute.xlu0 %1590
        %1592 = vrot.lane.b32.xlu0 %v768, 96
        %v1593 = vpop.permute.xlu0 %1592
        %1594 = vrot.lane.b32.xlu0 %v769, 96
        %v1595 = vpop.permute.xlu0 %1594
        %1596 = vrot.lane.b32.xlu0 %v770, 96
        %v1597 = vpop.permute.xlu0 %1596
        %1598 = vrot.lane.b32.xlu0 %v771, 96
        %v1599 = vpop.permute.xlu0 %1598
        %v1601 = vsel %vm772, %v1569, 0
        %v1604 = vsel %vm772, %v1571, 0
        %v1607 = vsel %vm772, %v1573, 0
        %v1610 = vsel %vm772, %v1575, 0
        %v1613 = vsel %vm772, %v1577, 0
        %v1616 = vsel %vm772, %v1579, 0
        %v1619 = vsel %vm772, %v1581, 0
        %v1622 = vsel %vm772, %v1583, 0
        %v1625 = vsel %vm772, %v1585, 0
        %v1628 = vsel %vm772, %v1587, 0
        %v1631 = vsel %vm772, %v1589, 0
        %v1634 = vsel %vm772, %v1591, 0
        %v1637 = vsel %vm772, %v1593, 0
        %v1640 = vsel %vm772, %v1595, 0
        %v1643 = vsel %vm772, %v1597, 0
        %v1646 = vsel %vm772, %v1599, 0
        %1648 = vmatprep.subr.bf16.mxu0 0
        %1649 = vmatpush1.bf16.xpose.msra.mxu0 %v1646
        %1650 = vmatprep.subr.bf16.mxu0 0
        %1651 = vmatpush1.bf16.xpose.msra.mxu0 %v1643
        %1652 = vmatprep.subr.bf16.mxu0 0
        %1653 = vmatpush1.bf16.xpose.msra.mxu0 %v1640
        %1654 = vmatprep.subr.bf16.mxu0 0
        %1655 = vmatpush1.bf16.xpose.msra.mxu0 %v1637
        %1656 = vmatprep.subr.bf16.mxu0 0
        %1657 = vmatpush1.bf16.xpose.msra.mxu0 %v1634
        %1658 = vmatprep.subr.bf16.mxu0 0
        %1659 = vmatpush1.bf16.xpose.msra.mxu0 %v1631
        %1660 = vmatprep.subr.bf16.mxu0 0
        %1661 = vmatpush1.bf16.xpose.msra.mxu0 %v1628
        %1662 = vmatprep.subr.bf16.mxu0 0
        %1663 = vmatpush1.bf16.xpose.msra.mxu0 %v1625
        %1664 = vmatprep.subr.bf16.mxu0 0
        %1665 = vmatpush2.bf16.xpose.msra.mxu0 0
        %1666 = vmatprep.subr.bf16.mxu0 0
        %1667 = vmatpush2.bf16.xpose.msra.mxu0 0
        %1668 = vmatprep.subr.bf16.mxu0 0
        %1669 = vmatpush2.bf16.xpose.msra.mxu0 0
        %1670 = vmatprep.subr.bf16.mxu0 0
        %1671 = vmatpush2.bf16.xpose.msra.mxu0 0
        %1672 = vmatprep.subr.bf16.mxu0 0
        %1673 = vmatpush2.bf16.xpose.msra.mxu0 0
        %1674 = vmatprep.subr.bf16.mxu0 0
        %1675 = vmatpush2.bf16.xpose.msra.mxu0 0
        %1676 = vmatprep.subr.bf16.mxu0 0
        %1677 = vmatpush2.bf16.xpose.msra.mxu0 0
        %1678 = vmatprep.subr.bf16.mxu0 0
        %1679 = vmatpush2.bf16.xpose.msra.mxu0 0
        %1680 = vmatprep.mubr.bf16.mxu0 0
        %1681 = vmatmul.mubr.bf16.gmra.mxu0 %v1601
        %v1682 = vpop.f32.mrf.mxu0
        %v1683 = vadd.f32 0.0, %v1682
        %v1684 = vpop.f32.mrf.mxu0
        %v1685 = vpop.f32.mrf.mxu0
        %v1686 = vadd.f32 0.0, %v1685
        %v1687 = vpop.f32.mrf.mxu0
        %1688 = vmatprep.mubr.bf16.mxu0 0
        %1689 = vmatmul.mubr.bf16.gmra.mxu0 %v1604
        %v1690 = vpop.f32.mrf.mxu0
        %v1691 = vadd.f32 0.0, %v1690
        %v1692 = vpop.f32.mrf.mxu0
        %v1693 = vpop.f32.mrf.mxu0
        %v1694 = vadd.f32 0.0, %v1693
        %v1695 = vpop.f32.mrf.mxu0
        %1696 = vmatprep.mubr.bf16.mxu0 0
        %1697 = vmatmul.mubr.bf16.gmra.mxu0 %v1607
        %v1698 = vpop.f32.mrf.mxu0
        %v1699 = vadd.f32 0.0, %v1698
        %v1700 = vpop.f32.mrf.mxu0
        %v1701 = vpop.f32.mrf.mxu0
        %v1702 = vadd.f32 0.0, %v1701
        %v1703 = vpop.f32.mrf.mxu0
        %1704 = vmatprep.mubr.bf16.mxu0 0
        %1705 = vmatmul.mubr.bf16.gmra.mxu0 %v1610
        %v1706 = vpop.f32.mrf.mxu0
        %v1707 = vadd.f32 0.0, %v1706
        %v1708 = vpop.f32.mrf.mxu0
        %v1709 = vpop.f32.mrf.mxu0
        %v1710 = vadd.f32 0.0, %v1709
        %v1711 = vpop.f32.mrf.mxu0
        %1712 = vmatprep.mubr.bf16.mxu0 0
        %1713 = vmatmul.mubr.bf16.gmra.mxu0 %v1613
        %v1714 = vpop.f32.mrf.mxu0
        %v1715 = vadd.f32 0.0, %v1714
        %v1716 = vpop.f32.mrf.mxu0
        %v1717 = vpop.f32.mrf.mxu0
        %v1718 = vadd.f32 0.0, %v1717
        %v1719 = vpop.f32.mrf.mxu0
        %1720 = vmatprep.mubr.bf16.mxu0 0
        %1721 = vmatmul.mubr.bf16.gmra.mxu0 %v1616
        %v1722 = vpop.f32.mrf.mxu0
        %v1723 = vadd.f32 0.0, %v1722
        %v1724 = vpop.f32.mrf.mxu0
        %v1725 = vpop.f32.mrf.mxu0
        %v1726 = vadd.f32 0.0, %v1725
        %v1727 = vpop.f32.mrf.mxu0
        %1728 = vmatprep.mubr.bf16.mxu0 0
        %1729 = vmatmul.mubr.bf16.gmra.mxu0 %v1619
        %v1730 = vpop.f32.mrf.mxu0
        %v1731 = vadd.f32 0.0, %v1730
        %v1732 = vpop.f32.mrf.mxu0
        %v1733 = vpop.f32.mrf.mxu0
        %v1734 = vadd.f32 0.0, %v1733
        %v1735 = vpop.f32.mrf.mxu0
        %1736 = vmatprep.mubr.bf16.mxu0 0
        %1737 = vmatmul.mubr.bf16.gmra.mxu0 %v1622
        %v1738 = vpop.f32.mrf.mxu0
        %v1739 = vadd.f32 0.0, %v1738
        %v1740 = vpop.f32.mrf.mxu0
        %v1741 = vpop.f32.mrf.mxu0
        %v1742 = vadd.f32 0.0, %v1741
        %v1743 = vpop.f32.mrf.mxu0
        %1744 = vdwg.mxu0
        %v1745 = vld [vmem:[#allocation2] sm:$0xff]
        %v1746 = vld [vmem:[#allocation2 + $0x8] sm:$0xff]
        %v1747 = vld [vmem:[#allocation2 + $0x10] sm:$0xff]
        %v1748 = vld [vmem:[#allocation2 + $0x18] sm:$0xff]
        %v1749 = vld [vmem:[#allocation2 + $0x20] sm:$0xff]
        %v1750 = vld [vmem:[#allocation2 + $0x28] sm:$0xff]
        %v1751 = vld [vmem:[#allocation2 + $0x30] sm:$0xff]
        %v1752 = vld [vmem:[#allocation2 + $0x38] sm:$0xff]
        %v1753 = vld [vmem:[#allocation2 + $0x40] sm:$0xff]
        %v1754 = vld [vmem:[#allocation2 + $0x48] sm:$0xff]
        %v1755 = vld [vmem:[#allocation2 + $0x50] sm:$0xff]
        %v1756 = vld [vmem:[#allocation2 + $0x58] sm:$0xff]
        %v1757 = vld [vmem:[#allocation2 + $0x60] sm:$0xff]
        %v1758 = vld [vmem:[#allocation2 + $0x68] sm:$0xff]
        %v1759 = vld [vmem:[#allocation2 + $0x70] sm:$0xff]
        %v1760 = vld [vmem:[#allocation2 + $0x78] sm:$0xff]
        %1761 = vmax.xlane.f32.xlu0 %v1683
        %v1762 = vpop.xlane.xlu0 %1761
        %1763 = vmax.xlane.f32.xlu0 %v1686
        %v1764 = vpop.xlane.xlu0 %1763
        %1765 = vmax.xlane.f32.xlu0 %v1691
        %v1766 = vpop.xlane.xlu0 %1765
        %1767 = vmax.xlane.f32.xlu0 %v1694
        %v1768 = vpop.xlane.xlu0 %1767
        %1769 = vmax.xlane.f32.xlu0 %v1699
        %v1770 = vpop.xlane.xlu0 %1769
        %1771 = vmax.xlane.f32.xlu0 %v1702
        %v1772 = vpop.xlane.xlu0 %1771
        %1773 = vmax.xlane.f32.xlu0 %v1707
        %v1774 = vpop.xlane.xlu0 %1773
        %1775 = vmax.xlane.f32.xlu0 %v1710
        %v1776 = vpop.xlane.xlu0 %1775
        %1777 = vmax.xlane.f32.xlu0 %v1715
        %v1778 = vpop.xlane.xlu0 %1777
        %1779 = vmax.xlane.f32.xlu0 %v1718
        %v1780 = vpop.xlane.xlu0 %1779
        %1781 = vmax.xlane.f32.xlu0 %v1723
        %v1782 = vpop.xlane.xlu0 %1781
        %1783 = vmax.xlane.f32.xlu0 %v1726
        %v1784 = vpop.xlane.xlu0 %1783
        %1785 = vmax.xlane.f32.xlu0 %v1731
        %v1786 = vpop.xlane.xlu0 %1785
        %1787 = vmax.xlane.f32.xlu0 %v1734
        %v1788 = vpop.xlane.xlu0 %1787
        %1789 = vmax.xlane.f32.xlu0 %v1739
        %v1790 = vpop.xlane.xlu0 %1789
        %1791 = vmax.xlane.f32.xlu0 %v1742
        %v1792 = vpop.xlane.xlu0 %1791
        %v1793 = vmax.f32 %v1745, %v1762
        %v1794 = vmax.f32 %v1746, %v1764
        %v1795 = vmax.f32 %v1747, %v1766
        %v1796 = vmax.f32 %v1748, %v1768
        %v1797 = vmax.f32 %v1749, %v1770
        %v1798 = vmax.f32 %v1750, %v1772
        %v1799 = vmax.f32 %v1751, %v1774
        %v1800 = vmax.f32 %v1752, %v1776
        %v1801 = vmax.f32 %v1753, %v1778
        %v1802 = vmax.f32 %v1754, %v1780
        %v1803 = vmax.f32 %v1755, %v1782
        %v1804 = vmax.f32 %v1756, %v1784
        %v1805 = vmax.f32 %v1757, %v1786
        %v1806 = vmax.f32 %v1758, %v1788
        %v1807 = vmax.f32 %v1759, %v1790
        %v1808 = vmax.f32 %v1760, %v1792
        %v1809 = vsub.f32 %v1745, %v1793
        %v1810 = vsub.f32 %v1746, %v1794
        %v1811 = vsub.f32 %v1747, %v1795
        %v1812 = vsub.f32 %v1748, %v1796
        %v1813 = vsub.f32 %v1749, %v1797
        %v1814 = vsub.f32 %v1750, %v1798
        %v1815 = vsub.f32 %v1751, %v1799
        %v1816 = vsub.f32 %v1752, %v1800
        %v1817 = vsub.f32 %v1753, %v1801
        %v1818 = vsub.f32 %v1754, %v1802
        %v1819 = vsub.f32 %v1755, %v1803
        %v1820 = vsub.f32 %v1756, %v1804
        %v1821 = vsub.f32 %v1757, %v1805
        %v1822 = vsub.f32 %v1758, %v1806
        %v1823 = vsub.f32 %v1759, %v1807
        %v1824 = vsub.f32 %v1760, %v1808
        %v1825 = vmul.f32 %v1809, 1.442695
        %v1826 = vpow.pop %v1825
        %v1827 = vmul.f32 %v1810, 1.442695
        %v1828 = vpow.pop %v1827
        %v1829 = vmul.f32 %v1811, 1.442695
        %v1830 = vpow.pop %v1829
        %v1831 = vmul.f32 %v1812, 1.442695
        %v1832 = vpow.pop %v1831
        %v1833 = vmul.f32 %v1813, 1.442695
        %v1834 = vpow.pop %v1833
        %v1835 = vmul.f32 %v1814, 1.442695
        %v1836 = vpow.pop %v1835
        %v1837 = vmul.f32 %v1815, 1.442695
        %v1838 = vpow.pop %v1837
        %v1839 = vmul.f32 %v1816, 1.442695
        %v1840 = vpow.pop %v1839
        %v1841 = vmul.f32 %v1817, 1.442695
        %v1842 = vpow.pop %v1841
        %v1843 = vmul.f32 %v1818, 1.442695
        %v1844 = vpow.pop %v1843
        %v1845 = vmul.f32 %v1819, 1.442695
        %v1846 = vpow.pop %v1845
        %v1847 = vmul.f32 %v1820, 1.442695
        %v1848 = vpow.pop %v1847
        %v1849 = vmul.f32 %v1821, 1.442695
        %v1850 = vpow.pop %v1849
        %v1851 = vmul.f32 %v1822, 1.442695
        %v1852 = vpow.pop %v1851
        %v1853 = vmul.f32 %v1823, 1.442695
        %v1854 = vpow.pop %v1853
        %v1855 = vmul.f32 %v1824, 1.442695
        %v1856 = vpow.pop %v1855
        %1858 = vset.pattern.permute.xlu0 1
        %1859 = vperm.xlu0 %1858, %v1793
        %v1860 = vpop.permute.xlu0 %1859
        %1863 = vset.pattern.permute.xlu0 1
        %1864 = vperm.xlu0 %1863, %v1794
        %v1865 = vpop.permute.xlu0 %1864
        %1868 = vset.pattern.permute.xlu0 1
        %1869 = vperm.xlu0 %1868, %v1795
        %v1870 = vpop.permute.xlu0 %1869
        %1873 = vset.pattern.permute.xlu0 1
        %1874 = vperm.xlu0 %1873, %v1796
        %v1875 = vpop.permute.xlu0 %1874
        %1878 = vset.pattern.permute.xlu0 1
        %1879 = vperm.xlu0 %1878, %v1797
        %v1880 = vpop.permute.xlu0 %1879
        %1883 = vset.pattern.permute.xlu0 1
        %1884 = vperm.xlu0 %1883, %v1798
        %v1885 = vpop.permute.xlu0 %1884
        %1888 = vset.pattern.permute.xlu0 1
        %1889 = vperm.xlu0 %1888, %v1799
        %v1890 = vpop.permute.xlu0 %1889
        %1893 = vset.pattern.permute.xlu0 1
        %1894 = vperm.xlu0 %1893, %v1800
        %v1895 = vpop.permute.xlu0 %1894
        %1898 = vset.pattern.permute.xlu0 1
        %1899 = vperm.xlu0 %1898, %v1801
        %v1900 = vpop.permute.xlu0 %1899
        %1903 = vset.pattern.permute.xlu0 1
        %1904 = vperm.xlu0 %1903, %v1802
        %v1905 = vpop.permute.xlu0 %1904
        %1908 = vset.pattern.permute.xlu0 1
        %1909 = vperm.xlu0 %1908, %v1803
        %v1910 = vpop.permute.xlu0 %1909
        %1913 = vset.pattern.permute.xlu0 1
        %1914 = vperm.xlu0 %1913, %v1804
        %v1915 = vpop.permute.xlu0 %1914
        %1918 = vset.pattern.permute.xlu0 1
        %1919 = vperm.xlu0 %1918, %v1805
        %v1920 = vpop.permute.xlu0 %1919
        %1923 = vset.pattern.permute.xlu0 1
        %1924 = vperm.xlu0 %1923, %v1806
        %v1925 = vpop.permute.xlu0 %1924
        %1928 = vset.pattern.permute.xlu0 1
        %1929 = vperm.xlu0 %1928, %v1807
        %v1930 = vpop.permute.xlu0 %1929
        %1933 = vset.pattern.permute.xlu0 1
        %1934 = vperm.xlu0 %1933, %v1808
        %v1935 = vpop.permute.xlu0 %1934
        %v1937 = vsub.f32 %v1683, %v1860
        %v1938 = vsub.f32 %v1686, %v1865
        %v1939 = vsub.f32 %v1691, %v1870
        %v1940 = vsub.f32 %v1694, %v1875
        %v1941 = vsub.f32 %v1699, %v1880
        %v1942 = vsub.f32 %v1702, %v1885
        %v1943 = vsub.f32 %v1707, %v1890
        %v1944 = vsub.f32 %v1710, %v1895
        %v1945 = vsub.f32 %v1715, %v1900
        %v1946 = vsub.f32 %v1718, %v1905
        %v1947 = vsub.f32 %v1723, %v1910
        %v1948 = vsub.f32 %v1726, %v1915
        %v1949 = vsub.f32 %v1731, %v1920
        %v1950 = vsub.f32 %v1734, %v1925
        %v1951 = vsub.f32 %v1739, %v1930
        %v1952 = vsub.f32 %v1742, %v1935
        %v1953 = vmul.f32 %v1937, 1.442695
        %v1954 = vpow.pop %v1953
        %v1955 = vmul.f32 %v1938, 1.442695
        %v1956 = vpow.pop %v1955
        %v1957 = vmul.f32 %v1939, 1.442695
        %v1958 = vpow.pop %v1957
        %v1959 = vmul.f32 %v1940, 1.442695
        %v1960 = vpow.pop %v1959
        %v1961 = vmul.f32 %v1941, 1.442695
        %v1962 = vpow.pop %v1961
        %v1963 = vmul.f32 %v1942, 1.442695
        %v1964 = vpow.pop %v1963
        %v1965 = vmul.f32 %v1943, 1.442695
        %v1966 = vpow.pop %v1965
        %v1967 = vmul.f32 %v1944, 1.442695
        %v1968 = vpow.pop %v1967
        %v1969 = vmul.f32 %v1945, 1.442695
        %v1970 = vpow.pop %v1969
        %v1971 = vmul.f32 %v1946, 1.442695
        %v1972 = vpow.pop %v1971
        %v1973 = vmul.f32 %v1947, 1.442695
        %v1974 = vpow.pop %v1973
        %v1975 = vmul.f32 %v1948, 1.442695
        %v1976 = vpow.pop %v1975
        %v1977 = vmul.f32 %v1949, 1.442695
        %v1978 = vpow.pop %v1977
        %v1979 = vmul.f32 %v1950, 1.442695
        %v1980 = vpow.pop %v1979
        %v1981 = vmul.f32 %v1951, 1.442695
        %v1982 = vpow.pop %v1981
        %v1983 = vmul.f32 %v1952, 1.442695
        %v1984 = vpow.pop %v1983
        %v1985 = vld [vmem:[#allocation3] sm:$0xff]
        %v1986 = vld [vmem:[#allocation3 + $0x8] sm:$0xff]
        %v1987 = vld [vmem:[#allocation3 + $0x10] sm:$0xff]
        %v1988 = vld [vmem:[#allocation3 + $0x18] sm:$0xff]
        %v1989 = vld [vmem:[#allocation3 + $0x20] sm:$0xff]
        %v1990 = vld [vmem:[#allocation3 + $0x28] sm:$0xff]
        %v1991 = vld [vmem:[#allocation3 + $0x30] sm:$0xff]
        %v1992 = vld [vmem:[#allocation3 + $0x38] sm:$0xff]
        %v1993 = vld [vmem:[#allocation3 + $0x40] sm:$0xff]
        %v1994 = vld [vmem:[#allocation3 + $0x48] sm:$0xff]
        %v1995 = vld [vmem:[#allocation3 + $0x50] sm:$0xff]
        %v1996 = vld [vmem:[#allocation3 + $0x58] sm:$0xff]
        %v1997 = vld [vmem:[#allocation3 + $0x60] sm:$0xff]
        %v1998 = vld [vmem:[#allocation3 + $0x68] sm:$0xff]
        %v1999 = vld [vmem:[#allocation3 + $0x70] sm:$0xff]
        %v2000 = vld [vmem:[#allocation3 + $0x78] sm:$0xff]
        %v2001 = vmul.f32 %v1826, %v1985
        %v2002 = vmul.f32 %v1828, %v1986
        %v2003 = vmul.f32 %v1830, %v1987
        %v2004 = vmul.f32 %v1832, %v1988
        %v2005 = vmul.f32 %v1834, %v1989
        %v2006 = vmul.f32 %v1836, %v1990
        %v2007 = vmul.f32 %v1838, %v1991
        %v2008 = vmul.f32 %v1840, %v1992
        %v2009 = vmul.f32 %v1842, %v1993
        %v2010 = vmul.f32 %v1844, %v1994
        %v2011 = vmul.f32 %v1846, %v1995
        %v2012 = vmul.f32 %v1848, %v1996
        %v2013 = vmul.f32 %v1850, %v1997
        %v2014 = vmul.f32 %v1852, %v1998
        %v2015 = vmul.f32 %v1854, %v1999
        %v2016 = vmul.f32 %v1856, %v2000
        %2017 = vadd.xlane.f32.xlu0 %v1954
        %v2018 = vpop.xlane.xlu0 %2017
        %2019 = vadd.xlane.f32.xlu0 %v1956
        %v2020 = vpop.xlane.xlu0 %2019
        %2021 = vadd.xlane.f32.xlu0 %v1958
        %v2022 = vpop.xlane.xlu0 %2021
        %2023 = vadd.xlane.f32.xlu0 %v1960
        %v2024 = vpop.xlane.xlu0 %2023
        %2025 = vadd.xlane.f32.xlu0 %v1962
        %v2026 = vpop.xlane.xlu0 %2025
        %2027 = vadd.xlane.f32.xlu0 %v1964
        %v2028 = vpop.xlane.xlu0 %2027
        %2029 = vadd.xlane.f32.xlu0 %v1966
        %v2030 = vpop.xlane.xlu0 %2029
        %2031 = vadd.xlane.f32.xlu0 %v1968
        %v2032 = vpop.xlane.xlu0 %2031
        %2033 = vadd.xlane.f32.xlu0 %v1970
        %v2034 = vpop.xlane.xlu0 %2033
        %2035 = vadd.xlane.f32.xlu0 %v1972
        %v2036 = vpop.xlane.xlu0 %2035
        %2037 = vadd.xlane.f32.xlu0 %v1974
        %v2038 = vpop.xlane.xlu0 %2037
        %2039 = vadd.xlane.f32.xlu0 %v1976
        %v2040 = vpop.xlane.xlu0 %2039
        %2041 = vadd.xlane.f32.xlu0 %v1978
        %v2042 = vpop.xlane.xlu0 %2041
        %2043 = vadd.xlane.f32.xlu0 %v1980
        %v2044 = vpop.xlane.xlu0 %2043
        %2045 = vadd.xlane.f32.xlu0 %v1982
        %v2046 = vpop.xlane.xlu0 %2045
        %2047 = vadd.xlane.f32.xlu0 %v1984
        %v2048 = vpop.xlane.xlu0 %2047
        %v2049 = vadd.f32 %v2001, %v2018
        %v2050 = vadd.f32 %v2002, %v2020
        %v2051 = vadd.f32 %v2003, %v2022
        %v2052 = vadd.f32 %v2004, %v2024
        %v2053 = vadd.f32 %v2005, %v2026
        %v2054 = vadd.f32 %v2006, %v2028
        %v2055 = vadd.f32 %v2007, %v2030
        %v2056 = vadd.f32 %v2008, %v2032
        %v2057 = vadd.f32 %v2009, %v2034
        %v2058 = vadd.f32 %v2010, %v2036
        %v2059 = vadd.f32 %v2011, %v2038
        %v2060 = vadd.f32 %v2012, %v2040
        %v2061 = vadd.f32 %v2013, %v2042
        %v2062 = vadd.f32 %v2014, %v2044
        %v2063 = vadd.f32 %v2015, %v2046
        %v2064 = vadd.f32 %v2016, %v2048
        %vm2065 = vcmask 15368
        %2066 = vst.msk [vmem:[#allocation3] sm:$0xff] %vm2065, %v2049
        %2067 = vst.msk [vmem:[#allocation3 + $0x8] sm:$0xff] %vm2065, %v2050
        %2068 = vst.msk [vmem:[#allocation3 + $0x10] sm:$0xff] %vm2065, %v2051
        %2069 = vst.msk [vmem:[#allocation3 + $0x18] sm:$0xff] %vm2065, %v2052
        %2070 = vst.msk [vmem:[#allocation3 + $0x20] sm:$0xff] %vm2065, %v2053
        %2071 = vst.msk [vmem:[#allocation3 + $0x28] sm:$0xff] %vm2065, %v2054
        %2072 = vst.msk [vmem:[#allocation3 + $0x30] sm:$0xff] %vm2065, %v2055
        %2073 = vst.msk [vmem:[#allocation3 + $0x38] sm:$0xff] %vm2065, %v2056
        %2074 = vst.msk [vmem:[#allocation3 + $0x40] sm:$0xff] %vm2065, %v2057
        %2075 = vst.msk [vmem:[#allocation3 + $0x48] sm:$0xff] %vm2065, %v2058
        %2076 = vst.msk [vmem:[#allocation3 + $0x50] sm:$0xff] %vm2065, %v2059
        %2077 = vst.msk [vmem:[#allocation3 + $0x58] sm:$0xff] %vm2065, %v2060
        %2078 = vst.msk [vmem:[#allocation3 + $0x60] sm:$0xff] %vm2065, %v2061
        %2079 = vst.msk [vmem:[#allocation3 + $0x68] sm:$0xff] %vm2065, %v2062
        %2080 = vst.msk [vmem:[#allocation3 + $0x70] sm:$0xff] %vm2065, %v2063
        %2081 = vst.msk [vmem:[#allocation3 + $0x78] sm:$0xff] %vm2065, %v2064
        %v2082 = vld [vmem:[#allocation4] sm:$0xff]
        %v2083 = vld [vmem:[#allocation4 + $0x8] sm:$0xff]
        %v2084 = vld [vmem:[#allocation4 + $0x10] sm:$0xff]
        %v2085 = vld [vmem:[#allocation4 + $0x18] sm:$0xff]
        %v2086 = vld [vmem:[#allocation4 + $0x20] sm:$0xff]
        %v2087 = vld [vmem:[#allocation4 + $0x28] sm:$0xff]
        %v2088 = vld [vmem:[#allocation4 + $0x30] sm:$0xff]
        %v2089 = vld [vmem:[#allocation4 + $0x38] sm:$0xff]
        %v2090 = vld [vmem:[#allocation4 + $0x40] sm:$0xff]
        %v2091 = vld [vmem:[#allocation4 + $0x48] sm:$0xff]
        %v2092 = vld [vmem:[#allocation4 + $0x50] sm:$0xff]
        %v2093 = vld [vmem:[#allocation4 + $0x58] sm:$0xff]
        %v2094 = vld [vmem:[#allocation4 + $0x60] sm:$0xff]
        %v2095 = vld [vmem:[#allocation4 + $0x68] sm:$0xff]
        %v2096 = vld [vmem:[#allocation4 + $0x70] sm:$0xff]
        %v2097 = vld [vmem:[#allocation4 + $0x78] sm:$0xff]
        %2099 = vset.pattern.permute.xlu0 1
        %2100 = vperm.xlu0 %2099, %v1826
        %v2101 = vpop.permute.xlu0 %2100
        %2104 = vset.pattern.permute.xlu0 1
        %2105 = vperm.xlu0 %2104, %v1828
        %v2106 = vpop.permute.xlu0 %2105
        %2109 = vset.pattern.permute.xlu0 1
        %2110 = vperm.xlu0 %2109, %v1830
        %v2111 = vpop.permute.xlu0 %2110
        %2114 = vset.pattern.permute.xlu0 1
        %2115 = vperm.xlu0 %2114, %v1832
        %v2116 = vpop.permute.xlu0 %2115
        %2119 = vset.pattern.permute.xlu0 1
        %2120 = vperm.xlu0 %2119, %v1834
        %v2121 = vpop.permute.xlu0 %2120
        %2124 = vset.pattern.permute.xlu0 1
        %2125 = vperm.xlu0 %2124, %v1836
        %v2126 = vpop.permute.xlu0 %2125
        %2129 = vset.pattern.permute.xlu0 1
        %2130 = vperm.xlu0 %2129, %v1838
        %v2131 = vpop.permute.xlu0 %2130
        %2134 = vset.pattern.permute.xlu0 1
        %2135 = vperm.xlu0 %2134, %v1840
        %v2136 = vpop.permute.xlu0 %2135
        %2139 = vset.pattern.permute.xlu0 1
        %2140 = vperm.xlu0 %2139, %v1842
        %v2141 = vpop.permute.xlu0 %2140
        %2144 = vset.pattern.permute.xlu0 1
        %2145 = vperm.xlu0 %2144, %v1844
        %v2146 = vpop.permute.xlu0 %2145
        %2149 = vset.pattern.permute.xlu0 1
        %2150 = vperm.xlu0 %2149, %v1846
        %v2151 = vpop.permute.xlu0 %2150
        %2154 = vset.pattern.permute.xlu0 1
        %2155 = vperm.xlu0 %2154, %v1848
        %v2156 = vpop.permute.xlu0 %2155
        %2159 = vset.pattern.permute.xlu0 1
        %2160 = vperm.xlu0 %2159, %v1850
        %v2161 = vpop.permute.xlu0 %2160
        %2164 = vset.pattern.permute.xlu0 1
        %2165 = vperm.xlu0 %2164, %v1852
        %v2166 = vpop.permute.xlu0 %2165
        %2169 = vset.pattern.permute.xlu0 1
        %2170 = vperm.xlu0 %2169, %v1854
        %v2171 = vpop.permute.xlu0 %2170
        %2174 = vset.pattern.permute.xlu0 1
        %2175 = vperm.xlu0 %2174, %v1856
        %v2176 = vpop.permute.xlu0 %2175
        %v2178 = vmul.f32 %v2101, %v2082
        %v2179 = vmul.f32 %v2106, %v2083
        %v2180 = vmul.f32 %v2111, %v2084
        %v2181 = vmul.f32 %v2116, %v2085
        %v2182 = vmul.f32 %v2121, %v2086
        %v2183 = vmul.f32 %v2126, %v2087
        %v2184 = vmul.f32 %v2131, %v2088
        %v2185 = vmul.f32 %v2136, %v2089
        %v2186 = vmul.f32 %v2141, %v2090
        %v2187 = vmul.f32 %v2146, %v2091
        %v2188 = vmul.f32 %v2151, %v2092
        %v2189 = vmul.f32 %v2156, %v2093
        %v2190 = vmul.f32 %v2161, %v2094
        %v2191 = vmul.f32 %v2166, %v2095
        %v2192 = vmul.f32 %v2171, %v2096
        %v2193 = vmul.f32 %v2176, %v2097
        %v2194 = vpack.c.bf16 %v1956, %v1954
        %v2195 = vpack.c.bf16 %v1960, %v1958
        %v2196 = vpack.c.bf16 %v1964, %v1962
        %v2197 = vpack.c.bf16 %v1968, %v1966
        %v2198 = vpack.c.bf16 %v1972, %v1970
        %v2199 = vpack.c.bf16 %v1976, %v1974
        %v2200 = vpack.c.bf16 %v1980, %v1978
        %v2201 = vpack.c.bf16 %v1984, %v1982
        %2202 = vrot.lane.b32.xlu0 %v1407, 96
        %v2203 = vpop.permute.xlu0 %2202
        %2204 = vrot.lane.b32.xlu0 %v1408, 96
        %v2205 = vpop.permute.xlu0 %2204
        %2206 = vrot.lane.b32.xlu0 %v1409, 96
        %v2207 = vpop.permute.xlu0 %2206
        %2208 = vrot.lane.b32.xlu0 %v1410, 96
        %v2209 = vpop.permute.xlu0 %2208
        %2210 = vrot.lane.b32.xlu0 %v1411, 96
        %v2211 = vpop.permute.xlu0 %2210
        %2212 = vrot.lane.b32.xlu0 %v1412, 96
        %v2213 = vpop.permute.xlu0 %2212
        %2214 = vrot.lane.b32.xlu0 %v1413, 96
        %v2215 = vpop.permute.xlu0 %2214
        %2216 = vrot.lane.b32.xlu0 %v1414, 96
        %v2217 = vpop.permute.xlu0 %2216
        %2226 = vmatprep.subr.bf16.mxu0 0
        %2227 = vmatpush1.bf16.msra.mxu0 %v2217
        %2228 = vmatprep.subr.bf16.mxu0 0
        %2229 = vmatpush1.bf16.msra.mxu0 %v2215
        %2230 = vmatprep.subr.bf16.mxu0 0
        %2231 = vmatpush1.bf16.msra.mxu0 %v2213
        %2232 = vmatprep.subr.bf16.mxu0 0
        %2233 = vmatpush1.bf16.msra.mxu0 %v2211
        %2234 = vmatprep.subr.bf16.mxu0 0
        %2235 = vmatpush1.bf16.msra.mxu0 %v2209
        %2236 = vmatprep.subr.bf16.mxu0 0
        %2237 = vmatpush1.bf16.msra.mxu0 %v2207
        %2238 = vmatprep.subr.bf16.mxu0 0
        %2239 = vmatpush1.bf16.msra.mxu0 %v2205
        %2240 = vmatprep.subr.bf16.mxu0 0
        %2241 = vmatpush1.bf16.msra.mxu0 %v2203
        %2242 = vmatprep.subr.bf16.mxu0 0
        %2243 = vmatpush2.bf16.msra.mxu0 0
        %2244 = vmatprep.subr.bf16.mxu0 0
        %2245 = vmatpush2.bf16.msra.mxu0 0
        %2246 = vmatprep.subr.bf16.mxu0 0
        %2247 = vmatpush2.bf16.msra.mxu0 0
        %2248 = vmatprep.subr.bf16.mxu0 0
        %2249 = vmatpush2.bf16.msra.mxu0 0
        %2250 = vmatprep.subr.bf16.mxu0 0
        %2251 = vmatpush2.bf16.msra.mxu0 0
        %2252 = vmatprep.subr.bf16.mxu0 0
        %2253 = vmatpush2.bf16.msra.mxu0 0
        %2254 = vmatprep.subr.bf16.mxu0 0
        %2255 = vmatpush2.bf16.msra.mxu0 0
        %2256 = vmatprep.subr.bf16.mxu0 0
        %2257 = vmatpush2.bf16.msra.mxu0 0
        %2258 = vmatprep.mubr.bf16.mxu0 0
        %2259 = vmatmul.mubr.bf16.gmra.mxu0 %v2194
        %v2260 = vpop.f32.mrf.mxu0
        %v2261 = vadd.f32 0.0, %v2260
        %v2262 = vpop.f32.mrf.mxu0
        %v2263 = vpop.f32.mrf.mxu0
        %v2264 = vadd.f32 0.0, %v2263
        %v2265 = vpop.f32.mrf.mxu0
        %2266 = vmatprep.mubr.bf16.mxu0 0
        %2267 = vmatmul.mubr.bf16.gmra.mxu0 %v2195
        %v2268 = vpop.f32.mrf.mxu0
        %v2269 = vadd.f32 0.0, %v2268
        %v2270 = vpop.f32.mrf.mxu0
        %v2271 = vpop.f32.mrf.mxu0
        %v2272 = vadd.f32 0.0, %v2271
        %v2273 = vpop.f32.mrf.mxu0
        %2274 = vmatprep.mubr.bf16.mxu0 0
        %2275 = vmatmul.mubr.bf16.gmra.mxu0 %v2196
        %v2276 = vpop.f32.mrf.mxu0
        %v2277 = vadd.f32 0.0, %v2276
        %v2278 = vpop.f32.mrf.mxu0
        %v2279 = vpop.f32.mrf.mxu0
        %v2280 = vadd.f32 0.0, %v2279
        %v2281 = vpop.f32.mrf.mxu0
        %2282 = vmatprep.mubr.bf16.mxu0 0
        %2283 = vmatmul.mubr.bf16.gmra.mxu0 %v2197
        %v2284 = vpop.f32.mrf.mxu0
        %v2285 = vadd.f32 0.0, %v2284
        %v2286 = vpop.f32.mrf.mxu0
        %v2287 = vpop.f32.mrf.mxu0
        %v2288 = vadd.f32 0.0, %v2287
        %v2289 = vpop.f32.mrf.mxu0
        %2290 = vmatprep.mubr.bf16.mxu0 0
        %2291 = vmatmul.mubr.bf16.gmra.mxu0 %v2198
        %v2292 = vpop.f32.mrf.mxu0
        %v2293 = vadd.f32 0.0, %v2292
        %v2294 = vpop.f32.mrf.mxu0
        %v2295 = vpop.f32.mrf.mxu0
        %v2296 = vadd.f32 0.0, %v2295
        %v2297 = vpop.f32.mrf.mxu0
        %2298 = vmatprep.mubr.bf16.mxu0 0
        %2299 = vmatmul.mubr.bf16.gmra.mxu0 %v2199
        %v2300 = vpop.f32.mrf.mxu0
        %v2301 = vadd.f32 0.0, %v2300
        %v2302 = vpop.f32.mrf.mxu0
        %v2303 = vpop.f32.mrf.mxu0
        %v2304 = vadd.f32 0.0, %v2303
        %v2305 = vpop.f32.mrf.mxu0
        %2306 = vmatprep.mubr.bf16.mxu0 0
        %2307 = vmatmul.mubr.bf16.gmra.mxu0 %v2200
        %v2308 = vpop.f32.mrf.mxu0
        %v2309 = vadd.f32 0.0, %v2308
        %v2310 = vpop.f32.mrf.mxu0
        %v2311 = vpop.f32.mrf.mxu0
        %v2312 = vadd.f32 0.0, %v2311
        %v2313 = vpop.f32.mrf.mxu0
        %2314 = vmatprep.mubr.bf16.mxu0 0
        %2315 = vmatmul.mubr.bf16.gmra.mxu0 %v2201
        %v2316 = vpop.f32.mrf.mxu0
        %v2317 = vadd.f32 0.0, %v2316
        %v2318 = vpop.f32.mrf.mxu0
        %v2319 = vpop.f32.mrf.mxu0
        %v2320 = vadd.f32 0.0, %v2319
        %v2321 = vpop.f32.mrf.mxu0
        %2322 = vdwg.mxu0
        %2339 = vrot.lane.b32.xlu0 %v2261, 32
        %v2340 = vpop.permute.xlu0 %2339
        %2341 = vrot.lane.b32.xlu0 %v2264, 32
        %v2342 = vpop.permute.xlu0 %2341
        %2343 = vrot.lane.b32.xlu0 %v2269, 32
        %v2344 = vpop.permute.xlu0 %2343
        %2345 = vrot.lane.b32.xlu0 %v2272, 32
        %v2346 = vpop.permute.xlu0 %2345
        %2347 = vrot.lane.b32.xlu0 %v2277, 32
        %v2348 = vpop.permute.xlu0 %2347
        %2349 = vrot.lane.b32.xlu0 %v2280, 32
        %v2350 = vpop.permute.xlu0 %2349
        %2351 = vrot.lane.b32.xlu0 %v2285, 32
        %v2352 = vpop.permute.xlu0 %2351
        %2353 = vrot.lane.b32.xlu0 %v2288, 32
        %v2354 = vpop.permute.xlu0 %2353
        %2355 = vrot.lane.b32.xlu0 %v2293, 32
        %v2356 = vpop.permute.xlu0 %2355
        %2357 = vrot.lane.b32.xlu0 %v2296, 32
        %v2358 = vpop.permute.xlu0 %2357
        %2359 = vrot.lane.b32.xlu0 %v2301, 32
        %v2360 = vpop.permute.xlu0 %2359
        %2361 = vrot.lane.b32.xlu0 %v2304, 32
        %v2362 = vpop.permute.xlu0 %2361
        %2363 = vrot.lane.b32.xlu0 %v2309, 32
        %v2364 = vpop.permute.xlu0 %2363
        %2365 = vrot.lane.b32.xlu0 %v2312, 32
        %v2366 = vpop.permute.xlu0 %2365
        %2367 = vrot.lane.b32.xlu0 %v2317, 32
        %v2368 = vpop.permute.xlu0 %2367
        %2369 = vrot.lane.b32.xlu0 %v2320, 32
        %v2370 = vpop.permute.xlu0 %2369
        %v2387 = vadd.f32 %v2178, %v2340
        %v2388 = vadd.f32 %v2179, %v2342
        %v2389 = vadd.f32 %v2180, %v2344
        %v2390 = vadd.f32 %v2181, %v2346
        %v2391 = vadd.f32 %v2182, %v2348
        %v2392 = vadd.f32 %v2183, %v2350
        %v2393 = vadd.f32 %v2184, %v2352
        %v2394 = vadd.f32 %v2185, %v2354
        %v2395 = vadd.f32 %v2186, %v2356
        %v2396 = vadd.f32 %v2187, %v2358
        %v2397 = vadd.f32 %v2188, %v2360
        %v2398 = vadd.f32 %v2189, %v2362
        %v2399 = vadd.f32 %v2190, %v2364
        %v2400 = vadd.f32 %v2191, %v2366
        %v2401 = vadd.f32 %v2192, %v2368
        %v2402 = vadd.f32 %v2193, %v2370
        %vm2403 = vcmask 523520
        %2404 = vst.msk [vmem:[#allocation4] sm:$0xff] %vm2403, %v2387
        %2405 = vst.msk [vmem:[#allocation4 + $0x8] sm:$0xff] %vm2403, %v2388
        %2406 = vst.msk [vmem:[#allocation4 + $0x10] sm:$0xff] %vm2403, %v2389
        %2407 = vst.msk [vmem:[#allocation4 + $0x18] sm:$0xff] %vm2403, %v2390
        %2408 = vst.msk [vmem:[#allocation4 + $0x20] sm:$0xff] %vm2403, %v2391
        %2409 = vst.msk [vmem:[#allocation4 + $0x28] sm:$0xff] %vm2403, %v2392
        %2410 = vst.msk [vmem:[#allocation4 + $0x30] sm:$0xff] %vm2403, %v2393
        %2411 = vst.msk [vmem:[#allocation4 + $0x38] sm:$0xff] %vm2403, %v2394
        %2412 = vst.msk [vmem:[#allocation4 + $0x40] sm:$0xff] %vm2403, %v2395
        %2413 = vst.msk [vmem:[#allocation4 + $0x48] sm:$0xff] %vm2403, %v2396
        %2414 = vst.msk [vmem:[#allocation4 + $0x50] sm:$0xff] %vm2403, %v2397
        %2415 = vst.msk [vmem:[#allocation4 + $0x58] sm:$0xff] %vm2403, %v2398
        %2416 = vst.msk [vmem:[#allocation4 + $0x60] sm:$0xff] %vm2403, %v2399
        %2417 = vst.msk [vmem:[#allocation4 + $0x68] sm:$0xff] %vm2403, %v2400
        %2418 = vst.msk [vmem:[#allocation4 + $0x70] sm:$0xff] %vm2403, %v2401
        %2419 = vst.msk [vmem:[#allocation4 + $0x78] sm:$0xff] %vm2403, %v2402
        %2420 = vst.msk [vmem:[#allocation2] sm:$0xff] %vm2065, %v1793
        %2421 = vst.msk [vmem:[#allocation2 + $0x8] sm:$0xff] %vm2065, %v1794
        %2422 = vst.msk [vmem:[#allocation2 + $0x10] sm:$0xff] %vm2065, %v1795
        %2423 = vst.msk [vmem:[#allocation2 + $0x18] sm:$0xff] %vm2065, %v1796
        %2424 = vst.msk [vmem:[#allocation2 + $0x20] sm:$0xff] %vm2065, %v1797
        %2425 = vst.msk [vmem:[#allocation2 + $0x28] sm:$0xff] %vm2065, %v1798
        %2426 = vst.msk [vmem:[#allocation2 + $0x30] sm:$0xff] %vm2065, %v1799
        %2427 = vst.msk [vmem:[#allocation2 + $0x38] sm:$0xff] %vm2065, %v1800
        %2428 = vst.msk [vmem:[#allocation2 + $0x40] sm:$0xff] %vm2065, %v1801
        %2429 = vst.msk [vmem:[#allocation2 + $0x48] sm:$0xff] %vm2065, %v1802
        %2430 = vst.msk [vmem:[#allocation2 + $0x50] sm:$0xff] %vm2065, %v1803
        %2431 = vst.msk [vmem:[#allocation2 + $0x58] sm:$0xff] %vm2065, %v1804
        %2432 = vst.msk [vmem:[#allocation2 + $0x60] sm:$0xff] %vm2065, %v1805
        %2433 = vst.msk [vmem:[#allocation2 + $0x68] sm:$0xff] %vm2065, %v1806
        %2434 = vst.msk [vmem:[#allocation2 + $0x70] sm:$0xff] %vm2065, %v1807
        %2435 = vst.msk [vmem:[#allocation2 + $0x78] sm:$0xff] %vm2065, %v1808
        %2436 = vrot.lane.b32.xlu0 %v724, 64
        %v2437 = vpop.permute.xlu0 %2436
        %2438 = vrot.lane.b32.xlu0 %v725, 64
        %v2439 = vpop.permute.xlu0 %2438
        %2440 = vrot.lane.b32.xlu0 %v726, 64
        %v2441 = vpop.permute.xlu0 %2440
        %2442 = vrot.lane.b32.xlu0 %v727, 64
        %v2443 = vpop.permute.xlu0 %2442
        %2444 = vrot.lane.b32.xlu0 %v728, 64
        %v2445 = vpop.permute.xlu0 %2444
        %2446 = vrot.lane.b32.xlu0 %v729, 64
        %v2447 = vpop.permute.xlu0 %2446
        %2448 = vrot.lane.b32.xlu0 %v730, 64
        %v2449 = vpop.permute.xlu0 %2448
        %2450 = vrot.lane.b32.xlu0 %v731, 64
        %v2451 = vpop.permute.xlu0 %2450
        %2452 = vrot.lane.b32.xlu0 %v764, 64
        %v2453 = vpop.permute.xlu0 %2452
        %2454 = vrot.lane.b32.xlu0 %v765, 64
        %v2455 = vpop.permute.xlu0 %2454
        %2456 = vrot.lane.b32.xlu0 %v766, 64
        %v2457 = vpop.permute.xlu0 %2456
        %2458 = vrot.lane.b32.xlu0 %v767, 64
        %v2459 = vpop.permute.xlu0 %2458
        %2460 = vrot.lane.b32.xlu0 %v768, 64
        %v2461 = vpop.permute.xlu0 %2460
        %2462 = vrot.lane.b32.xlu0 %v769, 64
        %v2463 = vpop.permute.xlu0 %2462
        %2464 = vrot.lane.b32.xlu0 %v770, 64
        %v2465 = vpop.permute.xlu0 %2464
        %2466 = vrot.lane.b32.xlu0 %v771, 64
        %v2467 = vpop.permute.xlu0 %2466
        %v2469 = vsel %vm772, %v2437, 0
        %v2472 = vsel %vm772, %v2439, 0
        %v2475 = vsel %vm772, %v2441, 0
        %v2478 = vsel %vm772, %v2443, 0
        %v2481 = vsel %vm772, %v2445, 0
        %v2484 = vsel %vm772, %v2447, 0
        %v2487 = vsel %vm772, %v2449, 0
        %v2490 = vsel %vm772, %v2451, 0
        %v2493 = vsel %vm772, %v2453, 0
        %v2496 = vsel %vm772, %v2455, 0
        %v2499 = vsel %vm772, %v2457, 0
        %v2502 = vsel %vm772, %v2459, 0
        %v2505 = vsel %vm772, %v2461, 0
        %v2508 = vsel %vm772, %v2463, 0
        %v2511 = vsel %vm772, %v2465, 0
        %v2514 = vsel %vm772, %v2467, 0
        %2516 = vmatprep.subr.bf16.mxu0 0
        %2517 = vmatpush1.bf16.xpose.msra.mxu0 %v2514
        %2518 = vmatprep.subr.bf16.mxu0 0
        %2519 = vmatpush1.bf16.xpose.msra.mxu0 %v2511
        %2520 = vmatprep.subr.bf16.mxu0 0
        %2521 = vmatpush1.bf16.xpose.msra.mxu0 %v2508
        %2522 = vmatprep.subr.bf16.mxu0 0
        %2523 = vmatpush1.bf16.xpose.msra.mxu0 %v2505
        %2524 = vmatprep.subr.bf16.mxu0 0
        %2525 = vmatpush1.bf16.xpose.msra.mxu0 %v2502
        %2526 = vmatprep.subr.bf16.mxu0 0
        %2527 = vmatpush1.bf16.xpose.msra.mxu0 %v2499
        %2528 = vmatprep.subr.bf16.mxu0 0
        %2529 = vmatpush1.bf16.xpose.msra.mxu0 %v2496
        %2530 = vmatprep.subr.bf16.mxu0 0
        %2531 = vmatpush1.bf16.xpose.msra.mxu0 %v2493
        %2532 = vmatprep.subr.bf16.mxu0 0
        %2533 = vmatpush2.bf16.xpose.msra.mxu0 0
        %2534 = vmatprep.subr.bf16.mxu0 0
        %2535 = vmatpush2.bf16.xpose.msra.mxu0 0
        %2536 = vmatprep.subr.bf16.mxu0 0
        %2537 = vmatpush2.bf16.xpose.msra.mxu0 0
        %2538 = vmatprep.subr.bf16.mxu0 0
        %2539 = vmatpush2.bf16.xpose.msra.mxu0 0
        %2540 = vmatprep.subr.bf16.mxu0 0
        %2541 = vmatpush2.bf16.xpose.msra.mxu0 0
        %2542 = vmatprep.subr.bf16.mxu0 0
        %2543 = vmatpush2.bf16.xpose.msra.mxu0 0
        %2544 = vmatprep.subr.bf16.mxu0 0
        %2545 = vmatpush2.bf16.xpose.msra.mxu0 0
        %2546 = vmatprep.subr.bf16.mxu0 0
        %2547 = vmatpush2.bf16.xpose.msra.mxu0 0
        %2548 = vmatprep.mubr.bf16.mxu0 0
        %2549 = vmatmul.mubr.bf16.gmra.mxu0 %v2469
        %v2550 = vpop.f32.mrf.mxu0
        %v2551 = vadd.f32 0.0, %v2550
        %v2552 = vpop.f32.mrf.mxu0
        %v2553 = vpop.f32.mrf.mxu0
        %v2554 = vadd.f32 0.0, %v2553
        %v2555 = vpop.f32.mrf.mxu0
        %2556 = vmatprep.mubr.bf16.mxu0 0
        %2557 = vmatmul.mubr.bf16.gmra.mxu0 %v2472
        %v2558 = vpop.f32.mrf.mxu0
        %v2559 = vadd.f32 0.0, %v2558
        %v2560 = vpop.f32.mrf.mxu0
        %v2561 = vpop.f32.mrf.mxu0
        %v2562 = vadd.f32 0.0, %v2561
        %v2563 = vpop.f32.mrf.mxu0
        %2564 = vmatprep.mubr.bf16.mxu0 0
        %2565 = vmatmul.mubr.bf16.gmra.mxu0 %v2475
        %v2566 = vpop.f32.mrf.mxu0
        %v2567 = vadd.f32 0.0, %v2566
        %v2568 = vpop.f32.mrf.mxu0
        %v2569 = vpop.f32.mrf.mxu0
        %v2570 = vadd.f32 0.0, %v2569
        %v2571 = vpop.f32.mrf.mxu0
        %2572 = vmatprep.mubr.bf16.mxu0 0
        %2573 = vmatmul.mubr.bf16.gmra.mxu0 %v2478
        %v2574 = vpop.f32.mrf.mxu0
        %v2575 = vadd.f32 0.0, %v2574
        %v2576 = vpop.f32.mrf.mxu0
        %v2577 = vpop.f32.mrf.mxu0
        %v2578 = vadd.f32 0.0, %v2577
        %v2579 = vpop.f32.mrf.mxu0
        %2580 = vmatprep.mubr.bf16.mxu0 0
        %2581 = vmatmul.mubr.bf16.gmra.mxu0 %v2481
        %v2582 = vpop.f32.mrf.mxu0
        %v2583 = vadd.f32 0.0, %v2582
        %v2584 = vpop.f32.mrf.mxu0
        %v2585 = vpop.f32.mrf.mxu0
        %v2586 = vadd.f32 0.0, %v2585
        %v2587 = vpop.f32.mrf.mxu0
        %2588 = vmatprep.mubr.bf16.mxu0 0
        %2589 = vmatmul.mubr.bf16.gmra.mxu0 %v2484
        %v2590 = vpop.f32.mrf.mxu0
        %v2591 = vadd.f32 0.0, %v2590
        %v2592 = vpop.f32.mrf.mxu0
        %v2593 = vpop.f32.mrf.mxu0
        %v2594 = vadd.f32 0.0, %v2593
        %v2595 = vpop.f32.mrf.mxu0
        %2596 = vmatprep.mubr.bf16.mxu0 0
        %2597 = vmatmul.mubr.bf16.gmra.mxu0 %v2487
        %v2598 = vpop.f32.mrf.mxu0
        %v2599 = vadd.f32 0.0, %v2598
        %v2600 = vpop.f32.mrf.mxu0
        %v2601 = vpop.f32.mrf.mxu0
        %v2602 = vadd.f32 0.0, %v2601
        %v2603 = vpop.f32.mrf.mxu0
        %2604 = vmatprep.mubr.bf16.mxu0 0
        %2605 = vmatmul.mubr.bf16.gmra.mxu0 %v2490
        %v2606 = vpop.f32.mrf.mxu0
        %v2607 = vadd.f32 0.0, %v2606
        %v2608 = vpop.f32.mrf.mxu0
        %v2609 = vpop.f32.mrf.mxu0
        %v2610 = vadd.f32 0.0, %v2609
        %v2611 = vpop.f32.mrf.mxu0
        %2612 = vdwg.mxu0
        %v2613 = vld [vmem:[#allocation2] sm:$0xff]
        %v2614 = vld [vmem:[#allocation2 + $0x8] sm:$0xff]
        %v2615 = vld [vmem:[#allocation2 + $0x10] sm:$0xff]
        %v2616 = vld [vmem:[#allocation2 + $0x18] sm:$0xff]
        %v2617 = vld [vmem:[#allocation2 + $0x20] sm:$0xff]
        %v2618 = vld [vmem:[#allocation2 + $0x28] sm:$0xff]
        %v2619 = vld [vmem:[#allocation2 + $0x30] sm:$0xff]
        %v2620 = vld [vmem:[#allocation2 + $0x38] sm:$0xff]
        %v2621 = vld [vmem:[#allocation2 + $0x40] sm:$0xff]
        %v2622 = vld [vmem:[#allocation2 + $0x48] sm:$0xff]
        %v2623 = vld [vmem:[#allocation2 + $0x50] sm:$0xff]
        %v2624 = vld [vmem:[#allocation2 + $0x58] sm:$0xff]
        %v2625 = vld [vmem:[#allocation2 + $0x60] sm:$0xff]
        %v2626 = vld [vmem:[#allocation2 + $0x68] sm:$0xff]
        %v2627 = vld [vmem:[#allocation2 + $0x70] sm:$0xff]
        %v2628 = vld [vmem:[#allocation2 + $0x78] sm:$0xff]
        %2629 = vmax.xlane.f32.xlu0 %v2551
        %v2630 = vpop.xlane.xlu0 %2629
        %2631 = vmax.xlane.f32.xlu0 %v2554
        %v2632 = vpop.xlane.xlu0 %2631
        %2633 = vmax.xlane.f32.xlu0 %v2559
        %v2634 = vpop.xlane.xlu0 %2633
        %2635 = vmax.xlane.f32.xlu0 %v2562
        %v2636 = vpop.xlane.xlu0 %2635
        %2637 = vmax.xlane.f32.xlu0 %v2567
        %v2638 = vpop.xlane.xlu0 %2637
        %2639 = vmax.xlane.f32.xlu0 %v2570
        %v2640 = vpop.xlane.xlu0 %2639
        %2641 = vmax.xlane.f32.xlu0 %v2575
        %v2642 = vpop.xlane.xlu0 %2641
        %2643 = vmax.xlane.f32.xlu0 %v2578
        %v2644 = vpop.xlane.xlu0 %2643
        %2645 = vmax.xlane.f32.xlu0 %v2583
        %v2646 = vpop.xlane.xlu0 %2645
        %2647 = vmax.xlane.f32.xlu0 %v2586
        %v2648 = vpop.xlane.xlu0 %2647
        %2649 = vmax.xlane.f32.xlu0 %v2591
        %v2650 = vpop.xlane.xlu0 %2649
        %2651 = vmax.xlane.f32.xlu0 %v2594
        %v2652 = vpop.xlane.xlu0 %2651
        %2653 = vmax.xlane.f32.xlu0 %v2599
        %v2654 = vpop.xlane.xlu0 %2653
        %2655 = vmax.xlane.f32.xlu0 %v2602
        %v2656 = vpop.xlane.xlu0 %2655
        %2657 = vmax.xlane.f32.xlu0 %v2607
        %v2658 = vpop.xlane.xlu0 %2657
        %2659 = vmax.xlane.f32.xlu0 %v2610
        %v2660 = vpop.xlane.xlu0 %2659
        %v2661 = vmax.f32 %v2613, %v2630
        %v2662 = vmax.f32 %v2614, %v2632
        %v2663 = vmax.f32 %v2615, %v2634
        %v2664 = vmax.f32 %v2616, %v2636
        %v2665 = vmax.f32 %v2617, %v2638
        %v2666 = vmax.f32 %v2618, %v2640
        %v2667 = vmax.f32 %v2619, %v2642
        %v2668 = vmax.f32 %v2620, %v2644
        %v2669 = vmax.f32 %v2621, %v2646
        %v2670 = vmax.f32 %v2622, %v2648
        %v2671 = vmax.f32 %v2623, %v2650
        %v2672 = vmax.f32 %v2624, %v2652
        %v2673 = vmax.f32 %v2625, %v2654
        %v2674 = vmax.f32 %v2626, %v2656
        %v2675 = vmax.f32 %v2627, %v2658
        %v2676 = vmax.f32 %v2628, %v2660
        %v2677 = vsub.f32 %v2613, %v2661
        %v2678 = vsub.f32 %v2614, %v2662
        %v2679 = vsub.f32 %v2615, %v2663
        %v2680 = vsub.f32 %v2616, %v2664
        %v2681 = vsub.f32 %v2617, %v2665
        %v2682 = vsub.f32 %v2618, %v2666
        %v2683 = vsub.f32 %v2619, %v2667
        %v2684 = vsub.f32 %v2620, %v2668
        %v2685 = vsub.f32 %v2621, %v2669
        %v2686 = vsub.f32 %v2622, %v2670
        %v2687 = vsub.f32 %v2623, %v2671
        %v2688 = vsub.f32 %v2624, %v2672
        %v2689 = vsub.f32 %v2625, %v2673
        %v2690 = vsub.f32 %v2626, %v2674
        %v2691 = vsub.f32 %v2627, %v2675
        %v2692 = vsub.f32 %v2628, %v2676
        %v2693 = vmul.f32 %v2677, 1.442695
        %v2694 = vpow.pop %v2693
        %v2695 = vmul.f32 %v2678, 1.442695
        %v2696 = vpow.pop %v2695
        %v2697 = vmul.f32 %v2679, 1.442695
        %v2698 = vpow.pop %v2697
        %v2699 = vmul.f32 %v2680, 1.442695
        %v2700 = vpow.pop %v2699
        %v2701 = vmul.f32 %v2681, 1.442695
        %v2702 = vpow.pop %v2701
        %v2703 = vmul.f32 %v2682, 1.442695
        %v2704 = vpow.pop %v2703
        %v2705 = vmul.f32 %v2683, 1.442695
        %v2706 = vpow.pop %v2705
        %v2707 = vmul.f32 %v2684, 1.442695
        %v2708 = vpow.pop %v2707
        %v2709 = vmul.f32 %v2685, 1.442695
        %v2710 = vpow.pop %v2709
        %v2711 = vmul.f32 %v2686, 1.442695
        %v2712 = vpow.pop %v2711
        %v2713 = vmul.f32 %v2687, 1.442695
        %v2714 = vpow.pop %v2713
        %v2715 = vmul.f32 %v2688, 1.442695
        %v2716 = vpow.pop %v2715
        %v2717 = vmul.f32 %v2689, 1.442695
        %v2718 = vpow.pop %v2717
        %v2719 = vmul.f32 %v2690, 1.442695
        %v2720 = vpow.pop %v2719
        %v2721 = vmul.f32 %v2691, 1.442695
        %v2722 = vpow.pop %v2721
        %v2723 = vmul.f32 %v2692, 1.442695
        %v2724 = vpow.pop %v2723
        %2726 = vset.pattern.permute.xlu0 2
        %2727 = vperm.xlu0 %2726, %v2661
        %v2728 = vpop.permute.xlu0 %2727
        %2731 = vset.pattern.permute.xlu0 2
        %2732 = vperm.xlu0 %2731, %v2662
        %v2733 = vpop.permute.xlu0 %2732
        %2736 = vset.pattern.permute.xlu0 2
        %2737 = vperm.xlu0 %2736, %v2663
        %v2738 = vpop.permute.xlu0 %2737
        %2741 = vset.pattern.permute.xlu0 2
        %2742 = vperm.xlu0 %2741, %v2664
        %v2743 = vpop.permute.xlu0 %2742
        %2746 = vset.pattern.permute.xlu0 2
        %2747 = vperm.xlu0 %2746, %v2665
        %v2748 = vpop.permute.xlu0 %2747
        %2751 = vset.pattern.permute.xlu0 2
        %2752 = vperm.xlu0 %2751, %v2666
        %v2753 = vpop.permute.xlu0 %2752
        %2756 = vset.pattern.permute.xlu0 2
        %2757 = vperm.xlu0 %2756, %v2667
        %v2758 = vpop.permute.xlu0 %2757
        %2761 = vset.pattern.permute.xlu0 2
        %2762 = vperm.xlu0 %2761, %v2668
        %v2763 = vpop.permute.xlu0 %2762
        %2766 = vset.pattern.permute.xlu0 2
        %2767 = vperm.xlu0 %2766, %v2669
        %v2768 = vpop.permute.xlu0 %2767
        %2771 = vset.pattern.permute.xlu0 2
        %2772 = vperm.xlu0 %2771, %v2670
        %v2773 = vpop.permute.xlu0 %2772
        %2776 = vset.pattern.permute.xlu0 2
        %2777 = vperm.xlu0 %2776, %v2671
        %v2778 = vpop.permute.xlu0 %2777
        %2781 = vset.pattern.permute.xlu0 2
        %2782 = vperm.xlu0 %2781, %v2672
        %v2783 = vpop.permute.xlu0 %2782
        %2786 = vset.pattern.permute.xlu0 2
        %2787 = vperm.xlu0 %2786, %v2673
        %v2788 = vpop.permute.xlu0 %2787
        %2791 = vset.pattern.permute.xlu0 2
        %2792 = vperm.xlu0 %2791, %v2674
        %v2793 = vpop.permute.xlu0 %2792
        %2796 = vset.pattern.permute.xlu0 2
        %2797 = vperm.xlu0 %2796, %v2675
        %v2798 = vpop.permute.xlu0 %2797
        %2801 = vset.pattern.permute.xlu0 2
        %2802 = vperm.xlu0 %2801, %v2676
        %v2803 = vpop.permute.xlu0 %2802
        %v2805 = vsub.f32 %v2551, %v2728
        %v2806 = vsub.f32 %v2554, %v2733
        %v2807 = vsub.f32 %v2559, %v2738
        %v2808 = vsub.f32 %v2562, %v2743
        %v2809 = vsub.f32 %v2567, %v2748
        %v2810 = vsub.f32 %v2570, %v2753
        %v2811 = vsub.f32 %v2575, %v2758
        %v2812 = vsub.f32 %v2578, %v2763
        %v2813 = vsub.f32 %v2583, %v2768
        %v2814 = vsub.f32 %v2586, %v2773
        %v2815 = vsub.f32 %v2591, %v2778
        %v2816 = vsub.f32 %v2594, %v2783
        %v2817 = vsub.f32 %v2599, %v2788
        %v2818 = vsub.f32 %v2602, %v2793
        %v2819 = vsub.f32 %v2607, %v2798
        %v2820 = vsub.f32 %v2610, %v2803
        %v2821 = vmul.f32 %v2805, 1.442695
        %v2822 = vpow.pop %v2821
        %v2823 = vmul.f32 %v2806, 1.442695
        %v2824 = vpow.pop %v2823
        %v2825 = vmul.f32 %v2807, 1.442695
        %v2826 = vpow.pop %v2825
        %v2827 = vmul.f32 %v2808, 1.442695
        %v2828 = vpow.pop %v2827
        %v2829 = vmul.f32 %v2809, 1.442695
        %v2830 = vpow.pop %v2829
        %v2831 = vmul.f32 %v2810, 1.442695
        %v2832 = vpow.pop %v2831
        %v2833 = vmul.f32 %v2811, 1.442695
        %v2834 = vpow.pop %v2833
        %v2835 = vmul.f32 %v2812, 1.442695
        %v2836 = vpow.pop %v2835
        %v2837 = vmul.f32 %v2813, 1.442695
        %v2838 = vpow.pop %v2837
        %v2839 = vmul.f32 %v2814, 1.442695
        %v2840 = vpow.pop %v2839
        %v2841 = vmul.f32 %v2815, 1.442695
        %v2842 = vpow.pop %v2841
        %v2843 = vmul.f32 %v2816, 1.442695
        %v2844 = vpow.pop %v2843
        %v2845 = vmul.f32 %v2817, 1.442695
        %v2846 = vpow.pop %v2845
        %v2847 = vmul.f32 %v2818, 1.442695
        %v2848 = vpow.pop %v2847
        %v2849 = vmul.f32 %v2819, 1.442695
        %v2850 = vpow.pop %v2849
        %v2851 = vmul.f32 %v2820, 1.442695
        %v2852 = vpow.pop %v2851
        %v2853 = vld [vmem:[#allocation3] sm:$0xff]
        %v2854 = vld [vmem:[#allocation3 + $0x8] sm:$0xff]
        %v2855 = vld [vmem:[#allocation3 + $0x10] sm:$0xff]
        %v2856 = vld [vmem:[#allocation3 + $0x18] sm:$0xff]
        %v2857 = vld [vmem:[#allocation3 + $0x20] sm:$0xff]
        %v2858 = vld [vmem:[#allocation3 + $0x28] sm:$0xff]
        %v2859 = vld [vmem:[#allocation3 + $0x30] sm:$0xff]
        %v2860 = vld [vmem:[#allocation3 + $0x38] sm:$0xff]
        %v2861 = vld [vmem:[#allocation3 + $0x40] sm:$0xff]
        %v2862 = vld [vmem:[#allocation3 + $0x48] sm:$0xff]
        %v2863 = vld [vmem:[#allocation3 + $0x50] sm:$0xff]
        %v2864 = vld [vmem:[#allocation3 + $0x58] sm:$0xff]
        %v2865 = vld [vmem:[#allocation3 + $0x60] sm:$0xff]
        %v2866 = vld [vmem:[#allocation3 + $0x68] sm:$0xff]
        %v2867 = vld [vmem:[#allocation3 + $0x70] sm:$0xff]
        %v2868 = vld [vmem:[#allocation3 + $0x78] sm:$0xff]
        %v2869 = vmul.f32 %v2694, %v2853
        %v2870 = vmul.f32 %v2696, %v2854
        %v2871 = vmul.f32 %v2698, %v2855
        %v2872 = vmul.f32 %v2700, %v2856
        %v2873 = vmul.f32 %v2702, %v2857
        %v2874 = vmul.f32 %v2704, %v2858
        %v2875 = vmul.f32 %v2706, %v2859
        %v2876 = vmul.f32 %v2708, %v2860
        %v2877 = vmul.f32 %v2710, %v2861
        %v2878 = vmul.f32 %v2712, %v2862
        %v2879 = vmul.f32 %v2714, %v2863
        %v2880 = vmul.f32 %v2716, %v2864
        %v2881 = vmul.f32 %v2718, %v2865
        %v2882 = vmul.f32 %v2720, %v2866
        %v2883 = vmul.f32 %v2722, %v2867
        %v2884 = vmul.f32 %v2724, %v2868
        %2885 = vadd.xlane.f32.xlu0 %v2822
        %v2886 = vpop.xlane.xlu0 %2885
        %2887 = vadd.xlane.f32.xlu0 %v2824
        %v2888 = vpop.xlane.xlu0 %2887
        %2889 = vadd.xlane.f32.xlu0 %v2826
        %v2890 = vpop.xlane.xlu0 %2889
        %2891 = vadd.xlane.f32.xlu0 %v2828
        %v2892 = vpop.xlane.xlu0 %2891
        %2893 = vadd.xlane.f32.xlu0 %v2830
        %v2894 = vpop.xlane.xlu0 %2893
        %2895 = vadd.xlane.f32.xlu0 %v2832
        %v2896 = vpop.xlane.xlu0 %2895
        %2897 = vadd.xlane.f32.xlu0 %v2834
        %v2898 = vpop.xlane.xlu0 %2897
        %2899 = vadd.xlane.f32.xlu0 %v2836
        %v2900 = vpop.xlane.xlu0 %2899
        %2901 = vadd.xlane.f32.xlu0 %v2838
        %v2902 = vpop.xlane.xlu0 %2901
        %2903 = vadd.xlane.f32.xlu0 %v2840
        %v2904 = vpop.xlane.xlu0 %2903
        %2905 = vadd.xlane.f32.xlu0 %v2842
        %v2906 = vpop.xlane.xlu0 %2905
        %2907 = vadd.xlane.f32.xlu0 %v2844
        %v2908 = vpop.xlane.xlu0 %2907
        %2909 = vadd.xlane.f32.xlu0 %v2846
        %v2910 = vpop.xlane.xlu0 %2909
        %2911 = vadd.xlane.f32.xlu0 %v2848
        %v2912 = vpop.xlane.xlu0 %2911
        %2913 = vadd.xlane.f32.xlu0 %v2850
        %v2914 = vpop.xlane.xlu0 %2913
        %2915 = vadd.xlane.f32.xlu0 %v2852
        %v2916 = vpop.xlane.xlu0 %2915
        %v2917 = vadd.f32 %v2869, %v2886
        %v2918 = vadd.f32 %v2870, %v2888
        %v2919 = vadd.f32 %v2871, %v2890
        %v2920 = vadd.f32 %v2872, %v2892
        %v2921 = vadd.f32 %v2873, %v2894
        %v2922 = vadd.f32 %v2874, %v2896
        %v2923 = vadd.f32 %v2875, %v2898
        %v2924 = vadd.f32 %v2876, %v2900
        %v2925 = vadd.f32 %v2877, %v2902
        %v2926 = vadd.f32 %v2878, %v2904
        %v2927 = vadd.f32 %v2879, %v2906
        %v2928 = vadd.f32 %v2880, %v2908
        %v2929 = vadd.f32 %v2881, %v2910
        %v2930 = vadd.f32 %v2882, %v2912
        %v2931 = vadd.f32 %v2883, %v2914
        %v2932 = vadd.f32 %v2884, %v2916
        %vm2933 = vcmask 23568
        %2934 = vst.msk [vmem:[#allocation3] sm:$0xff] %vm2933, %v2917
        %2935 = vst.msk [vmem:[#allocation3 + $0x8] sm:$0xff] %vm2933, %v2918
        %2936 = vst.msk [vmem:[#allocation3 + $0x10] sm:$0xff] %vm2933, %v2919
        %2937 = vst.msk [vmem:[#allocation3 + $0x18] sm:$0xff] %vm2933, %v2920
        %2938 = vst.msk [vmem:[#allocation3 + $0x20] sm:$0xff] %vm2933, %v2921
        %2939 = vst.msk [vmem:[#allocation3 + $0x28] sm:$0xff] %vm2933, %v2922
        %2940 = vst.msk [vmem:[#allocation3 + $0x30] sm:$0xff] %vm2933, %v2923
        %2941 = vst.msk [vmem:[#allocation3 + $0x38] sm:$0xff] %vm2933, %v2924
        %2942 = vst.msk [vmem:[#allocation3 + $0x40] sm:$0xff] %vm2933, %v2925
        %2943 = vst.msk [vmem:[#allocation3 + $0x48] sm:$0xff] %vm2933, %v2926
        %2944 = vst.msk [vmem:[#allocation3 + $0x50] sm:$0xff] %vm2933, %v2927
        %2945 = vst.msk [vmem:[#allocation3 + $0x58] sm:$0xff] %vm2933, %v2928
        %2946 = vst.msk [vmem:[#allocation3 + $0x60] sm:$0xff] %vm2933, %v2929
        %2947 = vst.msk [vmem:[#allocation3 + $0x68] sm:$0xff] %vm2933, %v2930
        %2948 = vst.msk [vmem:[#allocation3 + $0x70] sm:$0xff] %vm2933, %v2931
        %2949 = vst.msk [vmem:[#allocation3 + $0x78] sm:$0xff] %vm2933, %v2932
        %v2950 = vld [vmem:[#allocation4] sm:$0xff]
        %v2951 = vld [vmem:[#allocation4 + $0x8] sm:$0xff]
        %v2952 = vld [vmem:[#allocation4 + $0x10] sm:$0xff]
        %v2953 = vld [vmem:[#allocation4 + $0x18] sm:$0xff]
        %v2954 = vld [vmem:[#allocation4 + $0x20] sm:$0xff]
        %v2955 = vld [vmem:[#allocation4 + $0x28] sm:$0xff]
        %v2956 = vld [vmem:[#allocation4 + $0x30] sm:$0xff]
        %v2957 = vld [vmem:[#allocation4 + $0x38] sm:$0xff]
        %v2958 = vld [vmem:[#allocation4 + $0x40] sm:$0xff]
        %v2959 = vld [vmem:[#allocation4 + $0x48] sm:$0xff]
        %v2960 = vld [vmem:[#allocation4 + $0x50] sm:$0xff]
        %v2961 = vld [vmem:[#allocation4 + $0x58] sm:$0xff]
        %v2962 = vld [vmem:[#allocation4 + $0x60] sm:$0xff]
        %v2963 = vld [vmem:[#allocation4 + $0x68] sm:$0xff]
        %v2964 = vld [vmem:[#allocation4 + $0x70] sm:$0xff]
        %v2965 = vld [vmem:[#allocation4 + $0x78] sm:$0xff]
        %2967 = vset.pattern.permute.xlu0 2
        %2968 = vperm.xlu0 %2967, %v2694
        %v2969 = vpop.permute.xlu0 %2968
        %2972 = vset.pattern.permute.xlu0 2
        %2973 = vperm.xlu0 %2972, %v2696
        %v2974 = vpop.permute.xlu0 %2973
        %2977 = vset.pattern.permute.xlu0 2
        %2978 = vperm.xlu0 %2977, %v2698
        %v2979 = vpop.permute.xlu0 %2978
        %2982 = vset.pattern.permute.xlu0 2
        %2983 = vperm.xlu0 %2982, %v2700
        %v2984 = vpop.permute.xlu0 %2983
        %2987 = vset.pattern.permute.xlu0 2
        %2988 = vperm.xlu0 %2987, %v2702
        %v2989 = vpop.permute.xlu0 %2988
        %2992 = vset.pattern.permute.xlu0 2
        %2993 = vperm.xlu0 %2992, %v2704
        %v2994 = vpop.permute.xlu0 %2993
        %2997 = vset.pattern.permute.xlu0 2
        %2998 = vperm.xlu0 %2997, %v2706
        %v2999 = vpop.permute.xlu0 %2998
        %3002 = vset.pattern.permute.xlu0 2
        %3003 = vperm.xlu0 %3002, %v2708
        %v3004 = vpop.permute.xlu0 %3003
        %3007 = vset.pattern.permute.xlu0 2
        %3008 = vperm.xlu0 %3007, %v2710
        %v3009 = vpop.permute.xlu0 %3008
        %3012 = vset.pattern.permute.xlu0 2
        %3013 = vperm.xlu0 %3012, %v2712
        %v3014 = vpop.permute.xlu0 %3013
        %3017 = vset.pattern.permute.xlu0 2
        %3018 = vperm.xlu0 %3017, %v2714
        %v3019 = vpop.permute.xlu0 %3018
        %3022 = vset.pattern.permute.xlu0 2
        %3023 = vperm.xlu0 %3022, %v2716
        %v3024 = vpop.permute.xlu0 %3023
        %3027 = vset.pattern.permute.xlu0 2
        %3028 = vperm.xlu0 %3027, %v2718
        %v3029 = vpop.permute.xlu0 %3028
        %3032 = vset.pattern.permute.xlu0 2
        %3033 = vperm.xlu0 %3032, %v2720
        %v3034 = vpop.permute.xlu0 %3033
        %3037 = vset.pattern.permute.xlu0 2
        %3038 = vperm.xlu0 %3037, %v2722
        %v3039 = vpop.permute.xlu0 %3038
        %3042 = vset.pattern.permute.xlu0 2
        %3043 = vperm.xlu0 %3042, %v2724
        %v3044 = vpop.permute.xlu0 %3043
        %v3046 = vmul.f32 %v2969, %v2950
        %v3047 = vmul.f32 %v2974, %v2951
        %v3048 = vmul.f32 %v2979, %v2952
        %v3049 = vmul.f32 %v2984, %v2953
        %v3050 = vmul.f32 %v2989, %v2954
        %v3051 = vmul.f32 %v2994, %v2955
        %v3052 = vmul.f32 %v2999, %v2956
        %v3053 = vmul.f32 %v3004, %v2957
        %v3054 = vmul.f32 %v3009, %v2958
        %v3055 = vmul.f32 %v3014, %v2959
        %v3056 = vmul.f32 %v3019, %v2960
        %v3057 = vmul.f32 %v3024, %v2961
        %v3058 = vmul.f32 %v3029, %v2962
        %v3059 = vmul.f32 %v3034, %v2963
        %v3060 = vmul.f32 %v3039, %v2964
        %v3061 = vmul.f32 %v3044, %v2965
        %v3062 = vpack.c.bf16 %v2824, %v2822
        %v3063 = vpack.c.bf16 %v2828, %v2826
        %v3064 = vpack.c.bf16 %v2832, %v2830
        %v3065 = vpack.c.bf16 %v2836, %v2834
        %v3066 = vpack.c.bf16 %v2840, %v2838
        %v3067 = vpack.c.bf16 %v2844, %v2842
        %v3068 = vpack.c.bf16 %v2848, %v2846
        %v3069 = vpack.c.bf16 %v2852, %v2850
        %3070 = vrot.lane.b32.xlu0 %v1407, 64
        %v3071 = vpop.permute.xlu0 %3070
        %3072 = vrot.lane.b32.xlu0 %v1408, 64
        %v3073 = vpop.permute.xlu0 %3072
        %3074 = vrot.lane.b32.xlu0 %v1409, 64
        %v3075 = vpop.permute.xlu0 %3074
        %3076 = vrot.lane.b32.xlu0 %v1410, 64
        %v3077 = vpop.permute.xlu0 %3076
        %3078 = vrot.lane.b32.xlu0 %v1411, 64
        %v3079 = vpop.permute.xlu0 %3078
        %3080 = vrot.lane.b32.xlu0 %v1412, 64
        %v3081 = vpop.permute.xlu0 %3080
        %3082 = vrot.lane.b32.xlu0 %v1413, 64
        %v3083 = vpop.permute.xlu0 %3082
        %3084 = vrot.lane.b32.xlu0 %v1414, 64
        %v3085 = vpop.permute.xlu0 %3084
        %3094 = vmatprep.subr.bf16.mxu0 0
        %3095 = vmatpush1.bf16.msra.mxu0 %v3085
        %3096 = vmatprep.subr.bf16.mxu0 0
        %3097 = vmatpush1.bf16.msra.mxu0 %v3083
        %3098 = vmatprep.subr.bf16.mxu0 0
        %3099 = vmatpush1.bf16.msra.mxu0 %v3081
        %3100 = vmatprep.subr.bf16.mxu0 0
        %3101 = vmatpush1.bf16.msra.mxu0 %v3079
        %3102 = vmatprep.subr.bf16.mxu0 0
        %3103 = vmatpush1.bf16.msra.mxu0 %v3077
        %3104 = vmatprep.subr.bf16.mxu0 0
        %3105 = vmatpush1.bf16.msra.mxu0 %v3075
        %3106 = vmatprep.subr.bf16.mxu0 0
        %3107 = vmatpush1.bf16.msra.mxu0 %v3073
        %3108 = vmatprep.subr.bf16.mxu0 0
        %3109 = vmatpush1.bf16.msra.mxu0 %v3071
        %3110 = vmatprep.subr.bf16.mxu0 0
        %3111 = vmatpush2.bf16.msra.mxu0 0
        %3112 = vmatprep.subr.bf16.mxu0 0
        %3113 = vmatpush2.bf16.msra.mxu0 0
        %3114 = vmatprep.subr.bf16.mxu0 0
        %3115 = vmatpush2.bf16.msra.mxu0 0
        %3116 = vmatprep.subr.bf16.mxu0 0
        %3117 = vmatpush2.bf16.msra.mxu0 0
        %3118 = vmatprep.subr.bf16.mxu0 0
        %3119 = vmatpush2.bf16.msra.mxu0 0
        %3120 = vmatprep.subr.bf16.mxu0 0
        %3121 = vmatpush2.bf16.msra.mxu0 0
        %3122 = vmatprep.subr.bf16.mxu0 0
        %3123 = vmatpush2.bf16.msra.mxu0 0
        %3124 = vmatprep.subr.bf16.mxu0 0
        %3125 = vmatpush2.bf16.msra.mxu0 0
        %3126 = vmatprep.mubr.bf16.mxu0 0
        %3127 = vmatmul.mubr.bf16.gmra.mxu0 %v3062
        %v3128 = vpop.f32.mrf.mxu0
        %v3129 = vadd.f32 0.0, %v3128
        %v3130 = vpop.f32.mrf.mxu0
        %v3131 = vpop.f32.mrf.mxu0
        %v3132 = vadd.f32 0.0, %v3131
        %v3133 = vpop.f32.mrf.mxu0
        %3134 = vmatprep.mubr.bf16.mxu0 0
        %3135 = vmatmul.mubr.bf16.gmra.mxu0 %v3063
        %v3136 = vpop.f32.mrf.mxu0
        %v3137 = vadd.f32 0.0, %v3136
        %v3138 = vpop.f32.mrf.mxu0
        %v3139 = vpop.f32.mrf.mxu0
        %v3140 = vadd.f32 0.0, %v3139
        %v3141 = vpop.f32.mrf.mxu0
        %3142 = vmatprep.mubr.bf16.mxu0 0
        %3143 = vmatmul.mubr.bf16.gmra.mxu0 %v3064
        %v3144 = vpop.f32.mrf.mxu0
        %v3145 = vadd.f32 0.0, %v3144
        %v3146 = vpop.f32.mrf.mxu0
        %v3147 = vpop.f32.mrf.mxu0
        %v3148 = vadd.f32 0.0, %v3147
        %v3149 = vpop.f32.mrf.mxu0
        %3150 = vmatprep.mubr.bf16.mxu0 0
        %3151 = vmatmul.mubr.bf16.gmra.mxu0 %v3065
        %v3152 = vpop.f32.mrf.mxu0
        %v3153 = vadd.f32 0.0, %v3152
        %v3154 = vpop.f32.mrf.mxu0
        %v3155 = vpop.f32.mrf.mxu0
        %v3156 = vadd.f32 0.0, %v3155
        %v3157 = vpop.f32.mrf.mxu0
        %3158 = vmatprep.mubr.bf16.mxu0 0
        %3159 = vmatmul.mubr.bf16.gmra.mxu0 %v3066
        %v3160 = vpop.f32.mrf.mxu0
        %v3161 = vadd.f32 0.0, %v3160
        %v3162 = vpop.f32.mrf.mxu0
        %v3163 = vpop.f32.mrf.mxu0
        %v3164 = vadd.f32 0.0, %v3163
        %v3165 = vpop.f32.mrf.mxu0
        %3166 = vmatprep.mubr.bf16.mxu0 0
        %3167 = vmatmul.mubr.bf16.gmra.mxu0 %v3067
        %v3168 = vpop.f32.mrf.mxu0
        %v3169 = vadd.f32 0.0, %v3168
        %v3170 = vpop.f32.mrf.mxu0
        %v3171 = vpop.f32.mrf.mxu0
        %v3172 = vadd.f32 0.0, %v3171
        %v3173 = vpop.f32.mrf.mxu0
        %3174 = vmatprep.mubr.bf16.mxu0 0
        %3175 = vmatmul.mubr.bf16.gmra.mxu0 %v3068
        %v3176 = vpop.f32.mrf.mxu0
        %v3177 = vadd.f32 0.0, %v3176
        %v3178 = vpop.f32.mrf.mxu0
        %v3179 = vpop.f32.mrf.mxu0
        %v3180 = vadd.f32 0.0, %v3179
        %v3181 = vpop.f32.mrf.mxu0
        %3182 = vmatprep.mubr.bf16.mxu0 0
        %3183 = vmatmul.mubr.bf16.gmra.mxu0 %v3069
        %v3184 = vpop.f32.mrf.mxu0
        %v3185 = vadd.f32 0.0, %v3184
        %v3186 = vpop.f32.mrf.mxu0
        %v3187 = vpop.f32.mrf.mxu0
        %v3188 = vadd.f32 0.0, %v3187
        %v3189 = vpop.f32.mrf.mxu0
        %3190 = vdwg.mxu0
        %3207 = vrot.lane.b32.xlu0 %v3129, 64
        %v3208 = vpop.permute.xlu0 %3207
        %3209 = vrot.lane.b32.xlu0 %v3132, 64
        %v3210 = vpop.permute.xlu0 %3209
        %3211 = vrot.lane.b32.xlu0 %v3137, 64
        %v3212 = vpop.permute.xlu0 %3211
        %3213 = vrot.lane.b32.xlu0 %v3140, 64
        %v3214 = vpop.permute.xlu0 %3213
        %3215 = vrot.lane.b32.xlu0 %v3145, 64
        %v3216 = vpop.permute.xlu0 %3215
        %3217 = vrot.lane.b32.xlu0 %v3148, 64
        %v3218 = vpop.permute.xlu0 %3217
        %3219 = vrot.lane.b32.xlu0 %v3153, 64
        %v3220 = vpop.permute.xlu0 %3219
        %3221 = vrot.lane.b32.xlu0 %v3156, 64
        %v3222 = vpop.permute.xlu0 %3221
        %3223 = vrot.lane.b32.xlu0 %v3161, 64
        %v3224 = vpop.permute.xlu0 %3223
        %3225 = vrot.lane.b32.xlu0 %v3164, 64
        %v3226 = vpop.permute.xlu0 %3225
        %3227 = vrot.lane.b32.xlu0 %v3169, 64
        %v3228 = vpop.permute.xlu0 %3227
        %3229 = vrot.lane.b32.xlu0 %v3172, 64
        %v3230 = vpop.permute.xlu0 %3229
        %3231 = vrot.lane.b32.xlu0 %v3177, 64
        %v3232 = vpop.permute.xlu0 %3231
        %3233 = vrot.lane.b32.xlu0 %v3180, 64
        %v3234 = vpop.permute.xlu0 %3233
        %3235 = vrot.lane.b32.xlu0 %v3185, 64
        %v3236 = vpop.permute.xlu0 %3235
        %3237 = vrot.lane.b32.xlu0 %v3188, 64
        %v3238 = vpop.permute.xlu0 %3237
        %v3255 = vadd.f32 %v3046, %v3208
        %v3256 = vadd.f32 %v3047, %v3210
        %v3257 = vadd.f32 %v3048, %v3212
        %v3258 = vadd.f32 %v3049, %v3214
        %v3259 = vadd.f32 %v3050, %v3216
        %v3260 = vadd.f32 %v3051, %v3218
        %v3261 = vadd.f32 %v3052, %v3220
        %v3262 = vadd.f32 %v3053, %v3222
        %v3263 = vadd.f32 %v3054, %v3224
        %v3264 = vadd.f32 %v3055, %v3226
        %v3265 = vadd.f32 %v3056, %v3228
        %v3266 = vadd.f32 %v3057, %v3230
        %v3267 = vadd.f32 %v3058, %v3232
        %v3268 = vadd.f32 %v3059, %v3234
        %v3269 = vadd.f32 %v3060, %v3236
        %v3270 = vadd.f32 %v3061, %v3238
        %vm3271 = vcmask 785920
        %3272 = vst.msk [vmem:[#allocation4] sm:$0xff] %vm3271, %v3255
        %3273 = vst.msk [vmem:[#allocation4 + $0x8] sm:$0xff] %vm3271, %v3256
        %3274 = vst.msk [vmem:[#allocation4 + $0x10] sm:$0xff] %vm3271, %v3257
        %3275 = vst.msk [vmem:[#allocation4 + $0x18] sm:$0xff] %vm3271, %v3258
        %3276 = vst.msk [vmem:[#allocation4 + $0x20] sm:$0xff] %vm3271, %v3259
        %3277 = vst.msk [vmem:[#allocation4 + $0x28] sm:$0xff] %vm3271, %v3260
        %3278 = vst.msk [vmem:[#allocation4 + $0x30] sm:$0xff] %vm3271, %v3261
        %3279 = vst.msk [vmem:[#allocation4 + $0x38] sm:$0xff] %vm3271, %v3262
        %3280 = vst.msk [vmem:[#allocation4 + $0x40] sm:$0xff] %vm3271, %v3263
        %3281 = vst.msk [vmem:[#allocation4 + $0x48] sm:$0xff] %vm3271, %v3264
        %3282 = vst.msk [vmem:[#allocation4 + $0x50] sm:$0xff] %vm3271, %v3265
        %3283 = vst.msk [vmem:[#allocation4 + $0x58] sm:$0xff] %vm3271, %v3266
        %3284 = vst.msk [vmem:[#allocation4 + $0x60] sm:$0xff] %vm3271, %v3267
        %3285 = vst.msk [vmem:[#allocation4 + $0x68] sm:$0xff] %vm3271, %v3268
        %3286 = vst.msk [vmem:[#allocation4 + $0x70] sm:$0xff] %vm3271, %v3269
        %3287 = vst.msk [vmem:[#allocation4 + $0x78] sm:$0xff] %vm3271, %v3270
        %3288 = vst.msk [vmem:[#allocation2] sm:$0xff] %vm2933, %v2661
        %3289 = vst.msk [vmem:[#allocation2 + $0x8] sm:$0xff] %vm2933, %v2662
        %3290 = vst.msk [vmem:[#allocation2 + $0x10] sm:$0xff] %vm2933, %v2663
        %3291 = vst.msk [vmem:[#allocation2 + $0x18] sm:$0xff] %vm2933, %v2664
        %3292 = vst.msk [vmem:[#allocation2 + $0x20] sm:$0xff] %vm2933, %v2665
        %3293 = vst.msk [vmem:[#allocation2 + $0x28] sm:$0xff] %vm2933, %v2666
        %3294 = vst.msk [vmem:[#allocation2 + $0x30] sm:$0xff] %vm2933, %v2667
        %3295 = vst.msk [vmem:[#allocation2 + $0x38] sm:$0xff] %vm2933, %v2668
        %3296 = vst.msk [vmem:[#allocation2 + $0x40] sm:$0xff] %vm2933, %v2669
        %3297 = vst.msk [vmem:[#allocation2 + $0x48] sm:$0xff] %vm2933, %v2670
        %3298 = vst.msk [vmem:[#allocation2 + $0x50] sm:$0xff] %vm2933, %v2671
        %3299 = vst.msk [vmem:[#allocation2 + $0x58] sm:$0xff] %vm2933, %v2672
        %3300 = vst.msk [vmem:[#allocation2 + $0x60] sm:$0xff] %vm2933, %v2673
        %3301 = vst.msk [vmem:[#allocation2 + $0x68] sm:$0xff] %vm2933, %v2674
        %3302 = vst.msk [vmem:[#allocation2 + $0x70] sm:$0xff] %vm2933, %v2675
        %3303 = vst.msk [vmem:[#allocation2 + $0x78] sm:$0xff] %vm2933, %v2676
        %3304 = vrot.lane.b32.xlu0 %v724, 32
        %v3305 = vpop.permute.xlu0 %3304
        %3306 = vrot.lane.b32.xlu0 %v725, 32
        %v3307 = vpop.permute.xlu0 %3306
        %3308 = vrot.lane.b32.xlu0 %v726, 32
        %v3309 = vpop.permute.xlu0 %3308
        %3310 = vrot.lane.b32.xlu0 %v727, 32
        %v3311 = vpop.permute.xlu0 %3310
        %3312 = vrot.lane.b32.xlu0 %v728, 32
        %v3313 = vpop.permute.xlu0 %3312
        %3314 = vrot.lane.b32.xlu0 %v729, 32
        %v3315 = vpop.permute.xlu0 %3314
        %3316 = vrot.lane.b32.xlu0 %v730, 32
        %v3317 = vpop.permute.xlu0 %3316
        %3318 = vrot.lane.b32.xlu0 %v731, 32
        %v3319 = vpop.permute.xlu0 %3318
        %3320 = vrot.lane.b32.xlu0 %v764, 32
        %v3321 = vpop.permute.xlu0 %3320
        %3322 = vrot.lane.b32.xlu0 %v765, 32
        %v3323 = vpop.permute.xlu0 %3322
        %3324 = vrot.lane.b32.xlu0 %v766, 32
        %v3325 = vpop.permute.xlu0 %3324
        %3326 = vrot.lane.b32.xlu0 %v767, 32
        %v3327 = vpop.permute.xlu0 %3326
        %3328 = vrot.lane.b32.xlu0 %v768, 32
        %v3329 = vpop.permute.xlu0 %3328
        %3330 = vrot.lane.b32.xlu0 %v769, 32
        %v3331 = vpop.permute.xlu0 %3330
        %3332 = vrot.lane.b32.xlu0 %v770, 32
        %v3333 = vpop.permute.xlu0 %3332
        %3334 = vrot.lane.b32.xlu0 %v771, 32
        %v3335 = vpop.permute.xlu0 %3334
        %v3337 = vsel %vm772, %v3305, 0
        %v3340 = vsel %vm772, %v3307, 0
        %v3343 = vsel %vm772, %v3309, 0
        %v3346 = vsel %vm772, %v3311, 0
        %v3349 = vsel %vm772, %v3313, 0
        %v3352 = vsel %vm772, %v3315, 0
        %v3355 = vsel %vm772, %v3317, 0
        %v3358 = vsel %vm772, %v3319, 0
        %v3361 = vsel %vm772, %v3321, 0
        %v3364 = vsel %vm772, %v3323, 0
        %v3367 = vsel %vm772, %v3325, 0
        %v3370 = vsel %vm772, %v3327, 0
        %v3373 = vsel %vm772, %v3329, 0
        %v3376 = vsel %vm772, %v3331, 0
        %v3379 = vsel %vm772, %v3333, 0
        %v3382 = vsel %vm772, %v3335, 0
        %3384 = vmatprep.subr.bf16.mxu0 0
        %3385 = vmatpush1.bf16.xpose.msra.mxu0 %v3382
        %3386 = vmatprep.subr.bf16.mxu0 0
        %3387 = vmatpush1.bf16.xpose.msra.mxu0 %v3379
        %3388 = vmatprep.subr.bf16.mxu0 0
        %3389 = vmatpush1.bf16.xpose.msra.mxu0 %v3376
        %3390 = vmatprep.subr.bf16.mxu0 0
        %3391 = vmatpush1.bf16.xpose.msra.mxu0 %v3373
        %3392 = vmatprep.subr.bf16.mxu0 0
        %3393 = vmatpush1.bf16.xpose.msra.mxu0 %v3370
        %3394 = vmatprep.subr.bf16.mxu0 0
        %3395 = vmatpush1.bf16.xpose.msra.mxu0 %v3367
        %3396 = vmatprep.subr.bf16.mxu0 0
        %3397 = vmatpush1.bf16.xpose.msra.mxu0 %v3364
        %3398 = vmatprep.subr.bf16.mxu0 0
        %3399 = vmatpush1.bf16.xpose.msra.mxu0 %v3361
        %3400 = vmatprep.subr.bf16.mxu0 0
        %3401 = vmatpush2.bf16.xpose.msra.mxu0 0
        %3402 = vmatprep.subr.bf16.mxu0 0
        %3403 = vmatpush2.bf16.xpose.msra.mxu0 0
        %3404 = vmatprep.subr.bf16.mxu0 0
        %3405 = vmatpush2.bf16.xpose.msra.mxu0 0
        %3406 = vmatprep.subr.bf16.mxu0 0
        %3407 = vmatpush2.bf16.xpose.msra.mxu0 0
        %3408 = vmatprep.subr.bf16.mxu0 0
        %3409 = vmatpush2.bf16.xpose.msra.mxu0 0
        %3410 = vmatprep.subr.bf16.mxu0 0
        %3411 = vmatpush2.bf16.xpose.msra.mxu0 0
        %3412 = vmatprep.subr.bf16.mxu0 0
        %3413 = vmatpush2.bf16.xpose.msra.mxu0 0
        %3414 = vmatprep.subr.bf16.mxu0 0
        %3415 = vmatpush2.bf16.xpose.msra.mxu0 0
        %3416 = vmatprep.mubr.bf16.mxu0 0
        %3417 = vmatmul.mubr.bf16.gmra.mxu0 %v3337
        %v3418 = vpop.f32.mrf.mxu0
        %v3419 = vadd.f32 0.0, %v3418
        %v3420 = vpop.f32.mrf.mxu0
        %v3421 = vpop.f32.mrf.mxu0
        %v3422 = vadd.f32 0.0, %v3421
        %v3423 = vpop.f32.mrf.mxu0
        %3424 = vmatprep.mubr.bf16.mxu0 0
        %3425 = vmatmul.mubr.bf16.gmra.mxu0 %v3340
        %v3426 = vpop.f32.mrf.mxu0
        %v3427 = vadd.f32 0.0, %v3426
        %v3428 = vpop.f32.mrf.mxu0
        %v3429 = vpop.f32.mrf.mxu0
        %v3430 = vadd.f32 0.0, %v3429
        %v3431 = vpop.f32.mrf.mxu0
        %3432 = vmatprep.mubr.bf16.mxu0 0
        %3433 = vmatmul.mubr.bf16.gmra.mxu0 %v3343
        %v3434 = vpop.f32.mrf.mxu0
        %v3435 = vadd.f32 0.0, %v3434
        %v3436 = vpop.f32.mrf.mxu0
        %v3437 = vpop.f32.mrf.mxu0
        %v3438 = vadd.f32 0.0, %v3437
        %v3439 = vpop.f32.mrf.mxu0
        %3440 = vmatprep.mubr.bf16.mxu0 0
        %3441 = vmatmul.mubr.bf16.gmra.mxu0 %v3346
        %v3442 = vpop.f32.mrf.mxu0
        %v3443 = vadd.f32 0.0, %v3442
        %v3444 = vpop.f32.mrf.mxu0
        %v3445 = vpop.f32.mrf.mxu0
        %v3446 = vadd.f32 0.0, %v3445
        %v3447 = vpop.f32.mrf.mxu0
        %3448 = vmatprep.mubr.bf16.mxu0 0
        %3449 = vmatmul.mubr.bf16.gmra.mxu0 %v3349
        %v3450 = vpop.f32.mrf.mxu0
        %v3451 = vadd.f32 0.0, %v3450
        %v3452 = vpop.f32.mrf.mxu0
        %v3453 = vpop.f32.mrf.mxu0
        %v3454 = vadd.f32 0.0, %v3453
        %v3455 = vpop.f32.mrf.mxu0
        %3456 = vmatprep.mubr.bf16.mxu0 0
        %3457 = vmatmul.mubr.bf16.gmra.mxu0 %v3352
        %v3458 = vpop.f32.mrf.mxu0
        %v3459 = vadd.f32 0.0, %v3458
        %v3460 = vpop.f32.mrf.mxu0
        %v3461 = vpop.f32.mrf.mxu0
        %v3462 = vadd.f32 0.0, %v3461
        %v3463 = vpop.f32.mrf.mxu0
        %3464 = vmatprep.mubr.bf16.mxu0 0
        %3465 = vmatmul.mubr.bf16.gmra.mxu0 %v3355
        %v3466 = vpop.f32.mrf.mxu0
        %v3467 = vadd.f32 0.0, %v3466
        %v3468 = vpop.f32.mrf.mxu0
        %v3469 = vpop.f32.mrf.mxu0
        %v3470 = vadd.f32 0.0, %v3469
        %v3471 = vpop.f32.mrf.mxu0
        %3472 = vmatprep.mubr.bf16.mxu0 0
        %3473 = vmatmul.mubr.bf16.gmra.mxu0 %v3358
        %v3474 = vpop.f32.mrf.mxu0
        %v3475 = vadd.f32 0.0, %v3474
        %v3476 = vpop.f32.mrf.mxu0
        %v3477 = vpop.f32.mrf.mxu0
        %v3478 = vadd.f32 0.0, %v3477
        %v3479 = vpop.f32.mrf.mxu0
        %3480 = vdwg.mxu0
        %v3481 = vld [vmem:[#allocation2] sm:$0xff]
        %v3482 = vld [vmem:[#allocation2 + $0x8] sm:$0xff]
        %v3483 = vld [vmem:[#allocation2 + $0x10] sm:$0xff]
        %v3484 = vld [vmem:[#allocation2 + $0x18] sm:$0xff]
        %v3485 = vld [vmem:[#allocation2 + $0x20] sm:$0xff]
        %v3486 = vld [vmem:[#allocation2 + $0x28] sm:$0xff]
        %v3487 = vld [vmem:[#allocation2 + $0x30] sm:$0xff]
        %v3488 = vld [vmem:[#allocation2 + $0x38] sm:$0xff]
        %v3489 = vld [vmem:[#allocation2 + $0x40] sm:$0xff]
        %v3490 = vld [vmem:[#allocation2 + $0x48] sm:$0xff]
        %v3491 = vld [vmem:[#allocation2 + $0x50] sm:$0xff]
        %v3492 = vld [vmem:[#allocation2 + $0x58] sm:$0xff]
        %v3493 = vld [vmem:[#allocation2 + $0x60] sm:$0xff]
        %v3494 = vld [vmem:[#allocation2 + $0x68] sm:$0xff]
        %v3495 = vld [vmem:[#allocation2 + $0x70] sm:$0xff]
        %v3496 = vld [vmem:[#allocation2 + $0x78] sm:$0xff]
        %3497 = vmax.xlane.f32.xlu0 %v3419
        %v3498 = vpop.xlane.xlu0 %3497
        %3499 = vmax.xlane.f32.xlu0 %v3422
        %v3500 = vpop.xlane.xlu0 %3499
        %3501 = vmax.xlane.f32.xlu0 %v3427
        %v3502 = vpop.xlane.xlu0 %3501
        %3503 = vmax.xlane.f32.xlu0 %v3430
        %v3504 = vpop.xlane.xlu0 %3503
        %3505 = vmax.xlane.f32.xlu0 %v3435
        %v3506 = vpop.xlane.xlu0 %3505
        %3507 = vmax.xlane.f32.xlu0 %v3438
        %v3508 = vpop.xlane.xlu0 %3507
        %3509 = vmax.xlane.f32.xlu0 %v3443
        %v3510 = vpop.xlane.xlu0 %3509
        %3511 = vmax.xlane.f32.xlu0 %v3446
        %v3512 = vpop.xlane.xlu0 %3511
        %3513 = vmax.xlane.f32.xlu0 %v3451
        %v3514 = vpop.xlane.xlu0 %3513
        %3515 = vmax.xlane.f32.xlu0 %v3454
        %v3516 = vpop.xlane.xlu0 %3515
        %3517 = vmax.xlane.f32.xlu0 %v3459
        %v3518 = vpop.xlane.xlu0 %3517
        %3519 = vmax.xlane.f32.xlu0 %v3462
        %v3520 = vpop.xlane.xlu0 %3519
        %3521 = vmax.xlane.f32.xlu0 %v3467
        %v3522 = vpop.xlane.xlu0 %3521
        %3523 = vmax.xlane.f32.xlu0 %v3470
        %v3524 = vpop.xlane.xlu0 %3523
        %3525 = vmax.xlane.f32.xlu0 %v3475
        %v3526 = vpop.xlane.xlu0 %3525
        %3527 = vmax.xlane.f32.xlu0 %v3478
        %v3528 = vpop.xlane.xlu0 %3527
        %v3529 = vmax.f32 %v3481, %v3498
        %v3530 = vmax.f32 %v3482, %v3500
        %v3531 = vmax.f32 %v3483, %v3502
        %v3532 = vmax.f32 %v3484, %v3504
        %v3533 = vmax.f32 %v3485, %v3506
        %v3534 = vmax.f32 %v3486, %v3508
        %v3535 = vmax.f32 %v3487, %v3510
        %v3536 = vmax.f32 %v3488, %v3512
        %v3537 = vmax.f32 %v3489, %v3514
        %v3538 = vmax.f32 %v3490, %v3516
        %v3539 = vmax.f32 %v3491, %v3518
        %v3540 = vmax.f32 %v3492, %v3520
        %v3541 = vmax.f32 %v3493, %v3522
        %v3542 = vmax.f32 %v3494, %v3524
        %v3543 = vmax.f32 %v3495, %v3526
        %v3544 = vmax.f32 %v3496, %v3528
        %v3545 = vsub.f32 %v3481, %v3529
        %v3546 = vsub.f32 %v3482, %v3530
        %v3547 = vsub.f32 %v3483, %v3531
        %v3548 = vsub.f32 %v3484, %v3532
        %v3549 = vsub.f32 %v3485, %v3533
        %v3550 = vsub.f32 %v3486, %v3534
        %v3551 = vsub.f32 %v3487, %v3535
        %v3552 = vsub.f32 %v3488, %v3536
        %v3553 = vsub.f32 %v3489, %v3537
        %v3554 = vsub.f32 %v3490, %v3538
        %v3555 = vsub.f32 %v3491, %v3539
        %v3556 = vsub.f32 %v3492, %v3540
        %v3557 = vsub.f32 %v3493, %v3541
        %v3558 = vsub.f32 %v3494, %v3542
        %v3559 = vsub.f32 %v3495, %v3543
        %v3560 = vsub.f32 %v3496, %v3544
        %v3561 = vmul.f32 %v3545, 1.442695
        %v3562 = vpow.pop %v3561
        %v3563 = vmul.f32 %v3546, 1.442695
        %v3564 = vpow.pop %v3563
        %v3565 = vmul.f32 %v3547, 1.442695
        %v3566 = vpow.pop %v3565
        %v3567 = vmul.f32 %v3548, 1.442695
        %v3568 = vpow.pop %v3567
        %v3569 = vmul.f32 %v3549, 1.442695
        %v3570 = vpow.pop %v3569
        %v3571 = vmul.f32 %v3550, 1.442695
        %v3572 = vpow.pop %v3571
        %v3573 = vmul.f32 %v3551, 1.442695
        %v3574 = vpow.pop %v3573
        %v3575 = vmul.f32 %v3552, 1.442695
        %v3576 = vpow.pop %v3575
        %v3577 = vmul.f32 %v3553, 1.442695
        %v3578 = vpow.pop %v3577
        %v3579 = vmul.f32 %v3554, 1.442695
        %v3580 = vpow.pop %v3579
        %v3581 = vmul.f32 %v3555, 1.442695
        %v3582 = vpow.pop %v3581
        %v3583 = vmul.f32 %v3556, 1.442695
        %v3584 = vpow.pop %v3583
        %v3585 = vmul.f32 %v3557, 1.442695
        %v3586 = vpow.pop %v3585
        %v3587 = vmul.f32 %v3558, 1.442695
        %v3588 = vpow.pop %v3587
        %v3589 = vmul.f32 %v3559, 1.442695
        %v3590 = vpow.pop %v3589
        %v3591 = vmul.f32 %v3560, 1.442695
        %v3592 = vpow.pop %v3591
        %3594 = vset.pattern.permute.xlu0 3
        %3595 = vperm.xlu0 %3594, %v3529
        %v3596 = vpop.permute.xlu0 %3595
        %3599 = vset.pattern.permute.xlu0 3
        %3600 = vperm.xlu0 %3599, %v3530
        %v3601 = vpop.permute.xlu0 %3600
        %3604 = vset.pattern.permute.xlu0 3
        %3605 = vperm.xlu0 %3604, %v3531
        %v3606 = vpop.permute.xlu0 %3605
        %3609 = vset.pattern.permute.xlu0 3
        %3610 = vperm.xlu0 %3609, %v3532
        %v3611 = vpop.permute.xlu0 %3610
        %3614 = vset.pattern.permute.xlu0 3
        %3615 = vperm.xlu0 %3614, %v3533
        %v3616 = vpop.permute.xlu0 %3615
        %3619 = vset.pattern.permute.xlu0 3
        %3620 = vperm.xlu0 %3619, %v3534
        %v3621 = vpop.permute.xlu0 %3620
        %3624 = vset.pattern.permute.xlu0 3
        %3625 = vperm.xlu0 %3624, %v3535
        %v3626 = vpop.permute.xlu0 %3625
        %3629 = vset.pattern.permute.xlu0 3
        %3630 = vperm.xlu0 %3629, %v3536
        %v3631 = vpop.permute.xlu0 %3630
        %3634 = vset.pattern.permute.xlu0 3
        %3635 = vperm.xlu0 %3634, %v3537
        %v3636 = vpop.permute.xlu0 %3635
        %3639 = vset.pattern.permute.xlu0 3
        %3640 = vperm.xlu0 %3639, %v3538
        %v3641 = vpop.permute.xlu0 %3640
        %3644 = vset.pattern.permute.xlu0 3
        %3645 = vperm.xlu0 %3644, %v3539
        %v3646 = vpop.permute.xlu0 %3645
        %3649 = vset.pattern.permute.xlu0 3
        %3650 = vperm.xlu0 %3649, %v3540
        %v3651 = vpop.permute.xlu0 %3650
        %3654 = vset.pattern.permute.xlu0 3
        %3655 = vperm.xlu0 %3654, %v3541
        %v3656 = vpop.permute.xlu0 %3655
        %3659 = vset.pattern.permute.xlu0 3
        %3660 = vperm.xlu0 %3659, %v3542
        %v3661 = vpop.permute.xlu0 %3660
        %3664 = vset.pattern.permute.xlu0 3
        %3665 = vperm.xlu0 %3664, %v3543
        %v3666 = vpop.permute.xlu0 %3665
        %3669 = vset.pattern.permute.xlu0 3
        %3670 = vperm.xlu0 %3669, %v3544
        %v3671 = vpop.permute.xlu0 %3670
        %v3673 = vsub.f32 %v3419, %v3596
        %v3674 = vsub.f32 %v3422, %v3601
        %v3675 = vsub.f32 %v3427, %v3606
        %v3676 = vsub.f32 %v3430, %v3611
        %v3677 = vsub.f32 %v3435, %v3616
        %v3678 = vsub.f32 %v3438, %v3621
        %v3679 = vsub.f32 %v3443, %v3626
        %v3680 = vsub.f32 %v3446, %v3631
        %v3681 = vsub.f32 %v3451, %v3636
        %v3682 = vsub.f32 %v3454, %v3641
        %v3683 = vsub.f32 %v3459, %v3646
        %v3684 = vsub.f32 %v3462, %v3651
        %v3685 = vsub.f32 %v3467, %v3656
        %v3686 = vsub.f32 %v3470, %v3661
        %v3687 = vsub.f32 %v3475, %v3666
        %v3688 = vsub.f32 %v3478, %v3671
        %v3689 = vmul.f32 %v3673, 1.442695
        %v3690 = vpow.pop %v3689
        %v3691 = vmul.f32 %v3674, 1.442695
        %v3692 = vpow.pop %v3691
        %v3693 = vmul.f32 %v3675, 1.442695
        %v3694 = vpow.pop %v3693
        %v3695 = vmul.f32 %v3676, 1.442695
        %v3696 = vpow.pop %v3695
        %v3697 = vmul.f32 %v3677, 1.442695
        %v3698 = vpow.pop %v3697
        %v3699 = vmul.f32 %v3678, 1.442695
        %v3700 = vpow.pop %v3699
        %v3701 = vmul.f32 %v3679, 1.442695
        %v3702 = vpow.pop %v3701
        %v3703 = vmul.f32 %v3680, 1.442695
        %v3704 = vpow.pop %v3703
        %v3705 = vmul.f32 %v3681, 1.442695
        %v3706 = vpow.pop %v3705
        %v3707 = vmul.f32 %v3682, 1.442695
        %v3708 = vpow.pop %v3707
        %v3709 = vmul.f32 %v3683, 1.442695
        %v3710 = vpow.pop %v3709
        %v3711 = vmul.f32 %v3684, 1.442695
        %v3712 = vpow.pop %v3711
        %v3713 = vmul.f32 %v3685, 1.442695
        %v3714 = vpow.pop %v3713
        %v3715 = vmul.f32 %v3686, 1.442695
        %v3716 = vpow.pop %v3715
        %v3717 = vmul.f32 %v3687, 1.442695
        %v3718 = vpow.pop %v3717
        %v3719 = vmul.f32 %v3688, 1.442695
        %v3720 = vpow.pop %v3719
        %v3721 = vld [vmem:[#allocation3] sm:$0xff]
        %v3722 = vld [vmem:[#allocation3 + $0x8] sm:$0xff]
        %v3723 = vld [vmem:[#allocation3 + $0x10] sm:$0xff]
        %v3724 = vld [vmem:[#allocation3 + $0x18] sm:$0xff]
        %v3725 = vld [vmem:[#allocation3 + $0x20] sm:$0xff]
        %v3726 = vld [vmem:[#allocation3 + $0x28] sm:$0xff]
        %v3727 = vld [vmem:[#allocation3 + $0x30] sm:$0xff]
        %v3728 = vld [vmem:[#allocation3 + $0x38] sm:$0xff]
        %v3729 = vld [vmem:[#allocation3 + $0x40] sm:$0xff]
        %v3730 = vld [vmem:[#allocation3 + $0x48] sm:$0xff]
        %v3731 = vld [vmem:[#allocation3 + $0x50] sm:$0xff]
        %v3732 = vld [vmem:[#allocation3 + $0x58] sm:$0xff]
        %v3733 = vld [vmem:[#allocation3 + $0x60] sm:$0xff]
        %v3734 = vld [vmem:[#allocation3 + $0x68] sm:$0xff]
        %v3735 = vld [vmem:[#allocation3 + $0x70] sm:$0xff]
        %v3736 = vld [vmem:[#allocation3 + $0x78] sm:$0xff]
        %v3737 = vmul.f32 %v3562, %v3721
        %v3738 = vmul.f32 %v3564, %v3722
        %v3739 = vmul.f32 %v3566, %v3723
        %v3740 = vmul.f32 %v3568, %v3724
        %v3741 = vmul.f32 %v3570, %v3725
        %v3742 = vmul.f32 %v3572, %v3726
        %v3743 = vmul.f32 %v3574, %v3727
        %v3744 = vmul.f32 %v3576, %v3728
        %v3745 = vmul.f32 %v3578, %v3729
        %v3746 = vmul.f32 %v3580, %v3730
        %v3747 = vmul.f32 %v3582, %v3731
        %v3748 = vmul.f32 %v3584, %v3732
        %v3749 = vmul.f32 %v3586, %v3733
        %v3750 = vmul.f32 %v3588, %v3734
        %v3751 = vmul.f32 %v3590, %v3735
        %v3752 = vmul.f32 %v3592, %v3736
        %3753 = vadd.xlane.f32.xlu0 %v3690
        %v3754 = vpop.xlane.xlu0 %3753
        %3755 = vadd.xlane.f32.xlu0 %v3692
        %v3756 = vpop.xlane.xlu0 %3755
        %3757 = vadd.xlane.f32.xlu0 %v3694
        %v3758 = vpop.xlane.xlu0 %3757
        %3759 = vadd.xlane.f32.xlu0 %v3696
        %v3760 = vpop.xlane.xlu0 %3759
        %3761 = vadd.xlane.f32.xlu0 %v3698
        %v3762 = vpop.xlane.xlu0 %3761
        %3763 = vadd.xlane.f32.xlu0 %v3700
        %v3764 = vpop.xlane.xlu0 %3763
        %3765 = vadd.xlane.f32.xlu0 %v3702
        %v3766 = vpop.xlane.xlu0 %3765
        %3767 = vadd.xlane.f32.xlu0 %v3704
        %v3768 = vpop.xlane.xlu0 %3767
        %3769 = vadd.xlane.f32.xlu0 %v3706
        %v3770 = vpop.xlane.xlu0 %3769
        %3771 = vadd.xlane.f32.xlu0 %v3708
        %v3772 = vpop.xlane.xlu0 %3771
        %3773 = vadd.xlane.f32.xlu0 %v3710
        %v3774 = vpop.xlane.xlu0 %3773
        %3775 = vadd.xlane.f32.xlu0 %v3712
        %v3776 = vpop.xlane.xlu0 %3775
        %3777 = vadd.xlane.f32.xlu0 %v3714
        %v3778 = vpop.xlane.xlu0 %3777
        %3779 = vadd.xlane.f32.xlu0 %v3716
        %v3780 = vpop.xlane.xlu0 %3779
        %3781 = vadd.xlane.f32.xlu0 %v3718
        %v3782 = vpop.xlane.xlu0 %3781
        %3783 = vadd.xlane.f32.xlu0 %v3720
        %v3784 = vpop.xlane.xlu0 %3783
        %v3785 = vadd.f32 %v3737, %v3754
        %v3786 = vadd.f32 %v3738, %v3756
        %v3787 = vadd.f32 %v3739, %v3758
        %v3788 = vadd.f32 %v3740, %v3760
        %v3789 = vadd.f32 %v3741, %v3762
        %v3790 = vadd.f32 %v3742, %v3764
        %v3791 = vadd.f32 %v3743, %v3766
        %v3792 = vadd.f32 %v3744, %v3768
        %v3793 = vadd.f32 %v3745, %v3770
        %v3794 = vadd.f32 %v3746, %v3772
        %v3795 = vadd.f32 %v3747, %v3774
        %v3796 = vadd.f32 %v3748, %v3776
        %v3797 = vadd.f32 %v3749, %v3778
        %v3798 = vadd.f32 %v3750, %v3780
        %v3799 = vadd.f32 %v3751, %v3782
        %v3800 = vadd.f32 %v3752, %v3784
        %vm3801 = vcmask 31768
        %3802 = vst.msk [vmem:[#allocation3] sm:$0xff] %vm3801, %v3785
        %3803 = vst.msk [vmem:[#allocation3 + $0x8] sm:$0xff] %vm3801, %v3786
        %3804 = vst.msk [vmem:[#allocation3 + $0x10] sm:$0xff] %vm3801, %v3787
        %3805 = vst.msk [vmem:[#allocation3 + $0x18] sm:$0xff] %vm3801, %v3788
        %3806 = vst.msk [vmem:[#allocation3 + $0x20] sm:$0xff] %vm3801, %v3789
        %3807 = vst.msk [vmem:[#allocation3 + $0x28] sm:$0xff] %vm3801, %v3790
        %3808 = vst.msk [vmem:[#allocation3 + $0x30] sm:$0xff] %vm3801, %v3791
        %3809 = vst.msk [vmem:[#allocation3 + $0x38] sm:$0xff] %vm3801, %v3792
        %3810 = vst.msk [vmem:[#allocation3 + $0x40] sm:$0xff] %vm3801, %v3793
        %3811 = vst.msk [vmem:[#allocation3 + $0x48] sm:$0xff] %vm3801, %v3794
        %3812 = vst.msk [vmem:[#allocation3 + $0x50] sm:$0xff] %vm3801, %v3795
        %3813 = vst.msk [vmem:[#allocation3 + $0x58] sm:$0xff] %vm3801, %v3796
        %3814 = vst.msk [vmem:[#allocation3 + $0x60] sm:$0xff] %vm3801, %v3797
        %3815 = vst.msk [vmem:[#allocation3 + $0x68] sm:$0xff] %vm3801, %v3798
        %3816 = vst.msk [vmem:[#allocation3 + $0x70] sm:$0xff] %vm3801, %v3799
        %3817 = vst.msk [vmem:[#allocation3 + $0x78] sm:$0xff] %vm3801, %v3800
        %v3818 = vld [vmem:[#allocation4] sm:$0xff]
        %v3819 = vld [vmem:[#allocation4 + $0x8] sm:$0xff]
        %v3820 = vld [vmem:[#allocation4 + $0x10] sm:$0xff]
        %v3821 = vld [vmem:[#allocation4 + $0x18] sm:$0xff]
        %v3822 = vld [vmem:[#allocation4 + $0x20] sm:$0xff]
        %v3823 = vld [vmem:[#allocation4 + $0x28] sm:$0xff]
        %v3824 = vld [vmem:[#allocation4 + $0x30] sm:$0xff]
        %v3825 = vld [vmem:[#allocation4 + $0x38] sm:$0xff]
        %v3826 = vld [vmem:[#allocation4 + $0x40] sm:$0xff]
        %v3827 = vld [vmem:[#allocation4 + $0x48] sm:$0xff]
        %v3828 = vld [vmem:[#allocation4 + $0x50] sm:$0xff]
        %v3829 = vld [vmem:[#allocation4 + $0x58] sm:$0xff]
        %v3830 = vld [vmem:[#allocation4 + $0x60] sm:$0xff]
        %v3831 = vld [vmem:[#allocation4 + $0x68] sm:$0xff]
        %v3832 = vld [vmem:[#allocation4 + $0x70] sm:$0xff]
        %v3833 = vld [vmem:[#allocation4 + $0x78] sm:$0xff]
        %3835 = vset.pattern.permute.xlu0 3
        %3836 = vperm.xlu0 %3835, %v3562
        %v3837 = vpop.permute.xlu0 %3836
        %3840 = vset.pattern.permute.xlu0 3
        %3841 = vperm.xlu0 %3840, %v3564
        %v3842 = vpop.permute.xlu0 %3841
        %3845 = vset.pattern.permute.xlu0 3
        %3846 = vperm.xlu0 %3845, %v3566
        %v3847 = vpop.permute.xlu0 %3846
        %3850 = vset.pattern.permute.xlu0 3
        %3851 = vperm.xlu0 %3850, %v3568
        %v3852 = vpop.permute.xlu0 %3851
        %3855 = vset.pattern.permute.xlu0 3
        %3856 = vperm.xlu0 %3855, %v3570
        %v3857 = vpop.permute.xlu0 %3856
        %3860 = vset.pattern.permute.xlu0 3
        %3861 = vperm.xlu0 %3860, %v3572
        %v3862 = vpop.permute.xlu0 %3861
        %3865 = vset.pattern.permute.xlu0 3
        %3866 = vperm.xlu0 %3865, %v3574
        %v3867 = vpop.permute.xlu0 %3866
        %3870 = vset.pattern.permute.xlu0 3
        %3871 = vperm.xlu0 %3870, %v3576
        %v3872 = vpop.permute.xlu0 %3871
        %3875 = vset.pattern.permute.xlu0 3
        %3876 = vperm.xlu0 %3875, %v3578
        %v3877 = vpop.permute.xlu0 %3876
        %3880 = vset.pattern.permute.xlu0 3
        %3881 = vperm.xlu0 %3880, %v3580
        %v3882 = vpop.permute.xlu0 %3881
        %3885 = vset.pattern.permute.xlu0 3
        %3886 = vperm.xlu0 %3885, %v3582
        %v3887 = vpop.permute.xlu0 %3886
        %3890 = vset.pattern.permute.xlu0 3
        %3891 = vperm.xlu0 %3890, %v3584
        %v3892 = vpop.permute.xlu0 %3891
        %3895 = vset.pattern.permute.xlu0 3
        %3896 = vperm.xlu0 %3895, %v3586
        %v3897 = vpop.permute.xlu0 %3896
        %3900 = vset.pattern.permute.xlu0 3
        %3901 = vperm.xlu0 %3900, %v3588
        %v3902 = vpop.permute.xlu0 %3901
        %3905 = vset.pattern.permute.xlu0 3
        %3906 = vperm.xlu0 %3905, %v3590
        %v3907 = vpop.permute.xlu0 %3906
        %3910 = vset.pattern.permute.xlu0 3
        %3911 = vperm.xlu0 %3910, %v3592
        %v3912 = vpop.permute.xlu0 %3911
        %v3914 = vmul.f32 %v3837, %v3818
        %v3915 = vmul.f32 %v3842, %v3819
        %v3916 = vmul.f32 %v3847, %v3820
        %v3917 = vmul.f32 %v3852, %v3821
        %v3918 = vmul.f32 %v3857, %v3822
        %v3919 = vmul.f32 %v3862, %v3823
        %v3920 = vmul.f32 %v3867, %v3824
        %v3921 = vmul.f32 %v3872, %v3825
        %v3922 = vmul.f32 %v3877, %v3826
        %v3923 = vmul.f32 %v3882, %v3827
        %v3924 = vmul.f32 %v3887, %v3828
        %v3925 = vmul.f32 %v3892, %v3829
        %v3926 = vmul.f32 %v3897, %v3830
        %v3927 = vmul.f32 %v3902, %v3831
        %v3928 = vmul.f32 %v3907, %v3832
        %v3929 = vmul.f32 %v3912, %v3833
        %v3930 = vpack.c.bf16 %v3692, %v3690
        %v3931 = vpack.c.bf16 %v3696, %v3694
        %v3932 = vpack.c.bf16 %v3700, %v3698
        %v3933 = vpack.c.bf16 %v3704, %v3702
        %v3934 = vpack.c.bf16 %v3708, %v3706
        %v3935 = vpack.c.bf16 %v3712, %v3710
        %v3936 = vpack.c.bf16 %v3716, %v3714
        %v3937 = vpack.c.bf16 %v3720, %v3718
        %3938 = vrot.lane.b32.xlu0 %v1407, 32
        %v3939 = vpop.permute.xlu0 %3938
        %3940 = vrot.lane.b32.xlu0 %v1408, 32
        %v3941 = vpop.permute.xlu0 %3940
        %3942 = vrot.lane.b32.xlu0 %v1409, 32
        %v3943 = vpop.permute.xlu0 %3942
        %3944 = vrot.lane.b32.xlu0 %v1410, 32
        %v3945 = vpop.permute.xlu0 %3944
        %3946 = vrot.lane.b32.xlu0 %v1411, 32
        %v3947 = vpop.permute.xlu0 %3946
        %3948 = vrot.lane.b32.xlu0 %v1412, 32
        %v3949 = vpop.permute.xlu0 %3948
        %3950 = vrot.lane.b32.xlu0 %v1413, 32
        %v3951 = vpop.permute.xlu0 %3950
        %3952 = vrot.lane.b32.xlu0 %v1414, 32
        %v3953 = vpop.permute.xlu0 %3952
        %3962 = vmatprep.subr.bf16.mxu0 0
        %3963 = vmatpush1.bf16.msra.mxu0 %v3953
        %3964 = vmatprep.subr.bf16.mxu0 0
        %3965 = vmatpush1.bf16.msra.mxu0 %v3951
        %3966 = vmatprep.subr.bf16.mxu0 0
        %3967 = vmatpush1.bf16.msra.mxu0 %v3949
        %3968 = vmatprep.subr.bf16.mxu0 0
        %3969 = vmatpush1.bf16.msra.mxu0 %v3947
        %3970 = vmatprep.subr.bf16.mxu0 0
        %3971 = vmatpush1.bf16.msra.mxu0 %v3945
        %3972 = vmatprep.subr.bf16.mxu0 0
        %3973 = vmatpush1.bf16.msra.mxu0 %v3943
        %3974 = vmatprep.subr.bf16.mxu0 0
        %3975 = vmatpush1.bf16.msra.mxu0 %v3941
        %3976 = vmatprep.subr.bf16.mxu0 0
        %3977 = vmatpush1.bf16.msra.mxu0 %v3939
        %3978 = vmatprep.subr.bf16.mxu0 0
        %3979 = vmatpush2.bf16.msra.mxu0 0
        %3980 = vmatprep.subr.bf16.mxu0 0
        %3981 = vmatpush2.bf16.msra.mxu0 0
        %3982 = vmatprep.subr.bf16.mxu0 0
        %3983 = vmatpush2.bf16.msra.mxu0 0
        %3984 = vmatprep.subr.bf16.mxu0 0
        %3985 = vmatpush2.bf16.msra.mxu0 0
        %3986 = vmatprep.subr.bf16.mxu0 0
        %3987 = vmatpush2.bf16.msra.mxu0 0
        %3988 = vmatprep.subr.bf16.mxu0 0
        %3989 = vmatpush2.bf16.msra.mxu0 0
        %3990 = vmatprep.subr.bf16.mxu0 0
        %3991 = vmatpush2.bf16.msra.mxu0 0
        %3992 = vmatprep.subr.bf16.mxu0 0
        %3993 = vmatpush2.bf16.msra.mxu0 0
        %3994 = vmatprep.mubr.bf16.mxu0 0
        %3995 = vmatmul.mubr.bf16.gmra.mxu0 %v3930
        %v3996 = vpop.f32.mrf.mxu0
        %v3997 = vadd.f32 0.0, %v3996
        %v3998 = vpop.f32.mrf.mxu0
        %v3999 = vpop.f32.mrf.mxu0
        %v4000 = vadd.f32 0.0, %v3999
        %v4001 = vpop.f32.mrf.mxu0
        %4002 = vmatprep.mubr.bf16.mxu0 0
        %4003 = vmatmul.mubr.bf16.gmra.mxu0 %v3931
        %v4004 = vpop.f32.mrf.mxu0
        %v4005 = vadd.f32 0.0, %v4004
        %v4006 = vpop.f32.mrf.mxu0
        %v4007 = vpop.f32.mrf.mxu0
        %v4008 = vadd.f32 0.0, %v4007
        %v4009 = vpop.f32.mrf.mxu0
        %4010 = vmatprep.mubr.bf16.mxu0 0
        %4011 = vmatmul.mubr.bf16.gmra.mxu0 %v3932
        %v4012 = vpop.f32.mrf.mxu0
        %v4013 = vadd.f32 0.0, %v4012
        %v4014 = vpop.f32.mrf.mxu0
        %v4015 = vpop.f32.mrf.mxu0
        %v4016 = vadd.f32 0.0, %v4015
        %v4017 = vpop.f32.mrf.mxu0
        %4018 = vmatprep.mubr.bf16.mxu0 0
        %4019 = vmatmul.mubr.bf16.gmra.mxu0 %v3933
        %v4020 = vpop.f32.mrf.mxu0
        %v4021 = vadd.f32 0.0, %v4020
        %v4022 = vpop.f32.mrf.mxu0
        %v4023 = vpop.f32.mrf.mxu0
        %v4024 = vadd.f32 0.0, %v4023
        %v4025 = vpop.f32.mrf.mxu0
        %4026 = vmatprep.mubr.bf16.mxu0 0
        %4027 = vmatmul.mubr.bf16.gmra.mxu0 %v3934
        %v4028 = vpop.f32.mrf.mxu0
        %v4029 = vadd.f32 0.0, %v4028
        %v4030 = vpop.f32.mrf.mxu0
        %v4031 = vpop.f32.mrf.mxu0
        %v4032 = vadd.f32 0.0, %v4031
        %v4033 = vpop.f32.mrf.mxu0
        %4034 = vmatprep.mubr.bf16.mxu0 0
        %4035 = vmatmul.mubr.bf16.gmra.mxu0 %v3935
        %v4036 = vpop.f32.mrf.mxu0
        %v4037 = vadd.f32 0.0, %v4036
        %v4038 = vpop.f32.mrf.mxu0
        %v4039 = vpop.f32.mrf.mxu0
        %v4040 = vadd.f32 0.0, %v4039
        %v4041 = vpop.f32.mrf.mxu0
        %4042 = vmatprep.mubr.bf16.mxu0 0
        %4043 = vmatmul.mubr.bf16.gmra.mxu0 %v3936
        %v4044 = vpop.f32.mrf.mxu0
        %v4045 = vadd.f32 0.0, %v4044
        %v4046 = vpop.f32.mrf.mxu0
        %v4047 = vpop.f32.mrf.mxu0
        %v4048 = vadd.f32 0.0, %v4047
        %v4049 = vpop.f32.mrf.mxu0
        %4050 = vmatprep.mubr.bf16.mxu0 0
        %4051 = vmatmul.mubr.bf16.gmra.mxu0 %v3937
        %v4052 = vpop.f32.mrf.mxu0
        %v4053 = vadd.f32 0.0, %v4052
        %v4054 = vpop.f32.mrf.mxu0
        %v4055 = vpop.f32.mrf.mxu0
        %v4056 = vadd.f32 0.0, %v4055
        %v4057 = vpop.f32.mrf.mxu0
        %4058 = vdwg.mxu0
        %4075 = vrot.lane.b32.xlu0 %v3997, 96
        %v4076 = vpop.permute.xlu0 %4075
        %4077 = vrot.lane.b32.xlu0 %v4000, 96
        %v4078 = vpop.permute.xlu0 %4077
        %4079 = vrot.lane.b32.xlu0 %v4005, 96
        %v4080 = vpop.permute.xlu0 %4079
        %4081 = vrot.lane.b32.xlu0 %v4008, 96
        %v4082 = vpop.permute.xlu0 %4081
        %4083 = vrot.lane.b32.xlu0 %v4013, 96
        %v4084 = vpop.permute.xlu0 %4083
        %4085 = vrot.lane.b32.xlu0 %v4016, 96
        %v4086 = vpop.permute.xlu0 %4085
        %4087 = vrot.lane.b32.xlu0 %v4021, 96
        %v4088 = vpop.permute.xlu0 %4087
        %4089 = vrot.lane.b32.xlu0 %v4024, 96
        %v4090 = vpop.permute.xlu0 %4089
        %4091 = vrot.lane.b32.xlu0 %v4029, 96
        %v4092 = vpop.permute.xlu0 %4091
        %4093 = vrot.lane.b32.xlu0 %v4032, 96
        %v4094 = vpop.permute.xlu0 %4093
        %4095 = vrot.lane.b32.xlu0 %v4037, 96
        %v4096 = vpop.permute.xlu0 %4095
        %4097 = vrot.lane.b32.xlu0 %v4040, 96
        %v4098 = vpop.permute.xlu0 %4097
        %4099 = vrot.lane.b32.xlu0 %v4045, 96
        %v4100 = vpop.permute.xlu0 %4099
        %4101 = vrot.lane.b32.xlu0 %v4048, 96
        %v4102 = vpop.permute.xlu0 %4101
        %4103 = vrot.lane.b32.xlu0 %v4053, 96
        %v4104 = vpop.permute.xlu0 %4103
        %4105 = vrot.lane.b32.xlu0 %v4056, 96
        %v4106 = vpop.permute.xlu0 %4105
        %v4123 = vadd.f32 %v3914, %v4076
        %v4124 = vadd.f32 %v3915, %v4078
        %v4125 = vadd.f32 %v3916, %v4080
        %v4126 = vadd.f32 %v3917, %v4082
        %v4127 = vadd.f32 %v3918, %v4084
        %v4128 = vadd.f32 %v3919, %v4086
        %v4129 = vadd.f32 %v3920, %v4088
        %v4130 = vadd.f32 %v3921, %v4090
        %v4131 = vadd.f32 %v3922, %v4092
        %v4132 = vadd.f32 %v3923, %v4094
        %v4133 = vadd.f32 %v3924, %v4096
        %v4134 = vadd.f32 %v3925, %v4098
        %v4135 = vadd.f32 %v3926, %v4100
        %v4136 = vadd.f32 %v3927, %v4102
        %v4137 = vadd.f32 %v3928, %v4104
        %v4138 = vadd.f32 %v3929, %v4106
        %vm4139 = vcmask 1048320
        %4140 = vst.msk [vmem:[#allocation4] sm:$0xff] %vm4139, %v4123
        %4141 = vst.msk [vmem:[#allocation4 + $0x8] sm:$0xff] %vm4139, %v4124
        %4142 = vst.msk [vmem:[#allocation4 + $0x10] sm:$0xff] %vm4139, %v4125
        %4143 = vst.msk [vmem:[#allocation4 + $0x18] sm:$0xff] %vm4139, %v4126
        %4144 = vst.msk [vmem:[#allocation4 + $0x20] sm:$0xff] %vm4139, %v4127
        %4145 = vst.msk [vmem:[#allocation4 + $0x28] sm:$0xff] %vm4139, %v4128
        %4146 = vst.msk [vmem:[#allocation4 + $0x30] sm:$0xff] %vm4139, %v4129
        %4147 = vst.msk [vmem:[#allocation4 + $0x38] sm:$0xff] %vm4139, %v4130
        %4148 = vst.msk [vmem:[#allocation4 + $0x40] sm:$0xff] %vm4139, %v4131
        %4149 = vst.msk [vmem:[#allocation4 + $0x48] sm:$0xff] %vm4139, %v4132
        %4150 = vst.msk [vmem:[#allocation4 + $0x50] sm:$0xff] %vm4139, %v4133
        %4151 = vst.msk [vmem:[#allocation4 + $0x58] sm:$0xff] %vm4139, %v4134
        %4152 = vst.msk [vmem:[#allocation4 + $0x60] sm:$0xff] %vm4139, %v4135
        %4153 = vst.msk [vmem:[#allocation4 + $0x68] sm:$0xff] %vm4139, %v4136
        %4154 = vst.msk [vmem:[#allocation4 + $0x70] sm:$0xff] %vm4139, %v4137
        %4155 = vst.msk [vmem:[#allocation4 + $0x78] sm:$0xff] %vm4139, %v4138
        %4156 = vst.msk [vmem:[#allocation2] sm:$0xff] %vm3801, %v3529
        %4157 = vst.msk [vmem:[#allocation2 + $0x8] sm:$0xff] %vm3801, %v3530
        %4158 = vst.msk [vmem:[#allocation2 + $0x10] sm:$0xff] %vm3801, %v3531
        %4159 = vst.msk [vmem:[#allocation2 + $0x18] sm:$0xff] %vm3801, %v3532
        %4160 = vst.msk [vmem:[#allocation2 + $0x20] sm:$0xff] %vm3801, %v3533
        %4161 = vst.msk [vmem:[#allocation2 + $0x28] sm:$0xff] %vm3801, %v3534
        %4162 = vst.msk [vmem:[#allocation2 + $0x30] sm:$0xff] %vm3801, %v3535
        %4163 = vst.msk [vmem:[#allocation2 + $0x38] sm:$0xff] %vm3801, %v3536
        %4164 = vst.msk [vmem:[#allocation2 + $0x40] sm:$0xff] %vm3801, %v3537
        %4165 = vst.msk [vmem:[#allocation2 + $0x48] sm:$0xff] %vm3801, %v3538
        %4166 = vst.msk [vmem:[#allocation2 + $0x50] sm:$0xff] %vm3801, %v3539
        %4167 = vst.msk [vmem:[#allocation2 + $0x58] sm:$0xff] %vm3801, %v3540
        %4168 = vst.msk [vmem:[#allocation2 + $0x60] sm:$0xff] %vm3801, %v3541
        %4169 = vst.msk [vmem:[#allocation2 + $0x68] sm:$0xff] %vm3801, %v3542
        %4170 = vst.msk [vmem:[#allocation2 + $0x70] sm:$0xff] %vm3801, %v3543
        %4171 = vst.msk [vmem:[#allocation2 + $0x78] sm:$0xff] %vm3801, %v3544
        // Predicated region
        $region160: #{attention_forward.4} parent=142 // pred_check
          %p4172 = pneg %p575
        $region161: #{attention_forward.4} parent=142 // pred_check_branch
          %4174 = sbr.rel (%p4172) target = $region163
        $region162: #{attention_forward.4} parent=142 // pred_region
          %v4175 = vld [vmem:[#allocation3] sm:$0xff]
          %v4176 = vld [vmem:[#allocation3 + $0x8] sm:$0xff]
          %v4177 = vld [vmem:[#allocation3 + $0x10] sm:$0xff]
          %v4178 = vld [vmem:[#allocation3 + $0x18] sm:$0xff]
          %v4179 = vld [vmem:[#allocation3 + $0x20] sm:$0xff]
          %v4180 = vld [vmem:[#allocation3 + $0x28] sm:$0xff]
          %v4181 = vld [vmem:[#allocation3 + $0x30] sm:$0xff]
          %v4182 = vld [vmem:[#allocation3 + $0x38] sm:$0xff]
          %v4183 = vld [vmem:[#allocation3 + $0x40] sm:$0xff]
          %v4184 = vld [vmem:[#allocation3 + $0x48] sm:$0xff]
          %v4185 = vld [vmem:[#allocation3 + $0x50] sm:$0xff]
          %v4186 = vld [vmem:[#allocation3 + $0x58] sm:$0xff]
          %v4187 = vld [vmem:[#allocation3 + $0x60] sm:$0xff]
          %v4188 = vld [vmem:[#allocation3 + $0x68] sm:$0xff]
          %v4189 = vld [vmem:[#allocation3 + $0x70] sm:$0xff]
          %v4190 = vld [vmem:[#allocation3 + $0x78] sm:$0xff]
          %v4191 = vrcp.pop %v4175
          %v4192 = vrcp.pop %v4176
          %v4193 = vrcp.pop %v4177
          %v4194 = vrcp.pop %v4178
          %v4195 = vrcp.pop %v4179
          %v4196 = vrcp.pop %v4180
          %v4197 = vrcp.pop %v4181
          %v4198 = vrcp.pop %v4182
          %v4199 = vrcp.pop %v4183
          %v4200 = vrcp.pop %v4184
          %v4201 = vrcp.pop %v4185
          %v4202 = vrcp.pop %v4186
          %v4203 = vrcp.pop %v4187
          %v4204 = vrcp.pop %v4188
          %v4205 = vrcp.pop %v4189
          %v4206 = vrcp.pop %v4190
          %v4207 = vld [vmem:[#allocation4] sm:$0xff]
          %v4208 = vld [vmem:[#allocation4 + $0x8] sm:$0xff]
          %v4209 = vld [vmem:[#allocation4 + $0x10] sm:$0xff]
          %v4210 = vld [vmem:[#allocation4 + $0x18] sm:$0xff]
          %v4211 = vld [vmem:[#allocation4 + $0x20] sm:$0xff]
          %v4212 = vld [vmem:[#allocation4 + $0x28] sm:$0xff]
          %v4213 = vld [vmem:[#allocation4 + $0x30] sm:$0xff]
          %v4214 = vld [vmem:[#allocation4 + $0x38] sm:$0xff]
          %v4215 = vld [vmem:[#allocation4 + $0x40] sm:$0xff]
          %v4216 = vld [vmem:[#allocation4 + $0x48] sm:$0xff]
          %v4217 = vld [vmem:[#allocation4 + $0x50] sm:$0xff]
          %v4218 = vld [vmem:[#allocation4 + $0x58] sm:$0xff]
          %v4219 = vld [vmem:[#allocation4 + $0x60] sm:$0xff]
          %v4220 = vld [vmem:[#allocation4 + $0x68] sm:$0xff]
          %v4221 = vld [vmem:[#allocation4 + $0x70] sm:$0xff]
          %v4222 = vld [vmem:[#allocation4 + $0x78] sm:$0xff]
          %4224 = vset.pattern.permute.xlu0 0
          %4225 = vperm.xlu0 %4224, %v4191
          %v4226 = vpop.permute.xlu0 %4225
          %4229 = vset.pattern.permute.xlu0 0
          %4230 = vperm.xlu0 %4229, %v4192
          %v4231 = vpop.permute.xlu0 %4230
          %4234 = vset.pattern.permute.xlu0 0
          %4235 = vperm.xlu0 %4234, %v4193
          %v4236 = vpop.permute.xlu0 %4235
          %4239 = vset.pattern.permute.xlu0 0
          %4240 = vperm.xlu0 %4239, %v4194
          %v4241 = vpop.permute.xlu0 %4240
          %4244 = vset.pattern.permute.xlu0 0
          %4245 = vperm.xlu0 %4244, %v4195
          %v4246 = vpop.permute.xlu0 %4245
          %4249 = vset.pattern.permute.xlu0 0
          %4250 = vperm.xlu0 %4249, %v4196
          %v4251 = vpop.permute.xlu0 %4250
          %4254 = vset.pattern.permute.xlu0 0
          %4255 = vperm.xlu0 %4254, %v4197
          %v4256 = vpop.permute.xlu0 %4255
          %4259 = vset.pattern.permute.xlu0 0
          %4260 = vperm.xlu0 %4259, %v4198
          %v4261 = vpop.permute.xlu0 %4260
          %4264 = vset.pattern.permute.xlu0 0
          %4265 = vperm.xlu0 %4264, %v4199
          %v4266 = vpop.permute.xlu0 %4265
          %4269 = vset.pattern.permute.xlu0 0
          %4270 = vperm.xlu0 %4269, %v4200
          %v4271 = vpop.permute.xlu0 %4270
          %4274 = vset.pattern.permute.xlu0 0
          %4275 = vperm.xlu0 %4274, %v4201
          %v4276 = vpop.permute.xlu0 %4275
          %4279 = vset.pattern.permute.xlu0 0
          %4280 = vperm.xlu0 %4279, %v4202
          %v4281 = vpop.permute.xlu0 %4280
          %4284 = vset.pattern.permute.xlu0 0
          %4285 = vperm.xlu0 %4284, %v4203
          %v4286 = vpop.permute.xlu0 %4285
          %4289 = vset.pattern.permute.xlu0 0
          %4290 = vperm.xlu0 %4289, %v4204
          %v4291 = vpop.permute.xlu0 %4290
          %4294 = vset.pattern.permute.xlu0 0
          %4295 = vperm.xlu0 %4294, %v4205
          %v4296 = vpop.permute.xlu0 %4295
          %4299 = vset.pattern.permute.xlu0 0
          %4300 = vperm.xlu0 %4299, %v4206
          %v4301 = vpop.permute.xlu0 %4300
          %v4303 = vmul.f32 %v4207, %v4226
          %v4304 = vmul.f32 %v4208, %v4231
          %v4305 = vmul.f32 %v4209, %v4236
          %v4306 = vmul.f32 %v4210, %v4241
          %v4307 = vmul.f32 %v4211, %v4246
          %v4308 = vmul.f32 %v4212, %v4251
          %v4309 = vmul.f32 %v4213, %v4256
          %v4310 = vmul.f32 %v4214, %v4261
          %v4311 = vmul.f32 %v4215, %v4266
          %v4312 = vmul.f32 %v4216, %v4271
          %v4313 = vmul.f32 %v4217, %v4276
          %v4314 = vmul.f32 %v4218, %v4281
          %v4315 = vmul.f32 %v4219, %v4286
          %v4316 = vmul.f32 %v4220, %v4291
          %v4317 = vmul.f32 %v4221, %v4296
          %v4318 = vmul.f32 %v4222, %v4301
          %4319 = vst.msk [vmem:[%s571] sm:$0xff] %vm772, %v4303
          %4320 = vst.msk [vmem:[%s571 + $0x8] sm:$0xff] %vm772, %v4304
          %4321 = vst.msk [vmem:[%s571 + $0x10] sm:$0xff] %vm772, %v4305
          %4322 = vst.msk [vmem:[%s571 + $0x18] sm:$0xff] %vm772, %v4306
          %4323 = vst.msk [vmem:[%s571 + $0x20] sm:$0xff] %vm772, %v4307
          %4324 = vst.msk [vmem:[%s571 + $0x28] sm:$0xff] %vm772, %v4308
          %4325 = vst.msk [vmem:[%s571 + $0x30] sm:$0xff] %vm772, %v4309
          %4326 = vst.msk [vmem:[%s571 + $0x38] sm:$0xff] %vm772, %v4310
          %4327 = vst.msk [vmem:[%s571 + $0x40] sm:$0xff] %vm772, %v4311
          %4328 = vst.msk [vmem:[%s571 + $0x48] sm:$0xff] %vm772, %v4312
          %4329 = vst.msk [vmem:[%s571 + $0x50] sm:$0xff] %vm772, %v4313
          %4330 = vst.msk [vmem:[%s571 + $0x58] sm:$0xff] %vm772, %v4314
          %4331 = vst.msk [vmem:[%s571 + $0x60] sm:$0xff] %vm772, %v4315
          %4332 = vst.msk [vmem:[%s571 + $0x68] sm:$0xff] %vm772, %v4316
          %4333 = vst.msk [vmem:[%s571 + $0x70] sm:$0xff] %vm772, %v4317
          %4334 = vst.msk [vmem:[%s571 + $0x78] sm:$0xff] %vm772, %v4318
          %v4335 = vld [vmem:[#allocation3] sm:$0xff]
          %v4336 = vld [vmem:[#allocation3 + $0x8] sm:$0xff]
          %v4337 = vld [vmem:[#allocation3 + $0x10] sm:$0xff]
          %v4338 = vld [vmem:[#allocation3 + $0x18] sm:$0xff]
          %v4339 = vld [vmem:[#allocation3 + $0x20] sm:$0xff]
          %v4340 = vld [vmem:[#allocation3 + $0x28] sm:$0xff]
          %v4341 = vld [vmem:[#allocation3 + $0x30] sm:$0xff]
          %v4342 = vld [vmem:[#allocation3 + $0x38] sm:$0xff]
          %v4343 = vld [vmem:[#allocation3 + $0x40] sm:$0xff]
          %v4344 = vld [vmem:[#allocation3 + $0x48] sm:$0xff]
          %v4345 = vld [vmem:[#allocation3 + $0x50] sm:$0xff]
          %v4346 = vld [vmem:[#allocation3 + $0x58] sm:$0xff]
          %v4347 = vld [vmem:[#allocation3 + $0x60] sm:$0xff]
          %v4348 = vld [vmem:[#allocation3 + $0x68] sm:$0xff]
          %v4349 = vld [vmem:[#allocation3 + $0x70] sm:$0xff]
          %v4350 = vld [vmem:[#allocation3 + $0x78] sm:$0xff]
          %v4351 = vrcp.pop %v4335
          %v4352 = vrcp.pop %v4336
          %v4353 = vrcp.pop %v4337
          %v4354 = vrcp.pop %v4338
          %v4355 = vrcp.pop %v4339
          %v4356 = vrcp.pop %v4340
          %v4357 = vrcp.pop %v4341
          %v4358 = vrcp.pop %v4342
          %v4359 = vrcp.pop %v4343
          %v4360 = vrcp.pop %v4344
          %v4361 = vrcp.pop %v4345
          %v4362 = vrcp.pop %v4346
          %v4363 = vrcp.pop %v4347
          %v4364 = vrcp.pop %v4348
          %v4365 = vrcp.pop %v4349
          %v4366 = vrcp.pop %v4350
          %v4367 = vld [vmem:[#allocation4] sm:$0xff]
          %v4368 = vld [vmem:[#allocation4 + $0x8] sm:$0xff]
          %v4369 = vld [vmem:[#allocation4 + $0x10] sm:$0xff]
          %v4370 = vld [vmem:[#allocation4 + $0x18] sm:$0xff]
          %v4371 = vld [vmem:[#allocation4 + $0x20] sm:$0xff]
          %v4372 = vld [vmem:[#allocation4 + $0x28] sm:$0xff]
          %v4373 = vld [vmem:[#allocation4 + $0x30] sm:$0xff]
          %v4374 = vld [vmem:[#allocation4 + $0x38] sm:$0xff]
          %v4375 = vld [vmem:[#allocation4 + $0x40] sm:$0xff]
          %v4376 = vld [vmem:[#allocation4 + $0x48] sm:$0xff]
          %v4377 = vld [vmem:[#allocation4 + $0x50] sm:$0xff]
          %v4378 = vld [vmem:[#allocation4 + $0x58] sm:$0xff]
          %v4379 = vld [vmem:[#allocation4 + $0x60] sm:$0xff]
          %v4380 = vld [vmem:[#allocation4 + $0x68] sm:$0xff]
          %v4381 = vld [vmem:[#allocation4 + $0x70] sm:$0xff]
          %v4382 = vld [vmem:[#allocation4 + $0x78] sm:$0xff]
          %4384 = vset.pattern.permute.xlu0 1
          %4385 = vperm.xlu0 %4384, %v4351
          %v4386 = vpop.permute.xlu0 %4385
          %4389 = vset.pattern.permute.xlu0 1
          %4390 = vperm.xlu0 %4389, %v4352
          %v4391 = vpop.permute.xlu0 %4390
          %4394 = vset.pattern.permute.xlu0 1
          %4395 = vperm.xlu0 %4394, %v4353
          %v4396 = vpop.permute.xlu0 %4395
          %4399 = vset.pattern.permute.xlu0 1
          %4400 = vperm.xlu0 %4399, %v4354
          %v4401 = vpop.permute.xlu0 %4400
          %4404 = vset.pattern.permute.xlu0 1
          %4405 = vperm.xlu0 %4404, %v4355
          %v4406 = vpop.permute.xlu0 %4405
          %4409 = vset.pattern.permute.xlu0 1
          %4410 = vperm.xlu0 %4409, %v4356
          %v4411 = vpop.permute.xlu0 %4410
          %4414 = vset.pattern.permute.xlu0 1
          %4415 = vperm.xlu0 %4414, %v4357
          %v4416 = vpop.permute.xlu0 %4415
          %4419 = vset.pattern.permute.xlu0 1
          %4420 = vperm.xlu0 %4419, %v4358
          %v4421 = vpop.permute.xlu0 %4420
          %4424 = vset.pattern.permute.xlu0 1
          %4425 = vperm.xlu0 %4424, %v4359
          %v4426 = vpop.permute.xlu0 %4425
          %4429 = vset.pattern.permute.xlu0 1
          %4430 = vperm.xlu0 %4429, %v4360
          %v4431 = vpop.permute.xlu0 %4430
          %4434 = vset.pattern.permute.xlu0 1
          %4435 = vperm.xlu0 %4434, %v4361
          %v4436 = vpop.permute.xlu0 %4435
          %4439 = vset.pattern.permute.xlu0 1
          %4440 = vperm.xlu0 %4439, %v4362
          %v4441 = vpop.permute.xlu0 %4440
          %4444 = vset.pattern.permute.xlu0 1
          %4445 = vperm.xlu0 %4444, %v4363
          %v4446 = vpop.permute.xlu0 %4445
          %4449 = vset.pattern.permute.xlu0 1
          %4450 = vperm.xlu0 %4449, %v4364
          %v4451 = vpop.permute.xlu0 %4450
          %4454 = vset.pattern.permute.xlu0 1
          %4455 = vperm.xlu0 %4454, %v4365
          %v4456 = vpop.permute.xlu0 %4455
          %4459 = vset.pattern.permute.xlu0 1
          %4460 = vperm.xlu0 %4459, %v4366
          %v4461 = vpop.permute.xlu0 %4460
          %v4463 = vmul.f32 %v4367, %v4386
          %v4464 = vmul.f32 %v4368, %v4391
          %v4465 = vmul.f32 %v4369, %v4396
          %v4466 = vmul.f32 %v4370, %v4401
          %v4467 = vmul.f32 %v4371, %v4406
          %v4468 = vmul.f32 %v4372, %v4411
          %v4469 = vmul.f32 %v4373, %v4416
          %v4470 = vmul.f32 %v4374, %v4421
          %v4471 = vmul.f32 %v4375, %v4426
          %v4472 = vmul.f32 %v4376, %v4431
          %v4473 = vmul.f32 %v4377, %v4436
          %v4474 = vmul.f32 %v4378, %v4441
          %v4475 = vmul.f32 %v4379, %v4446
          %v4476 = vmul.f32 %v4380, %v4451
          %v4477 = vmul.f32 %v4381, %v4456
          %v4478 = vmul.f32 %v4382, %v4461
          %4479 = vst.msk [vmem:[%s571] sm:$0xff] %vm2403, %v4463
          %4480 = vst.msk [vmem:[%s571 + $0x8] sm:$0xff] %vm2403, %v4464
          %4481 = vst.msk [vmem:[%s571 + $0x10] sm:$0xff] %vm2403, %v4465
          %4482 = vst.msk [vmem:[%s571 + $0x18] sm:$0xff] %vm2403, %v4466
          %4483 = vst.msk [vmem:[%s571 + $0x20] sm:$0xff] %vm2403, %v4467
          %4484 = vst.msk [vmem:[%s571 + $0x28] sm:$0xff] %vm2403, %v4468
          %4485 = vst.msk [vmem:[%s571 + $0x30] sm:$0xff] %vm2403, %v4469
          %4486 = vst.msk [vmem:[%s571 + $0x38] sm:$0xff] %vm2403, %v4470
          %4487 = vst.msk [vmem:[%s571 + $0x40] sm:$0xff] %vm2403, %v4471
          %4488 = vst.msk [vmem:[%s571 + $0x48] sm:$0xff] %vm2403, %v4472
          %4489 = vst.msk [vmem:[%s571 + $0x50] sm:$0xff] %vm2403, %v4473
          %4490 = vst.msk [vmem:[%s571 + $0x58] sm:$0xff] %vm2403, %v4474
          %4491 = vst.msk [vmem:[%s571 + $0x60] sm:$0xff] %vm2403, %v4475
          %4492 = vst.msk [vmem:[%s571 + $0x68] sm:$0xff] %vm2403, %v4476
          %4493 = vst.msk [vmem:[%s571 + $0x70] sm:$0xff] %vm2403, %v4477
          %4494 = vst.msk [vmem:[%s571 + $0x78] sm:$0xff] %vm2403, %v4478
          %v4495 = vld [vmem:[#allocation3] sm:$0xff]
          %v4496 = vld [vmem:[#allocation3 + $0x8] sm:$0xff]
          %v4497 = vld [vmem:[#allocation3 + $0x10] sm:$0xff]
          %v4498 = vld [vmem:[#allocation3 + $0x18] sm:$0xff]
          %v4499 = vld [vmem:[#allocation3 + $0x20] sm:$0xff]
          %v4500 = vld [vmem:[#allocation3 + $0x28] sm:$0xff]
          %v4501 = vld [vmem:[#allocation3 + $0x30] sm:$0xff]
          %v4502 = vld [vmem:[#allocation3 + $0x38] sm:$0xff]
          %v4503 = vld [vmem:[#allocation3 + $0x40] sm:$0xff]
          %v4504 = vld [vmem:[#allocation3 + $0x48] sm:$0xff]
          %v4505 = vld [vmem:[#allocation3 + $0x50] sm:$0xff]
          %v4506 = vld [vmem:[#allocation3 + $0x58] sm:$0xff]
          %v4507 = vld [vmem:[#allocation3 + $0x60] sm:$0xff]
          %v4508 = vld [vmem:[#allocation3 + $0x68] sm:$0xff]
          %v4509 = vld [vmem:[#allocation3 + $0x70] sm:$0xff]
          %v4510 = vld [vmem:[#allocation3 + $0x78] sm:$0xff]
          %v4511 = vrcp.pop %v4495
          %v4512 = vrcp.pop %v4496
          %v4513 = vrcp.pop %v4497
          %v4514 = vrcp.pop %v4498
          %v4515 = vrcp.pop %v4499
          %v4516 = vrcp.pop %v4500
          %v4517 = vrcp.pop %v4501
          %v4518 = vrcp.pop %v4502
          %v4519 = vrcp.pop %v4503
          %v4520 = vrcp.pop %v4504
          %v4521 = vrcp.pop %v4505
          %v4522 = vrcp.pop %v4506
          %v4523 = vrcp.pop %v4507
          %v4524 = vrcp.pop %v4508
          %v4525 = vrcp.pop %v4509
          %v4526 = vrcp.pop %v4510
          %v4527 = vld [vmem:[#allocation4] sm:$0xff]
          %v4528 = vld [vmem:[#allocation4 + $0x8] sm:$0xff]
          %v4529 = vld [vmem:[#allocation4 + $0x10] sm:$0xff]
          %v4530 = vld [vmem:[#allocation4 + $0x18] sm:$0xff]
          %v4531 = vld [vmem:[#allocation4 + $0x20] sm:$0xff]
          %v4532 = vld [vmem:[#allocation4 + $0x28] sm:$0xff]
          %v4533 = vld [vmem:[#allocation4 + $0x30] sm:$0xff]
          %v4534 = vld [vmem:[#allocation4 + $0x38] sm:$0xff]
          %v4535 = vld [vmem:[#allocation4 + $0x40] sm:$0xff]
          %v4536 = vld [vmem:[#allocation4 + $0x48] sm:$0xff]
          %v4537 = vld [vmem:[#allocation4 + $0x50] sm:$0xff]
          %v4538 = vld [vmem:[#allocation4 + $0x58] sm:$0xff]
          %v4539 = vld [vmem:[#allocation4 + $0x60] sm:$0xff]
          %v4540 = vld [vmem:[#allocation4 + $0x68] sm:$0xff]
          %v4541 = vld [vmem:[#allocation4 + $0x70] sm:$0xff]
          %v4542 = vld [vmem:[#allocation4 + $0x78] sm:$0xff]
          %4544 = vset.pattern.permute.xlu0 2
          %4545 = vperm.xlu0 %4544, %v4511
          %v4546 = vpop.permute.xlu0 %4545
          %4549 = vset.pattern.permute.xlu0 2
          %4550 = vperm.xlu0 %4549, %v4512
          %v4551 = vpop.permute.xlu0 %4550
          %4554 = vset.pattern.permute.xlu0 2
          %4555 = vperm.xlu0 %4554, %v4513
          %v4556 = vpop.permute.xlu0 %4555
          %4559 = vset.pattern.permute.xlu0 2
          %4560 = vperm.xlu0 %4559, %v4514
          %v4561 = vpop.permute.xlu0 %4560
          %4564 = vset.pattern.permute.xlu0 2
          %4565 = vperm.xlu0 %4564, %v4515
          %v4566 = vpop.permute.xlu0 %4565
          %4569 = vset.pattern.permute.xlu0 2
          %4570 = vperm.xlu0 %4569, %v4516
          %v4571 = vpop.permute.xlu0 %4570
          %4574 = vset.pattern.permute.xlu0 2
          %4575 = vperm.xlu0 %4574, %v4517
          %v4576 = vpop.permute.xlu0 %4575
          %4579 = vset.pattern.permute.xlu0 2
          %4580 = vperm.xlu0 %4579, %v4518
          %v4581 = vpop.permute.xlu0 %4580
          %4584 = vset.pattern.permute.xlu0 2
          %4585 = vperm.xlu0 %4584, %v4519
          %v4586 = vpop.permute.xlu0 %4585
          %4589 = vset.pattern.permute.xlu0 2
          %4590 = vperm.xlu0 %4589, %v4520
          %v4591 = vpop.permute.xlu0 %4590
          %4594 = vset.pattern.permute.xlu0 2
          %4595 = vperm.xlu0 %4594, %v4521
          %v4596 = vpop.permute.xlu0 %4595
          %4599 = vset.pattern.permute.xlu0 2
          %4600 = vperm.xlu0 %4599, %v4522
          %v4601 = vpop.permute.xlu0 %4600
          %4604 = vset.pattern.permute.xlu0 2
          %4605 = vperm.xlu0 %4604, %v4523
          %v4606 = vpop.permute.xlu0 %4605
          %4609 = vset.pattern.permute.xlu0 2
          %4610 = vperm.xlu0 %4609, %v4524
          %v4611 = vpop.permute.xlu0 %4610
          %4614 = vset.pattern.permute.xlu0 2
          %4615 = vperm.xlu0 %4614, %v4525
          %v4616 = vpop.permute.xlu0 %4615
          %4619 = vset.pattern.permute.xlu0 2
          %4620 = vperm.xlu0 %4619, %v4526
          %v4621 = vpop.permute.xlu0 %4620
          %v4623 = vmul.f32 %v4527, %v4546
          %v4624 = vmul.f32 %v4528, %v4551
          %v4625 = vmul.f32 %v4529, %v4556
          %v4626 = vmul.f32 %v4530, %v4561
          %v4627 = vmul.f32 %v4531, %v4566
          %v4628 = vmul.f32 %v4532, %v4571
          %v4629 = vmul.f32 %v4533, %v4576
          %v4630 = vmul.f32 %v4534, %v4581
          %v4631 = vmul.f32 %v4535, %v4586
          %v4632 = vmul.f32 %v4536, %v4591
          %v4633 = vmul.f32 %v4537, %v4596
          %v4634 = vmul.f32 %v4538, %v4601
          %v4635 = vmul.f32 %v4539, %v4606
          %v4636 = vmul.f32 %v4540, %v4611
          %v4637 = vmul.f32 %v4541, %v4616
          %v4638 = vmul.f32 %v4542, %v4621
          %4639 = vst.msk [vmem:[%s571] sm:$0xff] %vm3271, %v4623
          %4640 = vst.msk [vmem:[%s571 + $0x8] sm:$0xff] %vm3271, %v4624
          %4641 = vst.msk [vmem:[%s571 + $0x10] sm:$0xff] %vm3271, %v4625
          %4642 = vst.msk [vmem:[%s571 + $0x18] sm:$0xff] %vm3271, %v4626
          %4643 = vst.msk [vmem:[%s571 + $0x20] sm:$0xff] %vm3271, %v4627
          %4644 = vst.msk [vmem:[%s571 + $0x28] sm:$0xff] %vm3271, %v4628
          %4645 = vst.msk [vmem:[%s571 + $0x30] sm:$0xff] %vm3271, %v4629
          %4646 = vst.msk [vmem:[%s571 + $0x38] sm:$0xff] %vm3271, %v4630
          %4647 = vst.msk [vmem:[%s571 + $0x40] sm:$0xff] %vm3271, %v4631
          %4648 = vst.msk [vmem:[%s571 + $0x48] sm:$0xff] %vm3271, %v4632
          %4649 = vst.msk [vmem:[%s571 + $0x50] sm:$0xff] %vm3271, %v4633
          %4650 = vst.msk [vmem:[%s571 + $0x58] sm:$0xff] %vm3271, %v4634
          %4651 = vst.msk [vmem:[%s571 + $0x60] sm:$0xff] %vm3271, %v4635
          %4652 = vst.msk [vmem:[%s571 + $0x68] sm:$0xff] %vm3271, %v4636
          %4653 = vst.msk [vmem:[%s571 + $0x70] sm:$0xff] %vm3271, %v4637
          %4654 = vst.msk [vmem:[%s571 + $0x78] sm:$0xff] %vm3271, %v4638
          %v4655 = vld [vmem:[#allocation3] sm:$0xff]
          %v4656 = vld [vmem:[#allocation3 + $0x8] sm:$0xff]
          %v4657 = vld [vmem:[#allocation3 + $0x10] sm:$0xff]
          %v4658 = vld [vmem:[#allocation3 + $0x18] sm:$0xff]
          %v4659 = vld [vmem:[#allocation3 + $0x20] sm:$0xff]
          %v4660 = vld [vmem:[#allocation3 + $0x28] sm:$0xff]
          %v4661 = vld [vmem:[#allocation3 + $0x30] sm:$0xff]
          %v4662 = vld [vmem:[#allocation3 + $0x38] sm:$0xff]
          %v4663 = vld [vmem:[#allocation3 + $0x40] sm:$0xff]
          %v4664 = vld [vmem:[#allocation3 + $0x48] sm:$0xff]
          %v4665 = vld [vmem:[#allocation3 + $0x50] sm:$0xff]
          %v4666 = vld [vmem:[#allocation3 + $0x58] sm:$0xff]
          %v4667 = vld [vmem:[#allocation3 + $0x60] sm:$0xff]
          %v4668 = vld [vmem:[#allocation3 + $0x68] sm:$0xff]
          %v4669 = vld [vmem:[#allocation3 + $0x70] sm:$0xff]
          %v4670 = vld [vmem:[#allocation3 + $0x78] sm:$0xff]
          %v4671 = vrcp.pop %v4655
          %v4672 = vrcp.pop %v4656
          %v4673 = vrcp.pop %v4657
          %v4674 = vrcp.pop %v4658
          %v4675 = vrcp.pop %v4659
          %v4676 = vrcp.pop %v4660
          %v4677 = vrcp.pop %v4661
          %v4678 = vrcp.pop %v4662
          %v4679 = vrcp.pop %v4663
          %v4680 = vrcp.pop %v4664
          %v4681 = vrcp.pop %v4665
          %v4682 = vrcp.pop %v4666
          %v4683 = vrcp.pop %v4667
          %v4684 = vrcp.pop %v4668
          %v4685 = vrcp.pop %v4669
          %v4686 = vrcp.pop %v4670
          %v4687 = vld [vmem:[#allocation4] sm:$0xff]
          %v4688 = vld [vmem:[#allocation4 + $0x8] sm:$0xff]
          %v4689 = vld [vmem:[#allocation4 + $0x10] sm:$0xff]
          %v4690 = vld [vmem:[#allocation4 + $0x18] sm:$0xff]
          %v4691 = vld [vmem:[#allocation4 + $0x20] sm:$0xff]
          %v4692 = vld [vmem:[#allocation4 + $0x28] sm:$0xff]
          %v4693 = vld [vmem:[#allocation4 + $0x30] sm:$0xff]
          %v4694 = vld [vmem:[#allocation4 + $0x38] sm:$0xff]
          %v4695 = vld [vmem:[#allocation4 + $0x40] sm:$0xff]
          %v4696 = vld [vmem:[#allocation4 + $0x48] sm:$0xff]
          %v4697 = vld [vmem:[#allocation4 + $0x50] sm:$0xff]
          %v4698 = vld [vmem:[#allocation4 + $0x58] sm:$0xff]
          %v4699 = vld [vmem:[#allocation4 + $0x60] sm:$0xff]
          %v4700 = vld [vmem:[#allocation4 + $0x68] sm:$0xff]
          %v4701 = vld [vmem:[#allocation4 + $0x70] sm:$0xff]
          %v4702 = vld [vmem:[#allocation4 + $0x78] sm:$0xff]
          %4704 = vset.pattern.permute.xlu0 3
          %4705 = vperm.xlu0 %4704, %v4671
          %v4706 = vpop.permute.xlu0 %4705
          %4709 = vset.pattern.permute.xlu0 3
          %4710 = vperm.xlu0 %4709, %v4672
          %v4711 = vpop.permute.xlu0 %4710
          %4714 = vset.pattern.permute.xlu0 3
          %4715 = vperm.xlu0 %4714, %v4673
          %v4716 = vpop.permute.xlu0 %4715
          %4719 = vset.pattern.permute.xlu0 3
          %4720 = vperm.xlu0 %4719, %v4674
          %v4721 = vpop.permute.xlu0 %4720
          %4724 = vset.pattern.permute.xlu0 3
          %4725 = vperm.xlu0 %4724, %v4675
          %v4726 = vpop.permute.xlu0 %4725
          %4729 = vset.pattern.permute.xlu0 3
          %4730 = vperm.xlu0 %4729, %v4676
          %v4731 = vpop.permute.xlu0 %4730
          %4734 = vset.pattern.permute.xlu0 3
          %4735 = vperm.xlu0 %4734, %v4677
          %v4736 = vpop.permute.xlu0 %4735
          %4739 = vset.pattern.permute.xlu0 3
          %4740 = vperm.xlu0 %4739, %v4678
          %v4741 = vpop.permute.xlu0 %4740
          %4744 = vset.pattern.permute.xlu0 3
          %4745 = vperm.xlu0 %4744, %v4679
          %v4746 = vpop.permute.xlu0 %4745
          %4749 = vset.pattern.permute.xlu0 3
          %4750 = vperm.xlu0 %4749, %v4680
          %v4751 = vpop.permute.xlu0 %4750
          %4754 = vset.pattern.permute.xlu0 3
          %4755 = vperm.xlu0 %4754, %v4681
          %v4756 = vpop.permute.xlu0 %4755
          %4759 = vset.pattern.permute.xlu0 3
          %4760 = vperm.xlu0 %4759, %v4682
          %v4761 = vpop.permute.xlu0 %4760
          %4764 = vset.pattern.permute.xlu0 3
          %4765 = vperm.xlu0 %4764, %v4683
          %v4766 = vpop.permute.xlu0 %4765
          %4769 = vset.pattern.permute.xlu0 3
          %4770 = vperm.xlu0 %4769, %v4684
          %v4771 = vpop.permute.xlu0 %4770
          %4774 = vset.pattern.permute.xlu0 3
          %4775 = vperm.xlu0 %4774, %v4685
          %v4776 = vpop.permute.xlu0 %4775
          %4779 = vset.pattern.permute.xlu0 3
          %4780 = vperm.xlu0 %4779, %v4686
          %v4781 = vpop.permute.xlu0 %4780
          %v4783 = vmul.f32 %v4687, %v4706
          %v4784 = vmul.f32 %v4688, %v4711
          %v4785 = vmul.f32 %v4689, %v4716
          %v4786 = vmul.f32 %v4690, %v4721
          %v4787 = vmul.f32 %v4691, %v4726
          %v4788 = vmul.f32 %v4692, %v4731
          %v4789 = vmul.f32 %v4693, %v4736
          %v4790 = vmul.f32 %v4694, %v4741
          %v4791 = vmul.f32 %v4695, %v4746
          %v4792 = vmul.f32 %v4696, %v4751
          %v4793 = vmul.f32 %v4697, %v4756
          %v4794 = vmul.f32 %v4698, %v4761
          %v4795 = vmul.f32 %v4699, %v4766
          %v4796 = vmul.f32 %v4700, %v4771
          %v4797 = vmul.f32 %v4701, %v4776
          %v4798 = vmul.f32 %v4702, %v4781
          %4799 = vst.msk [vmem:[%s571] sm:$0xff] %vm4139, %v4783
          %4800 = vst.msk [vmem:[%s571 + $0x8] sm:$0xff] %vm4139, %v4784
          %4801 = vst.msk [vmem:[%s571 + $0x10] sm:$0xff] %vm4139, %v4785
          %4802 = vst.msk [vmem:[%s571 + $0x18] sm:$0xff] %vm4139, %v4786
          %4803 = vst.msk [vmem:[%s571 + $0x20] sm:$0xff] %vm4139, %v4787
          %4804 = vst.msk [vmem:[%s571 + $0x28] sm:$0xff] %vm4139, %v4788
          %4805 = vst.msk [vmem:[%s571 + $0x30] sm:$0xff] %vm4139, %v4789
          %4806 = vst.msk [vmem:[%s571 + $0x38] sm:$0xff] %vm4139, %v4790
          %4807 = vst.msk [vmem:[%s571 + $0x40] sm:$0xff] %vm4139, %v4791
          %4808 = vst.msk [vmem:[%s571 + $0x48] sm:$0xff] %vm4139, %v4792
          %4809 = vst.msk [vmem:[%s571 + $0x50] sm:$0xff] %vm4139, %v4793
          %4810 = vst.msk [vmem:[%s571 + $0x58] sm:$0xff] %vm4139, %v4794
          %4811 = vst.msk [vmem:[%s571 + $0x60] sm:$0xff] %vm4139, %v4795
          %4812 = vst.msk [vmem:[%s571 + $0x68] sm:$0xff] %vm4139, %v4796
          %4813 = vst.msk [vmem:[%s571 + $0x70] sm:$0xff] %vm4139, %v4797
          %4814 = vst.msk [vmem:[%s571 + $0x78] sm:$0xff] %vm4139, %v4798
        $region163: #{attention_forward.4} parent=142 // pred_fallthru
          _
        %s4815 = smul.u32 16, %s20
        %p4816 = scmp.lt.s32.totalorder %s19, 1
        %s4817 = scalar_select %p4816, %s19, 1
        %p4818 = scmp.lt.s32.totalorder %s4815, 15
        %s4819 = scalar_select %p4818, %s4815, 15
        %s4820 = smul.addr %s4817, 16
        %s4821 = sadd.s32 %s4819, %s4820
        %s4822 = smul.addr %s4821, 8
        %s4823 = scalar_lea.vmem %s3, %s4822
        // Predicated region
        $region164: #{attention_forward.4} parent=142 // pred_check
          %p4824 = pneg %p137
        $region165: #{attention_forward.4} parent=142 // pred_check_branch
          %4826 = sbr.rel (%p4824) target = $region167
        $region166: #{attention_forward.4} parent=142 // pred_region
          %s4827 = smul.u32 16, %s20
        $region167: #{attention_forward.4} parent=142 // pred_fallthru
          _
      $region143: #{attention_forward.4} parent=5 // pred_fallthru
        _
      %p4828 = scmp.le.s32.totalorder 2, %s9
      // Predicated region
      $region168: #{attention_forward.4} parent=5 // pred_check
        %p4829 = pneg %p4828
      $region169: #{attention_forward.4} parent=5 // pred_check_branch
        %4831 = sbr.rel (%p4829) target = $region171
      $region170: #{attention_forward.4} parent=5 // pred_region
        %s4832 = ssub.s32 %s9, 2
        // Predicated region
        $region172: #{attention_forward.4} parent=170 // pred_check
          %p4833 = pneg %p143
        $region173: #{attention_forward.4} parent=170 // pred_check_branch
          %4835 = sbr.rel (%p4833) target = $region175
        $region174: #{attention_forward.4} parent=170 // pred_region
          %s4836 = smul.u32 16, %s23
          %p4837 = scmp.lt.s32.totalorder %s22, 1
          %s4838 = scalar_select %p4837, %s22, 1
          %p4839 = scmp.lt.s32.totalorder %s4836, 15
          %s4840 = scalar_select %p4839, %s4836, 15
          %s4841 = smul.addr %s4838, 16
          %s4842 = sadd.s32 %s4840, %s4841
          %s4843 = smul.addr %s4842, 8
          %s4844 = scalar_lea.vmem %s3, %s4843
        $region175: #{attention_forward.4} parent=170 // pred_fallthru
          _
      $region171: #{attention_forward.4} parent=5 // pred_fallthru
        _
    $region6: #{attention_forward.4} parent=1 // loop_footer
      %s13 = sadd.s32 1, %s9
    $region7: #{attention_forward.4} parent=1 // loop_footer_branch
      %8 = sbr.rel target = $region3
    $region8: #{attention_forward.4} parent=1 // loop_exit
      _

</llo_original>
